<compile_context>
chip_gen: v6e
topology: v6e:2x2x1
jax: 0.10.0
libtpu: 0.0.40
codegen_flags: <defaults>
</compile_context>

<pallas_src>
import jax
import jax.numpy as jnp
from jax.experimental import pallas as pl
from jax.experimental.pallas import tpu as pltpu


NH = 1280


# ----------------------------------------------------------------------------
# Fused kernel: whole Net forward in one invocation (no grid; all operands are
# full-array blocks, which satisfies the (8,128) rule via the "block == full
# array dims" escape hatch).
# ----------------------------------------------------------------------------

def _net_kernel(state_ref, img_ref,
                w1_ref, b1_ref, w2_ref, b2_ref, w3_ref, b3_ref,
                w4_hbm, b4_ref, wi_ref, bi_ref,
                wf1_hbm, bf1_ref, wf2_ref, bf2_ref,
                o_ref,
                w4_vmem, wf1_vmem, dma_sems):
    # Kick off the two dominant weight DMAs (HBM -> VMEM scratch) immediately
    # so they stream while the small front layers / GAP compute runs.
    w4_cp = pltpu.make_async_copy(w4_hbm, w4_vmem, dma_sems.at[0])
    w4_cp.start()
    fc1_cp = pltpu.make_async_copy(wf1_hbm, wf1_vmem, dma_sems.at[1])
    fc1_cp.start()

    def lin(x, w, b, relu=True):
        # Cast the activation to the weight dtype (bf16 for the big layers) and
        # accumulate in f32 on the MXU.
        y = jnp.dot(x.astype(w.dtype), w, preferred_element_type=jnp.float32) + b
        return jnp.maximum(y, 0.0) if relu else y

    # ---- state MLP: 2 -> 128 -> 512 -> 512 -> nh (ReLU after each) ----------
    h = state_ref[...]
    h = lin(h, w1_ref[...], b1_ref[...])
    h = lin(h, w2_ref[...], b2_ref[...])
    h = lin(h, w3_ref[...], b3_ref[...])

    # ---- image branch stand-in (see TODO(synk)): lane-dense GAP + proj ------
    pooled = jnp.mean(img_ref[...], axis=-1)          # (B, C); reduce over H*W lanes
    feat = lin(pooled, wi_ref[...], bi_ref[...])      # (B, nh) f32

    # Last state layer needs w4: wait for its DMA only now.
    w4_cp.wait()
    h = lin(h, w4_vmem[...], b4_ref[...])             # (B, nh) f32

    # ---- head: fc1(image_feat + state_feat) + ReLU --------------------------
    x = feat + h                                      # fused residual-style add
    fc1_cp.wait()                                     # fc1 weight resident in VMEM
    y = lin(x, wf1_vmem[...], bf1_ref[...])           # (B, nh) f32

    # ---- fc2: nh -> 1 as VPU multiply + lane reduction ----------------------
    out = jnp.sum(y * wf2_ref[...], axis=-1, keepdims=True) + bf2_ref[...]
    o_ref[...] = out.astype(o_ref.dtype)


# ----------------------------------------------------------------------------
# Wrapper
# ----------------------------------------------------------------------------

def net_forward(params, img, state):
    B = state.shape[0]
    Bi, C, H, W = img.shape
    # Lane-dense layout for the GAP reduction (last dim = H*W = 256).
    img_flat = img.reshape(Bi, C, H * W)

    (w1, b1), (w2, b2), (w3, b3), (w4, b4) = params["state_model"]
    wi, bi = params["img_proj"]
    wf1, bf1 = params["fc1"]
    wf2, bf2 = params["fc2"]

    in_arrays = (state, img_flat, w1, b1, w2, b2, w3, b3, w4, b4,
                 wi, bi, wf1, bf1, wf2, bf2)

    def full_spec(a):
        return pl.BlockSpec(a.shape, lambda: (0,) * a.ndim)

    in_specs = []
    for a in in_arrays:
        if a is w4 or a is wf1:
            # Big weights stay in HBM; the kernel DMAs them manually (overlap).
            in_specs.append(pl.BlockSpec(memory_space=pl.ANY))
        else:
            in_specs.append(full_spec(a))

    return pl.pallas_call(
        _net_kernel,
        out_shape=jax.ShapeDtypeStruct((B, 1), jnp.float32),
        in_specs=in_specs,
        out_specs=pl.BlockSpec((B, 1), lambda: (0, 0)),
        scratch_shapes=[
            pltpu.VMEM(w4.shape, w4.dtype),     # w4 weight landing buffer
            pltpu.VMEM(wf1.shape, wf1.dtype),   # fc1 weight landing buffer
            pltpu.SemaphoreType.DMA((2,)),
        ],
        compiler_params=pltpu.CompilerParams(
            vmem_limit_bytes=32 * 1024 * 1024),
    )(*in_arrays)


net_forward_jit = jax.jit(net_forward)


# ----------------------------------------------------------------------------
# Parameter construction (deterministic, synthetic)
# ----------------------------------------------------------------------------

def _init_linear(key, ni, no, w_dtype=jnp.float32):
    kw, kb = jax.random.split(key)
    bound = 1.0 / (ni ** 0.5)
    w = jax.random.uniform(kw, (ni, no), jnp.float32, -bound, bound).astype(w_dtype)
    b = jax.random.uniform(kb, (1, no), jnp.float32, -bound, bound)
    return w, b


def init_net_params(key, *, nh=NH, img_channels=3):
    keys = jax.random.split(key, 7)
    params = {}
    # state_model: keep the tiny K=2 layer in f32; big layers in bf16 (HBM win).
    dims = [(2, 128, jnp.float32),
            (128, 512, jnp.bfloat16),
            (512, 512, jnp.bfloat16),
            (512, nh, jnp.bfloat16)]
    params["state_model"] = [
        _init_linear(keys[i], ni, no, dt) for i, (ni, no, dt) in enumerate(dims)]
    # Stand-in image feature projection (GAP channels -> nh); K=3 so keep f32.
    params["img_proj"] = _init_linear(keys[4], img_channels, nh)
    # fc head: Linear(nh, nh)+ReLU (bf16 weight, manually DMA'd), then Linear(nh, 1).
    params["fc1"] = _init_linear(keys[5], nh, nh, jnp.bfloat16)
    # fc2 stored transposed as a (1, nh) row for the VPU mul + lane-reduce path.
    kw, kb = jax.random.split(keys[6])
    bound = 1.0 / (nh ** 0.5)
    w6 = jax.random.uniform(kw, (1, nh), jnp.float32, -bound, bound)
    b6 = jax.random.uniform(kb, (1, 1), jnp.float32, -bound, bound)
    params["fc2"] = (w6, b6)
    return params


# ----------------------------------------------------------------------------
# Pure-JAX reference (same numerics: bf16 weights, f32 accumulation)
# ----------------------------------------------------------------------------

def net_forward_ref(params, img, state):
    def lin(x, w, b, relu=True):
        y = jnp.dot(x.astype(w.dtype), w, preferred_element_type=jnp.float32) + b
        return jnp.maximum(y, 0.0) if relu else y

    h = state
    for w, b in params["state_model"]:
        h = lin(h, w, b)
    B, C = img.shape[:2]
    pooled = jnp.mean(img.reshape(B, C, -1), axis=-1)
    feat = lin(pooled, *params["img_proj"])
    y = lin(feat + h, *params["fc1"])
    w6, b6 = params["fc2"]
    return jnp.sum(y * w6, axis=-1, keepdims=True) + b6


# ----------------------------------------------------------------------------
# Main
# ----------------------------------------------------------------------------

if __name__ == "__main__":
    B, C, H, W = 2, 3, 16, 16

    key = jax.random.PRNGKey(0)
    k_params, k_img, k_state = jax.random.split(key, 3)

    params = init_net_params(k_params, nh=NH, img_channels=C)
    img = jax.random.normal(k_img, (B, C, H, W), jnp.float32)
    state = jax.random.normal(k_state, (B, 2), jnp.float32)

    out = jax.block_until_ready(net_forward_jit(params, img, state))
    ref = jax.block_until_ready(net_forward_ref(params, img, state))

    assert out.shape == (B, 1), out.shape
    assert jnp.allclose(out, ref, atol=5e-3, rtol=5e-3), (out, ref)
    print("KERNEL_OK")
</pallas_src>

<mosaic_0001>
module attributes {stable_mosaic.version = 11 : i64} {
  func.func @_net_kernel(%arg0: memref<2x2xf32, #tpu.memory_space<vmem>>, %arg1: memref<2x3x256xf32, #tpu.memory_space<vmem>>, %arg2: memref<2x128xf32, #tpu.memory_space<vmem>>, %arg3: memref<1x128xf32, #tpu.memory_space<vmem>>, %arg4: memref<128x512xbf16, #tpu.memory_space<vmem>>, %arg5: memref<1x512xf32, #tpu.memory_space<vmem>>, %arg6: memref<512x512xbf16, #tpu.memory_space<vmem>>, %arg7: memref<1x512xf32, #tpu.memory_space<vmem>>, %arg8: memref<512x1280xbf16, #tpu.memory_space<any>>, %arg9: memref<1x1280xf32, #tpu.memory_space<vmem>>, %arg10: memref<3x1280xf32, #tpu.memory_space<vmem>>, %arg11: memref<1x1280xf32, #tpu.memory_space<vmem>>, %arg12: memref<1280x1280xbf16, #tpu.memory_space<any>>, %arg13: memref<1x1280xf32, #tpu.memory_space<vmem>>, %arg14: memref<1x1280xf32, #tpu.memory_space<vmem>>, %arg15: memref<1x1xf32, #tpu.memory_space<vmem>>, %arg16: memref<2x1xf32, #tpu.memory_space<vmem>>, %arg17: memref<512x1280xbf16, #tpu.memory_space<vmem>>, %arg18: memref<1280x1280xbf16, #tpu.memory_space<vmem>>, %arg19: memref<2x!tpu.dma_semaphore, #tpu.memory_space<semaphore_mem>>) attributes {dimension_semantics = [], scalar_prefetch = 0 : i64, scratch_operands = 3 : i64, tpu.core_type = #tpu.core_type<tc>} {
    %c0_i32 = arith.constant 0 : i32
    %0 = tpu.memref_slice %arg19[%c0_i32] : memref<2x!tpu.dma_semaphore, #tpu.memory_space<semaphore_mem>> -> memref<1x!tpu.dma_semaphore, #tpu.memory_space<semaphore_mem>>
    %1 = tpu.memref_squeeze %0 : memref<1x!tpu.dma_semaphore, #tpu.memory_space<semaphore_mem>> -> memref<!tpu.dma_semaphore, #tpu.memory_space<semaphore_mem>>
    tpu.enqueue_dma source(%arg8 : memref<512x1280xbf16, #tpu.memory_space<any>>) target(%arg17 : memref<512x1280xbf16, #tpu.memory_space<vmem>>) target_semaphore(%1 : memref<!tpu.dma_semaphore, #tpu.memory_space<semaphore_mem>>)
    %c1_i32 = arith.constant 1 : i32
    %2 = tpu.memref_slice %arg19[%c1_i32] : memref<2x!tpu.dma_semaphore, #tpu.memory_space<semaphore_mem>> -> memref<1x!tpu.dma_semaphore, #tpu.memory_space<semaphore_mem>>
    %3 = tpu.memref_squeeze %2 : memref<1x!tpu.dma_semaphore, #tpu.memory_space<semaphore_mem>> -> memref<!tpu.dma_semaphore, #tpu.memory_space<semaphore_mem>>
    tpu.enqueue_dma source(%arg12 : memref<1280x1280xbf16, #tpu.memory_space<any>>) target(%arg18 : memref<1280x1280xbf16, #tpu.memory_space<vmem>>) target_semaphore(%3 : memref<!tpu.dma_semaphore, #tpu.memory_space<semaphore_mem>>)
    %c0 = arith.constant 0 : index
    %c0_0 = arith.constant 0 : index
    %4 = vector.load %arg0[%c0, %c0_0] : memref<2x2xf32, #tpu.memory_space<vmem>>, vector<2x2xf32>
    %c0_1 = arith.constant 0 : index
    %c0_2 = arith.constant 0 : index
    %5 = vector.load %arg2[%c0_1, %c0_2] : memref<2x128xf32, #tpu.memory_space<vmem>>, vector<2x128xf32>
    %c0_3 = arith.constant 0 : index
    %c0_4 = arith.constant 0 : index
    %6 = vector.load %arg3[%c0_3, %c0_4] : memref<1x128xf32, #tpu.memory_space<vmem>>, vector<1x128xf32>
    %cst = arith.constant dense<0.000000e+00> : vector<2x128xf32>
    %7 = tpu.matmul %4, %5, %cst {dimension_numbers = #tpu.dot_dimension_numbers<[1], [0], [0], [1], [0, 0, 1, 1], [], []>} : vector<2x2xf32>, vector<2x128xf32>, vector<2x128xf32> -> vector<2x128xf32>
    %8 = vector.broadcast %6 : vector<1x128xf32> to vector<2x128xf32>
    %9 = arith.addf %7, %8 : vector<2x128xf32>
    %cst_5 = arith.constant 0.000000e+00 : f32
    %10 = vector.broadcast %cst_5 : f32 to vector<2x128xf32>
    %11 = arith.maximumf %9, %10 : vector<2x128xf32>
    %c0_6 = arith.constant 0 : index
    %c0_7 = arith.constant 0 : index
    %12 = vector.load %arg4[%c0_6, %c0_7] : memref<128x512xbf16, #tpu.memory_space<vmem>>, vector<128x512xbf16>
    %c0_8 = arith.constant 0 : index
    %c0_9 = arith.constant 0 : index
    %13 = vector.load %arg5[%c0_8, %c0_9] : memref<1x512xf32, #tpu.memory_space<vmem>>, vector<1x512xf32>
    %14 = arith.truncf %11 : vector<2x128xf32> to vector<2x128xbf16>
    %cst_10 = arith.constant dense<0.000000e+00> : vector<2x512xf32>
    %15 = tpu.matmul %14, %12, %cst_10 {dimension_numbers = #tpu.dot_dimension_numbers<[1], [0], [0], [1], [0, 0, 1, 1], [], []>} : vector<2x128xbf16>, vector<128x512xbf16>, vector<2x512xf32> -> vector<2x512xf32>
    %16 = vector.broadcast %13 : vector<1x512xf32> to vector<2x512xf32>
    %17 = arith.addf %15, %16 : vector<2x512xf32>
    %cst_11 = arith.constant 0.000000e+00 : f32
    %18 = vector.broadcast %cst_11 : f32 to vector<2x512xf32>
    %19 = arith.maximumf %17, %18 : vector<2x512xf32>
    %c0_12 = arith.constant 0 : index
    %c0_13 = arith.constant 0 : index
    %20 = vector.load %arg6[%c0_12, %c0_13] : memref<512x512xbf16, #tpu.memory_space<vmem>>, vector<512x512xbf16>
    %c0_14 = arith.constant 0 : index
    %c0_15 = arith.constant 0 : index
    %21 = vector.load %arg7[%c0_14, %c0_15] : memref<1x512xf32, #tpu.memory_space<vmem>>, vector<1x512xf32>
    %22 = arith.truncf %19 : vector<2x512xf32> to vector<2x512xbf16>
    %cst_16 = arith.constant dense<0.000000e+00> : vector<2x512xf32>
    %23 = tpu.matmul %22, %20, %cst_16 {dimension_numbers = #tpu.dot_dimension_numbers<[1], [0], [0], [1], [0, 0, 1, 1], [], []>} : vector<2x512xbf16>, vector<512x512xbf16>, vector<2x512xf32> -> vector<2x512xf32>
    %24 = vector.broadcast %21 : vector<1x512xf32> to vector<2x512xf32>
    %25 = arith.addf %23, %24 : vector<2x512xf32>
    %cst_17 = arith.constant 0.000000e+00 : f32
    %26 = vector.broadcast %cst_17 : f32 to vector<2x512xf32>
    %27 = arith.maximumf %25, %26 : vector<2x512xf32>
    %c0_18 = arith.constant 0 : index
    %c0_19 = arith.constant 0 : index
    %c0_20 = arith.constant 0 : index
    %28 = vector.load %arg1[%c0_18, %c0_19, %c0_20] : memref<2x3x256xf32, #tpu.memory_space<vmem>>, vector<2x3x256xf32>
    %cst_21 = arith.constant dense<0.000000e+00> : vector<2x3xf32>
    %29 = vector.multi_reduction <add>, %28, %cst_21 [2] : vector<2x3x256xf32> to vector<2x3xf32>
    %cst_22 = arith.constant 2.560000e+02 : f32
    %30 = vector.broadcast %cst_22 : f32 to vector<2x3xf32>
    %31 = arith.divf %29, %30 : vector<2x3xf32>
    %c0_23 = arith.constant 0 : index
    %c0_24 = arith.constant 0 : index
    %32 = vector.load %arg10[%c0_23, %c0_24] : memref<3x1280xf32, #tpu.memory_space<vmem>>, vector<3x1280xf32>
    %c0_25 = arith.constant 0 : index
    %c0_26 = arith.constant 0 : index
    %33 = vector.load %arg11[%c0_25, %c0_26] : memref<1x1280xf32, #tpu.memory_space<vmem>>, vector<1x1280xf32>
    %cst_27 = arith.constant dense<0.000000e+00> : vector<2x1280xf32>
    %34 = tpu.matmul %31, %32, %cst_27 {dimension_numbers = #tpu.dot_dimension_numbers<[1], [0], [0], [1], [0, 0, 1, 1], [], []>} : vector<2x3xf32>, vector<3x1280xf32>, vector<2x1280xf32> -> vector<2x1280xf32>
    %35 = vector.broadcast %33 : vector<1x1280xf32> to vector<2x1280xf32>
    %36 = arith.addf %34, %35 : vector<2x1280xf32>
    %cst_28 = arith.constant 0.000000e+00 : f32
    %37 = vector.broadcast %cst_28 : f32 to vector<2x1280xf32>
    %38 = arith.maximumf %36, %37 : vector<2x1280xf32>
    %c0_i32_29 = arith.constant 0 : i32
    %39 = tpu.memref_slice %arg19[%c0_i32_29] : memref<2x!tpu.dma_semaphore, #tpu.memory_space<semaphore_mem>> -> memref<1x!tpu.dma_semaphore, #tpu.memory_space<semaphore_mem>>
    %40 = tpu.memref_squeeze %39 : memref<1x!tpu.dma_semaphore, #tpu.memory_space<semaphore_mem>> -> memref<!tpu.dma_semaphore, #tpu.memory_space<semaphore_mem>>
    tpu.wait_dma2 semaphore(%40 : memref<!tpu.dma_semaphore, #tpu.memory_space<semaphore_mem>>) src(%arg8 : memref<512x1280xbf16, #tpu.memory_space<any>>) dst(%arg17 : memref<512x1280xbf16, #tpu.memory_space<vmem>>)
    %c0_30 = arith.constant 0 : index
    %c0_31 = arith.constant 0 : index
    %41 = vector.load %arg17[%c0_30, %c0_31] : memref<512x1280xbf16, #tpu.memory_space<vmem>>, vector<512x1280xbf16>
    %c0_32 = arith.constant 0 : index
    %c0_33 = arith.constant 0 : index
    %42 = vector.load %arg9[%c0_32, %c0_33] : memref<1x1280xf32, #tpu.memory_space<vmem>>, vector<1x1280xf32>
    %43 = arith.truncf %27 : vector<2x512xf32> to vector<2x512xbf16>
    %cst_34 = arith.constant dense<0.000000e+00> : vector<2x1280xf32>
    %44 = tpu.matmul %43, %41, %cst_34 {dimension_numbers = #tpu.dot_dimension_numbers<[1], [0], [0], [1], [0, 0, 1, 1], [], []>} : vector<2x512xbf16>, vector<512x1280xbf16>, vector<2x1280xf32> -> vector<2x1280xf32>
    %45 = vector.broadcast %42 : vector<1x1280xf32> to vector<2x1280xf32>
    %46 = arith.addf %44, %45 : vector<2x1280xf32>
    %cst_35 = arith.constant 0.000000e+00 : f32
    %47 = vector.broadcast %cst_35 : f32 to vector<2x1280xf32>
    %48 = arith.maximumf %46, %47 : vector<2x1280xf32>
    %49 = arith.addf %38, %48 : vector<2x1280xf32>
    %c1_i32_36 = arith.constant 1 : i32
    %50 = tpu.memref_slice %arg19[%c1_i32_36] : memref<2x!tpu.dma_semaphore, #tpu.memory_space<semaphore_mem>> -> memref<1x!tpu.dma_semaphore, #tpu.memory_space<semaphore_mem>>
    %51 = tpu.memref_squeeze %50 : memref<1x!tpu.dma_semaphore, #tpu.memory_space<semaphore_mem>> -> memref<!tpu.dma_semaphore, #tpu.memory_space<semaphore_mem>>
    tpu.wait_dma2 semaphore(%51 : memref<!tpu.dma_semaphore, #tpu.memory_space<semaphore_mem>>) src(%arg12 : memref<1280x1280xbf16, #tpu.memory_space<any>>) dst(%arg18 : memref<1280x1280xbf16, #tpu.memory_space<vmem>>)
    %c0_37 = arith.constant 0 : index
    %c0_38 = arith.constant 0 : index
    %52 = vector.load %arg18[%c0_37, %c0_38] : memref<1280x1280xbf16, #tpu.memory_space<vmem>>, vector<1280x1280xbf16>
    %c0_39 = arith.constant 0 : index
    %c0_40 = arith.constant 0 : index
    %53 = vector.load %arg13[%c0_39, %c0_40] : memref<1x1280xf32, #tpu.memory_space<vmem>>, vector<1x1280xf32>
    %54 = arith.truncf %49 : vector<2x1280xf32> to vector<2x1280xbf16>
    %cst_41 = arith.constant dense<0.000000e+00> : vector<2x1280xf32>
    %55 = tpu.matmul %54, %52, %cst_41 {dimension_numbers = #tpu.dot_dimension_numbers<[1], [0], [0], [1], [0, 0, 1, 1], [], []>} : vector<2x1280xbf16>, vector<1280x1280xbf16>, vector<2x1280xf32> -> vector<2x1280xf32>
    %56 = vector.broadcast %53 : vector<1x1280xf32> to vector<2x1280xf32>
    %57 = arith.addf %55, %56 : vector<2x1280xf32>
    %cst_42 = arith.constant 0.000000e+00 : f32
    %58 = vector.broadcast %cst_42 : f32 to vector<2x1280xf32>
    %59 = arith.maximumf %57, %58 : vector<2x1280xf32>
    %c0_43 = arith.constant 0 : index
    %c0_44 = arith.constant 0 : index
    %60 = vector.load %arg14[%c0_43, %c0_44] : memref<1x1280xf32, #tpu.memory_space<vmem>>, vector<1x1280xf32>
    %61 = vector.broadcast %60 : vector<1x1280xf32> to vector<2x1280xf32>
    %62 = arith.mulf %59, %61 : vector<2x1280xf32>
    %cst_45 = arith.constant dense<0.000000e+00> : vector<2xf32>
    %63 = vector.multi_reduction <add>, %62, %cst_45 [1] : vector<2x1280xf32> to vector<2xf32>
    %64 = vector.shape_cast %63 : vector<2xf32> to vector<2x1xf32>
    %c0_46 = arith.constant 0 : index
    %c0_47 = arith.constant 0 : index
    %65 = vector.load %arg15[%c0_46, %c0_47] : memref<1x1xf32, #tpu.memory_space<vmem>>, vector<1x1xf32>
    %66 = vector.broadcast %65 : vector<1x1xf32> to vector<2x1xf32>
    %67 = arith.addf %64, %66 : vector<2x1xf32>
    %c0_48 = arith.constant 0 : index
    %c0_49 = arith.constant 0 : index
    %68 = vector.load %arg16[%c0_48, %c0_49] : memref<2x1xf32, #tpu.memory_space<vmem>>, vector<2x1xf32>
    tpu.vector_store %arg16[%c0_48, %c0_49], %67 {strides = array<i32>} : memref<2x1xf32, #tpu.memory_space<vmem>>, vector<2x1xf32>,
    return
  }
}

</mosaic_0001>

<llo_original>
// kernel: net_forward.1
$region0: #{net_forward.1}
  #allocation0 [shape = 'u32[]', space=smem, size = 0x4, offset = 0x4, fixed_abs, tag = 'smem constant byte address 0x4 - core index']
  #allocation1 [shape = 'u32[144,128]{1,0:T(1,128)}', space=vmem, size = 0x12000, scoped, tag = 'internal scratch']
  #allocation2 [shape = 'bf16[512,1280]{1,0:T(8,128)(2,1)}', space=vmem, size = 0x140000, scoped, tag = 'scratch operand']
  #allocation3 [shape = 'bf16[1280,1280]{1,0:T(8,128)(2,1)}', space=vmem, size = 0x320000, scoped, tag = 'scratch operand']
  #allocation4 [shape = 's32[2]{0}', space=sflag, size = 0x8, scoped, tag = 'scratch operand']
  #allocation5 [shape = 'f32[1,1]{1,0:T(1,128)S(1)}', space=vmem, size = 0x200, scoped, tag = 'scoped memory for net_forward.1']
  #allocation25 [shape = 's32[]', space=sflag, size = 0x4, offset = 0, fixed_abs, tag = 'sflag constant byte address 0x0 - dummy sync flag']
  #allocation26 [shape = 's32[]', space=sflag, size = 0x4, offset = 0, fixed_abs, tag = 'sflag constant byte address 0x0 - dummy sync flag']
  #allocation27 [shape = 'u32[]', space=smem, size = 0x4, offset = 0x44, fixed_abs, tag = 'smem constant byte address 0x44 - assertion arg 0']
  #allocation28 [shape = 'u32[]', space=smem, size = 0x4, offset = 0x48, fixed_abs, tag = 'smem constant byte address 0x48 - assertion arg 1']
  #allocation29 [shape = 's32[]', space=sflag, size = 0x4, offset = 0, fixed_abs, tag = 'sflag constant byte address 0x0 - dummy sync flag']
  #allocation30 [shape = 's32[]', space=sflag, size = 0x4, offset = 0, fixed_abs, tag = 'sflag constant byte address 0x0 - dummy sync flag']
  %s0 = inlined_call_operand.hbm [shape: f32[2,2], index: 0, kind: input, shape index: {}]
  %s1 = inlined_call_operand.vmem [shape: f32[2,3,256], index: 1, kind: input, shape index: {}]
  %s2 = inlined_call_operand.hbm [shape: f32[2,128], index: 2, kind: input, shape index: {}]
  %s3 = inlined_call_operand.hbm [shape: f32[1,128], index: 3, kind: input, shape index: {}]
  %s4 = inlined_call_operand.hbm [shape: bf16[128,512], index: 4, kind: input, shape index: {}]
  %s5 = inlined_call_operand.hbm [shape: f32[1,512], index: 5, kind: input, shape index: {}]
  %s6 = inlined_call_operand.hbm [shape: bf16[512,512], index: 6, kind: input, shape index: {}]
  %s7 = inlined_call_operand.hbm [shape: f32[1,512], index: 7, kind: input, shape index: {}]
  %s8 = inlined_call_operand.hbm [shape: bf16[512,1280], index: 8, kind: input, shape index: {}]
  %s9 = inlined_call_operand.hbm [shape: f32[1,1280], index: 9, kind: input, shape index: {}]
  %s10 = inlined_call_operand.hbm [shape: f32[3,1280], index: 10, kind: input, shape index: {}]
  %s11 = inlined_call_operand.hbm [shape: f32[1,1280], index: 11, kind: input, shape index: {}]
  %s12 = inlined_call_operand.hbm [shape: bf16[1280,1280], index: 12, kind: input, shape index: {}]
  %s13 = inlined_call_operand.hbm [shape: f32[1,1280], index: 13, kind: input, shape index: {}]
  %s14 = inlined_call_operand.hbm [shape: f32[1,1280], index: 14, kind: input, shape index: {}]
  %s15 = inlined_call_operand.<no memory space> [shape: f32[1,1], index: 15, kind: input, shape index: {}]
  %s16 = inlined_call_operand.vmem [shape: f32[2,1], index: 16, kind: output, shape index: {}]
  %s17 = sld [smem:[#allocation0]]
  $region122: #{net_forward.1} parent=0
    _
  %s19 = ssub.s32 1, %s17
  %s20 = scalar_select 0, %s19, %s17
  %v21 = vstv %s15
  %22 = vst [vmem:[#allocation5] sm:$0x1] %v21
  $region1: #{net_forward.1} parent=0
    #allocation6 [shape = 'u8[1024]{0}', space=vmem, size = 0x400, scoped, tag = 'input window, operand 0, single buffered']
    #allocation7 [shape = 's32[1]{0}', space=sflag, size = 0x4, scoped, tag = 'scoped memory for net_forward.1']
    #allocation8 [shape = 'u8[1024]{0}', space=vmem, size = 0x400, scoped, tag = 'input window, operand 2, single buffered']
    #allocation9 [shape = 's32[1]{0}', space=sflag, size = 0x4, scoped, tag = 'scoped memory for net_forward.1']
    #allocation10 [shape = 'u8[512]{0}', space=vmem, size = 0x400, scoped, tag = 'input window, operand 3, single buffered']
    #allocation11 [shape = 'u8[131072]{0}', space=vmem, size = 0x20000, scoped, tag = 'input window, operand 4, single buffered']
    #allocation12 [shape = 's32[1]{0}', space=sflag, size = 0x4, scoped, tag = 'scoped memory for net_forward.1']
    #allocation13 [shape = 'u8[2048]{0}', space=vmem, size = 0x800, scoped, tag = 'input window, operand 5, single buffered']
    #allocation14 [shape = 'u8[524288]{0}', space=vmem, size = 0x80000, scoped, tag = 'input window, operand 6, single buffered']
    #allocation15 [shape = 's32[1]{0}', space=sflag, size = 0x4, scoped, tag = 'scoped memory for net_forward.1']
    #allocation16 [shape = 'u8[2048]{0}', space=vmem, size = 0x800, scoped, tag = 'input window, operand 7, single buffered']
    #allocation17 [shape = 'u8[5120]{0}', space=vmem, size = 0x1400, scoped, tag = 'input window, operand 9, single buffered']
    #allocation18 [shape = 's32[1]{0}', space=sflag, size = 0x4, scoped, tag = 'scoped memory for net_forward.1']
    #allocation19 [shape = 'u8[20480]{0}', space=vmem, size = 0x5000, scoped, tag = 'input window, operand 10, single buffered']
    #allocation20 [shape = 'u8[5120]{0}', space=vmem, size = 0x1400, scoped, tag = 'input window, operand 11, single buffered']
    #allocation21 [shape = 's32[1]{0}', space=sflag, size = 0x4, scoped, tag = 'scoped memory for net_forward.1']
    #allocation22 [shape = 'u8[5120]{0}', space=vmem, size = 0x1400, scoped, tag = 'input window, operand 13, single buffered']
    #allocation23 [shape = 'u8[5120]{0}', space=vmem, size = 0x1400, scoped, tag = 'input window, operand 14, single buffered']
    #allocation24 [shape = 's32[1]{0}', space=sflag, size = 0x4, scoped, tag = 'scoped memory for net_forward.1']
    %23 = vsyncpa [#allocation7], 0
    %24 = vsyncpa [#allocation9], 0
    %25 = vsyncpa [#allocation12], 0
    %26 = vsyncpa [#allocation15], 0
    %27 = vsyncpa [#allocation18], 0
    %28 = vsyncpa [#allocation21], 0
    %29 = vsyncpa [#allocation24], 0
    // Predicated region
    $region2: #{net_forward.1} parent=1 // pred_check
      _
    $region3: #{net_forward.1} parent=1 // pred_check_branch
      %31 = sbr.rel (0) target = $region5
    $region4: #{net_forward.1} parent=1 // pred_region
      %s33 = ssub.s32 32, 32
      %34 = vsyncadd [#allocation7], %s33
      %s36 = sshll.u32 [#allocation6], 4
      %s37 = int_to_ptr.vmem [resolvable:$true] %s36
      %39 = dma.hbm_to_vmem [thread:$0]  %s0, 32, %s37, [#allocation7]
    $region5: #{net_forward.1} parent=1 // pred_fallthru
      _
    // Predicated region
    $region6: #{net_forward.1} parent=1 // pred_check
      _
    $region7: #{net_forward.1} parent=1 // pred_check_branch
      %41 = sbr.rel (0) target = $region9
    $region8: #{net_forward.1} parent=1 // pred_region
      _
    $region9: #{net_forward.1} parent=1 // pred_fallthru
      _
    // Predicated region
    $region10: #{net_forward.1} parent=1 // pred_check
      _
    $region11: #{net_forward.1} parent=1 // pred_check_branch
      %43 = sbr.rel (0) target = $region13
    $region12: #{net_forward.1} parent=1 // pred_region
      %s45 = ssub.s32 32, 32
      %46 = vsyncadd [#allocation9], %s45
      %s48 = sshll.u32 [#allocation8], 4
      %s49 = int_to_ptr.vmem [resolvable:$true] %s48
      %51 = dma.hbm_to_vmem [thread:$0]  %s2, 32, %s49, [#allocation9]
    $region13: #{net_forward.1} parent=1 // pred_fallthru
      _
    // Predicated region
    $region14: #{net_forward.1} parent=1 // pred_check
      _
    $region15: #{net_forward.1} parent=1 // pred_check_branch
      %53 = sbr.rel (0) target = $region17
    $region16: #{net_forward.1} parent=1 // pred_region
      %s55 = ssub.s32 16, 16
      %56 = vsyncadd [#allocation9], %s55
      %s58 = sshll.u32 [#allocation10], 4
      %s59 = int_to_ptr.vmem [resolvable:$true] %s58
      %61 = dma.hbm_to_vmem [thread:$0]  %s3, 16, %s59, [#allocation9]
    $region17: #{net_forward.1} parent=1 // pred_fallthru
      _
    // Predicated region
    $region18: #{net_forward.1} parent=1 // pred_check
      _
    $region19: #{net_forward.1} parent=1 // pred_check_branch
      %63 = sbr.rel (0) target = $region21
    $region20: #{net_forward.1} parent=1 // pred_region
      %s65 = ssub.s32 4096, 4096
      %66 = vsyncadd [#allocation12], %s65
      %s67 = sshll.u32 [#allocation11], 4
      %s68 = int_to_ptr.vmem [resolvable:$true] %s67
      %73 = dma.hbm_to_vmem [thread:$0]  %s4, 4096, %s68, [#allocation12], 256, 256, 16
    $region21: #{net_forward.1} parent=1 // pred_fallthru
      _
    // Predicated region
    $region22: #{net_forward.1} parent=1 // pred_check
      _
    $region23: #{net_forward.1} parent=1 // pred_check_branch
      %75 = sbr.rel (0) target = $region25
    $region24: #{net_forward.1} parent=1 // pred_region
      %s77 = ssub.s32 64, 64
      %78 = vsyncadd [#allocation12], %s77
      %s80 = sshll.u32 [#allocation13], 4
      %s81 = int_to_ptr.vmem [resolvable:$true] %s80
      %83 = dma.hbm_to_vmem [thread:$0]  %s5, 64, %s81, [#allocation12]
    $region25: #{net_forward.1} parent=1 // pred_fallthru
      _
    // Predicated region
    $region26: #{net_forward.1} parent=1 // pred_check
      _
    $region27: #{net_forward.1} parent=1 // pred_check_branch
      %85 = sbr.rel (0) target = $region29
    $region28: #{net_forward.1} parent=1 // pred_region
      %s87 = ssub.s32 16384, 16384
      %88 = vsyncadd [#allocation15], %s87
      %s89 = sshll.u32 [#allocation14], 4
      %s90 = int_to_ptr.vmem [resolvable:$true] %s89
      %95 = dma.hbm_to_vmem [thread:$0]  %s6, 16384, %s90, [#allocation15], 256, 256, 16
    $region29: #{net_forward.1} parent=1 // pred_fallthru
      _
    // Predicated region
    $region30: #{net_forward.1} parent=1 // pred_check
      _
    $region31: #{net_forward.1} parent=1 // pred_check_branch
      %97 = sbr.rel (0) target = $region33
    $region32: #{net_forward.1} parent=1 // pred_region
      %s99 = ssub.s32 64, 64
      %100 = vsyncadd [#allocation15], %s99
      %s102 = sshll.u32 [#allocation16], 4
      %s103 = int_to_ptr.vmem [resolvable:$true] %s102
      %105 = dma.hbm_to_vmem [thread:$0]  %s7, 64, %s103, [#allocation15]
    $region33: #{net_forward.1} parent=1 // pred_fallthru
      _
    // Predicated region
    $region34: #{net_forward.1} parent=1 // pred_check
      _
    $region35: #{net_forward.1} parent=1 // pred_check_branch
      %107 = sbr.rel (0) target = $region37
    $region36: #{net_forward.1} parent=1 // pred_region
      %s109 = ssub.s32 160, 160
      %110 = vsyncadd [#allocation18], %s109
      %s112 = sshll.u32 [#allocation17], 4
      %s113 = int_to_ptr.vmem [resolvable:$true] %s112
      %115 = dma.hbm_to_vmem [thread:$0]  %s9, 160, %s113, [#allocation18]
    $region37: #{net_forward.1} parent=1 // pred_fallthru
      _
    // Predicated region
    $region38: #{net_forward.1} parent=1 // pred_check
      _
    $region39: #{net_forward.1} parent=1 // pred_check_branch
      %117 = sbr.rel (0) target = $region41
    $region40: #{net_forward.1} parent=1 // pred_region
      %s119 = ssub.s32 640, 640
      %120 = vsyncadd [#allocation18], %s119
      %s122 = sshll.u32 [#allocation19], 4
      %s123 = int_to_ptr.vmem [resolvable:$true] %s122
      %125 = dma.hbm_to_vmem [thread:$0]  %s10, 640, %s123, [#allocation18]
    $region41: #{net_forward.1} parent=1 // pred_fallthru
      _
    // Predicated region
    $region42: #{net_forward.1} parent=1 // pred_check
      _
    $region43: #{net_forward.1} parent=1 // pred_check_branch
      %127 = sbr.rel (0) target = $region45
    $region44: #{net_forward.1} parent=1 // pred_region
      %s129 = ssub.s32 160, 160
      %130 = vsyncadd [#allocation21], %s129
      %s132 = sshll.u32 [#allocation20], 4
      %s133 = int_to_ptr.vmem [resolvable:$true] %s132
      %135 = dma.hbm_to_vmem [thread:$0]  %s11, 160, %s133, [#allocation21]
    $region45: #{net_forward.1} parent=1 // pred_fallthru
      _
    // Predicated region
    $region46: #{net_forward.1} parent=1 // pred_check
      _
    $region47: #{net_forward.1} parent=1 // pred_check_branch
      %137 = sbr.rel (0) target = $region49
    $region48: #{net_forward.1} parent=1 // pred_region
      %s139 = ssub.s32 160, 160
      %140 = vsyncadd [#allocation21], %s139
      %s142 = sshll.u32 [#allocation22], 4
      %s143 = int_to_ptr.vmem [resolvable:$true] %s142
      %145 = dma.hbm_to_vmem [thread:$0]  %s13, 160, %s143, [#allocation21]
    $region49: #{net_forward.1} parent=1 // pred_fallthru
      _
    // Predicated region
    $region50: #{net_forward.1} parent=1 // pred_check
      _
    $region51: #{net_forward.1} parent=1 // pred_check_branch
      %147 = sbr.rel (0) target = $region53
    $region52: #{net_forward.1} parent=1 // pred_region
      %s149 = ssub.s32 160, 160
      %150 = vsyncadd [#allocation24], %s149
      %s152 = sshll.u32 [#allocation23], 4
      %s153 = int_to_ptr.vmem [resolvable:$true] %s152
      %155 = dma.hbm_to_vmem [thread:$0]  %s14, 160, %s153, [#allocation24]
    $region53: #{net_forward.1} parent=1 // pred_fallthru
      _
    // Predicated region
    $region54: #{net_forward.1} parent=1 // pred_check
      _
    $region55: #{net_forward.1} parent=1 // pred_check_branch
      %157 = sbr.rel (0) target = $region57
    $region56: #{net_forward.1} parent=1 // pred_region
      _
    $region57: #{net_forward.1} parent=1 // pred_fallthru
      _
    // Predicated region
    $region58: #{net_forward.1} parent=1 // pred_check
      _
    $region59: #{net_forward.1} parent=1 // pred_check_branch
      %159 = sbr.rel (0) target = $region61
    $region60: #{net_forward.1} parent=1 // pred_region
      %160 = dma.done [#allocation7], 32
    $region61: #{net_forward.1} parent=1 // pred_fallthru
      _
    // Predicated region
    $region62: #{net_forward.1} parent=1 // pred_check
      _
    $region63: #{net_forward.1} parent=1 // pred_check_branch
      %162 = sbr.rel (0) target = $region65
    $region64: #{net_forward.1} parent=1 // pred_region
      %163 = dma.done [#allocation9], 32
    $region65: #{net_forward.1} parent=1 // pred_fallthru
      _
    // Predicated region
    $region66: #{net_forward.1} parent=1 // pred_check
      _
    $region67: #{net_forward.1} parent=1 // pred_check_branch
      %165 = sbr.rel (0) target = $region69
    $region68: #{net_forward.1} parent=1 // pred_region
      %166 = dma.done [#allocation9], 16
    $region69: #{net_forward.1} parent=1 // pred_fallthru
      _
    // Predicated region
    $region70: #{net_forward.1} parent=1 // pred_check
      _
    $region71: #{net_forward.1} parent=1 // pred_check_branch
      %168 = sbr.rel (0) target = $region73
    $region72: #{net_forward.1} parent=1 // pred_region
      %169 = dma.done [#allocation12], 4096
    $region73: #{net_forward.1} parent=1 // pred_fallthru
      _
    // Predicated region
    $region74: #{net_forward.1} parent=1 // pred_check
      _
    $region75: #{net_forward.1} parent=1 // pred_check_branch
      %171 = sbr.rel (0) target = $region77
    $region76: #{net_forward.1} parent=1 // pred_region
      %172 = dma.done [#allocation12], 64
    $region77: #{net_forward.1} parent=1 // pred_fallthru
      _
    // Predicated region
    $region78: #{net_forward.1} parent=1 // pred_check
      _
    $region79: #{net_forward.1} parent=1 // pred_check_branch
      %174 = sbr.rel (0) target = $region81
    $region80: #{net_forward.1} parent=1 // pred_region
      %175 = dma.done [#allocation15], 16384
    $region81: #{net_forward.1} parent=1 // pred_fallthru
      _
    // Predicated region
    $region82: #{net_forward.1} parent=1 // pred_check
      _
    $region83: #{net_forward.1} parent=1 // pred_check_branch
      %177 = sbr.rel (0) target = $region85
    $region84: #{net_forward.1} parent=1 // pred_region
      %178 = dma.done [#allocation15], 64
    $region85: #{net_forward.1} parent=1 // pred_fallthru
      _
    // Predicated region
    $region86: #{net_forward.1} parent=1 // pred_check
      _
    $region87: #{net_forward.1} parent=1 // pred_check_branch
      %180 = sbr.rel (0) target = $region89
    $region88: #{net_forward.1} parent=1 // pred_region
      %181 = dma.done [#allocation18], 160
    $region89: #{net_forward.1} parent=1 // pred_fallthru
      _
    // Predicated region
    $region90: #{net_forward.1} parent=1 // pred_check
      _
    $region91: #{net_forward.1} parent=1 // pred_check_branch
      %183 = sbr.rel (0) target = $region93
    $region92: #{net_forward.1} parent=1 // pred_region
      %184 = dma.done [#allocation18], 640
    $region93: #{net_forward.1} parent=1 // pred_fallthru
      _
    // Predicated region
    $region94: #{net_forward.1} parent=1 // pred_check
      _
    $region95: #{net_forward.1} parent=1 // pred_check_branch
      %186 = sbr.rel (0) target = $region97
    $region96: #{net_forward.1} parent=1 // pred_region
      %187 = dma.done [#allocation21], 160
    $region97: #{net_forward.1} parent=1 // pred_fallthru
      _
    // Predicated region
    $region98: #{net_forward.1} parent=1 // pred_check
      _
    $region99: #{net_forward.1} parent=1 // pred_check_branch
      %189 = sbr.rel (0) target = $region101
    $region100: #{net_forward.1} parent=1 // pred_region
      %190 = dma.done [#allocation21], 160
    $region101: #{net_forward.1} parent=1 // pred_fallthru
      _
    // Predicated region
    $region102: #{net_forward.1} parent=1 // pred_check
      _
    $region103: #{net_forward.1} parent=1 // pred_check_branch
      %192 = sbr.rel (0) target = $region105
    $region104: #{net_forward.1} parent=1 // pred_region
      %193 = dma.done [#allocation24], 160
    $region105: #{net_forward.1} parent=1 // pred_fallthru
      _
    // Predicated region
    $region106: #{net_forward.1} parent=1 // pred_check
      _
    $region107: #{net_forward.1} parent=1 // pred_check_branch
      %196 = sbr.rel target = $region109
    $region108: #{net_forward.1} parent=1 // pred_region
      %197 = sst [smem:[#allocation27]] [#allocation26]
      %198 = sst [smem:[#allocation28]] [#allocation25]
    $region109: #{net_forward.1} parent=1 // pred_fallthru
      _
    %200 = shalt.err (0)
    %s202 = sshll.u32 [#allocation2], 4
    %s203 = int_to_ptr.vmem [resolvable:$true] %s202
    %205 = dma.hbm_to_vmem [thread:$0]  %s8, 40960, %s203, [#allocation4]
    %s206 = scalar_lea.sflag [#allocation4], 1
    // Predicated region
    $region110: #{net_forward.1} parent=1 // pred_check
      _
    $region111: #{net_forward.1} parent=1 // pred_check_branch
      %208 = sbr.rel target = $region113
    $region112: #{net_forward.1} parent=1 // pred_region
      %209 = sst [smem:[#allocation27]] [#allocation30]
      %210 = sst [smem:[#allocation28]] [#allocation29]
    $region113: #{net_forward.1} parent=1 // pred_fallthru
      _
    %212 = shalt.err (0)
    %s214 = sshll.u32 [#allocation3], 4
    %s215 = int_to_ptr.vmem [resolvable:$true] %s214
    %217 = dma.hbm_to_vmem [thread:$0]  %s12, 102400, %s215, %s206
    %v218 = vld [vmem:[#allocation6] sm:$0x3]
    %v219 = vld [vmem:[#allocation8] sm:$0x3]
    %v220 = vld [vmem:[#allocation10] sm:$0x1]
    %v222 = vlaneseq
    %v223 = vshrl.u32 %v222, 7
    %v224 = vsub.s32 0, %v223
    %v225 = vrot.slane %v220, %v224
    %vm227 = vcmask 15360
    %v229 = vsel %vm227, %v218, 0
    %vm231 = vcmask 1041408
    %v233 = vsel %vm231, %v219, 0
    %235 = vmatprep.subr.mxu0 0.0
    %236 = vmatpush1.msra.mxu0 0.0
    %237 = vmatprep.subr.mxu0 0.0
    %238 = vmatpush1.msra.mxu0 0.0
    %239 = vmatprep.subr.mxu0 0.0
    %240 = vmatpush1.msra.mxu0 0.0
    %241 = vmatprep.subr.mxu0 0.0
    %242 = vmatpush1.msra.mxu0 0.0
    %243 = vmatprep.subr.mxu0 0.0
    %244 = vmatpush1.msra.mxu0 0.0
    %245 = vmatprep.subr.mxu0 0.0
    %246 = vmatpush1.msra.mxu0 0.0
    %247 = vmatprep.subr.mxu0 0.0
    %248 = vmatpush1.msra.mxu0 0.0
    %249 = vmatprep.subr.mxu0 0.0
    %250 = vmatpush1.msra.mxu0 0.0
    %251 = vmatprep.subr.mxu0 0.0
    %252 = vmatpush1.msra.mxu0 0.0
    %253 = vmatprep.subr.mxu0 0.0
    %254 = vmatpush1.msra.mxu0 0.0
    %255 = vmatprep.subr.mxu0 0.0
    %256 = vmatpush1.msra.mxu0 0.0
    %257 = vmatprep.subr.mxu0 0.0
    %258 = vmatpush1.msra.mxu0 0.0
    %259 = vmatprep.subr.mxu0 0.0
    %260 = vmatpush1.msra.mxu0 0.0
    %261 = vmatprep.subr.mxu0 0.0
    %262 = vmatpush1.msra.mxu0 0.0
    %263 = vmatprep.subr.mxu0 0.0
    %264 = vmatpush1.msra.mxu0 0.0
    %265 = vmatprep.subr.mxu0 0.0
    %266 = vmatpush1.msra.mxu0 %v233
    %267 = vmatprep.subr.mxu0 0.0
    %268 = vmatpush2.msra.mxu0 0.0
    %269 = vmatprep.subr.mxu0 0.0
    %270 = vmatpush2.msra.mxu0 0.0
    %271 = vmatprep.subr.mxu0 0.0
    %272 = vmatpush2.msra.mxu0 0.0
    %273 = vmatprep.subr.mxu0 0.0
    %274 = vmatpush2.msra.mxu0 0.0
    %275 = vmatprep.subr.mxu0 0.0
    %276 = vmatpush2.msra.mxu0 0.0
    %277 = vmatprep.subr.mxu0 0.0
    %278 = vmatpush2.msra.mxu0 0.0
    %279 = vmatprep.subr.mxu0 0.0
    %280 = vmatpush2.msra.mxu0 0.0
    %281 = vmatprep.subr.mxu0 0.0
    %282 = vmatpush2.msra.mxu0 0.0
    %283 = vmatprep.subr.mxu0 0.0
    %284 = vmatpush2.msra.mxu0 0.0
    %285 = vmatprep.subr.mxu0 0.0
    %286 = vmatpush2.msra.mxu0 0.0
    %287 = vmatprep.subr.mxu0 0.0
    %288 = vmatpush2.msra.mxu0 0.0
    %289 = vmatprep.subr.mxu0 0.0
    %290 = vmatpush2.msra.mxu0 0.0
    %291 = vmatprep.subr.mxu0 0.0
    %292 = vmatpush2.msra.mxu0 0.0
    %293 = vmatprep.subr.mxu0 0.0
    %294 = vmatpush2.msra.mxu0 0.0
    %295 = vmatprep.subr.mxu0 0.0
    %296 = vmatpush2.msra.mxu0 0.0
    %297 = vmatprep.subr.mxu0 0.0
    %298 = vmatpush2.msra.mxu0 0.0
    %299 = vmatprep.mubr.f32.mxu0 0.0
    %300 = vmatmul.mubr.f32.gmra.mxu0 %v229
    %v301 = vpop.f32.mrf.mxu0
    %v302 = vadd.f32 %v225, %v301
    %v303 = vpop.f32.mrf.mxu0
    %304 = vdwg.mxu0
    %v305 = vmax.f32 %v302, 0.0
    %v306 = vld [vmem:[#allocation11] sm:$0xff]
    %v307 = vld [vmem:[#allocation11 + $0x8] sm:$0xff]
    %v308 = vld [vmem:[#allocation11 + $0x10] sm:$0xff]
    %v309 = vld [vmem:[#allocation11 + $0x18] sm:$0xff]
    %v310 = vld [vmem:[#allocation11 + $0x20] sm:$0xff]
    %v311 = vld [vmem:[#allocation11 + $0x28] sm:$0xff]
    %v312 = vld [vmem:[#allocation11 + $0x30] sm:$0xff]
    %v313 = vld [vmem:[#allocation11 + $0x38] sm:$0xff]
    %v314 = vld [vmem:[#allocation11 + $0x40] sm:$0xff]
    %v315 = vld [vmem:[#allocation11 + $0x48] sm:$0xff]
    %v316 = vld [vmem:[#allocation11 + $0x50] sm:$0xff]
    %v317 = vld [vmem:[#allocation11 + $0x58] sm:$0xff]
    %v318 = vld [vmem:[#allocation11 + $0x60] sm:$0xff]
    %v319 = vld [vmem:[#allocation11 + $0x68] sm:$0xff]
    %v320 = vld [vmem:[#allocation11 + $0x70] sm:$0xff]
    %v321 = vld [vmem:[#allocation11 + $0x78] sm:$0xff]
    %v322 = vld [vmem:[#allocation11 + $0x80] sm:$0xff]
    %v323 = vld [vmem:[#allocation11 + $0x88] sm:$0xff]
    %v324 = vld [vmem:[#allocation11 + $0x90] sm:$0xff]
    %v325 = vld [vmem:[#allocation11 + $0x98] sm:$0xff]
    %v326 = vld [vmem:[#allocation11 + $0xa0] sm:$0xff]
    %v327 = vld [vmem:[#allocation11 + $0xa8] sm:$0xff]
    %v328 = vld [vmem:[#allocation11 + $0xb0] sm:$0xff]
    %v329 = vld [vmem:[#allocation11 + $0xb8] sm:$0xff]
    %v330 = vld [vmem:[#allocation11 + $0xc0] sm:$0xff]
    %v331 = vld [vmem:[#allocation11 + $0xc8] sm:$0xff]
    %v332 = vld [vmem:[#allocation11 + $0xd0] sm:$0xff]
    %v333 = vld [vmem:[#allocation11 + $0xd8] sm:$0xff]
    %v334 = vld [vmem:[#allocation11 + $0xe0] sm:$0xff]
    %v335 = vld [vmem:[#allocation11 + $0xe8] sm:$0xff]
    %v336 = vld [vmem:[#allocation11 + $0xf0] sm:$0xff]
    %v337 = vld [vmem:[#allocation11 + $0xf8] sm:$0xff]
    %v338 = vld [vmem:[#allocation13] sm:$0xf]
    %v339 = vpack.c.bf16 %v305, %v305
    %v341 = vlaneseq
    %v342 = vshrl.u32 %v341, 7
    %v343 = vsub.s32 0, %v342
    %v344 = vrot.slane %v338, %v343
    %v345 = vlaneseq
    %v346 = vshrl.u32 %v345, 7
    %v347 = vsub.s32 1, %v346
    %v348 = vrot.slane %v338, %v347
    %v349 = vlaneseq
    %v350 = vshrl.u32 %v349, 7
    %v351 = vsub.s32 2, %v350
    %v352 = vrot.slane %v338, %v351
    %v353 = vlaneseq
    %v354 = vshrl.u32 %v353, 7
    %v355 = vsub.s32 3, %v354
    %v356 = vrot.slane %v338, %v355
    %v393 = vunpack.c.l.b16 %v306
    %v394 = vunpack.c.h.b16 %v306
    %v395 = vunpack.c.l.b16 %v307
    %v396 = vunpack.c.h.b16 %v307
    %v397 = vunpack.c.l.b16 %v308
    %v398 = vunpack.c.h.b16 %v308
    %v399 = vunpack.c.l.b16 %v309
    %v400 = vunpack.c.h.b16 %v309
    %v401 = vunpack.c.l.b16 %v310
    %v402 = vunpack.c.h.b16 %v310
    %v403 = vunpack.c.l.b16 %v311
    %v404 = vunpack.c.h.b16 %v311
    %v405 = vunpack.c.l.b16 %v312
    %v406 = vunpack.c.h.b16 %v312
    %v407 = vunpack.c.l.b16 %v313
    %v408 = vunpack.c.h.b16 %v313
    %v409 = vunpack.c.l.b16 %v314
    %v410 = vunpack.c.h.b16 %v314
    %v411 = vunpack.c.l.b16 %v315
    %v412 = vunpack.c.h.b16 %v315
    %v413 = vunpack.c.l.b16 %v316
    %v414 = vunpack.c.h.b16 %v316
    %v415 = vunpack.c.l.b16 %v317
    %v416 = vunpack.c.h.b16 %v317
    %v417 = vunpack.c.l.b16 %v318
    %v418 = vunpack.c.h.b16 %v318
    %v419 = vunpack.c.l.b16 %v319
    %v420 = vunpack.c.h.b16 %v319
    %v421 = vunpack.c.l.b16 %v320
    %v422 = vunpack.c.h.b16 %v320
    %v423 = vunpack.c.l.b16 %v321
    %v424 = vunpack.c.h.b16 %v321
    %v425 = vunpack.c.l.b16 %v322
    %v426 = vunpack.c.h.b16 %v322
    %v427 = vunpack.c.l.b16 %v323
    %v428 = vunpack.c.h.b16 %v323
    %v429 = vunpack.c.l.b16 %v324
    %v430 = vunpack.c.h.b16 %v324
    %v431 = vunpack.c.l.b16 %v325
    %v432 = vunpack.c.h.b16 %v325
    %v433 = vunpack.c.l.b16 %v326
    %v434 = vunpack.c.h.b16 %v326
    %v435 = vunpack.c.l.b16 %v327
    %v436 = vunpack.c.h.b16 %v327
    %v437 = vunpack.c.l.b16 %v328
    %v438 = vunpack.c.h.b16 %v328
    %v439 = vunpack.c.l.b16 %v329
    %v440 = vunpack.c.h.b16 %v329
    %v441 = vunpack.c.l.b16 %v330
    %v442 = vunpack.c.h.b16 %v330
    %v443 = vunpack.c.l.b16 %v331
    %v444 = vunpack.c.h.b16 %v331
    %v445 = vunpack.c.l.b16 %v332
    %v446 = vunpack.c.h.b16 %v332
    %v447 = vunpack.c.l.b16 %v333
    %v448 = vunpack.c.h.b16 %v333
    %v449 = vunpack.c.l.b16 %v334
    %v450 = vunpack.c.h.b16 %v334
    %v451 = vunpack.c.l.b16 %v335
    %v452 = vunpack.c.h.b16 %v335
    %v453 = vunpack.c.l.b16 %v336
    %v454 = vunpack.c.h.b16 %v336
    %v455 = vunpack.c.l.b16 %v337
    %v456 = vunpack.c.h.b16 %v337
    %v457 = vpack.c.b16 %v397, %v393
    %v458 = vpack.c.b16 %v398, %v394
    %v459 = vpack.c.b16 %v399, %v395
    %v460 = vpack.c.b16 %v400, %v396
    %v461 = vpack.c.b16 %v405, %v401
    %v462 = vpack.c.b16 %v406, %v402
    %v463 = vpack.c.b16 %v407, %v403
    %v464 = vpack.c.b16 %v408, %v404
    %v465 = vpack.c.b16 %v413, %v409
    %v466 = vpack.c.b16 %v414, %v410
    %v467 = vpack.c.b16 %v415, %v411
    %v468 = vpack.c.b16 %v416, %v412
    %v469 = vpack.c.b16 %v421, %v417
    %v470 = vpack.c.b16 %v422, %v418
    %v471 = vpack.c.b16 %v423, %v419
    %v472 = vpack.c.b16 %v424, %v420
    %v473 = vpack.c.b16 %v429, %v425
    %v474 = vpack.c.b16 %v430, %v426
    %v475 = vpack.c.b16 %v431, %v427
    %v476 = vpack.c.b16 %v432, %v428
    %v477 = vpack.c.b16 %v437, %v433
    %v478 = vpack.c.b16 %v438, %v434
    %v479 = vpack.c.b16 %v439, %v435
    %v480 = vpack.c.b16 %v440, %v436
    %v481 = vpack.c.b16 %v445, %v441
    %v482 = vpack.c.b16 %v446, %v442
    %v483 = vpack.c.b16 %v447, %v443
    %v484 = vpack.c.b16 %v448, %v444
    %v485 = vpack.c.b16 %v453, %v449
    %v486 = vpack.c.b16 %v454, %v450
    %v487 = vpack.c.b16 %v455, %v451
    %v488 = vpack.c.b16 %v456, %v452
    %521 = vmatprep.subr.bf16.mxu0 %v486
    %522 = vmatpush1.bf16.msra.mxu0 %v485
    %523 = vmatprep.subr.bf16.mxu0 %v482
    %524 = vmatpush1.bf16.msra.mxu0 %v481
    %525 = vmatprep.subr.bf16.mxu0 %v478
    %526 = vmatpush1.bf16.msra.mxu0 %v477
    %527 = vmatprep.subr.bf16.mxu0 %v474
    %528 = vmatpush1.bf16.msra.mxu0 %v473
    %529 = vmatprep.subr.bf16.mxu0 %v470
    %530 = vmatpush1.bf16.msra.mxu0 %v469
    %531 = vmatprep.subr.bf16.mxu0 %v466
    %532 = vmatpush1.bf16.msra.mxu0 %v465
    %533 = vmatprep.subr.bf16.mxu0 %v462
    %534 = vmatpush1.bf16.msra.mxu0 %v461
    %535 = vmatprep.subr.bf16.mxu0 %v458
    %536 = vmatpush1.bf16.msra.mxu0 %v457
    %537 = vmatprep.subr.bf16.mxu0 0
    %538 = vmatpush2.bf16.msra.mxu0 0
    %539 = vmatprep.subr.bf16.mxu0 0
    %540 = vmatpush2.bf16.msra.mxu0 0
    %541 = vmatprep.subr.bf16.mxu0 0
    %542 = vmatpush2.bf16.msra.mxu0 0
    %543 = vmatprep.subr.bf16.mxu0 0
    %544 = vmatpush2.bf16.msra.mxu0 0
    %545 = vmatprep.subr.bf16.mxu0 0
    %546 = vmatpush2.bf16.msra.mxu0 0
    %547 = vmatprep.subr.bf16.mxu0 0
    %548 = vmatpush2.bf16.msra.mxu0 0
    %549 = vmatprep.subr.bf16.mxu0 0
    %550 = vmatpush2.bf16.msra.mxu0 0
    %551 = vmatprep.subr.bf16.mxu0 0
    %552 = vmatpush2.bf16.msra.mxu0 0
    %553 = vmatprep.mubr.bf16.mxu0 0
    %554 = vmatmul.mubr.bf16.gmra.mxu0 %v339
    %v555 = vpop.f32.mrf.mxu0
    %v556 = vadd.f32 %v344, %v555
    %v557 = vpop.f32.mrf.mxu0
    %v558 = vadd.f32 %v348, %v557
    %v559 = vpop.f32.mrf.mxu0
    %v560 = vpop.f32.mrf.mxu0
    %561 = vdwg.mxu0
    %562 = vmatprep.subr.bf16.mxu0 %v488
    %563 = vmatpush1.bf16.msra.mxu0 %v487
    %564 = vmatprep.subr.bf16.mxu0 %v484
    %565 = vmatpush1.bf16.msra.mxu0 %v483
    %566 = vmatprep.subr.bf16.mxu0 %v480
    %567 = vmatpush1.bf16.msra.mxu0 %v479
    %568 = vmatprep.subr.bf16.mxu0 %v476
    %569 = vmatpush1.bf16.msra.mxu0 %v475
    %570 = vmatprep.subr.bf16.mxu0 %v472
    %571 = vmatpush1.bf16.msra.mxu0 %v471
    %572 = vmatprep.subr.bf16.mxu0 %v468
    %573 = vmatpush1.bf16.msra.mxu0 %v467
    %574 = vmatprep.subr.bf16.mxu0 %v464
    %575 = vmatpush1.bf16.msra.mxu0 %v463
    %576 = vmatprep.subr.bf16.mxu0 %v460
    %577 = vmatpush1.bf16.msra.mxu0 %v459
    %578 = vmatprep.subr.bf16.mxu0 0
    %579 = vmatpush2.bf16.msra.mxu0 0
    %580 = vmatprep.subr.bf16.mxu0 0
    %581 = vmatpush2.bf16.msra.mxu0 0
    %582 = vmatprep.subr.bf16.mxu0 0
    %583 = vmatpush2.bf16.msra.mxu0 0
    %584 = vmatprep.subr.bf16.mxu0 0
    %585 = vmatpush2.bf16.msra.mxu0 0
    %586 = vmatprep.subr.bf16.mxu0 0
    %587 = vmatpush2.bf16.msra.mxu0 0
    %588 = vmatprep.subr.bf16.mxu0 0
    %589 = vmatpush2.bf16.msra.mxu0 0
    %590 = vmatprep.subr.bf16.mxu0 0
    %591 = vmatpush2.bf16.msra.mxu0 0
    %592 = vmatprep.subr.bf16.mxu0 0
    %593 = vmatpush2.bf16.msra.mxu0 0
    %594 = vmatprep.mubr.bf16.mxu0 0
    %595 = vmatmul.mubr.bf16.gmra.mxu0 %v339
    %v596 = vpop.f32.mrf.mxu0
    %v597 = vadd.f32 %v352, %v596
    %v598 = vpop.f32.mrf.mxu0
    %v599 = vadd.f32 %v356, %v598
    %v600 = vpop.f32.mrf.mxu0
    %v601 = vpop.f32.mrf.mxu0
    %602 = vdwg.mxu0
    %v603 = vmax.f32 %v556, 0.0
    %v604 = vmax.f32 %v558, 0.0
    %v605 = vmax.f32 %v597, 0.0
    %v606 = vmax.f32 %v599, 0.0
    %v607 = vld [vmem:[#allocation14] sm:$0xff]
    %v608 = vld [vmem:[#allocation14 + $0x8] sm:$0xff]
    %v609 = vld [vmem:[#allocation14 + $0x10] sm:$0xff]
    %v610 = vld [vmem:[#allocation14 + $0x18] sm:$0xff]
    %v611 = vld [vmem:[#allocation14 + $0x20] sm:$0xff]
    %v612 = vld [vmem:[#allocation14 + $0x28] sm:$0xff]
    %v613 = vld [vmem:[#allocation14 + $0x30] sm:$0xff]
    %v614 = vld [vmem:[#allocation14 + $0x38] sm:$0xff]
    %v615 = vld [vmem:[#allocation14 + $0x40] sm:$0xff]
    %v616 = vld [vmem:[#allocation14 + $0x48] sm:$0xff]
    %v617 = vld [vmem:[#allocation14 + $0x50] sm:$0xff]
    %v618 = vld [vmem:[#allocation14 + $0x58] sm:$0xff]
    %v619 = vld [vmem:[#allocation14 + $0x60] sm:$0xff]
    %v620 = vld [vmem:[#allocation14 + $0x68] sm:$0xff]
    %v621 = vld [vmem:[#allocation14 + $0x70] sm:$0xff]
    %v622 = vld [vmem:[#allocation14 + $0x78] sm:$0xff]
    %v623 = vld [vmem:[#allocation14 + $0x80] sm:$0xff]
    %v624 = vld [vmem:[#allocation14 + $0x88] sm:$0xff]
    %v625 = vld [vmem:[#allocation14 + $0x90] sm:$0xff]
    %v626 = vld [vmem:[#allocation14 + $0x98] sm:$0xff]
    %v627 = vld [vmem:[#allocation14 + $0xa0] sm:$0xff]
    %v628 = vld [vmem:[#allocation14 + $0xa8] sm:$0xff]
    %v629 = vld [vmem:[#allocation14 + $0xb0] sm:$0xff]
    %v630 = vld [vmem:[#allocation14 + $0xb8] sm:$0xff]
    %v631 = vld [vmem:[#allocation14 + $0xc0] sm:$0xff]
    %v632 = vld [vmem:[#allocation14 + $0xc8] sm:$0xff]
    %v633 = vld [vmem:[#allocation14 + $0xd0] sm:$0xff]
    %v634 = vld [vmem:[#allocation14 + $0xd8] sm:$0xff]
    %v635 = vld [vmem:[#allocation14 + $0xe0] sm:$0xff]
    %v636 = vld [vmem:[#allocation14 + $0xe8] sm:$0xff]
    %v637 = vld [vmem:[#allocation14 + $0xf0] sm:$0xff]
    %v638 = vld [vmem:[#allocation14 + $0xf8] sm:$0xff]
    %v639 = vld [vmem:[#allocation14 + $0x100] sm:$0xff]
    %v640 = vld [vmem:[#allocation14 + $0x108] sm:$0xff]
    %v641 = vld [vmem:[#allocation14 + $0x110] sm:$0xff]
    %v642 = vld [vmem:[#allocation14 + $0x118] sm:$0xff]
    %v643 = vld [vmem:[#allocation14 + $0x120] sm:$0xff]
    %v644 = vld [vmem:[#allocation14 + $0x128] sm:$0xff]
    %v645 = vld [vmem:[#allocation14 + $0x130] sm:$0xff]
    %v646 = vld [vmem:[#allocation14 + $0x138] sm:$0xff]
    %v647 = vld [vmem:[#allocation14 + $0x140] sm:$0xff]
    %v648 = vld [vmem:[#allocation14 + $0x148] sm:$0xff]
    %v649 = vld [vmem:[#allocation14 + $0x150] sm:$0xff]
    %v650 = vld [vmem:[#allocation14 + $0x158] sm:$0xff]
    %v651 = vld [vmem:[#allocation14 + $0x160] sm:$0xff]
    %v652 = vld [vmem:[#allocation14 + $0x168] sm:$0xff]
    %v653 = vld [vmem:[#allocation14 + $0x170] sm:$0xff]
    %v654 = vld [vmem:[#allocation14 + $0x178] sm:$0xff]
    %v655 = vld [vmem:[#allocation14 + $0x180] sm:$0xff]
    %v656 = vld [vmem:[#allocation14 + $0x188] sm:$0xff]
    %v657 = vld [vmem:[#allocation14 + $0x190] sm:$0xff]
    %v658 = vld [vmem:[#allocation14 + $0x198] sm:$0xff]
    %v659 = vld [vmem:[#allocation14 + $0x1a0] sm:$0xff]
    %v660 = vld [vmem:[#allocation14 + $0x1a8] sm:$0xff]
    %v661 = vld [vmem:[#allocation14 + $0x1b0] sm:$0xff]
    %v662 = vld [vmem:[#allocation14 + $0x1b8] sm:$0xff]
    %v663 = vld [vmem:[#allocation14 + $0x1c0] sm:$0xff]
    %v664 = vld [vmem:[#allocation14 + $0x1c8] sm:$0xff]
    %v665 = vld [vmem:[#allocation14 + $0x1d0] sm:$0xff]
    %v666 = vld [vmem:[#allocation14 + $0x1d8] sm:$0xff]
    %v667 = vld [vmem:[#allocation14 + $0x1e0] sm:$0xff]
    %v668 = vld [vmem:[#allocation14 + $0x1e8] sm:$0xff]
    %v669 = vld [vmem:[#allocation14 + $0x1f0] sm:$0xff]
    %v670 = vld [vmem:[#allocation14 + $0x1f8] sm:$0xff]
    %v671 = vld [vmem:[#allocation14 + $0x200] sm:$0xff]
    %v672 = vld [vmem:[#allocation14 + $0x208] sm:$0xff]
    %v673 = vld [vmem:[#allocation14 + $0x210] sm:$0xff]
    %v674 = vld [vmem:[#allocation14 + $0x218] sm:$0xff]
    %v675 = vld [vmem:[#allocation14 + $0x220] sm:$0xff]
    %v676 = vld [vmem:[#allocation14 + $0x228] sm:$0xff]
    %v677 = vld [vmem:[#allocation14 + $0x230] sm:$0xff]
    %v678 = vld [vmem:[#allocation14 + $0x238] sm:$0xff]
    %v679 = vld [vmem:[#allocation14 + $0x240] sm:$0xff]
    %v680 = vld [vmem:[#allocation14 + $0x248] sm:$0xff]
    %v681 = vld [vmem:[#allocation14 + $0x250] sm:$0xff]
    %v682 = vld [vmem:[#allocation14 + $0x258] sm:$0xff]
    %v683 = vld [vmem:[#allocation14 + $0x260] sm:$0xff]
    %v684 = vld [vmem:[#allocation14 + $0x268] sm:$0xff]
    %v685 = vld [vmem:[#allocation14 + $0x270] sm:$0xff]
    %v686 = vld [vmem:[#allocation14 + $0x278] sm:$0xff]
    %v687 = vld [vmem:[#allocation14 + $0x280] sm:$0xff]
    %v688 = vld [vmem:[#allocation14 + $0x288] sm:$0xff]
    %v689 = vld [vmem:[#allocation14 + $0x290] sm:$0xff]
    %v690 = vld [vmem:[#allocation14 + $0x298] sm:$0xff]
    %v691 = vld [vmem:[#allocation14 + $0x2a0] sm:$0xff]
    %v692 = vld [vmem:[#allocation14 + $0x2a8] sm:$0xff]
    %v693 = vld [vmem:[#allocation14 + $0x2b0] sm:$0xff]
    %v694 = vld [vmem:[#allocation14 + $0x2b8] sm:$0xff]
    %v695 = vld [vmem:[#allocation14 + $0x2c0] sm:$0xff]
    %v696 = vld [vmem:[#allocation14 + $0x2c8] sm:$0xff]
    %v697 = vld [vmem:[#allocation14 + $0x2d0] sm:$0xff]
    %v698 = vld [vmem:[#allocation14 + $0x2d8] sm:$0xff]
    %v699 = vld [vmem:[#allocation14 + $0x2e0] sm:$0xff]
    %v700 = vld [vmem:[#allocation14 + $0x2e8] sm:$0xff]
    %v701 = vld [vmem:[#allocation14 + $0x2f0] sm:$0xff]
    %v702 = vld [vmem:[#allocation14 + $0x2f8] sm:$0xff]
    %v703 = vld [vmem:[#allocation14 + $0x300] sm:$0xff]
    %v704 = vld [vmem:[#allocation14 + $0x308] sm:$0xff]
    %v705 = vld [vmem:[#allocation14 + $0x310] sm:$0xff]
    %v706 = vld [vmem:[#allocation14 + $0x318] sm:$0xff]
    %v707 = vld [vmem:[#allocation14 + $0x320] sm:$0xff]
    %v708 = vld [vmem:[#allocation14 + $0x328] sm:$0xff]
    %v709 = vld [vmem:[#allocation14 + $0x330] sm:$0xff]
    %v710 = vld [vmem:[#allocation14 + $0x338] sm:$0xff]
    %v711 = vld [vmem:[#allocation14 + $0x340] sm:$0xff]
    %v712 = vld [vmem:[#allocation14 + $0x348] sm:$0xff]
    %v713 = vld [vmem:[#allocation14 + $0x350] sm:$0xff]
    %v714 = vld [vmem:[#allocation14 + $0x358] sm:$0xff]
    %v715 = vld [vmem:[#allocation14 + $0x360] sm:$0xff]
    %v716 = vld [vmem:[#allocation14 + $0x368] sm:$0xff]
    %v717 = vld [vmem:[#allocation14 + $0x370] sm:$0xff]
    %v718 = vld [vmem:[#allocation14 + $0x378] sm:$0xff]
    %v719 = vld [vmem:[#allocation14 + $0x380] sm:$0xff]
    %v720 = vld [vmem:[#allocation14 + $0x388] sm:$0xff]
    %v721 = vld [vmem:[#allocation14 + $0x390] sm:$0xff]
    %v722 = vld [vmem:[#allocation14 + $0x398] sm:$0xff]
    %v723 = vld [vmem:[#allocation14 + $0x3a0] sm:$0xff]
    %v724 = vld [vmem:[#allocation14 + $0x3a8] sm:$0xff]
    %v725 = vld [vmem:[#allocation14 + $0x3b0] sm:$0xff]
    %v726 = vld [vmem:[#allocation14 + $0x3b8] sm:$0xff]
    %v727 = vld [vmem:[#allocation14 + $0x3c0] sm:$0xff]
    %v728 = vld [vmem:[#allocation14 + $0x3c8] sm:$0xff]
    %v729 = vld [vmem:[#allocation14 + $0x3d0] sm:$0xff]
    %v730 = vld [vmem:[#allocation14 + $0x3d8] sm:$0xff]
    %v731 = vld [vmem:[#allocation14 + $0x3e0] sm:$0xff]
    %v732 = vld [vmem:[#allocation14 + $0x3e8] sm:$0xff]
    %v733 = vld [vmem:[#allocation14 + $0x3f0] sm:$0xff]
    %v734 = vld [vmem:[#allocation14 + $0x3f8] sm:$0xff]
    %v735 = vld [vmem:[#allocation16] sm:$0xf]
    %v736 = vpack.c.bf16 %v603, %v603
    %v737 = vpack.c.bf16 %v604, %v604
    %v738 = vpack.c.bf16 %v605, %v605
    %v739 = vpack.c.bf16 %v606, %v606
    %v741 = vlaneseq
    %v742 = vshrl.u32 %v741, 7
    %v743 = vsub.s32 0, %v742
    %v744 = vrot.slane %v735, %v743
    %v745 = vlaneseq
    %v746 = vshrl.u32 %v745, 7
    %v747 = vsub.s32 1, %v746
    %v748 = vrot.slane %v735, %v747
    %v749 = vlaneseq
    %v750 = vshrl.u32 %v749, 7
    %v751 = vsub.s32 2, %v750
    %v752 = vrot.slane %v735, %v751
    %v753 = vlaneseq
    %v754 = vshrl.u32 %v753, 7
    %v755 = vsub.s32 3, %v754
    %v756 = vrot.slane %v735, %v755
    %v889 = vunpack.c.l.b16 %v607
    %v890 = vunpack.c.h.b16 %v607
    %v891 = vunpack.c.l.b16 %v608
    %v892 = vunpack.c.h.b16 %v608
    %v893 = vunpack.c.l.b16 %v609
    %v894 = vunpack.c.h.b16 %v609
    %v895 = vunpack.c.l.b16 %v610
    %v896 = vunpack.c.h.b16 %v610
    %v897 = vunpack.c.l.b16 %v611
    %v898 = vunpack.c.h.b16 %v611
    %v899 = vunpack.c.l.b16 %v612
    %v900 = vunpack.c.h.b16 %v612
    %v901 = vunpack.c.l.b16 %v613
    %v902 = vunpack.c.h.b16 %v613
    %v903 = vunpack.c.l.b16 %v614
    %v904 = vunpack.c.h.b16 %v614
    %v905 = vunpack.c.l.b16 %v615
    %v906 = vunpack.c.h.b16 %v615
    %v907 = vunpack.c.l.b16 %v616
    %v908 = vunpack.c.h.b16 %v616
    %v909 = vunpack.c.l.b16 %v617
    %v910 = vunpack.c.h.b16 %v617
    %v911 = vunpack.c.l.b16 %v618
    %v912 = vunpack.c.h.b16 %v618
    %v913 = vunpack.c.l.b16 %v619
    %v914 = vunpack.c.h.b16 %v619
    %v915 = vunpack.c.l.b16 %v620
    %v916 = vunpack.c.h.b16 %v620
    %v917 = vunpack.c.l.b16 %v621
    %v918 = vunpack.c.h.b16 %v621
    %v919 = vunpack.c.l.b16 %v622
    %v920 = vunpack.c.h.b16 %v622
    %v921 = vunpack.c.l.b16 %v623
    %v922 = vunpack.c.h.b16 %v623
    %v923 = vunpack.c.l.b16 %v624
    %v924 = vunpack.c.h.b16 %v624
    %v925 = vunpack.c.l.b16 %v625
    %v926 = vunpack.c.h.b16 %v625
    %v927 = vunpack.c.l.b16 %v626
    %v928 = vunpack.c.h.b16 %v626
    %v929 = vunpack.c.l.b16 %v627
    %v930 = vunpack.c.h.b16 %v627
    %v931 = vunpack.c.l.b16 %v628
    %v932 = vunpack.c.h.b16 %v628
    %v933 = vunpack.c.l.b16 %v629
    %v934 = vunpack.c.h.b16 %v629
    %v935 = vunpack.c.l.b16 %v630
    %v936 = vunpack.c.h.b16 %v630
    %v937 = vunpack.c.l.b16 %v631
    %v938 = vunpack.c.h.b16 %v631
    %v939 = vunpack.c.l.b16 %v632
    %v940 = vunpack.c.h.b16 %v632
    %v941 = vunpack.c.l.b16 %v633
    %v942 = vunpack.c.h.b16 %v633
    %v943 = vunpack.c.l.b16 %v634
    %v944 = vunpack.c.h.b16 %v634
    %v945 = vunpack.c.l.b16 %v635
    %v946 = vunpack.c.h.b16 %v635
    %v947 = vunpack.c.l.b16 %v636
    %v948 = vunpack.c.h.b16 %v636
    %v949 = vunpack.c.l.b16 %v637
    %v950 = vunpack.c.h.b16 %v637
    %v951 = vunpack.c.l.b16 %v638
    %v952 = vunpack.c.h.b16 %v638
    %v953 = vunpack.c.l.b16 %v639
    %v954 = vunpack.c.h.b16 %v639
    %v955 = vunpack.c.l.b16 %v640
    %v956 = vunpack.c.h.b16 %v640
    %v957 = vunpack.c.l.b16 %v641
    %v958 = vunpack.c.h.b16 %v641
    %v959 = vunpack.c.l.b16 %v642
    %v960 = vunpack.c.h.b16 %v642
    %v961 = vunpack.c.l.b16 %v643
    %v962 = vunpack.c.h.b16 %v643
    %v963 = vunpack.c.l.b16 %v644
    %v964 = vunpack.c.h.b16 %v644
    %v965 = vunpack.c.l.b16 %v645
    %v966 = vunpack.c.h.b16 %v645
    %v967 = vunpack.c.l.b16 %v646
    %v968 = vunpack.c.h.b16 %v646
    %v969 = vunpack.c.l.b16 %v647
    %v970 = vunpack.c.h.b16 %v647
    %v971 = vunpack.c.l.b16 %v648
    %v972 = vunpack.c.h.b16 %v648
    %v973 = vunpack.c.l.b16 %v649
    %v974 = vunpack.c.h.b16 %v649
    %v975 = vunpack.c.l.b16 %v650
    %v976 = vunpack.c.h.b16 %v650
    %v977 = vunpack.c.l.b16 %v651
    %v978 = vunpack.c.h.b16 %v651
    %v979 = vunpack.c.l.b16 %v652
    %v980 = vunpack.c.h.b16 %v652
    %v981 = vunpack.c.l.b16 %v653
    %v982 = vunpack.c.h.b16 %v653
    %v983 = vunpack.c.l.b16 %v654
    %v984 = vunpack.c.h.b16 %v654
    %v985 = vunpack.c.l.b16 %v655
    %v986 = vunpack.c.h.b16 %v655
    %v987 = vunpack.c.l.b16 %v656
    %v988 = vunpack.c.h.b16 %v656
    %v989 = vunpack.c.l.b16 %v657
    %v990 = vunpack.c.h.b16 %v657
    %v991 = vunpack.c.l.b16 %v658
    %v992 = vunpack.c.h.b16 %v658
    %v993 = vunpack.c.l.b16 %v659
    %v994 = vunpack.c.h.b16 %v659
    %v995 = vunpack.c.l.b16 %v660
    %v996 = vunpack.c.h.b16 %v660
    %v997 = vunpack.c.l.b16 %v661
    %v998 = vunpack.c.h.b16 %v661
    %v999 = vunpack.c.l.b16 %v662
    %v1000 = vunpack.c.h.b16 %v662
    %v1001 = vunpack.c.l.b16 %v663
    %v1002 = vunpack.c.h.b16 %v663
    %v1003 = vunpack.c.l.b16 %v664
    %v1004 = vunpack.c.h.b16 %v664
    %v1005 = vunpack.c.l.b16 %v665
    %v1006 = vunpack.c.h.b16 %v665
    %v1007 = vunpack.c.l.b16 %v666
    %v1008 = vunpack.c.h.b16 %v666
    %v1009 = vunpack.c.l.b16 %v667
    %v1010 = vunpack.c.h.b16 %v667
    %v1011 = vunpack.c.l.b16 %v668
    %v1012 = vunpack.c.h.b16 %v668
    %v1013 = vunpack.c.l.b16 %v669
    %v1014 = vunpack.c.h.b16 %v669
    %v1015 = vunpack.c.l.b16 %v670
    %v1016 = vunpack.c.h.b16 %v670
    %v1017 = vunpack.c.l.b16 %v671
    %v1018 = vunpack.c.h.b16 %v671
    %v1019 = vunpack.c.l.b16 %v672
    %v1020 = vunpack.c.h.b16 %v672
    %v1021 = vunpack.c.l.b16 %v673
    %v1022 = vunpack.c.h.b16 %v673
    %v1023 = vunpack.c.l.b16 %v674
    %v1024 = vunpack.c.h.b16 %v674
    %v1025 = vunpack.c.l.b16 %v675
    %v1026 = vunpack.c.h.b16 %v675
    %v1027 = vunpack.c.l.b16 %v676
    %v1028 = vunpack.c.h.b16 %v676
    %v1029 = vunpack.c.l.b16 %v677
    %v1030 = vunpack.c.h.b16 %v677
    %v1031 = vunpack.c.l.b16 %v678
    %v1032 = vunpack.c.h.b16 %v678
    %v1033 = vunpack.c.l.b16 %v679
    %v1034 = vunpack.c.h.b16 %v679
    %v1035 = vunpack.c.l.b16 %v680
    %v1036 = vunpack.c.h.b16 %v680
    %v1037 = vunpack.c.l.b16 %v681
    %v1038 = vunpack.c.h.b16 %v681
    %v1039 = vunpack.c.l.b16 %v682
    %v1040 = vunpack.c.h.b16 %v682
    %v1041 = vunpack.c.l.b16 %v683
    %v1042 = vunpack.c.h.b16 %v683
    %v1043 = vunpack.c.l.b16 %v684
    %v1044 = vunpack.c.h.b16 %v684
    %v1045 = vunpack.c.l.b16 %v685
    %v1046 = vunpack.c.h.b16 %v685
    %v1047 = vunpack.c.l.b16 %v686
    %v1048 = vunpack.c.h.b16 %v686
    %v1049 = vunpack.c.l.b16 %v687
    %v1050 = vunpack.c.h.b16 %v687
    %v1051 = vunpack.c.l.b16 %v688
    %v1052 = vunpack.c.h.b16 %v688
    %v1053 = vunpack.c.l.b16 %v689
    %v1054 = vunpack.c.h.b16 %v689
    %v1055 = vunpack.c.l.b16 %v690
    %v1056 = vunpack.c.h.b16 %v690
    %v1057 = vunpack.c.l.b16 %v691
    %v1058 = vunpack.c.h.b16 %v691
    %v1059 = vunpack.c.l.b16 %v692
    %v1060 = vunpack.c.h.b16 %v692
    %v1061 = vunpack.c.l.b16 %v693
    %v1062 = vunpack.c.h.b16 %v693
    %v1063 = vunpack.c.l.b16 %v694
    %v1064 = vunpack.c.h.b16 %v694
    %v1065 = vunpack.c.l.b16 %v695
    %v1066 = vunpack.c.h.b16 %v695
    %v1067 = vunpack.c.l.b16 %v696
    %v1068 = vunpack.c.h.b16 %v696
    %v1069 = vunpack.c.l.b16 %v697
    %v1070 = vunpack.c.h.b16 %v697
    %v1071 = vunpack.c.l.b16 %v698
    %v1072 = vunpack.c.h.b16 %v698
    %v1073 = vunpack.c.l.b16 %v699
    %v1074 = vunpack.c.h.b16 %v699
    %v1075 = vunpack.c.l.b16 %v700
    %v1076 = vunpack.c.h.b16 %v700
    %v1077 = vunpack.c.l.b16 %v701
    %v1078 = vunpack.c.h.b16 %v701
    %v1079 = vunpack.c.l.b16 %v702
    %v1080 = vunpack.c.h.b16 %v702
    %v1081 = vunpack.c.l.b16 %v703
    %v1082 = vunpack.c.h.b16 %v703
    %v1083 = vunpack.c.l.b16 %v704
    %v1084 = vunpack.c.h.b16 %v704
    %v1085 = vunpack.c.l.b16 %v705
    %v1086 = vunpack.c.h.b16 %v705
    %v1087 = vunpack.c.l.b16 %v706
    %v1088 = vunpack.c.h.b16 %v706
    %v1089 = vunpack.c.l.b16 %v707
    %v1090 = vunpack.c.h.b16 %v707
    %v1091 = vunpack.c.l.b16 %v708
    %v1092 = vunpack.c.h.b16 %v708
    %v1093 = vunpack.c.l.b16 %v709
    %v1094 = vunpack.c.h.b16 %v709
    %v1095 = vunpack.c.l.b16 %v710
    %v1096 = vunpack.c.h.b16 %v710
    %v1097 = vunpack.c.l.b16 %v711
    %v1098 = vunpack.c.h.b16 %v711
    %v1099 = vunpack.c.l.b16 %v712
    %v1100 = vunpack.c.h.b16 %v712
    %v1101 = vunpack.c.l.b16 %v713
    %v1102 = vunpack.c.h.b16 %v713
    %v1103 = vunpack.c.l.b16 %v714
    %v1104 = vunpack.c.h.b16 %v714
    %v1105 = vunpack.c.l.b16 %v715
    %v1106 = vunpack.c.h.b16 %v715
    %v1107 = vunpack.c.l.b16 %v716
    %v1108 = vunpack.c.h.b16 %v716
    %v1109 = vunpack.c.l.b16 %v717
    %v1110 = vunpack.c.h.b16 %v717
    %v1111 = vunpack.c.l.b16 %v718
    %v1112 = vunpack.c.h.b16 %v718
    %v1113 = vunpack.c.l.b16 %v719
    %v1114 = vunpack.c.h.b16 %v719
    %v1115 = vunpack.c.l.b16 %v720
    %v1116 = vunpack.c.h.b16 %v720
    %v1117 = vunpack.c.l.b16 %v721
    %v1118 = vunpack.c.h.b16 %v721
    %v1119 = vunpack.c.l.b16 %v722
    %v1120 = vunpack.c.h.b16 %v722
    %v1121 = vunpack.c.l.b16 %v723
    %v1122 = vunpack.c.h.b16 %v723
    %v1123 = vunpack.c.l.b16 %v724
    %v1124 = vunpack.c.h.b16 %v724
    %v1125 = vunpack.c.l.b16 %v725
    %v1126 = vunpack.c.h.b16 %v725
    %v1127 = vunpack.c.l.b16 %v726
    %v1128 = vunpack.c.h.b16 %v726
    %v1129 = vunpack.c.l.b16 %v727
    %v1130 = vunpack.c.h.b16 %v727
    %v1131 = vunpack.c.l.b16 %v728
    %v1132 = vunpack.c.h.b16 %v728
    %v1133 = vunpack.c.l.b16 %v729
    %v1134 = vunpack.c.h.b16 %v729
    %v1135 = vunpack.c.l.b16 %v730
    %v1136 = vunpack.c.h.b16 %v730
    %v1137 = vunpack.c.l.b16 %v731
    %v1138 = vunpack.c.h.b16 %v731
    %v1139 = vunpack.c.l.b16 %v732
    %v1140 = vunpack.c.h.b16 %v732
    %v1141 = vunpack.c.l.b16 %v733
    %v1142 = vunpack.c.h.b16 %v733
    %v1143 = vunpack.c.l.b16 %v734
    %v1144 = vunpack.c.h.b16 %v734
    %v1145 = vpack.c.b16 %v893, %v889
    %v1146 = vpack.c.b16 %v894, %v890
    %v1147 = vpack.c.b16 %v895, %v891
    %v1148 = vpack.c.b16 %v896, %v892
    %v1149 = vpack.c.b16 %v901, %v897
    %v1150 = vpack.c.b16 %v902, %v898
    %v1151 = vpack.c.b16 %v903, %v899
    %v1152 = vpack.c.b16 %v904, %v900
    %v1153 = vpack.c.b16 %v909, %v905
    %v1154 = vpack.c.b16 %v910, %v906
    %v1155 = vpack.c.b16 %v911, %v907
    %v1156 = vpack.c.b16 %v912, %v908
    %v1157 = vpack.c.b16 %v917, %v913
    %v1158 = vpack.c.b16 %v918, %v914
    %v1159 = vpack.c.b16 %v919, %v915
    %v1160 = vpack.c.b16 %v920, %v916
    %v1161 = vpack.c.b16 %v925, %v921
    %v1162 = vpack.c.b16 %v926, %v922
    %v1163 = vpack.c.b16 %v927, %v923
    %v1164 = vpack.c.b16 %v928, %v924
    %v1165 = vpack.c.b16 %v933, %v929
    %v1166 = vpack.c.b16 %v934, %v930
    %v1167 = vpack.c.b16 %v935, %v931
    %v1168 = vpack.c.b16 %v936, %v932
    %v1169 = vpack.c.b16 %v941, %v937
    %v1170 = vpack.c.b16 %v942, %v938
    %v1171 = vpack.c.b16 %v943, %v939
    %v1172 = vpack.c.b16 %v944, %v940
    %v1173 = vpack.c.b16 %v949, %v945
    %v1174 = vpack.c.b16 %v950, %v946
    %v1175 = vpack.c.b16 %v951, %v947
    %v1176 = vpack.c.b16 %v952, %v948
    %v1177 = vpack.c.b16 %v957, %v953
    %v1178 = vpack.c.b16 %v958, %v954
    %v1179 = vpack.c.b16 %v959, %v955
    %v1180 = vpack.c.b16 %v960, %v956
    %v1181 = vpack.c.b16 %v965, %v961
    %v1182 = vpack.c.b16 %v966, %v962
    %v1183 = vpack.c.b16 %v967, %v963
    %v1184 = vpack.c.b16 %v968, %v964
    %v1185 = vpack.c.b16 %v973, %v969
    %v1186 = vpack.c.b16 %v974, %v970
    %v1187 = vpack.c.b16 %v975, %v971
    %v1188 = vpack.c.b16 %v976, %v972
    %v1189 = vpack.c.b16 %v981, %v977
    %v1190 = vpack.c.b16 %v982, %v978
    %v1191 = vpack.c.b16 %v983, %v979
    %v1192 = vpack.c.b16 %v984, %v980
    %v1193 = vpack.c.b16 %v989, %v985
    %v1194 = vpack.c.b16 %v990, %v986
    %v1195 = vpack.c.b16 %v991, %v987
    %v1196 = vpack.c.b16 %v992, %v988
    %v1197 = vpack.c.b16 %v997, %v993
    %v1198 = vpack.c.b16 %v998, %v994
    %v1199 = vpack.c.b16 %v999, %v995
    %v1200 = vpack.c.b16 %v1000, %v996
    %v1201 = vpack.c.b16 %v1005, %v1001
    %v1202 = vpack.c.b16 %v1006, %v1002
    %v1203 = vpack.c.b16 %v1007, %v1003
    %v1204 = vpack.c.b16 %v1008, %v1004
    %v1205 = vpack.c.b16 %v1013, %v1009
    %v1206 = vpack.c.b16 %v1014, %v1010
    %v1207 = vpack.c.b16 %v1015, %v1011
    %v1208 = vpack.c.b16 %v1016, %v1012
    %v1209 = vpack.c.b16 %v1021, %v1017
    %v1210 = vpack.c.b16 %v1022, %v1018
    %v1211 = vpack.c.b16 %v1023, %v1019
    %v1212 = vpack.c.b16 %v1024, %v1020
    %v1213 = vpack.c.b16 %v1029, %v1025
    %v1214 = vpack.c.b16 %v1030, %v1026
    %v1215 = vpack.c.b16 %v1031, %v1027
    %v1216 = vpack.c.b16 %v1032, %v1028
    %v1217 = vpack.c.b16 %v1037, %v1033
    %v1218 = vpack.c.b16 %v1038, %v1034
    %v1219 = vpack.c.b16 %v1039, %v1035
    %v1220 = vpack.c.b16 %v1040, %v1036
    %v1221 = vpack.c.b16 %v1045, %v1041
    %v1222 = vpack.c.b16 %v1046, %v1042
    %v1223 = vpack.c.b16 %v1047, %v1043
    %v1224 = vpack.c.b16 %v1048, %v1044
    %v1225 = vpack.c.b16 %v1053, %v1049
    %v1226 = vpack.c.b16 %v1054, %v1050
    %v1227 = vpack.c.b16 %v1055, %v1051
    %v1228 = vpack.c.b16 %v1056, %v1052
    %v1229 = vpack.c.b16 %v1061, %v1057
    %v1230 = vpack.c.b16 %v1062, %v1058
    %v1231 = vpack.c.b16 %v1063, %v1059
    %v1232 = vpack.c.b16 %v1064, %v1060
    %v1233 = vpack.c.b16 %v1069, %v1065
    %v1234 = vpack.c.b16 %v1070, %v1066
    %v1235 = vpack.c.b16 %v1071, %v1067
    %v1236 = vpack.c.b16 %v1072, %v1068
    %v1237 = vpack.c.b16 %v1077, %v1073
    %v1238 = vpack.c.b16 %v1078, %v1074
    %v1239 = vpack.c.b16 %v1079, %v1075
    %v1240 = vpack.c.b16 %v1080, %v1076
    %v1241 = vpack.c.b16 %v1085, %v1081
    %v1242 = vpack.c.b16 %v1086, %v1082
    %v1243 = vpack.c.b16 %v1087, %v1083
    %v1244 = vpack.c.b16 %v1088, %v1084
    %v1245 = vpack.c.b16 %v1093, %v1089
    %v1246 = vpack.c.b16 %v1094, %v1090
    %v1247 = vpack.c.b16 %v1095, %v1091
    %v1248 = vpack.c.b16 %v1096, %v1092
    %v1249 = vpack.c.b16 %v1101, %v1097
    %v1250 = vpack.c.b16 %v1102, %v1098
    %v1251 = vpack.c.b16 %v1103, %v1099
    %v1252 = vpack.c.b16 %v1104, %v1100
    %v1253 = vpack.c.b16 %v1109, %v1105
    %v1254 = vpack.c.b16 %v1110, %v1106
    %v1255 = vpack.c.b16 %v1111, %v1107
    %v1256 = vpack.c.b16 %v1112, %v1108
    %v1257 = vpack.c.b16 %v1117, %v1113
    %v1258 = vpack.c.b16 %v1118, %v1114
    %v1259 = vpack.c.b16 %v1119, %v1115
    %v1260 = vpack.c.b16 %v1120, %v1116
    %v1261 = vpack.c.b16 %v1125, %v1121
    %v1262 = vpack.c.b16 %v1126, %v1122
    %v1263 = vpack.c.b16 %v1127, %v1123
    %v1264 = vpack.c.b16 %v1128, %v1124
    %v1265 = vpack.c.b16 %v1133, %v1129
    %v1266 = vpack.c.b16 %v1134, %v1130
    %v1267 = vpack.c.b16 %v1135, %v1131
    %v1268 = vpack.c.b16 %v1136, %v1132
    %v1269 = vpack.c.b16 %v1141, %v1137
    %v1270 = vpack.c.b16 %v1142, %v1138
    %v1271 = vpack.c.b16 %v1143, %v1139
    %v1272 = vpack.c.b16 %v1144, %v1140
    %1401 = vmatprep.subr.bf16.mxu0 %v1174
    %1402 = vmatpush1.bf16.msra.mxu0 %v1173
    %1403 = vmatprep.subr.bf16.mxu0 %v1170
    %1404 = vmatpush1.bf16.msra.mxu0 %v1169
    %1405 = vmatprep.subr.bf16.mxu0 %v1166
    %1406 = vmatpush1.bf16.msra.mxu0 %v1165
    %1407 = vmatprep.subr.bf16.mxu0 %v1162
    %1408 = vmatpush1.bf16.msra.mxu0 %v1161
    %1409 = vmatprep.subr.bf16.mxu0 %v1158
    %1410 = vmatpush1.bf16.msra.mxu0 %v1157
    %1411 = vmatprep.subr.bf16.mxu0 %v1154
    %1412 = vmatpush1.bf16.msra.mxu0 %v1153
    %1413 = vmatprep.subr.bf16.mxu0 %v1150
    %1414 = vmatpush1.bf16.msra.mxu0 %v1149
    %1415 = vmatprep.subr.bf16.mxu0 %v1146
    %1416 = vmatpush1.bf16.msra.mxu0 %v1145
    %1417 = vmatprep.subr.bf16.mxu0 %v1206
    %1418 = vmatpush2.bf16.msra.mxu0 %v1205
    %1419 = vmatprep.subr.bf16.mxu0 %v1202
    %1420 = vmatpush2.bf16.msra.mxu0 %v1201
    %1421 = vmatprep.subr.bf16.mxu0 %v1198
    %1422 = vmatpush2.bf16.msra.mxu0 %v1197
    %1423 = vmatprep.subr.bf16.mxu0 %v1194
    %1424 = vmatpush2.bf16.msra.mxu0 %v1193
    %1425 = vmatprep.subr.bf16.mxu0 %v1190
    %1426 = vmatpush2.bf16.msra.mxu0 %v1189
    %1427 = vmatprep.subr.bf16.mxu0 %v1186
    %1428 = vmatpush2.bf16.msra.mxu0 %v1185
    %1429 = vmatprep.subr.bf16.mxu0 %v1182
    %1430 = vmatpush2.bf16.msra.mxu0 %v1181
    %1431 = vmatprep.subr.bf16.mxu0 %v1178
    %1432 = vmatpush2.bf16.msra.mxu0 %v1177
    %1433 = vmatprep.mubr.bf16.mxu0 %v737
    %1434 = vmatmul.mubr.bf16.gmra.mxu0 %v736
    %v1435 = vpop.f32.mrf.mxu0
    %v1436 = vadd.f32 %v744, %v1435
    %v1437 = vpop.f32.mrf.mxu0
    %v1438 = vadd.f32 %v748, %v1437
    %v1439 = vpop.f32.mrf.mxu0
    %v1440 = vpop.f32.mrf.mxu0
    %1441 = vdwg.mxu0
    %1442 = vmatprep.subr.bf16.mxu0 %v1238
    %1443 = vmatpush1.bf16.msra.mxu0 %v1237
    %1444 = vmatprep.subr.bf16.mxu0 %v1234
    %1445 = vmatpush1.bf16.msra.mxu0 %v1233
    %1446 = vmatprep.subr.bf16.mxu0 %v1230
    %1447 = vmatpush1.bf16.msra.mxu0 %v1229
    %1448 = vmatprep.subr.bf16.mxu0 %v1226
    %1449 = vmatpush1.bf16.msra.mxu0 %v1225
    %1450 = vmatprep.subr.bf16.mxu0 %v1222
    %1451 = vmatpush1.bf16.msra.mxu0 %v1221
    %1452 = vmatprep.subr.bf16.mxu0 %v1218
    %1453 = vmatpush1.bf16.msra.mxu0 %v1217
    %1454 = vmatprep.subr.bf16.mxu0 %v1214
    %1455 = vmatpush1.bf16.msra.mxu0 %v1213
    %1456 = vmatprep.subr.bf16.mxu0 %v1210
    %1457 = vmatpush1.bf16.msra.mxu0 %v1209
    %1458 = vmatprep.subr.bf16.mxu0 %v1270
    %1459 = vmatpush2.bf16.msra.mxu0 %v1269
    %1460 = vmatprep.subr.bf16.mxu0 %v1266
    %1461 = vmatpush2.bf16.msra.mxu0 %v1265
    %1462 = vmatprep.subr.bf16.mxu0 %v1262
    %1463 = vmatpush2.bf16.msra.mxu0 %v1261
    %1464 = vmatprep.subr.bf16.mxu0 %v1258
    %1465 = vmatpush2.bf16.msra.mxu0 %v1257
    %1466 = vmatprep.subr.bf16.mxu0 %v1254
    %1467 = vmatpush2.bf16.msra.mxu0 %v1253
    %1468 = vmatprep.subr.bf16.mxu0 %v1250
    %1469 = vmatpush2.bf16.msra.mxu0 %v1249
    %1470 = vmatprep.subr.bf16.mxu0 %v1246
    %1471 = vmatpush2.bf16.msra.mxu0 %v1245
    %1472 = vmatprep.subr.bf16.mxu0 %v1242
    %1473 = vmatpush2.bf16.msra.mxu0 %v1241
    %1474 = vmatprep.mubr.bf16.mxu0 %v739
    %1475 = vmatmul.mubr.bf16.gmra.mxu0 %v738
    %v1476 = vpop.f32.mrf.mxu0
    %v1477 = vadd.f32 %v1436, %v1476
    %v1478 = vpop.f32.mrf.mxu0
    %v1479 = vadd.f32 %v1438, %v1478
    %v1480 = vpop.f32.mrf.mxu0
    %v1481 = vpop.f32.mrf.mxu0
    %1482 = vdwg.mxu0
    %1483 = vmatprep.subr.bf16.mxu0 %v1176
    %1484 = vmatpush1.bf16.msra.mxu0 %v1175
    %1485 = vmatprep.subr.bf16.mxu0 %v1172
    %1486 = vmatpush1.bf16.msra.mxu0 %v1171
    %1487 = vmatprep.subr.bf16.mxu0 %v1168
    %1488 = vmatpush1.bf16.msra.mxu0 %v1167
    %1489 = vmatprep.subr.bf16.mxu0 %v1164
    %1490 = vmatpush1.bf16.msra.mxu0 %v1163
    %1491 = vmatprep.subr.bf16.mxu0 %v1160
    %1492 = vmatpush1.bf16.msra.mxu0 %v1159
    %1493 = vmatprep.subr.bf16.mxu0 %v1156
    %1494 = vmatpush1.bf16.msra.mxu0 %v1155
    %1495 = vmatprep.subr.bf16.mxu0 %v1152
    %1496 = vmatpush1.bf16.msra.mxu0 %v1151
    %1497 = vmatprep.subr.bf16.mxu0 %v1148
    %1498 = vmatpush1.bf16.msra.mxu0 %v1147
    %1499 = vmatprep.subr.bf16.mxu0 %v1208
    %1500 = vmatpush2.bf16.msra.mxu0 %v1207
    %1501 = vmatprep.subr.bf16.mxu0 %v1204
    %1502 = vmatpush2.bf16.msra.mxu0 %v1203
    %1503 = vmatprep.subr.bf16.mxu0 %v1200
    %1504 = vmatpush2.bf16.msra.mxu0 %v1199
    %1505 = vmatprep.subr.bf16.mxu0 %v1196
    %1506 = vmatpush2.bf16.msra.mxu0 %v1195
    %1507 = vmatprep.subr.bf16.mxu0 %v1192
    %1508 = vmatpush2.bf16.msra.mxu0 %v1191
    %1509 = vmatprep.subr.bf16.mxu0 %v1188
    %1510 = vmatpush2.bf16.msra.mxu0 %v1187
    %1511 = vmatprep.subr.bf16.mxu0 %v1184
    %1512 = vmatpush2.bf16.msra.mxu0 %v1183
    %1513 = vmatprep.subr.bf16.mxu0 %v1180
    %1514 = vmatpush2.bf16.msra.mxu0 %v1179
    %1515 = vmatprep.mubr.bf16.mxu0 %v737
    %1516 = vmatmul.mubr.bf16.gmra.mxu0 %v736
    %v1517 = vpop.f32.mrf.mxu0
    %v1518 = vadd.f32 %v752, %v1517
    %v1519 = vpop.f32.mrf.mxu0
    %v1520 = vadd.f32 %v756, %v1519
    %v1521 = vpop.f32.mrf.mxu0
    %v1522 = vpop.f32.mrf.mxu0
    %1523 = vdwg.mxu0
    %1524 = vmatprep.subr.bf16.mxu0 %v1240
    %1525 = vmatpush1.bf16.msra.mxu0 %v1239
    %1526 = vmatprep.subr.bf16.mxu0 %v1236
    %1527 = vmatpush1.bf16.msra.mxu0 %v1235
    %1528 = vmatprep.subr.bf16.mxu0 %v1232
    %1529 = vmatpush1.bf16.msra.mxu0 %v1231
    %1530 = vmatprep.subr.bf16.mxu0 %v1228
    %1531 = vmatpush1.bf16.msra.mxu0 %v1227
    %1532 = vmatprep.subr.bf16.mxu0 %v1224
    %1533 = vmatpush1.bf16.msra.mxu0 %v1223
    %1534 = vmatprep.subr.bf16.mxu0 %v1220
    %1535 = vmatpush1.bf16.msra.mxu0 %v1219
    %1536 = vmatprep.subr.bf16.mxu0 %v1216
    %1537 = vmatpush1.bf16.msra.mxu0 %v1215
    %1538 = vmatprep.subr.bf16.mxu0 %v1212
    %1539 = vmatpush1.bf16.msra.mxu0 %v1211
    %1540 = vmatprep.subr.bf16.mxu0 %v1272
    %1541 = vmatpush2.bf16.msra.mxu0 %v1271
    %1542 = vmatprep.subr.bf16.mxu0 %v1268
    %1543 = vmatpush2.bf16.msra.mxu0 %v1267
    %1544 = vmatprep.subr.bf16.mxu0 %v1264
    %1545 = vmatpush2.bf16.msra.mxu0 %v1263
    %1546 = vmatprep.subr.bf16.mxu0 %v1260
    %1547 = vmatpush2.bf16.msra.mxu0 %v1259
    %1548 = vmatprep.subr.bf16.mxu0 %v1256
    %1549 = vmatpush2.bf16.msra.mxu0 %v1255
    %1550 = vmatprep.subr.bf16.mxu0 %v1252
    %1551 = vmatpush2.bf16.msra.mxu0 %v1251
    %1552 = vmatprep.subr.bf16.mxu0 %v1248
    %1553 = vmatpush2.bf16.msra.mxu0 %v1247
    %1554 = vmatprep.subr.bf16.mxu0 %v1244
    %1555 = vmatpush2.bf16.msra.mxu0 %v1243
    %1556 = vmatprep.mubr.bf16.mxu0 %v739
    %1557 = vmatmul.mubr.bf16.gmra.mxu0 %v738
    %v1558 = vpop.f32.mrf.mxu0
    %v1559 = vadd.f32 %v1518, %v1558
    %v1560 = vpop.f32.mrf.mxu0
    %v1561 = vadd.f32 %v1520, %v1560
    %v1562 = vpop.f32.mrf.mxu0
    %v1563 = vpop.f32.mrf.mxu0
    %1564 = vdwg.mxu0
    %v1565 = vmax.f32 %v1477, 0.0
    %v1566 = vmax.f32 %v1479, 0.0
    %v1567 = vmax.f32 %v1559, 0.0
    %v1568 = vmax.f32 %v1561, 0.0
    %v1569 = vld [vmem:[%s1] sm:$0x77]
    %v1570 = vld [vmem:[%s1 + $0x8] sm:$0x77]
    %v1573 = vcombine.high %v1569, %v1569
    %v1574 = vcombine.high %v1570, %v1570
    %vm1577 = vcmask 1042432
    %v1578 = vsel %vm1577, %v1569, 0.0
    %v1579 = vsel %vm1577, %v1573, 0.0
    %v1580 = vadd.f32 %v1578, %v1579
    %1581 = vadd.xlane.f32.xlu0 %v1580
    %v1582 = vpop.xlane.xlu0 %1581
    %v1583 = vsel %vm1577, %v1570, 0.0
    %v1584 = vsel %vm1577, %v1574, 0.0
    %v1585 = vadd.f32 %v1583, %v1584
    %1586 = vadd.xlane.f32.xlu0 %v1585
    %v1587 = vpop.xlane.xlu0 %1586
    %v1588 = vrcp.pop 256.0
    %v1589 = vmul.f32 %v1582, %v1588
    %v1590 = vmul.f32 %v1587, %v1588
    %v1591 = vld [vmem:[#allocation19] sm:$0x77]
    %v1592 = vld [vmem:[#allocation19 + $0x8] sm:$0x77]
    %v1593 = vld [vmem:[#allocation19 + $0x10] sm:$0x77]
    %v1594 = vld [vmem:[#allocation19 + $0x18] sm:$0x77]
    %v1595 = vld [vmem:[#allocation19 + $0x20] sm:$0x77]
    %v1596 = vld [vmem:[#allocation20] sm:$0xff]
    %v1597 = vld [vmem:[#allocation20 + $0x8] sm:$0x3]
    %v1600 = vlaneseq
    %v1601 = vshrl.u32 %v1600, 7
    %v1602 = vsub.s32 0, %v1601
    %v1603 = vrot.slane %v1596, %v1602
    %v1604 = vlaneseq
    %v1605 = vshrl.u32 %v1604, 7
    %v1606 = vsub.s32 1, %v1605
    %v1607 = vrot.slane %v1596, %v1606
    %v1608 = vlaneseq
    %v1609 = vshrl.u32 %v1608, 7
    %v1610 = vsub.s32 2, %v1609
    %v1611 = vrot.slane %v1596, %v1610
    %v1612 = vlaneseq
    %v1613 = vshrl.u32 %v1612, 7
    %v1614 = vsub.s32 3, %v1613
    %v1615 = vrot.slane %v1596, %v1614
    %v1616 = vlaneseq
    %v1617 = vshrl.u32 %v1616, 7
    %v1618 = vsub.s32 4, %v1617
    %v1619 = vrot.slane %v1596, %v1618
    %v1620 = vlaneseq
    %v1621 = vshrl.u32 %v1620, 7
    %v1622 = vsub.s32 5, %v1621
    %v1623 = vrot.slane %v1596, %v1622
    %v1624 = vlaneseq
    %v1625 = vshrl.u32 %v1624, 7
    %v1626 = vsub.s32 6, %v1625
    %v1627 = vrot.slane %v1596, %v1626
    %v1628 = vlaneseq
    %v1629 = vshrl.u32 %v1628, 7
    %v1630 = vsub.s32 7, %v1629
    %v1631 = vrot.slane %v1596, %v1630
    %v1632 = vlaneseq
    %v1633 = vshrl.u32 %v1632, 7
    %v1634 = vsub.s32 0, %v1633
    %v1635 = vrot.slane %v1597, %v1634
    %v1636 = vlaneseq
    %v1637 = vshrl.u32 %v1636, 7
    %v1638 = vsub.s32 1, %v1637
    %v1639 = vrot.slane %v1597, %v1638
    %v1652 = vlaneseq
    %v1653 = vand.u32 %v1652, 127
    %v1654 = vlaneseq
    %v1655 = vshrl.u32 %v1654, 7
    %v1656 = vsub.s32 %v1653, %v1655
    %v1657 = vrot.slane %v1589, %v1656
    %v1658 = vlaneseq
    %v1659 = vshrl.u32 %v1658, 7
    %v1660 = vsub.s32 %v1653, %v1659
    %v1661 = vrot.slane %v1590, %v1660
    %vm1662 = vcmask 1041409
    %v1663 = vsel %vm1662, %v1661, %v1657
    %v1669 = vcombine.high %v1591, %v1591
    %v1670 = vcombine.high %v1592, %v1592
    %v1671 = vcombine.high %v1593, %v1593
    %v1672 = vcombine.high %v1594, %v1594
    %v1673 = vcombine.high %v1595, %v1595
    %vm1674 = vcmask 23552
    %v1675 = vsel %vm1674, %v1663, 0
    %v1677 = vsel %vm1577, %v1591, 0
    %v1679 = vsel %vm1577, %v1669, 0
    %v1681 = vsel %vm1577, %v1592, 0
    %v1683 = vsel %vm1577, %v1670, 0
    %v1685 = vsel %vm1577, %v1593, 0
    %v1687 = vsel %vm1577, %v1671, 0
    %v1689 = vsel %vm1577, %v1594, 0
    %v1691 = vsel %vm1577, %v1672, 0
    %v1693 = vsel %vm1577, %v1595, 0
    %v1695 = vsel %vm1577, %v1673, 0
    %1697 = vmatprep.subr.mxu0 0.0
    %1698 = vmatpush1.msra.mxu0 0.0
    %1699 = vmatprep.subr.mxu0 0.0
    %1700 = vmatpush1.msra.mxu0 0.0
    %1701 = vmatprep.subr.mxu0 0.0
    %1702 = vmatpush1.msra.mxu0 0.0
    %1703 = vmatprep.subr.mxu0 0.0
    %1704 = vmatpush1.msra.mxu0 0.0
    %1705 = vmatprep.subr.mxu0 0.0
    %1706 = vmatpush1.msra.mxu0 0.0
    %1707 = vmatprep.subr.mxu0 0.0
    %1708 = vmatpush1.msra.mxu0 0.0
    %1709 = vmatprep.subr.mxu0 0.0
    %1710 = vmatpush1.msra.mxu0 0.0
    %1711 = vmatprep.subr.mxu0 0.0
    %1712 = vmatpush1.msra.mxu0 0.0
    %1713 = vmatprep.subr.mxu0 0.0
    %1714 = vmatpush1.msra.mxu0 0.0
    %1715 = vmatprep.subr.mxu0 0.0
    %1716 = vmatpush1.msra.mxu0 0.0
    %1717 = vmatprep.subr.mxu0 0.0
    %1718 = vmatpush1.msra.mxu0 0.0
    %1719 = vmatprep.subr.mxu0 0.0
    %1720 = vmatpush1.msra.mxu0 0.0
    %1721 = vmatprep.subr.mxu0 0.0
    %1722 = vmatpush1.msra.mxu0 0.0
    %1723 = vmatprep.subr.mxu0 0.0
    %1724 = vmatpush1.msra.mxu0 0.0
    %1725 = vmatprep.subr.mxu0 0.0
    %1726 = vmatpush1.msra.mxu0 0.0
    %1727 = vmatprep.subr.mxu0 %v1679
    %1728 = vmatpush1.msra.mxu0 %v1677
    %1729 = vmatprep.subr.mxu0 0.0
    %1730 = vmatpush2.msra.mxu0 0.0
    %1731 = vmatprep.subr.mxu0 0.0
    %1732 = vmatpush2.msra.mxu0 0.0
    %1733 = vmatprep.subr.mxu0 0.0
    %1734 = vmatpush2.msra.mxu0 0.0
    %1735 = vmatprep.subr.mxu0 0.0
    %1736 = vmatpush2.msra.mxu0 0.0
    %1737 = vmatprep.subr.mxu0 0.0
    %1738 = vmatpush2.msra.mxu0 0.0
    %1739 = vmatprep.subr.mxu0 0.0
    %1740 = vmatpush2.msra.mxu0 0.0
    %1741 = vmatprep.subr.mxu0 0.0
    %1742 = vmatpush2.msra.mxu0 0.0
    %1743 = vmatprep.subr.mxu0 0.0
    %1744 = vmatpush2.msra.mxu0 0.0
    %1745 = vmatprep.subr.mxu0 0.0
    %1746 = vmatpush2.msra.mxu0 0.0
    %1747 = vmatprep.subr.mxu0 0.0
    %1748 = vmatpush2.msra.mxu0 0.0
    %1749 = vmatprep.subr.mxu0 0.0
    %1750 = vmatpush2.msra.mxu0 0.0
    %1751 = vmatprep.subr.mxu0 0.0
    %1752 = vmatpush2.msra.mxu0 0.0
    %1753 = vmatprep.subr.mxu0 0.0
    %1754 = vmatpush2.msra.mxu0 0.0
    %1755 = vmatprep.subr.mxu0 0.0
    %1756 = vmatpush2.msra.mxu0 0.0
    %1757 = vmatprep.subr.mxu0 0.0
    %1758 = vmatpush2.msra.mxu0 0.0
    %1759 = vmatprep.subr.mxu0 0.0
    %1760 = vmatpush2.msra.mxu0 0.0
    %1761 = vmatprep.mubr.f32.mxu0 0.0
    %1762 = vmatmul.mubr.f32.gmra.mxu0 %v1675
    %v1763 = vpop.f32.mrf.mxu0
    %v1764 = vadd.f32 %v1603, %v1763
    %v1765 = vpop.f32.mrf.mxu0
    %v1766 = vadd.f32 %v1607, %v1765
    %1767 = vdwg.mxu0
    %1768 = vmatprep.subr.mxu0 0.0
    %1769 = vmatpush1.msra.mxu0 0.0
    %1770 = vmatprep.subr.mxu0 0.0
    %1771 = vmatpush1.msra.mxu0 0.0
    %1772 = vmatprep.subr.mxu0 0.0
    %1773 = vmatpush1.msra.mxu0 0.0
    %1774 = vmatprep.subr.mxu0 0.0
    %1775 = vmatpush1.msra.mxu0 0.0
    %1776 = vmatprep.subr.mxu0 0.0
    %1777 = vmatpush1.msra.mxu0 0.0
    %1778 = vmatprep.subr.mxu0 0.0
    %1779 = vmatpush1.msra.mxu0 0.0
    %1780 = vmatprep.subr.mxu0 0.0
    %1781 = vmatpush1.msra.mxu0 0.0
    %1782 = vmatprep.subr.mxu0 0.0
    %1783 = vmatpush1.msra.mxu0 0.0
    %1784 = vmatprep.subr.mxu0 0.0
    %1785 = vmatpush1.msra.mxu0 0.0
    %1786 = vmatprep.subr.mxu0 0.0
    %1787 = vmatpush1.msra.mxu0 0.0
    %1788 = vmatprep.subr.mxu0 0.0
    %1789 = vmatpush1.msra.mxu0 0.0
    %1790 = vmatprep.subr.mxu0 0.0
    %1791 = vmatpush1.msra.mxu0 0.0
    %1792 = vmatprep.subr.mxu0 0.0
    %1793 = vmatpush1.msra.mxu0 0.0
    %1794 = vmatprep.subr.mxu0 0.0
    %1795 = vmatpush1.msra.mxu0 0.0
    %1796 = vmatprep.subr.mxu0 0.0
    %1797 = vmatpush1.msra.mxu0 0.0
    %1798 = vmatprep.subr.mxu0 %v1683
    %1799 = vmatpush1.msra.mxu0 %v1681
    %1800 = vmatprep.subr.mxu0 0.0
    %1801 = vmatpush2.msra.mxu0 0.0
    %1802 = vmatprep.subr.mxu0 0.0
    %1803 = vmatpush2.msra.mxu0 0.0
    %1804 = vmatprep.subr.mxu0 0.0
    %1805 = vmatpush2.msra.mxu0 0.0
    %1806 = vmatprep.subr.mxu0 0.0
    %1807 = vmatpush2.msra.mxu0 0.0
    %1808 = vmatprep.subr.mxu0 0.0
    %1809 = vmatpush2.msra.mxu0 0.0
    %1810 = vmatprep.subr.mxu0 0.0
    %1811 = vmatpush2.msra.mxu0 0.0
    %1812 = vmatprep.subr.mxu0 0.0
    %1813 = vmatpush2.msra.mxu0 0.0
    %1814 = vmatprep.subr.mxu0 0.0
    %1815 = vmatpush2.msra.mxu0 0.0
    %1816 = vmatprep.subr.mxu0 0.0
    %1817 = vmatpush2.msra.mxu0 0.0
    %1818 = vmatprep.subr.mxu0 0.0
    %1819 = vmatpush2.msra.mxu0 0.0
    %1820 = vmatprep.subr.mxu0 0.0
    %1821 = vmatpush2.msra.mxu0 0.0
    %1822 = vmatprep.subr.mxu0 0.0
    %1823 = vmatpush2.msra.mxu0 0.0
    %1824 = vmatprep.subr.mxu0 0.0
    %1825 = vmatpush2.msra.mxu0 0.0
    %1826 = vmatprep.subr.mxu0 0.0
    %1827 = vmatpush2.msra.mxu0 0.0
    %1828 = vmatprep.subr.mxu0 0.0
    %1829 = vmatpush2.msra.mxu0 0.0
    %1830 = vmatprep.subr.mxu0 0.0
    %1831 = vmatpush2.msra.mxu0 0.0
    %1832 = vmatprep.mubr.f32.mxu0 0.0
    %1833 = vmatmul.mubr.f32.gmra.mxu0 %v1675
    %v1834 = vpop.f32.mrf.mxu0
    %v1835 = vadd.f32 %v1611, %v1834
    %v1836 = vpop.f32.mrf.mxu0
    %v1837 = vadd.f32 %v1615, %v1836
    %1838 = vdwg.mxu0
    %1839 = vmatprep.subr.mxu0 0.0
    %1840 = vmatpush1.msra.mxu0 0.0
    %1841 = vmatprep.subr.mxu0 0.0
    %1842 = vmatpush1.msra.mxu0 0.0
    %1843 = vmatprep.subr.mxu0 0.0
    %1844 = vmatpush1.msra.mxu0 0.0
    %1845 = vmatprep.subr.mxu0 0.0
    %1846 = vmatpush1.msra.mxu0 0.0
    %1847 = vmatprep.subr.mxu0 0.0
    %1848 = vmatpush1.msra.mxu0 0.0
    %1849 = vmatprep.subr.mxu0 0.0
    %1850 = vmatpush1.msra.mxu0 0.0
    %1851 = vmatprep.subr.mxu0 0.0
    %1852 = vmatpush1.msra.mxu0 0.0
    %1853 = vmatprep.subr.mxu0 0.0
    %1854 = vmatpush1.msra.mxu0 0.0
    %1855 = vmatprep.subr.mxu0 0.0
    %1856 = vmatpush1.msra.mxu0 0.0
    %1857 = vmatprep.subr.mxu0 0.0
    %1858 = vmatpush1.msra.mxu0 0.0
    %1859 = vmatprep.subr.mxu0 0.0
    %1860 = vmatpush1.msra.mxu0 0.0
    %1861 = vmatprep.subr.mxu0 0.0
    %1862 = vmatpush1.msra.mxu0 0.0
    %1863 = vmatprep.subr.mxu0 0.0
    %1864 = vmatpush1.msra.mxu0 0.0
    %1865 = vmatprep.subr.mxu0 0.0
    %1866 = vmatpush1.msra.mxu0 0.0
    %1867 = vmatprep.subr.mxu0 0.0
    %1868 = vmatpush1.msra.mxu0 0.0
    %1869 = vmatprep.subr.mxu0 %v1687
    %1870 = vmatpush1.msra.mxu0 %v1685
    %1871 = vmatprep.subr.mxu0 0.0
    %1872 = vmatpush2.msra.mxu0 0.0
    %1873 = vmatprep.subr.mxu0 0.0
    %1874 = vmatpush2.msra.mxu0 0.0
    %1875 = vmatprep.subr.mxu0 0.0
    %1876 = vmatpush2.msra.mxu0 0.0
    %1877 = vmatprep.subr.mxu0 0.0
    %1878 = vmatpush2.msra.mxu0 0.0
    %1879 = vmatprep.subr.mxu0 0.0
    %1880 = vmatpush2.msra.mxu0 0.0
    %1881 = vmatprep.subr.mxu0 0.0
    %1882 = vmatpush2.msra.mxu0 0.0
    %1883 = vmatprep.subr.mxu0 0.0
    %1884 = vmatpush2.msra.mxu0 0.0
    %1885 = vmatprep.subr.mxu0 0.0
    %1886 = vmatpush2.msra.mxu0 0.0
    %1887 = vmatprep.subr.mxu0 0.0
    %1888 = vmatpush2.msra.mxu0 0.0
    %1889 = vmatprep.subr.mxu0 0.0
    %1890 = vmatpush2.msra.mxu0 0.0
    %1891 = vmatprep.subr.mxu0 0.0
    %1892 = vmatpush2.msra.mxu0 0.0
    %1893 = vmatprep.subr.mxu0 0.0
    %1894 = vmatpush2.msra.mxu0 0.0
    %1895 = vmatprep.subr.mxu0 0.0
    %1896 = vmatpush2.msra.mxu0 0.0
    %1897 = vmatprep.subr.mxu0 0.0
    %1898 = vmatpush2.msra.mxu0 0.0
    %1899 = vmatprep.subr.mxu0 0.0
    %1900 = vmatpush2.msra.mxu0 0.0
    %1901 = vmatprep.subr.mxu0 0.0
    %1902 = vmatpush2.msra.mxu0 0.0
    %1903 = vmatprep.mubr.f32.mxu0 0.0
    %1904 = vmatmul.mubr.f32.gmra.mxu0 %v1675
    %v1905 = vpop.f32.mrf.mxu0
    %v1906 = vadd.f32 %v1619, %v1905
    %v1907 = vpop.f32.mrf.mxu0
    %v1908 = vadd.f32 %v1623, %v1907
    %1909 = vdwg.mxu0
    %1910 = vmatprep.subr.mxu0 0.0
    %1911 = vmatpush1.msra.mxu0 0.0
    %1912 = vmatprep.subr.mxu0 0.0
    %1913 = vmatpush1.msra.mxu0 0.0
    %1914 = vmatprep.subr.mxu0 0.0
    %1915 = vmatpush1.msra.mxu0 0.0
    %1916 = vmatprep.subr.mxu0 0.0
    %1917 = vmatpush1.msra.mxu0 0.0
    %1918 = vmatprep.subr.mxu0 0.0
    %1919 = vmatpush1.msra.mxu0 0.0
    %1920 = vmatprep.subr.mxu0 0.0
    %1921 = vmatpush1.msra.mxu0 0.0
    %1922 = vmatprep.subr.mxu0 0.0
    %1923 = vmatpush1.msra.mxu0 0.0
    %1924 = vmatprep.subr.mxu0 0.0
    %1925 = vmatpush1.msra.mxu0 0.0
    %1926 = vmatprep.subr.mxu0 0.0
    %1927 = vmatpush1.msra.mxu0 0.0
    %1928 = vmatprep.subr.mxu0 0.0
    %1929 = vmatpush1.msra.mxu0 0.0
    %1930 = vmatprep.subr.mxu0 0.0
    %1931 = vmatpush1.msra.mxu0 0.0
    %1932 = vmatprep.subr.mxu0 0.0
    %1933 = vmatpush1.msra.mxu0 0.0
    %1934 = vmatprep.subr.mxu0 0.0
    %1935 = vmatpush1.msra.mxu0 0.0
    %1936 = vmatprep.subr.mxu0 0.0
    %1937 = vmatpush1.msra.mxu0 0.0
    %1938 = vmatprep.subr.mxu0 0.0
    %1939 = vmatpush1.msra.mxu0 0.0
    %1940 = vmatprep.subr.mxu0 %v1691
    %1941 = vmatpush1.msra.mxu0 %v1689
    %1942 = vmatprep.subr.mxu0 0.0
    %1943 = vmatpush2.msra.mxu0 0.0
    %1944 = vmatprep.subr.mxu0 0.0
    %1945 = vmatpush2.msra.mxu0 0.0
    %1946 = vmatprep.subr.mxu0 0.0
    %1947 = vmatpush2.msra.mxu0 0.0
    %1948 = vmatprep.subr.mxu0 0.0
    %1949 = vmatpush2.msra.mxu0 0.0
    %1950 = vmatprep.subr.mxu0 0.0
    %1951 = vmatpush2.msra.mxu0 0.0
    %1952 = vmatprep.subr.mxu0 0.0
    %1953 = vmatpush2.msra.mxu0 0.0
    %1954 = vmatprep.subr.mxu0 0.0
    %1955 = vmatpush2.msra.mxu0 0.0
    %1956 = vmatprep.subr.mxu0 0.0
    %1957 = vmatpush2.msra.mxu0 0.0
    %1958 = vmatprep.subr.mxu0 0.0
    %1959 = vmatpush2.msra.mxu0 0.0
    %1960 = vmatprep.subr.mxu0 0.0
    %1961 = vmatpush2.msra.mxu0 0.0
    %1962 = vmatprep.subr.mxu0 0.0
    %1963 = vmatpush2.msra.mxu0 0.0
    %1964 = vmatprep.subr.mxu0 0.0
    %1965 = vmatpush2.msra.mxu0 0.0
    %1966 = vmatprep.subr.mxu0 0.0
    %1967 = vmatpush2.msra.mxu0 0.0
    %1968 = vmatprep.subr.mxu0 0.0
    %1969 = vmatpush2.msra.mxu0 0.0
    %1970 = vmatprep.subr.mxu0 0.0
    %1971 = vmatpush2.msra.mxu0 0.0
    %1972 = vmatprep.subr.mxu0 0.0
    %1973 = vmatpush2.msra.mxu0 0.0
    %1974 = vmatprep.mubr.f32.mxu0 0.0
    %1975 = vmatmul.mubr.f32.gmra.mxu0 %v1675
    %v1976 = vpop.f32.mrf.mxu0
    %v1977 = vadd.f32 %v1627, %v1976
    %v1978 = vpop.f32.mrf.mxu0
    %v1979 = vadd.f32 %v1631, %v1978
    %1980 = vdwg.mxu0
    %1981 = vmatprep.subr.mxu0 0.0
    %1982 = vmatpush1.msra.mxu0 0.0
    %1983 = vmatprep.subr.mxu0 0.0
    %1984 = vmatpush1.msra.mxu0 0.0
    %1985 = vmatprep.subr.mxu0 0.0
    %1986 = vmatpush1.msra.mxu0 0.0
    %1987 = vmatprep.subr.mxu0 0.0
    %1988 = vmatpush1.msra.mxu0 0.0
    %1989 = vmatprep.subr.mxu0 0.0
    %1990 = vmatpush1.msra.mxu0 0.0
    %1991 = vmatprep.subr.mxu0 0.0
    %1992 = vmatpush1.msra.mxu0 0.0
    %1993 = vmatprep.subr.mxu0 0.0
    %1994 = vmatpush1.msra.mxu0 0.0
    %1995 = vmatprep.subr.mxu0 0.0
    %1996 = vmatpush1.msra.mxu0 0.0
    %1997 = vmatprep.subr.mxu0 0.0
    %1998 = vmatpush1.msra.mxu0 0.0
    %1999 = vmatprep.subr.mxu0 0.0
    %2000 = vmatpush1.msra.mxu0 0.0
    %2001 = vmatprep.subr.mxu0 0.0
    %2002 = vmatpush1.msra.mxu0 0.0
    %2003 = vmatprep.subr.mxu0 0.0
    %2004 = vmatpush1.msra.mxu0 0.0
    %2005 = vmatprep.subr.mxu0 0.0
    %2006 = vmatpush1.msra.mxu0 0.0
    %2007 = vmatprep.subr.mxu0 0.0
    %2008 = vmatpush1.msra.mxu0 0.0
    %2009 = vmatprep.subr.mxu0 0.0
    %2010 = vmatpush1.msra.mxu0 0.0
    %2011 = vmatprep.subr.mxu0 %v1695
    %2012 = vmatpush1.msra.mxu0 %v1693
    %2013 = vmatprep.subr.mxu0 0.0
    %2014 = vmatpush2.msra.mxu0 0.0
    %2015 = vmatprep.subr.mxu0 0.0
    %2016 = vmatpush2.msra.mxu0 0.0
    %2017 = vmatprep.subr.mxu0 0.0
    %2018 = vmatpush2.msra.mxu0 0.0
    %2019 = vmatprep.subr.mxu0 0.0
    %2020 = vmatpush2.msra.mxu0 0.0
    %2021 = vmatprep.subr.mxu0 0.0
    %2022 = vmatpush2.msra.mxu0 0.0
    %2023 = vmatprep.subr.mxu0 0.0
    %2024 = vmatpush2.msra.mxu0 0.0
    %2025 = vmatprep.subr.mxu0 0.0
    %2026 = vmatpush2.msra.mxu0 0.0
    %2027 = vmatprep.subr.mxu0 0.0
    %2028 = vmatpush2.msra.mxu0 0.0
    %2029 = vmatprep.subr.mxu0 0.0
    %2030 = vmatpush2.msra.mxu0 0.0
    %2031 = vmatprep.subr.mxu0 0.0
    %2032 = vmatpush2.msra.mxu0 0.0
    %2033 = vmatprep.subr.mxu0 0.0
    %2034 = vmatpush2.msra.mxu0 0.0
    %2035 = vmatprep.subr.mxu0 0.0
    %2036 = vmatpush2.msra.mxu0 0.0
    %2037 = vmatprep.subr.mxu0 0.0
    %2038 = vmatpush2.msra.mxu0 0.0
    %2039 = vmatprep.subr.mxu0 0.0
    %2040 = vmatpush2.msra.mxu0 0.0
    %2041 = vmatprep.subr.mxu0 0.0
    %2042 = vmatpush2.msra.mxu0 0.0
    %2043 = vmatprep.subr.mxu0 0.0
    %2044 = vmatpush2.msra.mxu0 0.0
    %2045 = vmatprep.mubr.f32.mxu0 0.0
    %2046 = vmatmul.mubr.f32.gmra.mxu0 %v1675
    %v2047 = vpop.f32.mrf.mxu0
    %v2048 = vadd.f32 %v1635, %v2047
    %v2049 = vpop.f32.mrf.mxu0
    %v2050 = vadd.f32 %v1639, %v2049
    %2051 = vdwg.mxu0
    %v2052 = vmax.f32 %v1764, 0.0
    %v2053 = vmax.f32 %v1766, 0.0
    %v2054 = vmax.f32 %v1835, 0.0
    %v2055 = vmax.f32 %v1837, 0.0
    %v2056 = vmax.f32 %v1906, 0.0
    %v2057 = vmax.f32 %v1908, 0.0
    %v2058 = vmax.f32 %v1977, 0.0
    %v2059 = vmax.f32 %v1979, 0.0
    %v2060 = vmax.f32 %v2048, 0.0
    %v2061 = vmax.f32 %v2050, 0.0
    %s2062 = smul.u32 4, 64
    %s2063 = smul.u32 %s2062, 10
    %s2064 = sshll.u32 %s2063, 4
    %2065 = dma.done [#allocation4], %s2064
    %v2066 = vld [vmem:[#allocation2] sm:$0xff]
    %v2067 = vld [vmem:[#allocation2 + $0x8] sm:$0xff]
    %v2068 = vld [vmem:[#allocation2 + $0x10] sm:$0xff]
    %v2069 = vld [vmem:[#allocation2 + $0x18] sm:$0xff]
    %v2070 = vld [vmem:[#allocation2 + $0x20] sm:$0xff]
    %v2071 = vld [vmem:[#allocation2 + $0x28] sm:$0xff]
    %v2072 = vld [vmem:[#allocation2 + $0x30] sm:$0xff]
    %v2073 = vld [vmem:[#allocation2 + $0x38] sm:$0xff]
    %v2074 = vld [vmem:[#allocation2 + $0x40] sm:$0xff]
    %v2075 = vld [vmem:[#allocation2 + $0x48] sm:$0xff]
    %v2076 = vld [vmem:[#allocation2 + $0x50] sm:$0xff]
    %v2077 = vld [vmem:[#allocation2 + $0x58] sm:$0xff]
    %v2078 = vld [vmem:[#allocation2 + $0x60] sm:$0xff]
    %v2079 = vld [vmem:[#allocation2 + $0x68] sm:$0xff]
    %v2080 = vld [vmem:[#allocation2 + $0x70] sm:$0xff]
    %v2081 = vld [vmem:[#allocation2 + $0x78] sm:$0xff]
    %v2082 = vld [vmem:[#allocation2 + $0x80] sm:$0xff]
    %v2083 = vld [vmem:[#allocation2 + $0x88] sm:$0xff]
    %v2084 = vld [vmem:[#allocation2 + $0x90] sm:$0xff]
    %v2085 = vld [vmem:[#allocation2 + $0x98] sm:$0xff]
    %v2086 = vld [vmem:[#allocation2 + $0xa0] sm:$0xff]
    %v2087 = vld [vmem:[#allocation2 + $0xa8] sm:$0xff]
    %v2088 = vld [vmem:[#allocation2 + $0xb0] sm:$0xff]
    %v2089 = vld [vmem:[#allocation2 + $0xb8] sm:$0xff]
    %v2090 = vld [vmem:[#allocation2 + $0xc0] sm:$0xff]
    %v2091 = vld [vmem:[#allocation2 + $0xc8] sm:$0xff]
    %v2092 = vld [vmem:[#allocation2 + $0xd0] sm:$0xff]
    %v2093 = vld [vmem:[#allocation2 + $0xd8] sm:$0xff]
    %v2094 = vld [vmem:[#allocation2 + $0xe0] sm:$0xff]
    %v2095 = vld [vmem:[#allocation2 + $0xe8] sm:$0xff]
    %v2096 = vld [vmem:[#allocation2 + $0xf0] sm:$0xff]
    %v2097 = vld [vmem:[#allocation2 + $0xf8] sm:$0xff]
    %v2098 = vld [vmem:[#allocation2 + $0x100] sm:$0xff]
    %v2099 = vld [vmem:[#allocation2 + $0x108] sm:$0xff]
    %v2100 = vld [vmem:[#allocation2 + $0x110] sm:$0xff]
    %v2101 = vld [vmem:[#allocation2 + $0x118] sm:$0xff]
    %v2102 = vld [vmem:[#allocation2 + $0x120] sm:$0xff]
    %v2103 = vld [vmem:[#allocation2 + $0x128] sm:$0xff]
    %v2104 = vld [vmem:[#allocation2 + $0x130] sm:$0xff]
    %v2105 = vld [vmem:[#allocation2 + $0x138] sm:$0xff]
    %v2106 = vld [vmem:[#allocation2 + $0x140] sm:$0xff]
    %v2107 = vld [vmem:[#allocation2 + $0x148] sm:$0xff]
    %v2108 = vld [vmem:[#allocation2 + $0x150] sm:$0xff]
    %v2109 = vld [vmem:[#allocation2 + $0x158] sm:$0xff]
    %v2110 = vld [vmem:[#allocation2 + $0x160] sm:$0xff]
    %v2111 = vld [vmem:[#allocation2 + $0x168] sm:$0xff]
    %v2112 = vld [vmem:[#allocation2 + $0x170] sm:$0xff]
    %v2113 = vld [vmem:[#allocation2 + $0x178] sm:$0xff]
    %v2114 = vld [vmem:[#allocation2 + $0x180] sm:$0xff]
    %v2115 = vld [vmem:[#allocation2 + $0x188] sm:$0xff]
    %v2116 = vld [vmem:[#allocation2 + $0x190] sm:$0xff]
    %v2117 = vld [vmem:[#allocation2 + $0x198] sm:$0xff]
    %v2118 = vld [vmem:[#allocation2 + $0x1a0] sm:$0xff]
    %v2119 = vld [vmem:[#allocation2 + $0x1a8] sm:$0xff]
    %v2120 = vld [vmem:[#allocation2 + $0x1b0] sm:$0xff]
    %v2121 = vld [vmem:[#allocation2 + $0x1b8] sm:$0xff]
    %v2122 = vld [vmem:[#allocation2 + $0x1c0] sm:$0xff]
    %v2123 = vld [vmem:[#allocation2 + $0x1c8] sm:$0xff]
    %v2124 = vld [vmem:[#allocation2 + $0x1d0] sm:$0xff]
    %v2125 = vld [vmem:[#allocation2 + $0x1d8] sm:$0xff]
    %v2126 = vld [vmem:[#allocation2 + $0x1e0] sm:$0xff]
    %v2127 = vld [vmem:[#allocation2 + $0x1e8] sm:$0xff]
    %v2128 = vld [vmem:[#allocation2 + $0x1f0] sm:$0xff]
    %v2129 = vld [vmem:[#allocation2 + $0x1f8] sm:$0xff]
    %v2130 = vld [vmem:[#allocation2 + $0x200] sm:$0xff]
    %v2131 = vld [vmem:[#allocation2 + $0x208] sm:$0xff]
    %v2132 = vld [vmem:[#allocation2 + $0x210] sm:$0xff]
    %v2133 = vld [vmem:[#allocation2 + $0x218] sm:$0xff]
    %v2134 = vld [vmem:[#allocation2 + $0x220] sm:$0xff]
    %v2135 = vld [vmem:[#allocation2 + $0x228] sm:$0xff]
    %v2136 = vld [vmem:[#allocation2 + $0x230] sm:$0xff]
    %v2137 = vld [vmem:[#allocation2 + $0x238] sm:$0xff]
    %v2138 = vld [vmem:[#allocation2 + $0x240] sm:$0xff]
    %v2139 = vld [vmem:[#allocation2 + $0x248] sm:$0xff]
    %v2140 = vld [vmem:[#allocation2 + $0x250] sm:$0xff]
    %v2141 = vld [vmem:[#allocation2 + $0x258] sm:$0xff]
    %v2142 = vld [vmem:[#allocation2 + $0x260] sm:$0xff]
    %v2143 = vld [vmem:[#allocation2 + $0x268] sm:$0xff]
    %v2144 = vld [vmem:[#allocation2 + $0x270] sm:$0xff]
    %v2145 = vld [vmem:[#allocation2 + $0x278] sm:$0xff]
    %v2146 = vld [vmem:[#allocation2 + $0x280] sm:$0xff]
    %v2147 = vld [vmem:[#allocation2 + $0x288] sm:$0xff]
    %v2148 = vld [vmem:[#allocation2 + $0x290] sm:$0xff]
    %v2149 = vld [vmem:[#allocation2 + $0x298] sm:$0xff]
    %v2150 = vld [vmem:[#allocation2 + $0x2a0] sm:$0xff]
    %v2151 = vld [vmem:[#allocation2 + $0x2a8] sm:$0xff]
    %v2152 = vld [vmem:[#allocation2 + $0x2b0] sm:$0xff]
    %v2153 = vld [vmem:[#allocation2 + $0x2b8] sm:$0xff]
    %v2154 = vld [vmem:[#allocation2 + $0x2c0] sm:$0xff]
    %v2155 = vld [vmem:[#allocation2 + $0x2c8] sm:$0xff]
    %v2156 = vld [vmem:[#allocation2 + $0x2d0] sm:$0xff]
    %v2157 = vld [vmem:[#allocation2 + $0x2d8] sm:$0xff]
    %v2158 = vld [vmem:[#allocation2 + $0x2e0] sm:$0xff]
    %v2159 = vld [vmem:[#allocation2 + $0x2e8] sm:$0xff]
    %v2160 = vld [vmem:[#allocation2 + $0x2f0] sm:$0xff]
    %v2161 = vld [vmem:[#allocation2 + $0x2f8] sm:$0xff]
    %v2162 = vld [vmem:[#allocation2 + $0x300] sm:$0xff]
    %v2163 = vld [vmem:[#allocation2 + $0x308] sm:$0xff]
    %v2164 = vld [vmem:[#allocation2 + $0x310] sm:$0xff]
    %v2165 = vld [vmem:[#allocation2 + $0x318] sm:$0xff]
    %v2166 = vld [vmem:[#allocation2 + $0x320] sm:$0xff]
    %v2167 = vld [vmem:[#allocation2 + $0x328] sm:$0xff]
    %v2168 = vld [vmem:[#allocation2 + $0x330] sm:$0xff]
    %v2169 = vld [vmem:[#allocation2 + $0x338] sm:$0xff]
    %v2170 = vld [vmem:[#allocation2 + $0x340] sm:$0xff]
    %v2171 = vld [vmem:[#allocation2 + $0x348] sm:$0xff]
    %v2172 = vld [vmem:[#allocation2 + $0x350] sm:$0xff]
    %v2173 = vld [vmem:[#allocation2 + $0x358] sm:$0xff]
    %v2174 = vld [vmem:[#allocation2 + $0x360] sm:$0xff]
    %v2175 = vld [vmem:[#allocation2 + $0x368] sm:$0xff]
    %v2176 = vld [vmem:[#allocation2 + $0x370] sm:$0xff]
    %v2177 = vld [vmem:[#allocation2 + $0x378] sm:$0xff]
    %v2178 = vld [vmem:[#allocation2 + $0x380] sm:$0xff]
    %v2179 = vld [vmem:[#allocation2 + $0x388] sm:$0xff]
    %v2180 = vld [vmem:[#allocation2 + $0x390] sm:$0xff]
    %v2181 = vld [vmem:[#allocation2 + $0x398] sm:$0xff]
    %v2182 = vld [vmem:[#allocation2 + $0x3a0] sm:$0xff]
    %v2183 = vld [vmem:[#allocation2 + $0x3a8] sm:$0xff]
    %v2184 = vld [vmem:[#allocation2 + $0x3b0] sm:$0xff]
    %v2185 = vld [vmem:[#allocation2 + $0x3b8] sm:$0xff]
    %v2186 = vld [vmem:[#allocation2 + $0x3c0] sm:$0xff]
    %v2187 = vld [vmem:[#allocation2 + $0x3c8] sm:$0xff]
    %v2188 = vld [vmem:[#allocation2 + $0x3d0] sm:$0xff]
    %v2189 = vld [vmem:[#allocation2 + $0x3d8] sm:$0xff]
    %v2190 = vld [vmem:[#allocation2 + $0x3e0] sm:$0xff]
    %v2191 = vld [vmem:[#allocation2 + $0x3e8] sm:$0xff]
    %v2192 = vld [vmem:[#allocation2 + $0x3f0] sm:$0xff]
    %v2193 = vld [vmem:[#allocation2 + $0x3f8] sm:$0xff]
    %v2194 = vld [vmem:[#allocation2 + $0x400] sm:$0xff]
    %v2195 = vld [vmem:[#allocation2 + $0x408] sm:$0xff]
    %v2196 = vld [vmem:[#allocation2 + $0x410] sm:$0xff]
    %v2197 = vld [vmem:[#allocation2 + $0x418] sm:$0xff]
    %v2198 = vld [vmem:[#allocation2 + $0x420] sm:$0xff]
    %v2199 = vld [vmem:[#allocation2 + $0x428] sm:$0xff]
    %v2200 = vld [vmem:[#allocation2 + $0x430] sm:$0xff]
    %v2201 = vld [vmem:[#allocation2 + $0x438] sm:$0xff]
    %v2202 = vld [vmem:[#allocation2 + $0x440] sm:$0xff]
    %v2203 = vld [vmem:[#allocation2 + $0x448] sm:$0xff]
    %v2204 = vld [vmem:[#allocation2 + $0x450] sm:$0xff]
    %v2205 = vld [vmem:[#allocation2 + $0x458] sm:$0xff]
    %v2206 = vld [vmem:[#allocation2 + $0x460] sm:$0xff]
    %v2207 = vld [vmem:[#allocation2 + $0x468] sm:$0xff]
    %v2208 = vld [vmem:[#allocation2 + $0x470] sm:$0xff]
    %v2209 = vld [vmem:[#allocation2 + $0x478] sm:$0xff]
    %v2210 = vld [vmem:[#allocation2 + $0x480] sm:$0xff]
    %v2211 = vld [vmem:[#allocation2 + $0x488] sm:$0xff]
    %v2212 = vld [vmem:[#allocation2 + $0x490] sm:$0xff]
    %v2213 = vld [vmem:[#allocation2 + $0x498] sm:$0xff]
    %v2214 = vld [vmem:[#allocation2 + $0x4a0] sm:$0xff]
    %v2215 = vld [vmem:[#allocation2 + $0x4a8] sm:$0xff]
    %v2216 = vld [vmem:[#allocation2 + $0x4b0] sm:$0xff]
    %v2217 = vld [vmem:[#allocation2 + $0x4b8] sm:$0xff]
    %v2218 = vld [vmem:[#allocation2 + $0x4c0] sm:$0xff]
    %v2219 = vld [vmem:[#allocation2 + $0x4c8] sm:$0xff]
    %v2220 = vld [vmem:[#allocation2 + $0x4d0] sm:$0xff]
    %v2221 = vld [vmem:[#allocation2 + $0x4d8] sm:$0xff]
    %v2222 = vld [vmem:[#allocation2 + $0x4e0] sm:$0xff]
    %v2223 = vld [vmem:[#allocation2 + $0x4e8] sm:$0xff]
    %v2224 = vld [vmem:[#allocation2 + $0x4f0] sm:$0xff]
    %v2225 = vld [vmem:[#allocation2 + $0x4f8] sm:$0xff]
    %v2226 = vld [vmem:[#allocation2 + $0x500] sm:$0xff]
    %v2227 = vld [vmem:[#allocation2 + $0x508] sm:$0xff]
    %v2228 = vld [vmem:[#allocation2 + $0x510] sm:$0xff]
    %v2229 = vld [vmem:[#allocation2 + $0x518] sm:$0xff]
    %v2230 = vld [vmem:[#allocation2 + $0x520] sm:$0xff]
    %v2231 = vld [vmem:[#allocation2 + $0x528] sm:$0xff]
    %v2232 = vld [vmem:[#allocation2 + $0x530] sm:$0xff]
    %v2233 = vld [vmem:[#allocation2 + $0x538] sm:$0xff]
    %v2234 = vld [vmem:[#allocation2 + $0x540] sm:$0xff]
    %v2235 = vld [vmem:[#allocation2 + $0x548] sm:$0xff]
    %v2236 = vld [vmem:[#allocation2 + $0x550] sm:$0xff]
    %v2237 = vld [vmem:[#allocation2 + $0x558] sm:$0xff]
    %v2238 = vld [vmem:[#allocation2 + $0x560] sm:$0xff]
    %v2239 = vld [vmem:[#allocation2 + $0x568] sm:$0xff]
    %v2240 = vld [vmem:[#allocation2 + $0x570] sm:$0xff]
    %v2241 = vld [vmem:[#allocation2 + $0x578] sm:$0xff]
    %v2242 = vld [vmem:[#allocation2 + $0x580] sm:$0xff]
    %v2243 = vld [vmem:[#allocation2 + $0x588] sm:$0xff]
    %v2244 = vld [vmem:[#allocation2 + $0x590] sm:$0xff]
    %v2245 = vld [vmem:[#allocation2 + $0x598] sm:$0xff]
    %v2246 = vld [vmem:[#allocation2 + $0x5a0] sm:$0xff]
    %v2247 = vld [vmem:[#allocation2 + $0x5a8] sm:$0xff]
    %v2248 = vld [vmem:[#allocation2 + $0x5b0] sm:$0xff]
    %v2249 = vld [vmem:[#allocation2 + $0x5b8] sm:$0xff]
    %v2250 = vld [vmem:[#allocation2 + $0x5c0] sm:$0xff]
    %v2251 = vld [vmem:[#allocation2 + $0x5c8] sm:$0xff]
    %v2252 = vld [vmem:[#allocation2 + $0x5d0] sm:$0xff]
    %v2253 = vld [vmem:[#allocation2 + $0x5d8] sm:$0xff]
    %v2254 = vld [vmem:[#allocation2 + $0x5e0] sm:$0xff]
    %v2255 = vld [vmem:[#allocation2 + $0x5e8] sm:$0xff]
    %v2256 = vld [vmem:[#allocation2 + $0x5f0] sm:$0xff]
    %v2257 = vld [vmem:[#allocation2 + $0x5f8] sm:$0xff]
    %v2258 = vld [vmem:[#allocation2 + $0x600] sm:$0xff]
    %v2259 = vld [vmem:[#allocation2 + $0x608] sm:$0xff]
    %v2260 = vld [vmem:[#allocation2 + $0x610] sm:$0xff]
    %v2261 = vld [vmem:[#allocation2 + $0x618] sm:$0xff]
    %v2262 = vld [vmem:[#allocation2 + $0x620] sm:$0xff]
    %v2263 = vld [vmem:[#allocation2 + $0x628] sm:$0xff]
    %v2264 = vld [vmem:[#allocation2 + $0x630] sm:$0xff]
    %v2265 = vld [vmem:[#allocation2 + $0x638] sm:$0xff]
    %v2266 = vld [vmem:[#allocation2 + $0x640] sm:$0xff]
    %v2267 = vld [vmem:[#allocation2 + $0x648] sm:$0xff]
    %v2268 = vld [vmem:[#allocation2 + $0x650] sm:$0xff]
    %v2269 = vld [vmem:[#allocation2 + $0x658] sm:$0xff]
    %v2270 = vld [vmem:[#allocation2 + $0x660] sm:$0xff]
    %v2271 = vld [vmem:[#allocation2 + $0x668] sm:$0xff]
    %v2272 = vld [vmem:[#allocation2 + $0x670] sm:$0xff]
    %v2273 = vld [vmem:[#allocation2 + $0x678] sm:$0xff]
    %v2274 = vld [vmem:[#allocation2 + $0x680] sm:$0xff]
    %v2275 = vld [vmem:[#allocation2 + $0x688] sm:$0xff]
    %v2276 = vld [vmem:[#allocation2 + $0x690] sm:$0xff]
    %v2277 = vld [vmem:[#allocation2 + $0x698] sm:$0xff]
    %v2278 = vld [vmem:[#allocation2 + $0x6a0] sm:$0xff]
    %v2279 = vld [vmem:[#allocation2 + $0x6a8] sm:$0xff]
    %v2280 = vld [vmem:[#allocation2 + $0x6b0] sm:$0xff]
    %v2281 = vld [vmem:[#allocation2 + $0x6b8] sm:$0xff]
    %v2282 = vld [vmem:[#allocation2 + $0x6c0] sm:$0xff]
    %v2283 = vld [vmem:[#allocation2 + $0x6c8] sm:$0xff]
    %v2284 = vld [vmem:[#allocation2 + $0x6d0] sm:$0xff]
    %v2285 = vld [vmem:[#allocation2 + $0x6d8] sm:$0xff]
    %v2286 = vld [vmem:[#allocation2 + $0x6e0] sm:$0xff]
    %v2287 = vld [vmem:[#allocation2 + $0x6e8] sm:$0xff]
    %v2288 = vld [vmem:[#allocation2 + $0x6f0] sm:$0xff]
    %v2289 = vld [vmem:[#allocation2 + $0x6f8] sm:$0xff]
    %v2290 = vld [vmem:[#allocation2 + $0x700] sm:$0xff]
    %v2291 = vld [vmem:[#allocation2 + $0x708] sm:$0xff]
    %v2292 = vld [vmem:[#allocation2 + $0x710] sm:$0xff]
    %v2293 = vld [vmem:[#allocation2 + $0x718] sm:$0xff]
    %v2294 = vld [vmem:[#allocation2 + $0x720] sm:$0xff]
    %v2295 = vld [vmem:[#allocation2 + $0x728] sm:$0xff]
    %v2296 = vld [vmem:[#allocation2 + $0x730] sm:$0xff]
    %v2297 = vld [vmem:[#allocation2 + $0x738] sm:$0xff]
    %v2298 = vld [vmem:[#allocation2 + $0x740] sm:$0xff]
    %v2299 = vld [vmem:[#allocation2 + $0x748] sm:$0xff]
    %v2300 = vld [vmem:[#allocation2 + $0x750] sm:$0xff]
    %v2301 = vld [vmem:[#allocation2 + $0x758] sm:$0xff]
    %v2302 = vld [vmem:[#allocation2 + $0x760] sm:$0xff]
    %v2303 = vld [vmem:[#allocation2 + $0x768] sm:$0xff]
    %v2304 = vld [vmem:[#allocation2 + $0x770] sm:$0xff]
    %v2305 = vld [vmem:[#allocation2 + $0x778] sm:$0xff]
    %v2306 = vld [vmem:[#allocation2 + $0x780] sm:$0xff]
    %v2307 = vld [vmem:[#allocation2 + $0x788] sm:$0xff]
    %v2308 = vld [vmem:[#allocation2 + $0x790] sm:$0xff]
    %v2309 = vld [vmem:[#allocation2 + $0x798] sm:$0xff]
    %v2310 = vld [vmem:[#allocation2 + $0x7a0] sm:$0xff]
    %v2311 = vld [vmem:[#allocation2 + $0x7a8] sm:$0xff]
    %v2312 = vld [vmem:[#allocation2 + $0x7b0] sm:$0xff]
    %v2313 = vld [vmem:[#allocation2 + $0x7b8] sm:$0xff]
    %v2314 = vld [vmem:[#allocation2 + $0x7c0] sm:$0xff]
    %v2315 = vld [vmem:[#allocation2 + $0x7c8] sm:$0xff]
    %v2316 = vld [vmem:[#allocation2 + $0x7d0] sm:$0xff]
    %v2317 = vld [vmem:[#allocation2 + $0x7d8] sm:$0xff]
    %v2318 = vld [vmem:[#allocation2 + $0x7e0] sm:$0xff]
    %v2319 = vld [vmem:[#allocation2 + $0x7e8] sm:$0xff]
    %v2320 = vld [vmem:[#allocation2 + $0x7f0] sm:$0xff]
    %v2321 = vld [vmem:[#allocation2 + $0x7f8] sm:$0xff]
    %v2322 = vld [vmem:[#allocation2 + $0x800] sm:$0xff]
    %v2323 = vld [vmem:[#allocation2 + $0x808] sm:$0xff]
    %v2324 = vld [vmem:[#allocation2 + $0x810] sm:$0xff]
    %v2325 = vld [vmem:[#allocation2 + $0x818] sm:$0xff]
    %v2326 = vld [vmem:[#allocation2 + $0x820] sm:$0xff]
    %v2327 = vld [vmem:[#allocation2 + $0x828] sm:$0xff]
    %v2328 = vld [vmem:[#allocation2 + $0x830] sm:$0xff]
    %v2329 = vld [vmem:[#allocation2 + $0x838] sm:$0xff]
    %v2330 = vld [vmem:[#allocation2 + $0x840] sm:$0xff]
    %v2331 = vld [vmem:[#allocation2 + $0x848] sm:$0xff]
    %v2332 = vld [vmem:[#allocation2 + $0x850] sm:$0xff]
    %v2333 = vld [vmem:[#allocation2 + $0x858] sm:$0xff]
    %v2334 = vld [vmem:[#allocation2 + $0x860] sm:$0xff]
    %v2335 = vld [vmem:[#allocation2 + $0x868] sm:$0xff]
    %v2336 = vld [vmem:[#allocation2 + $0x870] sm:$0xff]
    %v2337 = vld [vmem:[#allocation2 + $0x878] sm:$0xff]
    %v2338 = vld [vmem:[#allocation2 + $0x880] sm:$0xff]
    %v2339 = vld [vmem:[#allocation2 + $0x888] sm:$0xff]
    %v2340 = vld [vmem:[#allocation2 + $0x890] sm:$0xff]
    %v2341 = vld [vmem:[#allocation2 + $0x898] sm:$0xff]
    %v2342 = vld [vmem:[#allocation2 + $0x8a0] sm:$0xff]
    %v2343 = vld [vmem:[#allocation2 + $0x8a8] sm:$0xff]
    %v2344 = vld [vmem:[#allocation2 + $0x8b0] sm:$0xff]
    %v2345 = vld [vmem:[#allocation2 + $0x8b8] sm:$0xff]
    %v2346 = vld [vmem:[#allocation2 + $0x8c0] sm:$0xff]
    %v2347 = vld [vmem:[#allocation2 + $0x8c8] sm:$0xff]
    %v2348 = vld [vmem:[#allocation2 + $0x8d0] sm:$0xff]
    %v2349 = vld [vmem:[#allocation2 + $0x8d8] sm:$0xff]
    %v2350 = vld [vmem:[#allocation2 + $0x8e0] sm:$0xff]
    %v2351 = vld [vmem:[#allocation2 + $0x8e8] sm:$0xff]
    %v2352 = vld [vmem:[#allocation2 + $0x8f0] sm:$0xff]
    %v2353 = vld [vmem:[#allocation2 + $0x8f8] sm:$0xff]
    %v2354 = vld [vmem:[#allocation2 + $0x900] sm:$0xff]
    %v2355 = vld [vmem:[#allocation2 + $0x908] sm:$0xff]
    %v2356 = vld [vmem:[#allocation2 + $0x910] sm:$0xff]
    %v2357 = vld [vmem:[#allocation2 + $0x918] sm:$0xff]
    %v2358 = vld [vmem:[#allocation2 + $0x920] sm:$0xff]
    %v2359 = vld [vmem:[#allocation2 + $0x928] sm:$0xff]
    %v2360 = vld [vmem:[#allocation2 + $0x930] sm:$0xff]
    %v2361 = vld [vmem:[#allocation2 + $0x938] sm:$0xff]
    %v2362 = vld [vmem:[#allocation2 + $0x940] sm:$0xff]
    %v2363 = vld [vmem:[#allocation2 + $0x948] sm:$0xff]
    %v2364 = vld [vmem:[#allocation2 + $0x950] sm:$0xff]
    %v2365 = vld [vmem:[#allocation2 + $0x958] sm:$0xff]
    %v2366 = vld [vmem:[#allocation2 + $0x960] sm:$0xff]
    %v2367 = vld [vmem:[#allocation2 + $0x968] sm:$0xff]
    %v2368 = vld [vmem:[#allocation2 + $0x970] sm:$0xff]
    %v2369 = vld [vmem:[#allocation2 + $0x978] sm:$0xff]
    %v2370 = vld [vmem:[#allocation2 + $0x980] sm:$0xff]
    %v2371 = vld [vmem:[#allocation2 + $0x988] sm:$0xff]
    %v2372 = vld [vmem:[#allocation2 + $0x990] sm:$0xff]
    %v2373 = vld [vmem:[#allocation2 + $0x998] sm:$0xff]
    %v2374 = vld [vmem:[#allocation2 + $0x9a0] sm:$0xff]
    %v2375 = vld [vmem:[#allocation2 + $0x9a8] sm:$0xff]
    %v2376 = vld [vmem:[#allocation2 + $0x9b0] sm:$0xff]
    %v2377 = vld [vmem:[#allocation2 + $0x9b8] sm:$0xff]
    %v2378 = vld [vmem:[#allocation2 + $0x9c0] sm:$0xff]
    %v2379 = vld [vmem:[#allocation2 + $0x9c8] sm:$0xff]
    %v2380 = vld [vmem:[#allocation2 + $0x9d0] sm:$0xff]
    %v2381 = vld [vmem:[#allocation2 + $0x9d8] sm:$0xff]
    %v2382 = vld [vmem:[#allocation2 + $0x9e0] sm:$0xff]
    %v2383 = vld [vmem:[#allocation2 + $0x9e8] sm:$0xff]
    %v2384 = vld [vmem:[#allocation2 + $0x9f0] sm:$0xff]
    %v2385 = vld [vmem:[#allocation2 + $0x9f8] sm:$0xff]
    %v2386 = vld [vmem:[#allocation17] sm:$0xff]
    %v2387 = vld [vmem:[#allocation17 + $0x8] sm:$0x3]
    %v2388 = vpack.c.bf16 %v1565, %v1565
    %v2389 = vpack.c.bf16 %v1566, %v1566
    %v2390 = vpack.c.bf16 %v1567, %v1567
    %v2391 = vpack.c.bf16 %v1568, %v1568
    %v2394 = vlaneseq
    %v2395 = vshrl.u32 %v2394, 7
    %v2396 = vsub.s32 0, %v2395
    %v2397 = vrot.slane %v2386, %v2396
    %v2398 = vlaneseq
    %v2399 = vshrl.u32 %v2398, 7
    %v2400 = vsub.s32 1, %v2399
    %v2401 = vrot.slane %v2386, %v2400
    %v2402 = vlaneseq
    %v2403 = vshrl.u32 %v2402, 7
    %v2404 = vsub.s32 2, %v2403
    %v2405 = vrot.slane %v2386, %v2404
    %v2406 = vlaneseq
    %v2407 = vshrl.u32 %v2406, 7
    %v2408 = vsub.s32 3, %v2407
    %v2409 = vrot.slane %v2386, %v2408
    %v2410 = vlaneseq
    %v2411 = vshrl.u32 %v2410, 7
    %v2412 = vsub.s32 4, %v2411
    %v2413 = vrot.slane %v2386, %v2412
    %v2414 = vlaneseq
    %v2415 = vshrl.u32 %v2414, 7
    %v2416 = vsub.s32 5, %v2415
    %v2417 = vrot.slane %v2386, %v2416
    %v2418 = vlaneseq
    %v2419 = vshrl.u32 %v2418, 7
    %v2420 = vsub.s32 6, %v2419
    %v2421 = vrot.slane %v2386, %v2420
    %v2422 = vlaneseq
    %v2423 = vshrl.u32 %v2422, 7
    %v2424 = vsub.s32 7, %v2423
    %v2425 = vrot.slane %v2386, %v2424
    %v2426 = vlaneseq
    %v2427 = vshrl.u32 %v2426, 7
    %v2428 = vsub.s32 0, %v2427
    %v2429 = vrot.slane %v2387, %v2428
    %v2430 = vlaneseq
    %v2431 = vshrl.u32 %v2430, 7
    %v2432 = vsub.s32 1, %v2431
    %v2433 = vrot.slane %v2387, %v2432
    %v2764 = vunpack.c.l.b16 %v2066
    %v2765 = vunpack.c.h.b16 %v2066
    %v2766 = vunpack.c.l.b16 %v2067
    %v2767 = vunpack.c.h.b16 %v2067
    %v2768 = vunpack.c.l.b16 %v2068
    %v2769 = vunpack.c.h.b16 %v2068
    %v2770 = vunpack.c.l.b16 %v2069
    %v2771 = vunpack.c.h.b16 %v2069
    %v2772 = vunpack.c.l.b16 %v2070
    %v2773 = vunpack.c.h.b16 %v2070
    %v2774 = vunpack.c.l.b16 %v2071
    %v2775 = vunpack.c.h.b16 %v2071
    %v2776 = vunpack.c.l.b16 %v2072
    %v2777 = vunpack.c.h.b16 %v2072
    %v2778 = vunpack.c.l.b16 %v2073
    %v2779 = vunpack.c.h.b16 %v2073
    %v2780 = vunpack.c.l.b16 %v2074
    %v2781 = vunpack.c.h.b16 %v2074
    %v2782 = vunpack.c.l.b16 %v2075
    %v2783 = vunpack.c.h.b16 %v2075
    %v2784 = vunpack.c.l.b16 %v2076
    %v2785 = vunpack.c.h.b16 %v2076
    %v2786 = vunpack.c.l.b16 %v2077
    %v2787 = vunpack.c.h.b16 %v2077
    %v2788 = vunpack.c.l.b16 %v2078
    %v2789 = vunpack.c.h.b16 %v2078
    %v2790 = vunpack.c.l.b16 %v2079
    %v2791 = vunpack.c.h.b16 %v2079
    %v2792 = vunpack.c.l.b16 %v2080
    %v2793 = vunpack.c.h.b16 %v2080
    %v2794 = vunpack.c.l.b16 %v2081
    %v2795 = vunpack.c.h.b16 %v2081
    %v2796 = vunpack.c.l.b16 %v2082
    %v2797 = vunpack.c.h.b16 %v2082
    %v2798 = vunpack.c.l.b16 %v2083
    %v2799 = vunpack.c.h.b16 %v2083
    %v2800 = vunpack.c.l.b16 %v2084
    %v2801 = vunpack.c.h.b16 %v2084
    %v2802 = vunpack.c.l.b16 %v2085
    %v2803 = vunpack.c.h.b16 %v2085
    %v2804 = vunpack.c.l.b16 %v2086
    %v2805 = vunpack.c.h.b16 %v2086
    %v2806 = vunpack.c.l.b16 %v2087
    %v2807 = vunpack.c.h.b16 %v2087
    %v2808 = vunpack.c.l.b16 %v2088
    %v2809 = vunpack.c.h.b16 %v2088
    %v2810 = vunpack.c.l.b16 %v2089
    %v2811 = vunpack.c.h.b16 %v2089
    %v2812 = vunpack.c.l.b16 %v2090
    %v2813 = vunpack.c.h.b16 %v2090
    %v2814 = vunpack.c.l.b16 %v2091
    %v2815 = vunpack.c.h.b16 %v2091
    %v2816 = vunpack.c.l.b16 %v2092
    %v2817 = vunpack.c.h.b16 %v2092
    %v2818 = vunpack.c.l.b16 %v2093
    %v2819 = vunpack.c.h.b16 %v2093
    %v2820 = vunpack.c.l.b16 %v2094
    %v2821 = vunpack.c.h.b16 %v2094
    %v2822 = vunpack.c.l.b16 %v2095
    %v2823 = vunpack.c.h.b16 %v2095
    %v2824 = vunpack.c.l.b16 %v2096
    %v2825 = vunpack.c.h.b16 %v2096
    %v2826 = vunpack.c.l.b16 %v2097
    %v2827 = vunpack.c.h.b16 %v2097
    %v2828 = vunpack.c.l.b16 %v2098
    %v2829 = vunpack.c.h.b16 %v2098
    %v2830 = vunpack.c.l.b16 %v2099
    %v2831 = vunpack.c.h.b16 %v2099
    %v2832 = vunpack.c.l.b16 %v2100
    %v2833 = vunpack.c.h.b16 %v2100
    %v2834 = vunpack.c.l.b16 %v2101
    %v2835 = vunpack.c.h.b16 %v2101
    %v2836 = vunpack.c.l.b16 %v2102
    %v2837 = vunpack.c.h.b16 %v2102
    %v2838 = vunpack.c.l.b16 %v2103
    %v2839 = vunpack.c.h.b16 %v2103
    %v2840 = vunpack.c.l.b16 %v2104
    %v2841 = vunpack.c.h.b16 %v2104
    %v2842 = vunpack.c.l.b16 %v2105
    %v2843 = vunpack.c.h.b16 %v2105
    %v2844 = vunpack.c.l.b16 %v2106
    %v2845 = vunpack.c.h.b16 %v2106
    %v2846 = vunpack.c.l.b16 %v2107
    %v2847 = vunpack.c.h.b16 %v2107
    %v2848 = vunpack.c.l.b16 %v2108
    %v2849 = vunpack.c.h.b16 %v2108
    %v2850 = vunpack.c.l.b16 %v2109
    %v2851 = vunpack.c.h.b16 %v2109
    %v2852 = vunpack.c.l.b16 %v2110
    %v2853 = vunpack.c.h.b16 %v2110
    %v2854 = vunpack.c.l.b16 %v2111
    %v2855 = vunpack.c.h.b16 %v2111
    %v2856 = vunpack.c.l.b16 %v2112
    %v2857 = vunpack.c.h.b16 %v2112
    %v2858 = vunpack.c.l.b16 %v2113
    %v2859 = vunpack.c.h.b16 %v2113
    %v2860 = vunpack.c.l.b16 %v2114
    %v2861 = vunpack.c.h.b16 %v2114
    %v2862 = vunpack.c.l.b16 %v2115
    %v2863 = vunpack.c.h.b16 %v2115
    %v2864 = vunpack.c.l.b16 %v2116
    %v2865 = vunpack.c.h.b16 %v2116
    %v2866 = vunpack.c.l.b16 %v2117
    %v2867 = vunpack.c.h.b16 %v2117
    %v2868 = vunpack.c.l.b16 %v2118
    %v2869 = vunpack.c.h.b16 %v2118
    %v2870 = vunpack.c.l.b16 %v2119
    %v2871 = vunpack.c.h.b16 %v2119
    %v2872 = vunpack.c.l.b16 %v2120
    %v2873 = vunpack.c.h.b16 %v2120
    %v2874 = vunpack.c.l.b16 %v2121
    %v2875 = vunpack.c.h.b16 %v2121
    %v2876 = vunpack.c.l.b16 %v2122
    %v2877 = vunpack.c.h.b16 %v2122
    %v2878 = vunpack.c.l.b16 %v2123
    %v2879 = vunpack.c.h.b16 %v2123
    %v2880 = vunpack.c.l.b16 %v2124
    %v2881 = vunpack.c.h.b16 %v2124
    %v2882 = vunpack.c.l.b16 %v2125
    %v2883 = vunpack.c.h.b16 %v2125
    %v2884 = vunpack.c.l.b16 %v2126
    %v2885 = vunpack.c.h.b16 %v2126
    %v2886 = vunpack.c.l.b16 %v2127
    %v2887 = vunpack.c.h.b16 %v2127
    %v2888 = vunpack.c.l.b16 %v2128
    %v2889 = vunpack.c.h.b16 %v2128
    %v2890 = vunpack.c.l.b16 %v2129
    %v2891 = vunpack.c.h.b16 %v2129
    %v2892 = vunpack.c.l.b16 %v2130
    %v2893 = vunpack.c.h.b16 %v2130
    %v2894 = vunpack.c.l.b16 %v2131
    %v2895 = vunpack.c.h.b16 %v2131
    %v2896 = vunpack.c.l.b16 %v2132
    %v2897 = vunpack.c.h.b16 %v2132
    %v2898 = vunpack.c.l.b16 %v2133
    %v2899 = vunpack.c.h.b16 %v2133
    %v2900 = vunpack.c.l.b16 %v2134
    %v2901 = vunpack.c.h.b16 %v2134
    %v2902 = vunpack.c.l.b16 %v2135
    %v2903 = vunpack.c.h.b16 %v2135
    %v2904 = vunpack.c.l.b16 %v2136
    %v2905 = vunpack.c.h.b16 %v2136
    %v2906 = vunpack.c.l.b16 %v2137
    %v2907 = vunpack.c.h.b16 %v2137
    %v2908 = vunpack.c.l.b16 %v2138
    %v2909 = vunpack.c.h.b16 %v2138
    %v2910 = vunpack.c.l.b16 %v2139
    %v2911 = vunpack.c.h.b16 %v2139
    %v2912 = vunpack.c.l.b16 %v2140
    %v2913 = vunpack.c.h.b16 %v2140
    %v2914 = vunpack.c.l.b16 %v2141
    %v2915 = vunpack.c.h.b16 %v2141
    %v2916 = vunpack.c.l.b16 %v2142
    %v2917 = vunpack.c.h.b16 %v2142
    %v2918 = vunpack.c.l.b16 %v2143
    %v2919 = vunpack.c.h.b16 %v2143
    %v2920 = vunpack.c.l.b16 %v2144
    %v2921 = vunpack.c.h.b16 %v2144
    %v2922 = vunpack.c.l.b16 %v2145
    %v2923 = vunpack.c.h.b16 %v2145
    %v2924 = vunpack.c.l.b16 %v2146
    %v2925 = vunpack.c.h.b16 %v2146
    %v2926 = vunpack.c.l.b16 %v2147
    %v2927 = vunpack.c.h.b16 %v2147
    %v2928 = vunpack.c.l.b16 %v2148
    %v2929 = vunpack.c.h.b16 %v2148
    %v2930 = vunpack.c.l.b16 %v2149
    %v2931 = vunpack.c.h.b16 %v2149
    %v2932 = vunpack.c.l.b16 %v2150
    %v2933 = vunpack.c.h.b16 %v2150
    %v2934 = vunpack.c.l.b16 %v2151
    %v2935 = vunpack.c.h.b16 %v2151
    %v2936 = vunpack.c.l.b16 %v2152
    %v2937 = vunpack.c.h.b16 %v2152
    %v2938 = vunpack.c.l.b16 %v2153
    %v2939 = vunpack.c.h.b16 %v2153
    %v2940 = vunpack.c.l.b16 %v2154
    %v2941 = vunpack.c.h.b16 %v2154
    %v2942 = vunpack.c.l.b16 %v2155
    %v2943 = vunpack.c.h.b16 %v2155
    %v2944 = vunpack.c.l.b16 %v2156
    %v2945 = vunpack.c.h.b16 %v2156
    %v2946 = vunpack.c.l.b16 %v2157
    %v2947 = vunpack.c.h.b16 %v2157
    %v2948 = vunpack.c.l.b16 %v2158
    %v2949 = vunpack.c.h.b16 %v2158
    %v2950 = vunpack.c.l.b16 %v2159
    %v2951 = vunpack.c.h.b16 %v2159
    %v2952 = vunpack.c.l.b16 %v2160
    %v2953 = vunpack.c.h.b16 %v2160
    %v2954 = vunpack.c.l.b16 %v2161
    %v2955 = vunpack.c.h.b16 %v2161
    %v2956 = vunpack.c.l.b16 %v2162
    %v2957 = vunpack.c.h.b16 %v2162
    %v2958 = vunpack.c.l.b16 %v2163
    %v2959 = vunpack.c.h.b16 %v2163
    %v2960 = vunpack.c.l.b16 %v2164
    %v2961 = vunpack.c.h.b16 %v2164
    %v2962 = vunpack.c.l.b16 %v2165
    %v2963 = vunpack.c.h.b16 %v2165
    %v2964 = vunpack.c.l.b16 %v2166
    %v2965 = vunpack.c.h.b16 %v2166
    %v2966 = vunpack.c.l.b16 %v2167
    %v2967 = vunpack.c.h.b16 %v2167
    %v2968 = vunpack.c.l.b16 %v2168
    %v2969 = vunpack.c.h.b16 %v2168
    %v2970 = vunpack.c.l.b16 %v2169
    %v2971 = vunpack.c.h.b16 %v2169
    %v2972 = vunpack.c.l.b16 %v2170
    %v2973 = vunpack.c.h.b16 %v2170
    %v2974 = vunpack.c.l.b16 %v2171
    %v2975 = vunpack.c.h.b16 %v2171
    %v2976 = vunpack.c.l.b16 %v2172
    %v2977 = vunpack.c.h.b16 %v2172
    %v2978 = vunpack.c.l.b16 %v2173
    %v2979 = vunpack.c.h.b16 %v2173
    %v2980 = vunpack.c.l.b16 %v2174
    %v2981 = vunpack.c.h.b16 %v2174
    %v2982 = vunpack.c.l.b16 %v2175
    %v2983 = vunpack.c.h.b16 %v2175
    %v2984 = vunpack.c.l.b16 %v2176
    %v2985 = vunpack.c.h.b16 %v2176
    %v2986 = vunpack.c.l.b16 %v2177
    %v2987 = vunpack.c.h.b16 %v2177
    %v2988 = vunpack.c.l.b16 %v2178
    %v2989 = vunpack.c.h.b16 %v2178
    %v2990 = vunpack.c.l.b16 %v2179
    %v2991 = vunpack.c.h.b16 %v2179
    %v2992 = vunpack.c.l.b16 %v2180
    %v2993 = vunpack.c.h.b16 %v2180
    %v2994 = vunpack.c.l.b16 %v2181
    %v2995 = vunpack.c.h.b16 %v2181
    %v2996 = vunpack.c.l.b16 %v2182
    %v2997 = vunpack.c.h.b16 %v2182
    %v2998 = vunpack.c.l.b16 %v2183
    %v2999 = vunpack.c.h.b16 %v2183
    %v3000 = vunpack.c.l.b16 %v2184
    %v3001 = vunpack.c.h.b16 %v2184
    %v3002 = vunpack.c.l.b16 %v2185
    %v3003 = vunpack.c.h.b16 %v2185
    %v3004 = vunpack.c.l.b16 %v2186
    %v3005 = vunpack.c.h.b16 %v2186
    %v3006 = vunpack.c.l.b16 %v2187
    %v3007 = vunpack.c.h.b16 %v2187
    %v3008 = vunpack.c.l.b16 %v2188
    %v3009 = vunpack.c.h.b16 %v2188
    %v3010 = vunpack.c.l.b16 %v2189
    %v3011 = vunpack.c.h.b16 %v2189
    %v3012 = vunpack.c.l.b16 %v2190
    %v3013 = vunpack.c.h.b16 %v2190
    %v3014 = vunpack.c.l.b16 %v2191
    %v3015 = vunpack.c.h.b16 %v2191
    %v3016 = vunpack.c.l.b16 %v2192
    %v3017 = vunpack.c.h.b16 %v2192
    %v3018 = vunpack.c.l.b16 %v2193
    %v3019 = vunpack.c.h.b16 %v2193
    %v3020 = vunpack.c.l.b16 %v2194
    %v3021 = vunpack.c.h.b16 %v2194
    %v3022 = vunpack.c.l.b16 %v2195
    %v3023 = vunpack.c.h.b16 %v2195
    %v3024 = vunpack.c.l.b16 %v2196
    %v3025 = vunpack.c.h.b16 %v2196
    %v3026 = vunpack.c.l.b16 %v2197
    %v3027 = vunpack.c.h.b16 %v2197
    %v3028 = vunpack.c.l.b16 %v2198
    %v3029 = vunpack.c.h.b16 %v2198
    %v3030 = vunpack.c.l.b16 %v2199
    %v3031 = vunpack.c.h.b16 %v2199
    %v3032 = vunpack.c.l.b16 %v2200
    %v3033 = vunpack.c.h.b16 %v2200
    %v3034 = vunpack.c.l.b16 %v2201
    %v3035 = vunpack.c.h.b16 %v2201
    %v3036 = vunpack.c.l.b16 %v2202
    %v3037 = vunpack.c.h.b16 %v2202
    %v3038 = vunpack.c.l.b16 %v2203
    %v3039 = vunpack.c.h.b16 %v2203
    %v3040 = vunpack.c.l.b16 %v2204
    %v3041 = vunpack.c.h.b16 %v2204
    %v3042 = vunpack.c.l.b16 %v2205
    %v3043 = vunpack.c.h.b16 %v2205
    %v3044 = vunpack.c.l.b16 %v2206
    %v3045 = vunpack.c.h.b16 %v2206
    %v3046 = vunpack.c.l.b16 %v2207
    %v3047 = vunpack.c.h.b16 %v2207
    %v3048 = vunpack.c.l.b16 %v2208
    %v3049 = vunpack.c.h.b16 %v2208
    %v3050 = vunpack.c.l.b16 %v2209
    %v3051 = vunpack.c.h.b16 %v2209
    %v3052 = vunpack.c.l.b16 %v2210
    %v3053 = vunpack.c.h.b16 %v2210
    %v3054 = vunpack.c.l.b16 %v2211
    %v3055 = vunpack.c.h.b16 %v2211
    %v3056 = vunpack.c.l.b16 %v2212
    %v3057 = vunpack.c.h.b16 %v2212
    %v3058 = vunpack.c.l.b16 %v2213
    %v3059 = vunpack.c.h.b16 %v2213
    %v3060 = vunpack.c.l.b16 %v2214
    %v3061 = vunpack.c.h.b16 %v2214
    %v3062 = vunpack.c.l.b16 %v2215
    %v3063 = vunpack.c.h.b16 %v2215
    %v3064 = vunpack.c.l.b16 %v2216
    %v3065 = vunpack.c.h.b16 %v2216
    %v3066 = vunpack.c.l.b16 %v2217
    %v3067 = vunpack.c.h.b16 %v2217
    %v3068 = vunpack.c.l.b16 %v2218
    %v3069 = vunpack.c.h.b16 %v2218
    %v3070 = vunpack.c.l.b16 %v2219
    %v3071 = vunpack.c.h.b16 %v2219
    %v3072 = vunpack.c.l.b16 %v2220
    %v3073 = vunpack.c.h.b16 %v2220
    %v3074 = vunpack.c.l.b16 %v2221
    %v3075 = vunpack.c.h.b16 %v2221
    %v3076 = vunpack.c.l.b16 %v2222
    %v3077 = vunpack.c.h.b16 %v2222
    %v3078 = vunpack.c.l.b16 %v2223
    %v3079 = vunpack.c.h.b16 %v2223
    %v3080 = vunpack.c.l.b16 %v2224
    %v3081 = vunpack.c.h.b16 %v2224
    %v3082 = vunpack.c.l.b16 %v2225
    %v3083 = vunpack.c.h.b16 %v2225
    %v3084 = vunpack.c.l.b16 %v2226
    %v3085 = vunpack.c.h.b16 %v2226
    %v3086 = vunpack.c.l.b16 %v2227
    %v3087 = vunpack.c.h.b16 %v2227
    %v3088 = vunpack.c.l.b16 %v2228
    %v3089 = vunpack.c.h.b16 %v2228
    %v3090 = vunpack.c.l.b16 %v2229
    %v3091 = vunpack.c.h.b16 %v2229
    %v3092 = vunpack.c.l.b16 %v2230
    %v3093 = vunpack.c.h.b16 %v2230
    %v3094 = vunpack.c.l.b16 %v2231
    %v3095 = vunpack.c.h.b16 %v2231
    %v3096 = vunpack.c.l.b16 %v2232
    %v3097 = vunpack.c.h.b16 %v2232
    %v3098 = vunpack.c.l.b16 %v2233
    %v3099 = vunpack.c.h.b16 %v2233
    %v3100 = vunpack.c.l.b16 %v2234
    %v3101 = vunpack.c.h.b16 %v2234
    %v3102 = vunpack.c.l.b16 %v2235
    %v3103 = vunpack.c.h.b16 %v2235
    %v3104 = vunpack.c.l.b16 %v2236
    %v3105 = vunpack.c.h.b16 %v2236
    %v3106 = vunpack.c.l.b16 %v2237
    %v3107 = vunpack.c.h.b16 %v2237
    %v3108 = vunpack.c.l.b16 %v2238
    %v3109 = vunpack.c.h.b16 %v2238
    %v3110 = vunpack.c.l.b16 %v2239
    %v3111 = vunpack.c.h.b16 %v2239
    %v3112 = vunpack.c.l.b16 %v2240
    %v3113 = vunpack.c.h.b16 %v2240
    %v3114 = vunpack.c.l.b16 %v2241
    %v3115 = vunpack.c.h.b16 %v2241
    %v3116 = vunpack.c.l.b16 %v2242
    %v3117 = vunpack.c.h.b16 %v2242
    %v3118 = vunpack.c.l.b16 %v2243
    %v3119 = vunpack.c.h.b16 %v2243
    %v3120 = vunpack.c.l.b16 %v2244
    %v3121 = vunpack.c.h.b16 %v2244
    %v3122 = vunpack.c.l.b16 %v2245
    %v3123 = vunpack.c.h.b16 %v2245
    %v3124 = vunpack.c.l.b16 %v2246
    %v3125 = vunpack.c.h.b16 %v2246
    %v3126 = vunpack.c.l.b16 %v2247
    %v3127 = vunpack.c.h.b16 %v2247
    %v3128 = vunpack.c.l.b16 %v2248
    %v3129 = vunpack.c.h.b16 %v2248
    %v3130 = vunpack.c.l.b16 %v2249
    %v3131 = vunpack.c.h.b16 %v2249
    %v3132 = vunpack.c.l.b16 %v2250
    %v3133 = vunpack.c.h.b16 %v2250
    %v3134 = vunpack.c.l.b16 %v2251
    %v3135 = vunpack.c.h.b16 %v2251
    %v3136 = vunpack.c.l.b16 %v2252
    %v3137 = vunpack.c.h.b16 %v2252
    %v3138 = vunpack.c.l.b16 %v2253
    %v3139 = vunpack.c.h.b16 %v2253
    %v3140 = vunpack.c.l.b16 %v2254
    %v3141 = vunpack.c.h.b16 %v2254
    %v3142 = vunpack.c.l.b16 %v2255
    %v3143 = vunpack.c.h.b16 %v2255
    %v3144 = vunpack.c.l.b16 %v2256
    %v3145 = vunpack.c.h.b16 %v2256
    %v3146 = vunpack.c.l.b16 %v2257
    %v3147 = vunpack.c.h.b16 %v2257
    %v3148 = vunpack.c.l.b16 %v2258
    %v3149 = vunpack.c.h.b16 %v2258
    %v3150 = vunpack.c.l.b16 %v2259
    %v3151 = vunpack.c.h.b16 %v2259
    %v3152 = vunpack.c.l.b16 %v2260
    %v3153 = vunpack.c.h.b16 %v2260
    %v3154 = vunpack.c.l.b16 %v2261
    %v3155 = vunpack.c.h.b16 %v2261
    %v3156 = vunpack.c.l.b16 %v2262
    %v3157 = vunpack.c.h.b16 %v2262
    %v3158 = vunpack.c.l.b16 %v2263
    %v3159 = vunpack.c.h.b16 %v2263
    %v3160 = vunpack.c.l.b16 %v2264
    %v3161 = vunpack.c.h.b16 %v2264
    %v3162 = vunpack.c.l.b16 %v2265
    %v3163 = vunpack.c.h.b16 %v2265
    %v3164 = vunpack.c.l.b16 %v2266
    %v3165 = vunpack.c.h.b16 %v2266
    %v3166 = vunpack.c.l.b16 %v2267
    %v3167 = vunpack.c.h.b16 %v2267
    %v3168 = vunpack.c.l.b16 %v2268
    %v3169 = vunpack.c.h.b16 %v2268
    %v3170 = vunpack.c.l.b16 %v2269
    %v3171 = vunpack.c.h.b16 %v2269
    %v3172 = vunpack.c.l.b16 %v2270
    %v3173 = vunpack.c.h.b16 %v2270
    %v3174 = vunpack.c.l.b16 %v2271
    %v3175 = vunpack.c.h.b16 %v2271
    %v3176 = vunpack.c.l.b16 %v2272
    %v3177 = vunpack.c.h.b16 %v2272
    %v3178 = vunpack.c.l.b16 %v2273
    %v3179 = vunpack.c.h.b16 %v2273
    %v3180 = vunpack.c.l.b16 %v2274
    %v3181 = vunpack.c.h.b16 %v2274
    %v3182 = vunpack.c.l.b16 %v2275
    %v3183 = vunpack.c.h.b16 %v2275
    %v3184 = vunpack.c.l.b16 %v2276
    %v3185 = vunpack.c.h.b16 %v2276
    %v3186 = vunpack.c.l.b16 %v2277
    %v3187 = vunpack.c.h.b16 %v2277
    %v3188 = vunpack.c.l.b16 %v2278
    %v3189 = vunpack.c.h.b16 %v2278
    %v3190 = vunpack.c.l.b16 %v2279
    %v3191 = vunpack.c.h.b16 %v2279
    %v3192 = vunpack.c.l.b16 %v2280
    %v3193 = vunpack.c.h.b16 %v2280
    %v3194 = vunpack.c.l.b16 %v2281
    %v3195 = vunpack.c.h.b16 %v2281
    %v3196 = vunpack.c.l.b16 %v2282
    %v3197 = vunpack.c.h.b16 %v2282
    %v3198 = vunpack.c.l.b16 %v2283
    %v3199 = vunpack.c.h.b16 %v2283
    %v3200 = vunpack.c.l.b16 %v2284
    %v3201 = vunpack.c.h.b16 %v2284
    %v3202 = vunpack.c.l.b16 %v2285
    %v3203 = vunpack.c.h.b16 %v2285
    %v3204 = vunpack.c.l.b16 %v2286
    %v3205 = vunpack.c.h.b16 %v2286
    %v3206 = vunpack.c.l.b16 %v2287
    %v3207 = vunpack.c.h.b16 %v2287
    %v3208 = vunpack.c.l.b16 %v2288
    %v3209 = vunpack.c.h.b16 %v2288
    %v3210 = vunpack.c.l.b16 %v2289
    %v3211 = vunpack.c.h.b16 %v2289
    %v3212 = vunpack.c.l.b16 %v2290
    %v3213 = vunpack.c.h.b16 %v2290
    %v3214 = vunpack.c.l.b16 %v2291
    %v3215 = vunpack.c.h.b16 %v2291
    %v3216 = vunpack.c.l.b16 %v2292
    %v3217 = vunpack.c.h.b16 %v2292
    %v3218 = vunpack.c.l.b16 %v2293
    %v3219 = vunpack.c.h.b16 %v2293
    %v3220 = vunpack.c.l.b16 %v2294
    %v3221 = vunpack.c.h.b16 %v2294
    %v3222 = vunpack.c.l.b16 %v2295
    %v3223 = vunpack.c.h.b16 %v2295
    %v3224 = vunpack.c.l.b16 %v2296
    %v3225 = vunpack.c.h.b16 %v2296
    %v3226 = vunpack.c.l.b16 %v2297
    %v3227 = vunpack.c.h.b16 %v2297
    %v3228 = vunpack.c.l.b16 %v2298
    %v3229 = vunpack.c.h.b16 %v2298
    %v3230 = vunpack.c.l.b16 %v2299
    %v3231 = vunpack.c.h.b16 %v2299
    %v3232 = vunpack.c.l.b16 %v2300
    %v3233 = vunpack.c.h.b16 %v2300
    %v3234 = vunpack.c.l.b16 %v2301
    %v3235 = vunpack.c.h.b16 %v2301
    %v3236 = vunpack.c.l.b16 %v2302
    %v3237 = vunpack.c.h.b16 %v2302
    %v3238 = vunpack.c.l.b16 %v2303
    %v3239 = vunpack.c.h.b16 %v2303
    %v3240 = vunpack.c.l.b16 %v2304
    %v3241 = vunpack.c.h.b16 %v2304
    %v3242 = vunpack.c.l.b16 %v2305
    %v3243 = vunpack.c.h.b16 %v2305
    %v3244 = vunpack.c.l.b16 %v2306
    %v3245 = vunpack.c.h.b16 %v2306
    %v3246 = vunpack.c.l.b16 %v2307
    %v3247 = vunpack.c.h.b16 %v2307
    %v3248 = vunpack.c.l.b16 %v2308
    %v3249 = vunpack.c.h.b16 %v2308
    %v3250 = vunpack.c.l.b16 %v2309
    %v3251 = vunpack.c.h.b16 %v2309
    %v3252 = vunpack.c.l.b16 %v2310
    %v3253 = vunpack.c.h.b16 %v2310
    %v3254 = vunpack.c.l.b16 %v2311
    %v3255 = vunpack.c.h.b16 %v2311
    %v3256 = vunpack.c.l.b16 %v2312
    %v3257 = vunpack.c.h.b16 %v2312
    %v3258 = vunpack.c.l.b16 %v2313
    %v3259 = vunpack.c.h.b16 %v2313
    %v3260 = vunpack.c.l.b16 %v2314
    %v3261 = vunpack.c.h.b16 %v2314
    %v3262 = vunpack.c.l.b16 %v2315
    %v3263 = vunpack.c.h.b16 %v2315
    %v3264 = vunpack.c.l.b16 %v2316
    %v3265 = vunpack.c.h.b16 %v2316
    %v3266 = vunpack.c.l.b16 %v2317
    %v3267 = vunpack.c.h.b16 %v2317
    %v3268 = vunpack.c.l.b16 %v2318
    %v3269 = vunpack.c.h.b16 %v2318
    %v3270 = vunpack.c.l.b16 %v2319
    %v3271 = vunpack.c.h.b16 %v2319
    %v3272 = vunpack.c.l.b16 %v2320
    %v3273 = vunpack.c.h.b16 %v2320
    %v3274 = vunpack.c.l.b16 %v2321
    %v3275 = vunpack.c.h.b16 %v2321
    %v3276 = vunpack.c.l.b16 %v2322
    %v3277 = vunpack.c.h.b16 %v2322
    %v3278 = vunpack.c.l.b16 %v2323
    %v3279 = vunpack.c.h.b16 %v2323
    %v3280 = vunpack.c.l.b16 %v2324
    %v3281 = vunpack.c.h.b16 %v2324
    %v3282 = vunpack.c.l.b16 %v2325
    %v3283 = vunpack.c.h.b16 %v2325
    %v3284 = vunpack.c.l.b16 %v2326
    %v3285 = vunpack.c.h.b16 %v2326
    %v3286 = vunpack.c.l.b16 %v2327
    %v3287 = vunpack.c.h.b16 %v2327
    %v3288 = vunpack.c.l.b16 %v2328
    %v3289 = vunpack.c.h.b16 %v2328
    %v3290 = vunpack.c.l.b16 %v2329
    %v3291 = vunpack.c.h.b16 %v2329
    %v3292 = vunpack.c.l.b16 %v2330
    %v3293 = vunpack.c.h.b16 %v2330
    %v3294 = vunpack.c.l.b16 %v2331
    %v3295 = vunpack.c.h.b16 %v2331
    %v3296 = vunpack.c.l.b16 %v2332
    %v3297 = vunpack.c.h.b16 %v2332
    %v3298 = vunpack.c.l.b16 %v2333
    %v3299 = vunpack.c.h.b16 %v2333
    %v3300 = vunpack.c.l.b16 %v2334
    %v3301 = vunpack.c.h.b16 %v2334
    %v3302 = vunpack.c.l.b16 %v2335
    %v3303 = vunpack.c.h.b16 %v2335
    %v3304 = vunpack.c.l.b16 %v2336
    %v3305 = vunpack.c.h.b16 %v2336
    %v3306 = vunpack.c.l.b16 %v2337
    %v3307 = vunpack.c.h.b16 %v2337
    %v3308 = vunpack.c.l.b16 %v2338
    %v3309 = vunpack.c.h.b16 %v2338
    %v3310 = vunpack.c.l.b16 %v2339
    %v3311 = vunpack.c.h.b16 %v2339
    %v3312 = vunpack.c.l.b16 %v2340
    %v3313 = vunpack.c.h.b16 %v2340
    %v3314 = vunpack.c.l.b16 %v2341
    %v3315 = vunpack.c.h.b16 %v2341
    %v3316 = vunpack.c.l.b16 %v2342
    %v3317 = vunpack.c.h.b16 %v2342
    %v3318 = vunpack.c.l.b16 %v2343
    %v3319 = vunpack.c.h.b16 %v2343
    %v3320 = vunpack.c.l.b16 %v2344
    %v3321 = vunpack.c.h.b16 %v2344
    %v3322 = vunpack.c.l.b16 %v2345
    %v3323 = vunpack.c.h.b16 %v2345
    %v3324 = vunpack.c.l.b16 %v2346
    %v3325 = vunpack.c.h.b16 %v2346
    %v3326 = vunpack.c.l.b16 %v2347
    %v3327 = vunpack.c.h.b16 %v2347
    %v3328 = vunpack.c.l.b16 %v2348
    %v3329 = vunpack.c.h.b16 %v2348
    %v3330 = vunpack.c.l.b16 %v2349
    %v3331 = vunpack.c.h.b16 %v2349
    %v3332 = vunpack.c.l.b16 %v2350
    %v3333 = vunpack.c.h.b16 %v2350
    %v3334 = vunpack.c.l.b16 %v2351
    %v3335 = vunpack.c.h.b16 %v2351
    %v3336 = vunpack.c.l.b16 %v2352
    %v3337 = vunpack.c.h.b16 %v2352
    %v3338 = vunpack.c.l.b16 %v2353
    %v3339 = vunpack.c.h.b16 %v2353
    %v3340 = vunpack.c.l.b16 %v2354
    %v3341 = vunpack.c.h.b16 %v2354
    %v3342 = vunpack.c.l.b16 %v2355
    %v3343 = vunpack.c.h.b16 %v2355
    %v3344 = vunpack.c.l.b16 %v2356
    %v3345 = vunpack.c.h.b16 %v2356
    %v3346 = vunpack.c.l.b16 %v2357
    %v3347 = vunpack.c.h.b16 %v2357
    %v3348 = vunpack.c.l.b16 %v2358
    %v3349 = vunpack.c.h.b16 %v2358
    %v3350 = vunpack.c.l.b16 %v2359
    %v3351 = vunpack.c.h.b16 %v2359
    %v3352 = vunpack.c.l.b16 %v2360
    %v3353 = vunpack.c.h.b16 %v2360
    %v3354 = vunpack.c.l.b16 %v2361
    %v3355 = vunpack.c.h.b16 %v2361
    %v3356 = vunpack.c.l.b16 %v2362
    %v3357 = vunpack.c.h.b16 %v2362
    %v3358 = vunpack.c.l.b16 %v2363
    %v3359 = vunpack.c.h.b16 %v2363
    %v3360 = vunpack.c.l.b16 %v2364
    %v3361 = vunpack.c.h.b16 %v2364
    %v3362 = vunpack.c.l.b16 %v2365
    %v3363 = vunpack.c.h.b16 %v2365
    %v3364 = vunpack.c.l.b16 %v2366
    %v3365 = vunpack.c.h.b16 %v2366
    %v3366 = vunpack.c.l.b16 %v2367
    %v3367 = vunpack.c.h.b16 %v2367
    %v3368 = vunpack.c.l.b16 %v2368
    %v3369 = vunpack.c.h.b16 %v2368
    %v3370 = vunpack.c.l.b16 %v2369
    %v3371 = vunpack.c.h.b16 %v2369
    %v3372 = vunpack.c.l.b16 %v2370
    %v3373 = vunpack.c.h.b16 %v2370
    %v3374 = vunpack.c.l.b16 %v2371
    %v3375 = vunpack.c.h.b16 %v2371
    %v3376 = vunpack.c.l.b16 %v2372
    %v3377 = vunpack.c.h.b16 %v2372
    %v3378 = vunpack.c.l.b16 %v2373
    %v3379 = vunpack.c.h.b16 %v2373
    %v3380 = vunpack.c.l.b16 %v2374
    %v3381 = vunpack.c.h.b16 %v2374
    %v3382 = vunpack.c.l.b16 %v2375
    %v3383 = vunpack.c.h.b16 %v2375
    %v3384 = vunpack.c.l.b16 %v2376
    %v3385 = vunpack.c.h.b16 %v2376
    %v3386 = vunpack.c.l.b16 %v2377
    %v3387 = vunpack.c.h.b16 %v2377
    %v3388 = vunpack.c.l.b16 %v2378
    %v3389 = vunpack.c.h.b16 %v2378
    %v3390 = vunpack.c.l.b16 %v2379
    %v3391 = vunpack.c.h.b16 %v2379
    %v3392 = vunpack.c.l.b16 %v2380
    %v3393 = vunpack.c.h.b16 %v2380
    %v3394 = vunpack.c.l.b16 %v2381
    %v3395 = vunpack.c.h.b16 %v2381
    %v3396 = vunpack.c.l.b16 %v2382
    %v3397 = vunpack.c.h.b16 %v2382
    %v3398 = vunpack.c.l.b16 %v2383
    %v3399 = vunpack.c.h.b16 %v2383
    %v3400 = vunpack.c.l.b16 %v2384
    %v3401 = vunpack.c.h.b16 %v2384
    %v3402 = vunpack.c.l.b16 %v2385
    %v3403 = vunpack.c.h.b16 %v2385
    %v3404 = vpack.c.b16 %v2774, %v2764
    %v3405 = vpack.c.b16 %v2775, %v2765
    %v3406 = vpack.c.b16 %v2776, %v2766
    %v3407 = vpack.c.b16 %v2777, %v2767
    %v3408 = vpack.c.b16 %v2778, %v2768
    %v3409 = vpack.c.b16 %v2779, %v2769
    %v3410 = vpack.c.b16 %v2780, %v2770
    %v3411 = vpack.c.b16 %v2781, %v2771
    %v3412 = vpack.c.b16 %v2782, %v2772
    %v3413 = vpack.c.b16 %v2783, %v2773
    %v3414 = vpack.c.b16 %v2794, %v2784
    %v3415 = vpack.c.b16 %v2795, %v2785
    %v3416 = vpack.c.b16 %v2796, %v2786
    %v3417 = vpack.c.b16 %v2797, %v2787
    %v3418 = vpack.c.b16 %v2798, %v2788
    %v3419 = vpack.c.b16 %v2799, %v2789
    %v3420 = vpack.c.b16 %v2800, %v2790
    %v3421 = vpack.c.b16 %v2801, %v2791
    %v3422 = vpack.c.b16 %v2802, %v2792
    %v3423 = vpack.c.b16 %v2803, %v2793
    %v3424 = vpack.c.b16 %v2814, %v2804
    %v3425 = vpack.c.b16 %v2815, %v2805
    %v3426 = vpack.c.b16 %v2816, %v2806
    %v3427 = vpack.c.b16 %v2817, %v2807
    %v3428 = vpack.c.b16 %v2818, %v2808
    %v3429 = vpack.c.b16 %v2819, %v2809
    %v3430 = vpack.c.b16 %v2820, %v2810
    %v3431 = vpack.c.b16 %v2821, %v2811
    %v3432 = vpack.c.b16 %v2822, %v2812
    %v3433 = vpack.c.b16 %v2823, %v2813
    %v3434 = vpack.c.b16 %v2834, %v2824
    %v3435 = vpack.c.b16 %v2835, %v2825
    %v3436 = vpack.c.b16 %v2836, %v2826
    %v3437 = vpack.c.b16 %v2837, %v2827
    %v3438 = vpack.c.b16 %v2838, %v2828
    %v3439 = vpack.c.b16 %v2839, %v2829
    %v3440 = vpack.c.b16 %v2840, %v2830
    %v3441 = vpack.c.b16 %v2841, %v2831
    %v3442 = vpack.c.b16 %v2842, %v2832
    %v3443 = vpack.c.b16 %v2843, %v2833
    %v3444 = vpack.c.b16 %v2854, %v2844
    %v3445 = vpack.c.b16 %v2855, %v2845
    %v3446 = vpack.c.b16 %v2856, %v2846
    %v3447 = vpack.c.b16 %v2857, %v2847
    %v3448 = vpack.c.b16 %v2858, %v2848
    %v3449 = vpack.c.b16 %v2859, %v2849
    %v3450 = vpack.c.b16 %v2860, %v2850
    %v3451 = vpack.c.b16 %v2861, %v2851
    %v3452 = vpack.c.b16 %v2862, %v2852
    %v3453 = vpack.c.b16 %v2863, %v2853
    %v3454 = vpack.c.b16 %v2874, %v2864
    %v3455 = vpack.c.b16 %v2875, %v2865
    %v3456 = vpack.c.b16 %v2876, %v2866
    %v3457 = vpack.c.b16 %v2877, %v2867
    %v3458 = vpack.c.b16 %v2878, %v2868
    %v3459 = vpack.c.b16 %v2879, %v2869
    %v3460 = vpack.c.b16 %v2880, %v2870
    %v3461 = vpack.c.b16 %v2881, %v2871
    %v3462 = vpack.c.b16 %v2882, %v2872
    %v3463 = vpack.c.b16 %v2883, %v2873
    %v3464 = vpack.c.b16 %v2894, %v2884
    %v3465 = vpack.c.b16 %v2895, %v2885
    %v3466 = vpack.c.b16 %v2896, %v2886
    %v3467 = vpack.c.b16 %v2897, %v2887
    %v3468 = vpack.c.b16 %v2898, %v2888
    %v3469 = vpack.c.b16 %v2899, %v2889
    %v3470 = vpack.c.b16 %v2900, %v2890
    %v3471 = vpack.c.b16 %v2901, %v2891
    %v3472 = vpack.c.b16 %v2902, %v2892
    %v3473 = vpack.c.b16 %v2903, %v2893
    %v3474 = vpack.c.b16 %v2914, %v2904
    %v3475 = vpack.c.b16 %v2915, %v2905
    %v3476 = vpack.c.b16 %v2916, %v2906
    %v3477 = vpack.c.b16 %v2917, %v2907
    %v3478 = vpack.c.b16 %v2918, %v2908
    %v3479 = vpack.c.b16 %v2919, %v2909
    %v3480 = vpack.c.b16 %v2920, %v2910
    %v3481 = vpack.c.b16 %v2921, %v2911
    %v3482 = vpack.c.b16 %v2922, %v2912
    %v3483 = vpack.c.b16 %v2923, %v2913
    %v3484 = vpack.c.b16 %v2934, %v2924
    %v3485 = vpack.c.b16 %v2935, %v2925
    %v3486 = vpack.c.b16 %v2936, %v2926
    %v3487 = vpack.c.b16 %v2937, %v2927
    %v3488 = vpack.c.b16 %v2938, %v2928
    %v3489 = vpack.c.b16 %v2939, %v2929
    %v3490 = vpack.c.b16 %v2940, %v2930
    %v3491 = vpack.c.b16 %v2941, %v2931
    %v3492 = vpack.c.b16 %v2942, %v2932
    %v3493 = vpack.c.b16 %v2943, %v2933
    %v3494 = vpack.c.b16 %v2954, %v2944
    %v3495 = vpack.c.b16 %v2955, %v2945
    %v3496 = vpack.c.b16 %v2956, %v2946
    %v3497 = vpack.c.b16 %v2957, %v2947
    %v3498 = vpack.c.b16 %v2958, %v2948
    %v3499 = vpack.c.b16 %v2959, %v2949
    %v3500 = vpack.c.b16 %v2960, %v2950
    %v3501 = vpack.c.b16 %v2961, %v2951
    %v3502 = vpack.c.b16 %v2962, %v2952
    %v3503 = vpack.c.b16 %v2963, %v2953
    %v3504 = vpack.c.b16 %v2974, %v2964
    %v3505 = vpack.c.b16 %v2975, %v2965
    %v3506 = vpack.c.b16 %v2976, %v2966
    %v3507 = vpack.c.b16 %v2977, %v2967
    %v3508 = vpack.c.b16 %v2978, %v2968
    %v3509 = vpack.c.b16 %v2979, %v2969
    %v3510 = vpack.c.b16 %v2980, %v2970
    %v3511 = vpack.c.b16 %v2981, %v2971
    %v3512 = vpack.c.b16 %v2982, %v2972
    %v3513 = vpack.c.b16 %v2983, %v2973
    %v3514 = vpack.c.b16 %v2994, %v2984
    %v3515 = vpack.c.b16 %v2995, %v2985
    %v3516 = vpack.c.b16 %v2996, %v2986
    %v3517 = vpack.c.b16 %v2997, %v2987
    %v3518 = vpack.c.b16 %v2998, %v2988
    %v3519 = vpack.c.b16 %v2999, %v2989
    %v3520 = vpack.c.b16 %v3000, %v2990
    %v3521 = vpack.c.b16 %v3001, %v2991
    %v3522 = vpack.c.b16 %v3002, %v2992
    %v3523 = vpack.c.b16 %v3003, %v2993
    %v3524 = vpack.c.b16 %v3014, %v3004
    %v3525 = vpack.c.b16 %v3015, %v3005
    %v3526 = vpack.c.b16 %v3016, %v3006
    %v3527 = vpack.c.b16 %v3017, %v3007
    %v3528 = vpack.c.b16 %v3018, %v3008
    %v3529 = vpack.c.b16 %v3019, %v3009
    %v3530 = vpack.c.b16 %v3020, %v3010
    %v3531 = vpack.c.b16 %v3021, %v3011
    %v3532 = vpack.c.b16 %v3022, %v3012
    %v3533 = vpack.c.b16 %v3023, %v3013
    %v3534 = vpack.c.b16 %v3034, %v3024
    %v3535 = vpack.c.b16 %v3035, %v3025
    %v3536 = vpack.c.b16 %v3036, %v3026
    %v3537 = vpack.c.b16 %v3037, %v3027
    %v3538 = vpack.c.b16 %v3038, %v3028
    %v3539 = vpack.c.b16 %v3039, %v3029
    %v3540 = vpack.c.b16 %v3040, %v3030
    %v3541 = vpack.c.b16 %v3041, %v3031
    %v3542 = vpack.c.b16 %v3042, %v3032
    %v3543 = vpack.c.b16 %v3043, %v3033
    %v3544 = vpack.c.b16 %v3054, %v3044
    %v3545 = vpack.c.b16 %v3055, %v3045
    %v3546 = vpack.c.b16 %v3056, %v3046
    %v3547 = vpack.c.b16 %v3057, %v3047
    %v3548 = vpack.c.b16 %v3058, %v3048
    %v3549 = vpack.c.b16 %v3059, %v3049
    %v3550 = vpack.c.b16 %v3060, %v3050
    %v3551 = vpack.c.b16 %v3061, %v3051
    %v3552 = vpack.c.b16 %v3062, %v3052
    %v3553 = vpack.c.b16 %v3063, %v3053
    %v3554 = vpack.c.b16 %v3074, %v3064
    %v3555 = vpack.c.b16 %v3075, %v3065
    %v3556 = vpack.c.b16 %v3076, %v3066
    %v3557 = vpack.c.b16 %v3077, %v3067
    %v3558 = vpack.c.b16 %v3078, %v3068
    %v3559 = vpack.c.b16 %v3079, %v3069
    %v3560 = vpack.c.b16 %v3080, %v3070
    %v3561 = vpack.c.b16 %v3081, %v3071
    %v3562 = vpack.c.b16 %v3082, %v3072
    %v3563 = vpack.c.b16 %v3083, %v3073
    %v3564 = vpack.c.b16 %v3094, %v3084
    %v3565 = vpack.c.b16 %v3095, %v3085
    %v3566 = vpack.c.b16 %v3096, %v3086
    %v3567 = vpack.c.b16 %v3097, %v3087
    %v3568 = vpack.c.b16 %v3098, %v3088
    %v3569 = vpack.c.b16 %v3099, %v3089
    %v3570 = vpack.c.b16 %v3100, %v3090
    %v3571 = vpack.c.b16 %v3101, %v3091
    %v3572 = vpack.c.b16 %v3102, %v3092
    %v3573 = vpack.c.b16 %v3103, %v3093
    %v3574 = vpack.c.b16 %v3114, %v3104
    %v3575 = vpack.c.b16 %v3115, %v3105
    %v3576 = vpack.c.b16 %v3116, %v3106
    %v3577 = vpack.c.b16 %v3117, %v3107
    %v3578 = vpack.c.b16 %v3118, %v3108
    %v3579 = vpack.c.b16 %v3119, %v3109
    %v3580 = vpack.c.b16 %v3120, %v3110
    %v3581 = vpack.c.b16 %v3121, %v3111
    %v3582 = vpack.c.b16 %v3122, %v3112
    %v3583 = vpack.c.b16 %v3123, %v3113
    %v3584 = vpack.c.b16 %v3134, %v3124
    %v3585 = vpack.c.b16 %v3135, %v3125
    %v3586 = vpack.c.b16 %v3136, %v3126
    %v3587 = vpack.c.b16 %v3137, %v3127
    %v3588 = vpack.c.b16 %v3138, %v3128
    %v3589 = vpack.c.b16 %v3139, %v3129
    %v3590 = vpack.c.b16 %v3140, %v3130
    %v3591 = vpack.c.b16 %v3141, %v3131
    %v3592 = vpack.c.b16 %v3142, %v3132
    %v3593 = vpack.c.b16 %v3143, %v3133
    %v3594 = vpack.c.b16 %v3154, %v3144
    %v3595 = vpack.c.b16 %v3155, %v3145
    %v3596 = vpack.c.b16 %v3156, %v3146
    %v3597 = vpack.c.b16 %v3157, %v3147
    %v3598 = vpack.c.b16 %v3158, %v3148
    %v3599 = vpack.c.b16 %v3159, %v3149
    %v3600 = vpack.c.b16 %v3160, %v3150
    %v3601 = vpack.c.b16 %v3161, %v3151
    %v3602 = vpack.c.b16 %v3162, %v3152
    %v3603 = vpack.c.b16 %v3163, %v3153
    %v3604 = vpack.c.b16 %v3174, %v3164
    %v3605 = vpack.c.b16 %v3175, %v3165
    %v3606 = vpack.c.b16 %v3176, %v3166
    %v3607 = vpack.c.b16 %v3177, %v3167
    %v3608 = vpack.c.b16 %v3178, %v3168
    %v3609 = vpack.c.b16 %v3179, %v3169
    %v3610 = vpack.c.b16 %v3180, %v3170
    %v3611 = vpack.c.b16 %v3181, %v3171
    %v3612 = vpack.c.b16 %v3182, %v3172
    %v3613 = vpack.c.b16 %v3183, %v3173
    %v3614 = vpack.c.b16 %v3194, %v3184
    %v3615 = vpack.c.b16 %v3195, %v3185
    %v3616 = vpack.c.b16 %v3196, %v3186
    %v3617 = vpack.c.b16 %v3197, %v3187
    %v3618 = vpack.c.b16 %v3198, %v3188
    %v3619 = vpack.c.b16 %v3199, %v3189
    %v3620 = vpack.c.b16 %v3200, %v3190
    %v3621 = vpack.c.b16 %v3201, %v3191
    %v3622 = vpack.c.b16 %v3202, %v3192
    %v3623 = vpack.c.b16 %v3203, %v3193
    %v3624 = vpack.c.b16 %v3214, %v3204
    %v3625 = vpack.c.b16 %v3215, %v3205
    %v3626 = vpack.c.b16 %v3216, %v3206
    %v3627 = vpack.c.b16 %v3217, %v3207
    %v3628 = vpack.c.b16 %v3218, %v3208
    %v3629 = vpack.c.b16 %v3219, %v3209
    %v3630 = vpack.c.b16 %v3220, %v3210
    %v3631 = vpack.c.b16 %v3221, %v3211
    %v3632 = vpack.c.b16 %v3222, %v3212
    %v3633 = vpack.c.b16 %v3223, %v3213
    %v3634 = vpack.c.b16 %v3234, %v3224
    %v3635 = vpack.c.b16 %v3235, %v3225
    %v3636 = vpack.c.b16 %v3236, %v3226
    %v3637 = vpack.c.b16 %v3237, %v3227
    %v3638 = vpack.c.b16 %v3238, %v3228
    %v3639 = vpack.c.b16 %v3239, %v3229
    %v3640 = vpack.c.b16 %v3240, %v3230
    %v3641 = vpack.c.b16 %v3241, %v3231
    %v3642 = vpack.c.b16 %v3242, %v3232
    %v3643 = vpack.c.b16 %v3243, %v3233
    %v3644 = vpack.c.b16 %v3254, %v3244
    %v3645 = vpack.c.b16 %v3255, %v3245
    %v3646 = vpack.c.b16 %v3256, %v3246
    %v3647 = vpack.c.b16 %v3257, %v3247
    %v3648 = vpack.c.b16 %v3258, %v3248
    %v3649 = vpack.c.b16 %v3259, %v3249
    %v3650 = vpack.c.b16 %v3260, %v3250
    %v3651 = vpack.c.b16 %v3261, %v3251
    %v3652 = vpack.c.b16 %v3262, %v3252
    %v3653 = vpack.c.b16 %v3263, %v3253
    %v3654 = vpack.c.b16 %v3274, %v3264
    %v3655 = vpack.c.b16 %v3275, %v3265
    %v3656 = vpack.c.b16 %v3276, %v3266
    %v3657 = vpack.c.b16 %v3277, %v3267
    %v3658 = vpack.c.b16 %v3278, %v3268
    %v3659 = vpack.c.b16 %v3279, %v3269
    %v3660 = vpack.c.b16 %v3280, %v3270
    %v3661 = vpack.c.b16 %v3281, %v3271
    %v3662 = vpack.c.b16 %v3282, %v3272
    %v3663 = vpack.c.b16 %v3283, %v3273
    %v3664 = vpack.c.b16 %v3294, %v3284
    %v3665 = vpack.c.b16 %v3295, %v3285
    %v3666 = vpack.c.b16 %v3296, %v3286
    %v3667 = vpack.c.b16 %v3297, %v3287
    %v3668 = vpack.c.b16 %v3298, %v3288
    %v3669 = vpack.c.b16 %v3299, %v3289
    %v3670 = vpack.c.b16 %v3300, %v3290
    %v3671 = vpack.c.b16 %v3301, %v3291
    %v3672 = vpack.c.b16 %v3302, %v3292
    %v3673 = vpack.c.b16 %v3303, %v3293
    %v3674 = vpack.c.b16 %v3314, %v3304
    %v3675 = vpack.c.b16 %v3315, %v3305
    %v3676 = vpack.c.b16 %v3316, %v3306
    %v3677 = vpack.c.b16 %v3317, %v3307
    %v3678 = vpack.c.b16 %v3318, %v3308
    %v3679 = vpack.c.b16 %v3319, %v3309
    %v3680 = vpack.c.b16 %v3320, %v3310
    %v3681 = vpack.c.b16 %v3321, %v3311
    %v3682 = vpack.c.b16 %v3322, %v3312
    %v3683 = vpack.c.b16 %v3323, %v3313
    %v3684 = vpack.c.b16 %v3334, %v3324
    %v3685 = vpack.c.b16 %v3335, %v3325
    %v3686 = vpack.c.b16 %v3336, %v3326
    %v3687 = vpack.c.b16 %v3337, %v3327
    %v3688 = vpack.c.b16 %v3338, %v3328
    %v3689 = vpack.c.b16 %v3339, %v3329
    %v3690 = vpack.c.b16 %v3340, %v3330
    %v3691 = vpack.c.b16 %v3341, %v3331
    %v3692 = vpack.c.b16 %v3342, %v3332
    %v3693 = vpack.c.b16 %v3343, %v3333
    %v3694 = vpack.c.b16 %v3354, %v3344
    %v3695 = vpack.c.b16 %v3355, %v3345
    %v3696 = vpack.c.b16 %v3356, %v3346
    %v3697 = vpack.c.b16 %v3357, %v3347
    %v3698 = vpack.c.b16 %v3358, %v3348
    %v3699 = vpack.c.b16 %v3359, %v3349
    %v3700 = vpack.c.b16 %v3360, %v3350
    %v3701 = vpack.c.b16 %v3361, %v3351
    %v3702 = vpack.c.b16 %v3362, %v3352
    %v3703 = vpack.c.b16 %v3363, %v3353
    %v3704 = vpack.c.b16 %v3374, %v3364
    %v3705 = vpack.c.b16 %v3375, %v3365
    %v3706 = vpack.c.b16 %v3376, %v3366
    %v3707 = vpack.c.b16 %v3377, %v3367
    %v3708 = vpack.c.b16 %v3378, %v3368
    %v3709 = vpack.c.b16 %v3379, %v3369
    %v3710 = vpack.c.b16 %v3380, %v3370
    %v3711 = vpack.c.b16 %v3381, %v3371
    %v3712 = vpack.c.b16 %v3382, %v3372
    %v3713 = vpack.c.b16 %v3383, %v3373
    %v3714 = vpack.c.b16 %v3394, %v3384
    %v3715 = vpack.c.b16 %v3395, %v3385
    %v3716 = vpack.c.b16 %v3396, %v3386
    %v3717 = vpack.c.b16 %v3397, %v3387
    %v3718 = vpack.c.b16 %v3398, %v3388
    %v3719 = vpack.c.b16 %v3399, %v3389
    %v3720 = vpack.c.b16 %v3400, %v3390
    %v3721 = vpack.c.b16 %v3401, %v3391
    %v3722 = vpack.c.b16 %v3402, %v3392
    %v3723 = vpack.c.b16 %v3403, %v3393
    %4044 = vmatprep.subr.bf16.mxu0 %v3475
    %4045 = vmatpush1.bf16.msra.mxu0 %v3474
    %4046 = vmatprep.subr.bf16.mxu0 %v3465
    %4047 = vmatpush1.bf16.msra.mxu0 %v3464
    %4048 = vmatprep.subr.bf16.mxu0 %v3455
    %4049 = vmatpush1.bf16.msra.mxu0 %v3454
    %4050 = vmatprep.subr.bf16.mxu0 %v3445
    %4051 = vmatpush1.bf16.msra.mxu0 %v3444
    %4052 = vmatprep.subr.bf16.mxu0 %v3435
    %4053 = vmatpush1.bf16.msra.mxu0 %v3434
    %4054 = vmatprep.subr.bf16.mxu0 %v3425
    %4055 = vmatpush1.bf16.msra.mxu0 %v3424
    %4056 = vmatprep.subr.bf16.mxu0 %v3415
    %4057 = vmatpush1.bf16.msra.mxu0 %v3414
    %4058 = vmatprep.subr.bf16.mxu0 %v3405
    %4059 = vmatpush1.bf16.msra.mxu0 %v3404
    %4060 = vmatprep.subr.bf16.mxu0 %v3555
    %4061 = vmatpush2.bf16.msra.mxu0 %v3554
    %4062 = vmatprep.subr.bf16.mxu0 %v3545
    %4063 = vmatpush2.bf16.msra.mxu0 %v3544
    %4064 = vmatprep.subr.bf16.mxu0 %v3535
    %4065 = vmatpush2.bf16.msra.mxu0 %v3534
    %4066 = vmatprep.subr.bf16.mxu0 %v3525
    %4067 = vmatpush2.bf16.msra.mxu0 %v3524
    %4068 = vmatprep.subr.bf16.mxu0 %v3515
    %4069 = vmatpush2.bf16.msra.mxu0 %v3514
    %4070 = vmatprep.subr.bf16.mxu0 %v3505
    %4071 = vmatpush2.bf16.msra.mxu0 %v3504
    %4072 = vmatprep.subr.bf16.mxu0 %v3495
    %4073 = vmatpush2.bf16.msra.mxu0 %v3494
    %4074 = vmatprep.subr.bf16.mxu0 %v3485
    %4075 = vmatpush2.bf16.msra.mxu0 %v3484
    %4076 = vmatprep.mubr.bf16.mxu0 %v2389
    %4077 = vmatmul.mubr.bf16.gmra.mxu0 %v2388
    %v4078 = vpop.f32.mrf.mxu0
    %v4079 = vadd.f32 %v2397, %v4078
    %v4080 = vpop.f32.mrf.mxu0
    %v4081 = vadd.f32 %v2401, %v4080
    %v4082 = vpop.f32.mrf.mxu0
    %v4083 = vpop.f32.mrf.mxu0
    %4084 = vdwg.mxu0
    %4085 = vmatprep.subr.bf16.mxu0 %v3635
    %4086 = vmatpush1.bf16.msra.mxu0 %v3634
    %4087 = vmatprep.subr.bf16.mxu0 %v3625
    %4088 = vmatpush1.bf16.msra.mxu0 %v3624
    %4089 = vmatprep.subr.bf16.mxu0 %v3615
    %4090 = vmatpush1.bf16.msra.mxu0 %v3614
    %4091 = vmatprep.subr.bf16.mxu0 %v3605
    %4092 = vmatpush1.bf16.msra.mxu0 %v3604
    %4093 = vmatprep.subr.bf16.mxu0 %v3595
    %4094 = vmatpush1.bf16.msra.mxu0 %v3594
    %4095 = vmatprep.subr.bf16.mxu0 %v3585
    %4096 = vmatpush1.bf16.msra.mxu0 %v3584
    %4097 = vmatprep.subr.bf16.mxu0 %v3575
    %4098 = vmatpush1.bf16.msra.mxu0 %v3574
    %4099 = vmatprep.subr.bf16.mxu0 %v3565
    %4100 = vmatpush1.bf16.msra.mxu0 %v3564
    %4101 = vmatprep.subr.bf16.mxu0 %v3715
    %4102 = vmatpush2.bf16.msra.mxu0 %v3714
    %4103 = vmatprep.subr.bf16.mxu0 %v3705
    %4104 = vmatpush2.bf16.msra.mxu0 %v3704
    %4105 = vmatprep.subr.bf16.mxu0 %v3695
    %4106 = vmatpush2.bf16.msra.mxu0 %v3694
    %4107 = vmatprep.subr.bf16.mxu0 %v3685
    %4108 = vmatpush2.bf16.msra.mxu0 %v3684
    %4109 = vmatprep.subr.bf16.mxu0 %v3675
    %4110 = vmatpush2.bf16.msra.mxu0 %v3674
    %4111 = vmatprep.subr.bf16.mxu0 %v3665
    %4112 = vmatpush2.bf16.msra.mxu0 %v3664
    %4113 = vmatprep.subr.bf16.mxu0 %v3655
    %4114 = vmatpush2.bf16.msra.mxu0 %v3654
    %4115 = vmatprep.subr.bf16.mxu0 %v3645
    %4116 = vmatpush2.bf16.msra.mxu0 %v3644
    %4117 = vmatprep.mubr.bf16.mxu0 %v2391
    %4118 = vmatmul.mubr.bf16.gmra.mxu0 %v2390
    %v4119 = vpop.f32.mrf.mxu0
    %v4120 = vadd.f32 %v4079, %v4119
    %v4121 = vpop.f32.mrf.mxu0
    %v4122 = vadd.f32 %v4081, %v4121
    %v4123 = vpop.f32.mrf.mxu0
    %v4124 = vpop.f32.mrf.mxu0
    %4125 = vdwg.mxu0
    %4126 = vmatprep.subr.bf16.mxu0 %v3477
    %4127 = vmatpush1.bf16.msra.mxu0 %v3476
    %4128 = vmatprep.subr.bf16.mxu0 %v3467
    %4129 = vmatpush1.bf16.msra.mxu0 %v3466
    %4130 = vmatprep.subr.bf16.mxu0 %v3457
    %4131 = vmatpush1.bf16.msra.mxu0 %v3456
    %4132 = vmatprep.subr.bf16.mxu0 %v3447
    %4133 = vmatpush1.bf16.msra.mxu0 %v3446
    %4134 = vmatprep.subr.bf16.mxu0 %v3437
    %4135 = vmatpush1.bf16.msra.mxu0 %v3436
    %4136 = vmatprep.subr.bf16.mxu0 %v3427
    %4137 = vmatpush1.bf16.msra.mxu0 %v3426
    %4138 = vmatprep.subr.bf16.mxu0 %v3417
    %4139 = vmatpush1.bf16.msra.mxu0 %v3416
    %4140 = vmatprep.subr.bf16.mxu0 %v3407
    %4141 = vmatpush1.bf16.msra.mxu0 %v3406
    %4142 = vmatprep.subr.bf16.mxu0 %v3557
    %4143 = vmatpush2.bf16.msra.mxu0 %v3556
    %4144 = vmatprep.subr.bf16.mxu0 %v3547
    %4145 = vmatpush2.bf16.msra.mxu0 %v3546
    %4146 = vmatprep.subr.bf16.mxu0 %v3537
    %4147 = vmatpush2.bf16.msra.mxu0 %v3536
    %4148 = vmatprep.subr.bf16.mxu0 %v3527
    %4149 = vmatpush2.bf16.msra.mxu0 %v3526
    %4150 = vmatprep.subr.bf16.mxu0 %v3517
    %4151 = vmatpush2.bf16.msra.mxu0 %v3516
    %4152 = vmatprep.subr.bf16.mxu0 %v3507
    %4153 = vmatpush2.bf16.msra.mxu0 %v3506
    %4154 = vmatprep.subr.bf16.mxu0 %v3497
    %4155 = vmatpush2.bf16.msra.mxu0 %v3496
    %4156 = vmatprep.subr.bf16.mxu0 %v3487
    %4157 = vmatpush2.bf16.msra.mxu0 %v3486
    %4158 = vmatprep.mubr.bf16.mxu0 %v2389
    %4159 = vmatmul.mubr.bf16.gmra.mxu0 %v2388
    %v4160 = vpop.f32.mrf.mxu0
    %v4161 = vadd.f32 %v2405, %v4160
    %v4162 = vpop.f32.mrf.mxu0
    %v4163 = vadd.f32 %v2409, %v4162
    %v4164 = vpop.f32.mrf.mxu0
    %v4165 = vpop.f32.mrf.mxu0
    %4166 = vdwg.mxu0
    %4167 = vmatprep.subr.bf16.mxu0 %v3637
    %4168 = vmatpush1.bf16.msra.mxu0 %v3636
    %4169 = vmatprep.subr.bf16.mxu0 %v3627
    %4170 = vmatpush1.bf16.msra.mxu0 %v3626
    %4171 = vmatprep.subr.bf16.mxu0 %v3617
    %4172 = vmatpush1.bf16.msra.mxu0 %v3616
    %4173 = vmatprep.subr.bf16.mxu0 %v3607
    %4174 = vmatpush1.bf16.msra.mxu0 %v3606
    %4175 = vmatprep.subr.bf16.mxu0 %v3597
    %4176 = vmatpush1.bf16.msra.mxu0 %v3596
    %4177 = vmatprep.subr.bf16.mxu0 %v3587
    %4178 = vmatpush1.bf16.msra.mxu0 %v3586
    %4179 = vmatprep.subr.bf16.mxu0 %v3577
    %4180 = vmatpush1.bf16.msra.mxu0 %v3576
    %4181 = vmatprep.subr.bf16.mxu0 %v3567
    %4182 = vmatpush1.bf16.msra.mxu0 %v3566
    %4183 = vmatprep.subr.bf16.mxu0 %v3717
    %4184 = vmatpush2.bf16.msra.mxu0 %v3716
    %4185 = vmatprep.subr.bf16.mxu0 %v3707
    %4186 = vmatpush2.bf16.msra.mxu0 %v3706
    %4187 = vmatprep.subr.bf16.mxu0 %v3697
    %4188 = vmatpush2.bf16.msra.mxu0 %v3696
    %4189 = vmatprep.subr.bf16.mxu0 %v3687
    %4190 = vmatpush2.bf16.msra.mxu0 %v3686
    %4191 = vmatprep.subr.bf16.mxu0 %v3677
    %4192 = vmatpush2.bf16.msra.mxu0 %v3676
    %4193 = vmatprep.subr.bf16.mxu0 %v3667
    %4194 = vmatpush2.bf16.msra.mxu0 %v3666
    %4195 = vmatprep.subr.bf16.mxu0 %v3657
    %4196 = vmatpush2.bf16.msra.mxu0 %v3656
    %4197 = vmatprep.subr.bf16.mxu0 %v3647
    %4198 = vmatpush2.bf16.msra.mxu0 %v3646
    %4199 = vmatprep.mubr.bf16.mxu0 %v2391
    %4200 = vmatmul.mubr.bf16.gmra.mxu0 %v2390
    %v4201 = vpop.f32.mrf.mxu0
    %v4202 = vadd.f32 %v4161, %v4201
    %v4203 = vpop.f32.mrf.mxu0
    %v4204 = vadd.f32 %v4163, %v4203
    %v4205 = vpop.f32.mrf.mxu0
    %v4206 = vpop.f32.mrf.mxu0
    %4207 = vdwg.mxu0
    %4208 = vmatprep.subr.bf16.mxu0 %v3479
    %4209 = vmatpush1.bf16.msra.mxu0 %v3478
    %4210 = vmatprep.subr.bf16.mxu0 %v3469
    %4211 = vmatpush1.bf16.msra.mxu0 %v3468
    %4212 = vmatprep.subr.bf16.mxu0 %v3459
    %4213 = vmatpush1.bf16.msra.mxu0 %v3458
    %4214 = vmatprep.subr.bf16.mxu0 %v3449
    %4215 = vmatpush1.bf16.msra.mxu0 %v3448
    %4216 = vmatprep.subr.bf16.mxu0 %v3439
    %4217 = vmatpush1.bf16.msra.mxu0 %v3438
    %4218 = vmatprep.subr.bf16.mxu0 %v3429
    %4219 = vmatpush1.bf16.msra.mxu0 %v3428
    %4220 = vmatprep.subr.bf16.mxu0 %v3419
    %4221 = vmatpush1.bf16.msra.mxu0 %v3418
    %4222 = vmatprep.subr.bf16.mxu0 %v3409
    %4223 = vmatpush1.bf16.msra.mxu0 %v3408
    %4224 = vmatprep.subr.bf16.mxu0 %v3559
    %4225 = vmatpush2.bf16.msra.mxu0 %v3558
    %4226 = vmatprep.subr.bf16.mxu0 %v3549
    %4227 = vmatpush2.bf16.msra.mxu0 %v3548
    %4228 = vmatprep.subr.bf16.mxu0 %v3539
    %4229 = vmatpush2.bf16.msra.mxu0 %v3538
    %4230 = vmatprep.subr.bf16.mxu0 %v3529
    %4231 = vmatpush2.bf16.msra.mxu0 %v3528
    %4232 = vmatprep.subr.bf16.mxu0 %v3519
    %4233 = vmatpush2.bf16.msra.mxu0 %v3518
    %4234 = vmatprep.subr.bf16.mxu0 %v3509
    %4235 = vmatpush2.bf16.msra.mxu0 %v3508
    %4236 = vmatprep.subr.bf16.mxu0 %v3499
    %4237 = vmatpush2.bf16.msra.mxu0 %v3498
    %4238 = vmatprep.subr.bf16.mxu0 %v3489
    %4239 = vmatpush2.bf16.msra.mxu0 %v3488
    %4240 = vmatprep.mubr.bf16.mxu0 %v2389
    %4241 = vmatmul.mubr.bf16.gmra.mxu0 %v2388
    %v4242 = vpop.f32.mrf.mxu0
    %v4243 = vadd.f32 %v2413, %v4242
    %v4244 = vpop.f32.mrf.mxu0
    %v4245 = vadd.f32 %v2417, %v4244
    %v4246 = vpop.f32.mrf.mxu0
    %v4247 = vpop.f32.mrf.mxu0
    %4248 = vdwg.mxu0
    %4249 = vmatprep.subr.bf16.mxu0 %v3639
    %4250 = vmatpush1.bf16.msra.mxu0 %v3638
    %4251 = vmatprep.subr.bf16.mxu0 %v3629
    %4252 = vmatpush1.bf16.msra.mxu0 %v3628
    %4253 = vmatprep.subr.bf16.mxu0 %v3619
    %4254 = vmatpush1.bf16.msra.mxu0 %v3618
    %4255 = vmatprep.subr.bf16.mxu0 %v3609
    %4256 = vmatpush1.bf16.msra.mxu0 %v3608
    %4257 = vmatprep.subr.bf16.mxu0 %v3599
    %4258 = vmatpush1.bf16.msra.mxu0 %v3598
    %4259 = vmatprep.subr.bf16.mxu0 %v3589
    %4260 = vmatpush1.bf16.msra.mxu0 %v3588
    %4261 = vmatprep.subr.bf16.mxu0 %v3579
    %4262 = vmatpush1.bf16.msra.mxu0 %v3578
    %4263 = vmatprep.subr.bf16.mxu0 %v3569
    %4264 = vmatpush1.bf16.msra.mxu0 %v3568
    %4265 = vmatprep.subr.bf16.mxu0 %v3719
    %4266 = vmatpush2.bf16.msra.mxu0 %v3718
    %4267 = vmatprep.subr.bf16.mxu0 %v3709
    %4268 = vmatpush2.bf16.msra.mxu0 %v3708
    %4269 = vmatprep.subr.bf16.mxu0 %v3699
    %4270 = vmatpush2.bf16.msra.mxu0 %v3698
    %4271 = vmatprep.subr.bf16.mxu0 %v3689
    %4272 = vmatpush2.bf16.msra.mxu0 %v3688
    %4273 = vmatprep.subr.bf16.mxu0 %v3679
    %4274 = vmatpush2.bf16.msra.mxu0 %v3678
    %4275 = vmatprep.subr.bf16.mxu0 %v3669
    %4276 = vmatpush2.bf16.msra.mxu0 %v3668
    %4277 = vmatprep.subr.bf16.mxu0 %v3659
    %4278 = vmatpush2.bf16.msra.mxu0 %v3658
    %4279 = vmatprep.subr.bf16.mxu0 %v3649
    %4280 = vmatpush2.bf16.msra.mxu0 %v3648
    %4281 = vmatprep.mubr.bf16.mxu0 %v2391
    %4282 = vmatmul.mubr.bf16.gmra.mxu0 %v2390
    %v4283 = vpop.f32.mrf.mxu0
    %v4284 = vadd.f32 %v4243, %v4283
    %v4285 = vpop.f32.mrf.mxu0
    %v4286 = vadd.f32 %v4245, %v4285
    %v4287 = vpop.f32.mrf.mxu0
    %v4288 = vpop.f32.mrf.mxu0
    %4289 = vdwg.mxu0
    %4290 = vmatprep.subr.bf16.mxu0 %v3481
    %4291 = vmatpush1.bf16.msra.mxu0 %v3480
    %4292 = vmatprep.subr.bf16.mxu0 %v3471
    %4293 = vmatpush1.bf16.msra.mxu0 %v3470
    %4294 = vmatprep.subr.bf16.mxu0 %v3461
    %4295 = vmatpush1.bf16.msra.mxu0 %v3460
    %4296 = vmatprep.subr.bf16.mxu0 %v3451
    %4297 = vmatpush1.bf16.msra.mxu0 %v3450
    %4298 = vmatprep.subr.bf16.mxu0 %v3441
    %4299 = vmatpush1.bf16.msra.mxu0 %v3440
    %4300 = vmatprep.subr.bf16.mxu0 %v3431
    %4301 = vmatpush1.bf16.msra.mxu0 %v3430
    %4302 = vmatprep.subr.bf16.mxu0 %v3421
    %4303 = vmatpush1.bf16.msra.mxu0 %v3420
    %4304 = vmatprep.subr.bf16.mxu0 %v3411
    %4305 = vmatpush1.bf16.msra.mxu0 %v3410
    %4306 = vmatprep.subr.bf16.mxu0 %v3561
    %4307 = vmatpush2.bf16.msra.mxu0 %v3560
    %4308 = vmatprep.subr.bf16.mxu0 %v3551
    %4309 = vmatpush2.bf16.msra.mxu0 %v3550
    %4310 = vmatprep.subr.bf16.mxu0 %v3541
    %4311 = vmatpush2.bf16.msra.mxu0 %v3540
    %4312 = vmatprep.subr.bf16.mxu0 %v3531
    %4313 = vmatpush2.bf16.msra.mxu0 %v3530
    %4314 = vmatprep.subr.bf16.mxu0 %v3521
    %4315 = vmatpush2.bf16.msra.mxu0 %v3520
    %4316 = vmatprep.subr.bf16.mxu0 %v3511
    %4317 = vmatpush2.bf16.msra.mxu0 %v3510
    %4318 = vmatprep.subr.bf16.mxu0 %v3501
    %4319 = vmatpush2.bf16.msra.mxu0 %v3500
    %4320 = vmatprep.subr.bf16.mxu0 %v3491
    %4321 = vmatpush2.bf16.msra.mxu0 %v3490
    %4322 = vmatprep.mubr.bf16.mxu0 %v2389
    %4323 = vmatmul.mubr.bf16.gmra.mxu0 %v2388
    %v4324 = vpop.f32.mrf.mxu0
    %v4325 = vadd.f32 %v2421, %v4324
    %v4326 = vpop.f32.mrf.mxu0
    %v4327 = vadd.f32 %v2425, %v4326
    %v4328 = vpop.f32.mrf.mxu0
    %v4329 = vpop.f32.mrf.mxu0
    %4330 = vdwg.mxu0
    %4331 = vmatprep.subr.bf16.mxu0 %v3641
    %4332 = vmatpush1.bf16.msra.mxu0 %v3640
    %4333 = vmatprep.subr.bf16.mxu0 %v3631
    %4334 = vmatpush1.bf16.msra.mxu0 %v3630
    %4335 = vmatprep.subr.bf16.mxu0 %v3621
    %4336 = vmatpush1.bf16.msra.mxu0 %v3620
    %4337 = vmatprep.subr.bf16.mxu0 %v3611
    %4338 = vmatpush1.bf16.msra.mxu0 %v3610
    %4339 = vmatprep.subr.bf16.mxu0 %v3601
    %4340 = vmatpush1.bf16.msra.mxu0 %v3600
    %4341 = vmatprep.subr.bf16.mxu0 %v3591
    %4342 = vmatpush1.bf16.msra.mxu0 %v3590
    %4343 = vmatprep.subr.bf16.mxu0 %v3581
    %4344 = vmatpush1.bf16.msra.mxu0 %v3580
    %4345 = vmatprep.subr.bf16.mxu0 %v3571
    %4346 = vmatpush1.bf16.msra.mxu0 %v3570
    %4347 = vmatprep.subr.bf16.mxu0 %v3721
    %4348 = vmatpush2.bf16.msra.mxu0 %v3720
    %4349 = vmatprep.subr.bf16.mxu0 %v3711
    %4350 = vmatpush2.bf16.msra.mxu0 %v3710
    %4351 = vmatprep.subr.bf16.mxu0 %v3701
    %4352 = vmatpush2.bf16.msra.mxu0 %v3700
    %4353 = vmatprep.subr.bf16.mxu0 %v3691
    %4354 = vmatpush2.bf16.msra.mxu0 %v3690
    %4355 = vmatprep.subr.bf16.mxu0 %v3681
    %4356 = vmatpush2.bf16.msra.mxu0 %v3680
    %4357 = vmatprep.subr.bf16.mxu0 %v3671
    %4358 = vmatpush2.bf16.msra.mxu0 %v3670
    %4359 = vmatprep.subr.bf16.mxu0 %v3661
    %4360 = vmatpush2.bf16.msra.mxu0 %v3660
    %4361 = vmatprep.subr.bf16.mxu0 %v3651
    %4362 = vmatpush2.bf16.msra.mxu0 %v3650
    %4363 = vmatprep.mubr.bf16.mxu0 %v2391
    %4364 = vmatmul.mubr.bf16.gmra.mxu0 %v2390
    %v4365 = vpop.f32.mrf.mxu0
    %v4366 = vadd.f32 %v4325, %v4365
    %v4367 = vpop.f32.mrf.mxu0
    %v4368 = vadd.f32 %v4327, %v4367
    %v4369 = vpop.f32.mrf.mxu0
    %v4370 = vpop.f32.mrf.mxu0
    %4371 = vdwg.mxu0
    %4372 = vmatprep.subr.bf16.mxu0 %v3483
    %4373 = vmatpush1.bf16.msra.mxu0 %v3482
    %4374 = vmatprep.subr.bf16.mxu0 %v3473
    %4375 = vmatpush1.bf16.msra.mxu0 %v3472
    %4376 = vmatprep.subr.bf16.mxu0 %v3463
    %4377 = vmatpush1.bf16.msra.mxu0 %v3462
    %4378 = vmatprep.subr.bf16.mxu0 %v3453
    %4379 = vmatpush1.bf16.msra.mxu0 %v3452
    %4380 = vmatprep.subr.bf16.mxu0 %v3443
    %4381 = vmatpush1.bf16.msra.mxu0 %v3442
    %4382 = vmatprep.subr.bf16.mxu0 %v3433
    %4383 = vmatpush1.bf16.msra.mxu0 %v3432
    %4384 = vmatprep.subr.bf16.mxu0 %v3423
    %4385 = vmatpush1.bf16.msra.mxu0 %v3422
    %4386 = vmatprep.subr.bf16.mxu0 %v3413
    %4387 = vmatpush1.bf16.msra.mxu0 %v3412
    %4388 = vmatprep.subr.bf16.mxu0 %v3563
    %4389 = vmatpush2.bf16.msra.mxu0 %v3562
    %4390 = vmatprep.subr.bf16.mxu0 %v3553
    %4391 = vmatpush2.bf16.msra.mxu0 %v3552
    %4392 = vmatprep.subr.bf16.mxu0 %v3543
    %4393 = vmatpush2.bf16.msra.mxu0 %v3542
    %4394 = vmatprep.subr.bf16.mxu0 %v3533
    %4395 = vmatpush2.bf16.msra.mxu0 %v3532
    %4396 = vmatprep.subr.bf16.mxu0 %v3523
    %4397 = vmatpush2.bf16.msra.mxu0 %v3522
    %4398 = vmatprep.subr.bf16.mxu0 %v3513
    %4399 = vmatpush2.bf16.msra.mxu0 %v3512
    %4400 = vmatprep.subr.bf16.mxu0 %v3503
    %4401 = vmatpush2.bf16.msra.mxu0 %v3502
    %4402 = vmatprep.subr.bf16.mxu0 %v3493
    %4403 = vmatpush2.bf16.msra.mxu0 %v3492
    %4404 = vmatprep.mubr.bf16.mxu0 %v2389
    %4405 = vmatmul.mubr.bf16.gmra.mxu0 %v2388
    %v4406 = vpop.f32.mrf.mxu0
    %v4407 = vadd.f32 %v2429, %v4406
    %v4408 = vpop.f32.mrf.mxu0
    %v4409 = vadd.f32 %v2433, %v4408
    %v4410 = vpop.f32.mrf.mxu0
    %v4411 = vpop.f32.mrf.mxu0
    %4412 = vdwg.mxu0
    %4413 = vmatprep.subr.bf16.mxu0 %v3643
    %4414 = vmatpush1.bf16.msra.mxu0 %v3642
    %4415 = vmatprep.subr.bf16.mxu0 %v3633
    %4416 = vmatpush1.bf16.msra.mxu0 %v3632
    %4417 = vmatprep.subr.bf16.mxu0 %v3623
    %4418 = vmatpush1.bf16.msra.mxu0 %v3622
    %4419 = vmatprep.subr.bf16.mxu0 %v3613
    %4420 = vmatpush1.bf16.msra.mxu0 %v3612
    %4421 = vmatprep.subr.bf16.mxu0 %v3603
    %4422 = vmatpush1.bf16.msra.mxu0 %v3602
    %4423 = vmatprep.subr.bf16.mxu0 %v3593
    %4424 = vmatpush1.bf16.msra.mxu0 %v3592
    %4425 = vmatprep.subr.bf16.mxu0 %v3583
    %4426 = vmatpush1.bf16.msra.mxu0 %v3582
    %4427 = vmatprep.subr.bf16.mxu0 %v3573
    %4428 = vmatpush1.bf16.msra.mxu0 %v3572
    %4429 = vmatprep.subr.bf16.mxu0 %v3723
    %4430 = vmatpush2.bf16.msra.mxu0 %v3722
    %4431 = vmatprep.subr.bf16.mxu0 %v3713
    %4432 = vmatpush2.bf16.msra.mxu0 %v3712
    %4433 = vmatprep.subr.bf16.mxu0 %v3703
    %4434 = vmatpush2.bf16.msra.mxu0 %v3702
    %4435 = vmatprep.subr.bf16.mxu0 %v3693
    %4436 = vmatpush2.bf16.msra.mxu0 %v3692
    %4437 = vmatprep.subr.bf16.mxu0 %v3683
    %4438 = vmatpush2.bf16.msra.mxu0 %v3682
    %4439 = vmatprep.subr.bf16.mxu0 %v3673
    %4440 = vmatpush2.bf16.msra.mxu0 %v3672
    %4441 = vmatprep.subr.bf16.mxu0 %v3663
    %4442 = vmatpush2.bf16.msra.mxu0 %v3662
    %4443 = vmatprep.subr.bf16.mxu0 %v3653
    %4444 = vmatpush2.bf16.msra.mxu0 %v3652
    %4445 = vmatprep.mubr.bf16.mxu0 %v2391
    %4446 = vmatmul.mubr.bf16.gmra.mxu0 %v2390
    %v4447 = vpop.f32.mrf.mxu0
    %v4448 = vadd.f32 %v4407, %v4447
    %v4449 = vpop.f32.mrf.mxu0
    %v4450 = vadd.f32 %v4409, %v4449
    %v4451 = vpop.f32.mrf.mxu0
    %v4452 = vpop.f32.mrf.mxu0
    %4453 = vdwg.mxu0
    %v4454 = vmax.f32 %v4120, 0.0
    %v4455 = vmax.f32 %v4122, 0.0
    %v4456 = vmax.f32 %v4202, 0.0
    %v4457 = vmax.f32 %v4204, 0.0
    %v4458 = vmax.f32 %v4284, 0.0
    %v4459 = vmax.f32 %v4286, 0.0
    %v4460 = vmax.f32 %v4366, 0.0
    %v4461 = vmax.f32 %v4368, 0.0
    %v4462 = vmax.f32 %v4448, 0.0
    %v4463 = vmax.f32 %v4450, 0.0
    %v4464 = vadd.f32 %v2052, %v4454
    %v4465 = vadd.f32 %v2053, %v4455
    %v4466 = vadd.f32 %v2054, %v4456
    %v4467 = vadd.f32 %v2055, %v4457
    %v4468 = vadd.f32 %v2056, %v4458
    %v4469 = vadd.f32 %v2057, %v4459
    %v4470 = vadd.f32 %v2058, %v4460
    %v4471 = vadd.f32 %v2059, %v4461
    %v4472 = vadd.f32 %v2060, %v4462
    %v4473 = vadd.f32 %v2061, %v4463
    %s4474 = smul.u32 4, 160
    %s4475 = smul.u32 %s4474, 10
    %s4476 = sshll.u32 %s4475, 4
    %4477 = dma.done %s206, %s4476
    %v4478 = vld [vmem:[#allocation3] sm:$0xff]
    %v4479 = vld [vmem:[#allocation3 + $0x8] sm:$0xff]
    %v4480 = vld [vmem:[#allocation3 + $0x10] sm:$0xff]
    %v4481 = vld [vmem:[#allocation3 + $0x18] sm:$0xff]
    %v4482 = vld [vmem:[#allocation3 + $0x20] sm:$0xff]
    %v4483 = vld [vmem:[#allocation3 + $0x28] sm:$0xff]
    %v4484 = vld [vmem:[#allocation3 + $0x30] sm:$0xff]
    %v4485 = vld [vmem:[#allocation3 + $0x38] sm:$0xff]
    %v4486 = vld [vmem:[#allocation3 + $0x40] sm:$0xff]
    %v4487 = vld [vmem:[#allocation3 + $0x48] sm:$0xff]
    %v4488 = vld [vmem:[#allocation3 + $0x50] sm:$0xff]
    %v4489 = vld [vmem:[#allocation3 + $0x58] sm:$0xff]
    %v4490 = vld [vmem:[#allocation3 + $0x60] sm:$0xff]
    %v4491 = vld [vmem:[#allocation3 + $0x68] sm:$0xff]
    %v4492 = vld [vmem:[#allocation3 + $0x70] sm:$0xff]
    %v4493 = vld [vmem:[#allocation3 + $0x78] sm:$0xff]
    %v4494 = vld [vmem:[#allocation3 + $0x80] sm:$0xff]
    %v4495 = vld [vmem:[#allocation3 + $0x88] sm:$0xff]
    %v4496 = vld [vmem:[#allocation3 + $0x90] sm:$0xff]
    %v4497 = vld [vmem:[#allocation3 + $0x98] sm:$0xff]
    %v4498 = vld [vmem:[#allocation3 + $0xa0] sm:$0xff]
    %v4499 = vld [vmem:[#allocation3 + $0xa8] sm:$0xff]
    %v4500 = vld [vmem:[#allocation3 + $0xb0] sm:$0xff]
    %v4501 = vld [vmem:[#allocation3 + $0xb8] sm:$0xff]
    %v4502 = vld [vmem:[#allocation3 + $0xc0] sm:$0xff]
    %v4503 = vld [vmem:[#allocation3 + $0xc8] sm:$0xff]
    %v4504 = vld [vmem:[#allocation3 + $0xd0] sm:$0xff]
    %v4505 = vld [vmem:[#allocation3 + $0xd8] sm:$0xff]
    %v4506 = vld [vmem:[#allocation3 + $0xe0] sm:$0xff]
    %v4507 = vld [vmem:[#allocation3 + $0xe8] sm:$0xff]
    %v4508 = vld [vmem:[#allocation3 + $0xf0] sm:$0xff]
    %v4509 = vld [vmem:[#allocation3 + $0xf8] sm:$0xff]
    %v4510 = vld [vmem:[#allocation3 + $0x100] sm:$0xff]
    %v4511 = vld [vmem:[#allocation3 + $0x108] sm:$0xff]
    %v4512 = vld [vmem:[#allocation3 + $0x110] sm:$0xff]
    %v4513 = vld [vmem:[#allocation3 + $0x118] sm:$0xff]
    %v4514 = vld [vmem:[#allocation3 + $0x120] sm:$0xff]
    %v4515 = vld [vmem:[#allocation3 + $0x128] sm:$0xff]
    %v4516 = vld [vmem:[#allocation3 + $0x130] sm:$0xff]
    %v4517 = vld [vmem:[#allocation3 + $0x138] sm:$0xff]
    %v4518 = vld [vmem:[#allocation3 + $0x140] sm:$0xff]
    %v4519 = vld [vmem:[#allocation3 + $0x148] sm:$0xff]
    %v4520 = vld [vmem:[#allocation3 + $0x150] sm:$0xff]
    %v4521 = vld [vmem:[#allocation3 + $0x158] sm:$0xff]
    %v4522 = vld [vmem:[#allocation3 + $0x160] sm:$0xff]
    %v4523 = vld [vmem:[#allocation3 + $0x168] sm:$0xff]
    %v4524 = vld [vmem:[#allocation3 + $0x170] sm:$0xff]
    %v4525 = vld [vmem:[#allocation3 + $0x178] sm:$0xff]
    %v4526 = vld [vmem:[#allocation3 + $0x180] sm:$0xff]
    %v4527 = vld [vmem:[#allocation3 + $0x188] sm:$0xff]
    %v4528 = vld [vmem:[#allocation3 + $0x190] sm:$0xff]
    %v4529 = vld [vmem:[#allocation3 + $0x198] sm:$0xff]
    %v4530 = vld [vmem:[#allocation3 + $0x1a0] sm:$0xff]
    %v4531 = vld [vmem:[#allocation3 + $0x1a8] sm:$0xff]
    %v4532 = vld [vmem:[#allocation3 + $0x1b0] sm:$0xff]
    %v4533 = vld [vmem:[#allocation3 + $0x1b8] sm:$0xff]
    %v4534 = vld [vmem:[#allocation3 + $0x1c0] sm:$0xff]
    %v4535 = vld [vmem:[#allocation3 + $0x1c8] sm:$0xff]
    %v4536 = vld [vmem:[#allocation3 + $0x1d0] sm:$0xff]
    %v4537 = vld [vmem:[#allocation3 + $0x1d8] sm:$0xff]
    %v4538 = vld [vmem:[#allocation3 + $0x1e0] sm:$0xff]
    %v4539 = vld [vmem:[#allocation3 + $0x1e8] sm:$0xff]
    %v4540 = vld [vmem:[#allocation3 + $0x1f0] sm:$0xff]
    %v4541 = vld [vmem:[#allocation3 + $0x1f8] sm:$0xff]
    %v4542 = vld [vmem:[#allocation3 + $0x200] sm:$0xff]
    %v4543 = vld [vmem:[#allocation3 + $0x208] sm:$0xff]
    %v4544 = vld [vmem:[#allocation3 + $0x210] sm:$0xff]
    %v4545 = vld [vmem:[#allocation3 + $0x218] sm:$0xff]
    %v4546 = vld [vmem:[#allocation3 + $0x220] sm:$0xff]
    %v4547 = vld [vmem:[#allocation3 + $0x228] sm:$0xff]
    %v4548 = vld [vmem:[#allocation3 + $0x230] sm:$0xff]
    %v4549 = vld [vmem:[#allocation3 + $0x238] sm:$0xff]
    %v4550 = vld [vmem:[#allocation3 + $0x240] sm:$0xff]
    %v4551 = vld [vmem:[#allocation3 + $0x248] sm:$0xff]
    %v4552 = vld [vmem:[#allocation3 + $0x250] sm:$0xff]
    %v4553 = vld [vmem:[#allocation3 + $0x258] sm:$0xff]
    %v4554 = vld [vmem:[#allocation3 + $0x260] sm:$0xff]
    %v4555 = vld [vmem:[#allocation3 + $0x268] sm:$0xff]
    %v4556 = vld [vmem:[#allocation3 + $0x270] sm:$0xff]
    %v4557 = vld [vmem:[#allocation3 + $0x278] sm:$0xff]
    %v4558 = vld [vmem:[#allocation3 + $0x280] sm:$0xff]
    %v4559 = vld [vmem:[#allocation3 + $0x288] sm:$0xff]
    %v4560 = vld [vmem:[#allocation3 + $0x290] sm:$0xff]
    %v4561 = vld [vmem:[#allocation3 + $0x298] sm:$0xff]
    %v4562 = vld [vmem:[#allocation3 + $0x2a0] sm:$0xff]
    %v4563 = vld [vmem:[#allocation3 + $0x2a8] sm:$0xff]
    %v4564 = vld [vmem:[#allocation3 + $0x2b0] sm:$0xff]
    %v4565 = vld [vmem:[#allocation3 + $0x2b8] sm:$0xff]
    %v4566 = vld [vmem:[#allocation3 + $0x2c0] sm:$0xff]
    %v4567 = vld [vmem:[#allocation3 + $0x2c8] sm:$0xff]
    %v4568 = vld [vmem:[#allocation3 + $0x2d0] sm:$0xff]
    %v4569 = vld [vmem:[#allocation3 + $0x2d8] sm:$0xff]
    %v4570 = vld [vmem:[#allocation3 + $0x2e0] sm:$0xff]
    %v4571 = vld [vmem:[#allocation3 + $0x2e8] sm:$0xff]
    %v4572 = vld [vmem:[#allocation3 + $0x2f0] sm:$0xff]
    %v4573 = vld [vmem:[#allocation3 + $0x2f8] sm:$0xff]
    %v4574 = vld [vmem:[#allocation3 + $0x300] sm:$0xff]
    %v4575 = vld [vmem:[#allocation3 + $0x308] sm:$0xff]
    %v4576 = vld [vmem:[#allocation3 + $0x310] sm:$0xff]
    %v4577 = vld [vmem:[#allocation3 + $0x318] sm:$0xff]
    %v4578 = vld [vmem:[#allocation3 + $0x320] sm:$0xff]
    %v4579 = vld [vmem:[#allocation3 + $0x328] sm:$0xff]
    %v4580 = vld [vmem:[#allocation3 + $0x330] sm:$0xff]
    %v4581 = vld [vmem:[#allocation3 + $0x338] sm:$0xff]
    %v4582 = vld [vmem:[#allocation3 + $0x340] sm:$0xff]
    %v4583 = vld [vmem:[#allocation3 + $0x348] sm:$0xff]
    %v4584 = vld [vmem:[#allocation3 + $0x350] sm:$0xff]
    %v4585 = vld [vmem:[#allocation3 + $0x358] sm:$0xff]
    %v4586 = vld [vmem:[#allocation3 + $0x360] sm:$0xff]
    %v4587 = vld [vmem:[#allocation3 + $0x368] sm:$0xff]
    %v4588 = vld [vmem:[#allocation3 + $0x370] sm:$0xff]
    %v4589 = vld [vmem:[#allocation3 + $0x378] sm:$0xff]
    %v4590 = vld [vmem:[#allocation3 + $0x380] sm:$0xff]
    %v4591 = vld [vmem:[#allocation3 + $0x388] sm:$0xff]
    %v4592 = vld [vmem:[#allocation3 + $0x390] sm:$0xff]
    %v4593 = vld [vmem:[#allocation3 + $0x398] sm:$0xff]
    %v4594 = vld [vmem:[#allocation3 + $0x3a0] sm:$0xff]
    %v4595 = vld [vmem:[#allocation3 + $0x3a8] sm:$0xff]
    %v4596 = vld [vmem:[#allocation3 + $0x3b0] sm:$0xff]
    %v4597 = vld [vmem:[#allocation3 + $0x3b8] sm:$0xff]
    %v4598 = vld [vmem:[#allocation3 + $0x3c0] sm:$0xff]
    %v4599 = vld [vmem:[#allocation3 + $0x3c8] sm:$0xff]
    %v4600 = vld [vmem:[#allocation3 + $0x3d0] sm:$0xff]
    %v4601 = vld [vmem:[#allocation3 + $0x3d8] sm:$0xff]
    %v4602 = vld [vmem:[#allocation3 + $0x3e0] sm:$0xff]
    %v4603 = vld [vmem:[#allocation3 + $0x3e8] sm:$0xff]
    %v4604 = vld [vmem:[#allocation3 + $0x3f0] sm:$0xff]
    %v4605 = vld [vmem:[#allocation3 + $0x3f8] sm:$0xff]
    %v4606 = vld [vmem:[#allocation3 + $0x400] sm:$0xff]
    %v4607 = vld [vmem:[#allocation3 + $0x408] sm:$0xff]
    %v4608 = vld [vmem:[#allocation3 + $0x410] sm:$0xff]
    %v4609 = vld [vmem:[#allocation3 + $0x418] sm:$0xff]
    %v4610 = vld [vmem:[#allocation3 + $0x420] sm:$0xff]
    %v4611 = vld [vmem:[#allocation3 + $0x428] sm:$0xff]
    %v4612 = vld [vmem:[#allocation3 + $0x430] sm:$0xff]
    %v4613 = vld [vmem:[#allocation3 + $0x438] sm:$0xff]
    %v4614 = vld [vmem:[#allocation3 + $0x440] sm:$0xff]
    %v4615 = vld [vmem:[#allocation3 + $0x448] sm:$0xff]
    %v4616 = vld [vmem:[#allocation3 + $0x450] sm:$0xff]
    %v4617 = vld [vmem:[#allocation3 + $0x458] sm:$0xff]
    %v4618 = vld [vmem:[#allocation3 + $0x460] sm:$0xff]
    %v4619 = vld [vmem:[#allocation3 + $0x468] sm:$0xff]
    %v4620 = vld [vmem:[#allocation3 + $0x470] sm:$0xff]
    %v4621 = vld [vmem:[#allocation3 + $0x478] sm:$0xff]
    %v4622 = vld [vmem:[#allocation3 + $0x480] sm:$0xff]
    %v4623 = vld [vmem:[#allocation3 + $0x488] sm:$0xff]
    %v4624 = vld [vmem:[#allocation3 + $0x490] sm:$0xff]
    %v4625 = vld [vmem:[#allocation3 + $0x498] sm:$0xff]
    %v4626 = vld [vmem:[#allocation3 + $0x4a0] sm:$0xff]
    %v4627 = vld [vmem:[#allocation3 + $0x4a8] sm:$0xff]
    %v4628 = vld [vmem:[#allocation3 + $0x4b0] sm:$0xff]
    %v4629 = vld [vmem:[#allocation3 + $0x4b8] sm:$0xff]
    %v4630 = vld [vmem:[#allocation3 + $0x4c0] sm:$0xff]
    %v4631 = vld [vmem:[#allocation3 + $0x4c8] sm:$0xff]
    %v4632 = vld [vmem:[#allocation3 + $0x4d0] sm:$0xff]
    %v4633 = vld [vmem:[#allocation3 + $0x4d8] sm:$0xff]
    %v4634 = vld [vmem:[#allocation3 + $0x4e0] sm:$0xff]
    %v4635 = vld [vmem:[#allocation3 + $0x4e8] sm:$0xff]
    %v4636 = vld [vmem:[#allocation3 + $0x4f0] sm:$0xff]
    %v4637 = vld [vmem:[#allocation3 + $0x4f8] sm:$0xff]
    %v4638 = vld [vmem:[#allocation3 + $0x500] sm:$0xff]
    %v4639 = vld [vmem:[#allocation3 + $0x508] sm:$0xff]
    %v4640 = vld [vmem:[#allocation3 + $0x510] sm:$0xff]
    %v4641 = vld [vmem:[#allocation3 + $0x518] sm:$0xff]
    %v4642 = vld [vmem:[#allocation3 + $0x520] sm:$0xff]
    %v4643 = vld [vmem:[#allocation3 + $0x528] sm:$0xff]
    %v4644 = vld [vmem:[#allocation3 + $0x530] sm:$0xff]
    %v4645 = vld [vmem:[#allocation3 + $0x538] sm:$0xff]
    %v4646 = vld [vmem:[#allocation3 + $0x540] sm:$0xff]
    %v4647 = vld [vmem:[#allocation3 + $0x548] sm:$0xff]
    %v4648 = vld [vmem:[#allocation3 + $0x550] sm:$0xff]
    %v4649 = vld [vmem:[#allocation3 + $0x558] sm:$0xff]
    %v4650 = vld [vmem:[#allocation3 + $0x560] sm:$0xff]
    %v4651 = vld [vmem:[#allocation3 + $0x568] sm:$0xff]
    %v4652 = vld [vmem:[#allocation3 + $0x570] sm:$0xff]
    %v4653 = vld [vmem:[#allocation3 + $0x578] sm:$0xff]
    %v4654 = vld [vmem:[#allocation3 + $0x580] sm:$0xff]
    %v4655 = vld [vmem:[#allocation3 + $0x588] sm:$0xff]
    %v4656 = vld [vmem:[#allocation3 + $0x590] sm:$0xff]
    %v4657 = vld [vmem:[#allocation3 + $0x598] sm:$0xff]
    %v4658 = vld [vmem:[#allocation3 + $0x5a0] sm:$0xff]
    %v4659 = vld [vmem:[#allocation3 + $0x5a8] sm:$0xff]
    %v4660 = vld [vmem:[#allocation3 + $0x5b0] sm:$0xff]
    %v4661 = vld [vmem:[#allocation3 + $0x5b8] sm:$0xff]
    %v4662 = vld [vmem:[#allocation3 + $0x5c0] sm:$0xff]
    %v4663 = vld [vmem:[#allocation3 + $0x5c8] sm:$0xff]
    %v4664 = vld [vmem:[#allocation3 + $0x5d0] sm:$0xff]
    %v4665 = vld [vmem:[#allocation3 + $0x5d8] sm:$0xff]
    %v4666 = vld [vmem:[#allocation3 + $0x5e0] sm:$0xff]
    %v4667 = vld [vmem:[#allocation3 + $0x5e8] sm:$0xff]
    %v4668 = vld [vmem:[#allocation3 + $0x5f0] sm:$0xff]
    %v4669 = vld [vmem:[#allocation3 + $0x5f8] sm:$0xff]
    %v4670 = vld [vmem:[#allocation3 + $0x600] sm:$0xff]
    %v4671 = vld [vmem:[#allocation3 + $0x608] sm:$0xff]
    %v4672 = vld [vmem:[#allocation3 + $0x610] sm:$0xff]
    %v4673 = vld [vmem:[#allocation3 + $0x618] sm:$0xff]
    %v4674 = vld [vmem:[#allocation3 + $0x620] sm:$0xff]
    %v4675 = vld [vmem:[#allocation3 + $0x628] sm:$0xff]
    %v4676 = vld [vmem:[#allocation3 + $0x630] sm:$0xff]
    %v4677 = vld [vmem:[#allocation3 + $0x638] sm:$0xff]
    %v4678 = vld [vmem:[#allocation3 + $0x640] sm:$0xff]
    %v4679 = vld [vmem:[#allocation3 + $0x648] sm:$0xff]
    %v4680 = vld [vmem:[#allocation3 + $0x650] sm:$0xff]
    %v4681 = vld [vmem:[#allocation3 + $0x658] sm:$0xff]
    %v4682 = vld [vmem:[#allocation3 + $0x660] sm:$0xff]
    %v4683 = vld [vmem:[#allocation3 + $0x668] sm:$0xff]
    %v4684 = vld [vmem:[#allocation3 + $0x670] sm:$0xff]
    %v4685 = vld [vmem:[#allocation3 + $0x678] sm:$0xff]
    %v4686 = vld [vmem:[#allocation3 + $0x680] sm:$0xff]
    %v4687 = vld [vmem:[#allocation3 + $0x688] sm:$0xff]
    %v4688 = vld [vmem:[#allocation3 + $0x690] sm:$0xff]
    %v4689 = vld [vmem:[#allocation3 + $0x698] sm:$0xff]
    %v4690 = vld [vmem:[#allocation3 + $0x6a0] sm:$0xff]
    %v4691 = vld [vmem:[#allocation3 + $0x6a8] sm:$0xff]
    %v4692 = vld [vmem:[#allocation3 + $0x6b0] sm:$0xff]
    %v4693 = vld [vmem:[#allocation3 + $0x6b8] sm:$0xff]
    %v4694 = vld [vmem:[#allocation3 + $0x6c0] sm:$0xff]
    %v4695 = vld [vmem:[#allocation3 + $0x6c8] sm:$0xff]
    %v4696 = vld [vmem:[#allocation3 + $0x6d0] sm:$0xff]
    %v4697 = vld [vmem:[#allocation3 + $0x6d8] sm:$0xff]
    %v4698 = vld [vmem:[#allocation3 + $0x6e0] sm:$0xff]
    %v4699 = vld [vmem:[#allocation3 + $0x6e8] sm:$0xff]
    %v4700 = vld [vmem:[#allocation3 + $0x6f0] sm:$0xff]
    %v4701 = vld [vmem:[#allocation3 + $0x6f8] sm:$0xff]
    %v4702 = vld [vmem:[#allocation3 + $0x700] sm:$0xff]
    %v4703 = vld [vmem:[#allocation3 + $0x708] sm:$0xff]
    %v4704 = vld [vmem:[#allocation3 + $0x710] sm:$0xff]
    %v4705 = vld [vmem:[#allocation3 + $0x718] sm:$0xff]
    %v4706 = vld [vmem:[#allocation3 + $0x720] sm:$0xff]
    %v4707 = vld [vmem:[#allocation3 + $0x728] sm:$0xff]
    %v4708 = vld [vmem:[#allocation3 + $0x730] sm:$0xff]
    %v4709 = vld [vmem:[#allocation3 + $0x738] sm:$0xff]
    %v4710 = vld [vmem:[#allocation3 + $0x740] sm:$0xff]
    %v4711 = vld [vmem:[#allocation3 + $0x748] sm:$0xff]
    %v4712 = vld [vmem:[#allocation3 + $0x750] sm:$0xff]
    %v4713 = vld [vmem:[#allocation3 + $0x758] sm:$0xff]
    %v4714 = vld [vmem:[#allocation3 + $0x760] sm:$0xff]
    %v4715 = vld [vmem:[#allocation3 + $0x768] sm:$0xff]
    %v4716 = vld [vmem:[#allocation3 + $0x770] sm:$0xff]
    %v4717 = vld [vmem:[#allocation3 + $0x778] sm:$0xff]
    %v4718 = vld [vmem:[#allocation3 + $0x780] sm:$0xff]
    %v4719 = vld [vmem:[#allocation3 + $0x788] sm:$0xff]
    %v4720 = vld [vmem:[#allocation3 + $0x790] sm:$0xff]
    %v4721 = vld [vmem:[#allocation3 + $0x798] sm:$0xff]
    %v4722 = vld [vmem:[#allocation3 + $0x7a0] sm:$0xff]
    %v4723 = vld [vmem:[#allocation3 + $0x7a8] sm:$0xff]
    %v4724 = vld [vmem:[#allocation3 + $0x7b0] sm:$0xff]
    %v4725 = vld [vmem:[#allocation3 + $0x7b8] sm:$0xff]
    %v4726 = vld [vmem:[#allocation3 + $0x7c0] sm:$0xff]
    %v4727 = vld [vmem:[#allocation3 + $0x7c8] sm:$0xff]
    %v4728 = vld [vmem:[#allocation3 + $0x7d0] sm:$0xff]
    %v4729 = vld [vmem:[#allocation3 + $0x7d8] sm:$0xff]
    %v4730 = vld [vmem:[#allocation3 + $0x7e0] sm:$0xff]
    %v4731 = vld [vmem:[#allocation3 + $0x7e8] sm:$0xff]
    %v4732 = vld [vmem:[#allocation3 + $0x7f0] sm:$0xff]
    %v4733 = vld [vmem:[#allocation3 + $0x7f8] sm:$0xff]
    %v4734 = vld [vmem:[#allocation3 + $0x800] sm:$0xff]
    %v4735 = vld [vmem:[#allocation3 + $0x808] sm:$0xff]
    %v4736 = vld [vmem:[#allocation3 + $0x810] sm:$0xff]
    %v4737 = vld [vmem:[#allocation3 + $0x818] sm:$0xff]
    %v4738 = vld [vmem:[#allocation3 + $0x820] sm:$0xff]
    %v4739 = vld [vmem:[#allocation3 + $0x828] sm:$0xff]
    %v4740 = vld [vmem:[#allocation3 + $0x830] sm:$0xff]
    %v4741 = vld [vmem:[#allocation3 + $0x838] sm:$0xff]
    %v4742 = vld [vmem:[#allocation3 + $0x840] sm:$0xff]
    %v4743 = vld [vmem:[#allocation3 + $0x848] sm:$0xff]
    %v4744 = vld [vmem:[#allocation3 + $0x850] sm:$0xff]
    %v4745 = vld [vmem:[#allocation3 + $0x858] sm:$0xff]
    %v4746 = vld [vmem:[#allocation3 + $0x860] sm:$0xff]
    %v4747 = vld [vmem:[#allocation3 + $0x868] sm:$0xff]
    %v4748 = vld [vmem:[#allocation3 + $0x870] sm:$0xff]
    %v4749 = vld [vmem:[#allocation3 + $0x878] sm:$0xff]
    %v4750 = vld [vmem:[#allocation3 + $0x880] sm:$0xff]
    %v4751 = vld [vmem:[#allocation3 + $0x888] sm:$0xff]
    %v4752 = vld [vmem:[#allocation3 + $0x890] sm:$0xff]
    %v4753 = vld [vmem:[#allocation3 + $0x898] sm:$0xff]
    %v4754 = vld [vmem:[#allocation3 + $0x8a0] sm:$0xff]
    %v4755 = vld [vmem:[#allocation3 + $0x8a8] sm:$0xff]
    %v4756 = vld [vmem:[#allocation3 + $0x8b0] sm:$0xff]
    %v4757 = vld [vmem:[#allocation3 + $0x8b8] sm:$0xff]
    %v4758 = vld [vmem:[#allocation3 + $0x8c0] sm:$0xff]
    %v4759 = vld [vmem:[#allocation3 + $0x8c8] sm:$0xff]
    %v4760 = vld [vmem:[#allocation3 + $0x8d0] sm:$0xff]
    %v4761 = vld [vmem:[#allocation3 + $0x8d8] sm:$0xff]
    %v4762 = vld [vmem:[#allocation3 + $0x8e0] sm:$0xff]
    %v4763 = vld [vmem:[#allocation3 + $0x8e8] sm:$0xff]
    %v4764 = vld [vmem:[#allocation3 + $0x8f0] sm:$0xff]
    %v4765 = vld [vmem:[#allocation3 + $0x8f8] sm:$0xff]
    %v4766 = vld [vmem:[#allocation3 + $0x900] sm:$0xff]
    %v4767 = vld [vmem:[#allocation3 + $0x908] sm:$0xff]
    %v4768 = vld [vmem:[#allocation3 + $0x910] sm:$0xff]
    %v4769 = vld [vmem:[#allocation3 + $0x918] sm:$0xff]
    %v4770 = vld [vmem:[#allocation3 + $0x920] sm:$0xff]
    %v4771 = vld [vmem:[#allocation3 + $0x928] sm:$0xff]
    %v4772 = vld [vmem:[#allocation3 + $0x930] sm:$0xff]
    %v4773 = vld [vmem:[#allocation3 + $0x938] sm:$0xff]
    %v4774 = vld [vmem:[#allocation3 + $0x940] sm:$0xff]
    %v4775 = vld [vmem:[#allocation3 + $0x948] sm:$0xff]
    %v4776 = vld [vmem:[#allocation3 + $0x950] sm:$0xff]
    %v4777 = vld [vmem:[#allocation3 + $0x958] sm:$0xff]
    %v4778 = vld [vmem:[#allocation3 + $0x960] sm:$0xff]
    %v4779 = vld [vmem:[#allocation3 + $0x968] sm:$0xff]
    %v4780 = vld [vmem:[#allocation3 + $0x970] sm:$0xff]
    %v4781 = vld [vmem:[#allocation3 + $0x978] sm:$0xff]
    %v4782 = vld [vmem:[#allocation3 + $0x980] sm:$0xff]
    %v4783 = vld [vmem:[#allocation3 + $0x988] sm:$0xff]
    %v4784 = vld [vmem:[#allocation3 + $0x990] sm:$0xff]
    %v4785 = vld [vmem:[#allocation3 + $0x998] sm:$0xff]
    %v4786 = vld [vmem:[#allocation3 + $0x9a0] sm:$0xff]
    %v4787 = vld [vmem:[#allocation3 + $0x9a8] sm:$0xff]
    %v4788 = vld [vmem:[#allocation3 + $0x9b0] sm:$0xff]
    %v4789 = vld [vmem:[#allocation3 + $0x9b8] sm:$0xff]
    %v4790 = vld [vmem:[#allocation3 + $0x9c0] sm:$0xff]
    %v4791 = vld [vmem:[#allocation3 + $0x9c8] sm:$0xff]
    %v4792 = vld [vmem:[#allocation3 + $0x9d0] sm:$0xff]
    %v4793 = vld [vmem:[#allocation3 + $0x9d8] sm:$0xff]
    %v4794 = vld [vmem:[#allocation3 + $0x9e0] sm:$0xff]
    %v4795 = vld [vmem:[#allocation3 + $0x9e8] sm:$0xff]
    %v4796 = vld [vmem:[#allocation3 + $0x9f0] sm:$0xff]
    %v4797 = vld [vmem:[#allocation3 + $0x9f8] sm:$0xff]
    %v4798 = vld [vmem:[#allocation3 + $0xa00] sm:$0xff]
    %v4799 = vld [vmem:[#allocation3 + $0xa08] sm:$0xff]
    %v4800 = vld [vmem:[#allocation3 + $0xa10] sm:$0xff]
    %v4801 = vld [vmem:[#allocation3 + $0xa18] sm:$0xff]
    %v4802 = vld [vmem:[#allocation3 + $0xa20] sm:$0xff]
    %v4803 = vld [vmem:[#allocation3 + $0xa28] sm:$0xff]
    %v4804 = vld [vmem:[#allocation3 + $0xa30] sm:$0xff]
    %v4805 = vld [vmem:[#allocation3 + $0xa38] sm:$0xff]
    %v4806 = vld [vmem:[#allocation3 + $0xa40] sm:$0xff]
    %v4807 = vld [vmem:[#allocation3 + $0xa48] sm:$0xff]
    %v4808 = vld [vmem:[#allocation3 + $0xa50] sm:$0xff]
    %v4809 = vld [vmem:[#allocation3 + $0xa58] sm:$0xff]
    %v4810 = vld [vmem:[#allocation3 + $0xa60] sm:$0xff]
    %v4811 = vld [vmem:[#allocation3 + $0xa68] sm:$0xff]
    %v4812 = vld [vmem:[#allocation3 + $0xa70] sm:$0xff]
    %v4813 = vld [vmem:[#allocation3 + $0xa78] sm:$0xff]
    %v4814 = vld [vmem:[#allocation3 + $0xa80] sm:$0xff]
    %v4815 = vld [vmem:[#allocation3 + $0xa88] sm:$0xff]
    %v4816 = vld [vmem:[#allocation3 + $0xa90] sm:$0xff]
    %v4817 = vld [vmem:[#allocation3 + $0xa98] sm:$0xff]
    %v4818 = vld [vmem:[#allocation3 + $0xaa0] sm:$0xff]
    %v4819 = vld [vmem:[#allocation3 + $0xaa8] sm:$0xff]
    %v4820 = vld [vmem:[#allocation3 + $0xab0] sm:$0xff]
    %v4821 = vld [vmem:[#allocation3 + $0xab8] sm:$0xff]
    %v4822 = vld [vmem:[#allocation3 + $0xac0] sm:$0xff]
    %v4823 = vld [vmem:[#allocation3 + $0xac8] sm:$0xff]
    %v4824 = vld [vmem:[#allocation3 + $0xad0] sm:$0xff]
    %v4825 = vld [vmem:[#allocation3 + $0xad8] sm:$0xff]
    %v4826 = vld [vmem:[#allocation3 + $0xae0] sm:$0xff]
    %v4827 = vld [vmem:[#allocation3 + $0xae8] sm:$0xff]
    %v4828 = vld [vmem:[#allocation3 + $0xaf0] sm:$0xff]
    %v4829 = vld [vmem:[#allocation3 + $0xaf8] sm:$0xff]
    %v4830 = vld [vmem:[#allocation3 + $0xb00] sm:$0xff]
    %v4831 = vld [vmem:[#allocation3 + $0xb08] sm:$0xff]
    %v4832 = vld [vmem:[#allocation3 + $0xb10] sm:$0xff]
    %v4833 = vld [vmem:[#allocation3 + $0xb18] sm:$0xff]
    %v4834 = vld [vmem:[#allocation3 + $0xb20] sm:$0xff]
    %v4835 = vld [vmem:[#allocation3 + $0xb28] sm:$0xff]
    %v4836 = vld [vmem:[#allocation3 + $0xb30] sm:$0xff]
    %v4837 = vld [vmem:[#allocation3 + $0xb38] sm:$0xff]
    %v4838 = vld [vmem:[#allocation3 + $0xb40] sm:$0xff]
    %v4839 = vld [vmem:[#allocation3 + $0xb48] sm:$0xff]
    %v4840 = vld [vmem:[#allocation3 + $0xb50] sm:$0xff]
    %v4841 = vld [vmem:[#allocation3 + $0xb58] sm:$0xff]
    %v4842 = vld [vmem:[#allocation3 + $0xb60] sm:$0xff]
    %v4843 = vld [vmem:[#allocation3 + $0xb68] sm:$0xff]
    %v4844 = vld [vmem:[#allocation3 + $0xb70] sm:$0xff]
    %v4845 = vld [vmem:[#allocation3 + $0xb78] sm:$0xff]
    %v4846 = vld [vmem:[#allocation3 + $0xb80] sm:$0xff]
    %v4847 = vld [vmem:[#allocation3 + $0xb88] sm:$0xff]
    %v4848 = vld [vmem:[#allocation3 + $0xb90] sm:$0xff]
    %v4849 = vld [vmem:[#allocation3 + $0xb98] sm:$0xff]
    %v4850 = vld [vmem:[#allocation3 + $0xba0] sm:$0xff]
    %v4851 = vld [vmem:[#allocation3 + $0xba8] sm:$0xff]
    %v4852 = vld [vmem:[#allocation3 + $0xbb0] sm:$0xff]
    %v4853 = vld [vmem:[#allocation3 + $0xbb8] sm:$0xff]
    %v4854 = vld [vmem:[#allocation3 + $0xbc0] sm:$0xff]
    %v4855 = vld [vmem:[#allocation3 + $0xbc8] sm:$0xff]
    %v4856 = vld [vmem:[#allocation3 + $0xbd0] sm:$0xff]
    %v4857 = vld [vmem:[#allocation3 + $0xbd8] sm:$0xff]
    %v4858 = vld [vmem:[#allocation3 + $0xbe0] sm:$0xff]
    %v4859 = vld [vmem:[#allocation3 + $0xbe8] sm:$0xff]
    %v4860 = vld [vmem:[#allocation3 + $0xbf0] sm:$0xff]
    %v4861 = vld [vmem:[#allocation3 + $0xbf8] sm:$0xff]
    %v4862 = vld [vmem:[#allocation3 + $0xc00] sm:$0xff]
    %v4863 = vld [vmem:[#allocation3 + $0xc08] sm:$0xff]
    %v4864 = vld [vmem:[#allocation3 + $0xc10] sm:$0xff]
    %v4865 = vld [vmem:[#allocation3 + $0xc18] sm:$0xff]
    %v4866 = vld [vmem:[#allocation3 + $0xc20] sm:$0xff]
    %v4867 = vld [vmem:[#allocation3 + $0xc28] sm:$0xff]
    %v4868 = vld [vmem:[#allocation3 + $0xc30] sm:$0xff]
    %v4869 = vld [vmem:[#allocation3 + $0xc38] sm:$0xff]
    %v4870 = vld [vmem:[#allocation3 + $0xc40] sm:$0xff]
    %v4871 = vld [vmem:[#allocation3 + $0xc48] sm:$0xff]
    %v4872 = vld [vmem:[#allocation3 + $0xc50] sm:$0xff]
    %v4873 = vld [vmem:[#allocation3 + $0xc58] sm:$0xff]
    %v4874 = vld [vmem:[#allocation3 + $0xc60] sm:$0xff]
    %v4875 = vld [vmem:[#allocation3 + $0xc68] sm:$0xff]
    %v4876 = vld [vmem:[#allocation3 + $0xc70] sm:$0xff]
    %v4877 = vld [vmem:[#allocation3 + $0xc78] sm:$0xff]
    %v4878 = vld [vmem:[#allocation3 + $0xc80] sm:$0xff]
    %v4879 = vld [vmem:[#allocation3 + $0xc88] sm:$0xff]
    %v4880 = vld [vmem:[#allocation3 + $0xc90] sm:$0xff]
    %v4881 = vld [vmem:[#allocation3 + $0xc98] sm:$0xff]
    %v4882 = vld [vmem:[#allocation3 + $0xca0] sm:$0xff]
    %v4883 = vld [vmem:[#allocation3 + $0xca8] sm:$0xff]
    %v4884 = vld [vmem:[#allocation3 + $0xcb0] sm:$0xff]
    %v4885 = vld [vmem:[#allocation3 + $0xcb8] sm:$0xff]
    %v4886 = vld [vmem:[#allocation3 + $0xcc0] sm:$0xff]
    %v4887 = vld [vmem:[#allocation3 + $0xcc8] sm:$0xff]
    %v4888 = vld [vmem:[#allocation3 + $0xcd0] sm:$0xff]
    %v4889 = vld [vmem:[#allocation3 + $0xcd8] sm:$0xff]
    %v4890 = vld [vmem:[#allocation3 + $0xce0] sm:$0xff]
    %v4891 = vld [vmem:[#allocation3 + $0xce8] sm:$0xff]
    %v4892 = vld [vmem:[#allocation3 + $0xcf0] sm:$0xff]
    %v4893 = vld [vmem:[#allocation3 + $0xcf8] sm:$0xff]
    %v4894 = vld [vmem:[#allocation3 + $0xd00] sm:$0xff]
    %v4895 = vld [vmem:[#allocation3 + $0xd08] sm:$0xff]
    %v4896 = vld [vmem:[#allocation3 + $0xd10] sm:$0xff]
    %v4897 = vld [vmem:[#allocation3 + $0xd18] sm:$0xff]
    %v4898 = vld [vmem:[#allocation3 + $0xd20] sm:$0xff]
    %v4899 = vld [vmem:[#allocation3 + $0xd28] sm:$0xff]
    %v4900 = vld [vmem:[#allocation3 + $0xd30] sm:$0xff]
    %v4901 = vld [vmem:[#allocation3 + $0xd38] sm:$0xff]
    %v4902 = vld [vmem:[#allocation3 + $0xd40] sm:$0xff]
    %v4903 = vld [vmem:[#allocation3 + $0xd48] sm:$0xff]
    %v4904 = vld [vmem:[#allocation3 + $0xd50] sm:$0xff]
    %v4905 = vld [vmem:[#allocation3 + $0xd58] sm:$0xff]
    %v4906 = vld [vmem:[#allocation3 + $0xd60] sm:$0xff]
    %v4907 = vld [vmem:[#allocation3 + $0xd68] sm:$0xff]
    %v4908 = vld [vmem:[#allocation3 + $0xd70] sm:$0xff]
    %v4909 = vld [vmem:[#allocation3 + $0xd78] sm:$0xff]
    %v4910 = vld [vmem:[#allocation3 + $0xd80] sm:$0xff]
    %v4911 = vld [vmem:[#allocation3 + $0xd88] sm:$0xff]
    %v4912 = vld [vmem:[#allocation3 + $0xd90] sm:$0xff]
    %v4913 = vld [vmem:[#allocation3 + $0xd98] sm:$0xff]
    %v4914 = vld [vmem:[#allocation3 + $0xda0] sm:$0xff]
    %v4915 = vld [vmem:[#allocation3 + $0xda8] sm:$0xff]
    %v4916 = vld [vmem:[#allocation3 + $0xdb0] sm:$0xff]
    %v4917 = vld [vmem:[#allocation3 + $0xdb8] sm:$0xff]
    %v4918 = vld [vmem:[#allocation3 + $0xdc0] sm:$0xff]
    %v4919 = vld [vmem:[#allocation3 + $0xdc8] sm:$0xff]
    %v4920 = vld [vmem:[#allocation3 + $0xdd0] sm:$0xff]
    %v4921 = vld [vmem:[#allocation3 + $0xdd8] sm:$0xff]
    %v4922 = vld [vmem:[#allocation3 + $0xde0] sm:$0xff]
    %v4923 = vld [vmem:[#allocation3 + $0xde8] sm:$0xff]
    %v4924 = vld [vmem:[#allocation3 + $0xdf0] sm:$0xff]
    %v4925 = vld [vmem:[#allocation3 + $0xdf8] sm:$0xff]
    %v4926 = vld [vmem:[#allocation3 + $0xe00] sm:$0xff]
    %v4927 = vld [vmem:[#allocation3 + $0xe08] sm:$0xff]
    %v4928 = vld [vmem:[#allocation3 + $0xe10] sm:$0xff]
    %v4929 = vld [vmem:[#allocation3 + $0xe18] sm:$0xff]
    %v4930 = vld [vmem:[#allocation3 + $0xe20] sm:$0xff]
    %v4931 = vld [vmem:[#allocation3 + $0xe28] sm:$0xff]
    %v4932 = vld [vmem:[#allocation3 + $0xe30] sm:$0xff]
    %v4933 = vld [vmem:[#allocation3 + $0xe38] sm:$0xff]
    %v4934 = vld [vmem:[#allocation3 + $0xe40] sm:$0xff]
    %v4935 = vld [vmem:[#allocation3 + $0xe48] sm:$0xff]
    %v4936 = vld [vmem:[#allocation3 + $0xe50] sm:$0xff]
    %v4937 = vld [vmem:[#allocation3 + $0xe58] sm:$0xff]
    %v4938 = vld [vmem:[#allocation3 + $0xe60] sm:$0xff]
    %v4939 = vld [vmem:[#allocation3 + $0xe68] sm:$0xff]
    %v4940 = vld [vmem:[#allocation3 + $0xe70] sm:$0xff]
    %v4941 = vld [vmem:[#allocation3 + $0xe78] sm:$0xff]
    %v4942 = vld [vmem:[#allocation3 + $0xe80] sm:$0xff]
    %v4943 = vld [vmem:[#allocation3 + $0xe88] sm:$0xff]
    %v4944 = vld [vmem:[#allocation3 + $0xe90] sm:$0xff]
    %v4945 = vld [vmem:[#allocation3 + $0xe98] sm:$0xff]
    %v4946 = vld [vmem:[#allocation3 + $0xea0] sm:$0xff]
    %v4947 = vld [vmem:[#allocation3 + $0xea8] sm:$0xff]
    %v4948 = vld [vmem:[#allocation3 + $0xeb0] sm:$0xff]
    %v4949 = vld [vmem:[#allocation3 + $0xeb8] sm:$0xff]
    %v4950 = vld [vmem:[#allocation3 + $0xec0] sm:$0xff]
    %v4951 = vld [vmem:[#allocation3 + $0xec8] sm:$0xff]
    %v4952 = vld [vmem:[#allocation3 + $0xed0] sm:$0xff]
    %v4953 = vld [vmem:[#allocation3 + $0xed8] sm:$0xff]
    %v4954 = vld [vmem:[#allocation3 + $0xee0] sm:$0xff]
    %v4955 = vld [vmem:[#allocation3 + $0xee8] sm:$0xff]
    %v4956 = vld [vmem:[#allocation3 + $0xef0] sm:$0xff]
    %v4957 = vld [vmem:[#allocation3 + $0xef8] sm:$0xff]
    %v4958 = vld [vmem:[#allocation3 + $0xf00] sm:$0xff]
    %v4959 = vld [vmem:[#allocation3 + $0xf08] sm:$0xff]
    %v4960 = vld [vmem:[#allocation3 + $0xf10] sm:$0xff]
    %v4961 = vld [vmem:[#allocation3 + $0xf18] sm:$0xff]
    %v4962 = vld [vmem:[#allocation3 + $0xf20] sm:$0xff]
    %v4963 = vld [vmem:[#allocation3 + $0xf28] sm:$0xff]
    %v4964 = vld [vmem:[#allocation3 + $0xf30] sm:$0xff]
    %v4965 = vld [vmem:[#allocation3 + $0xf38] sm:$0xff]
    %v4966 = vld [vmem:[#allocation3 + $0xf40] sm:$0xff]
    %v4967 = vld [vmem:[#allocation3 + $0xf48] sm:$0xff]
    %v4968 = vld [vmem:[#allocation3 + $0xf50] sm:$0xff]
    %v4969 = vld [vmem:[#allocation3 + $0xf58] sm:$0xff]
    %v4970 = vld [vmem:[#allocation3 + $0xf60] sm:$0xff]
    %v4971 = vld [vmem:[#allocation3 + $0xf68] sm:$0xff]
    %v4972 = vld [vmem:[#allocation3 + $0xf70] sm:$0xff]
    %v4973 = vld [vmem:[#allocation3 + $0xf78] sm:$0xff]
    %v4974 = vld [vmem:[#allocation3 + $0xf80] sm:$0xff]
    %v4975 = vld [vmem:[#allocation3 + $0xf88] sm:$0xff]
    %v4976 = vld [vmem:[#allocation3 + $0xf90] sm:$0xff]
    %v4977 = vld [vmem:[#allocation3 + $0xf98] sm:$0xff]
    %v4978 = vld [vmem:[#allocation3 + $0xfa0] sm:$0xff]
    %v4979 = vld [vmem:[#allocation3 + $0xfa8] sm:$0xff]
    %v4980 = vld [vmem:[#allocation3 + $0xfb0] sm:$0xff]
    %v4981 = vld [vmem:[#allocation3 + $0xfb8] sm:$0xff]
    %v4982 = vld [vmem:[#allocation3 + $0xfc0] sm:$0xff]
    %v4983 = vld [vmem:[#allocation3 + $0xfc8] sm:$0xff]
    %v4984 = vld [vmem:[#allocation3 + $0xfd0] sm:$0xff]
    %v4985 = vld [vmem:[#allocation3 + $0xfd8] sm:$0xff]
    %v4986 = vld [vmem:[#allocation3 + $0xfe0] sm:$0xff]
    %v4987 = vld [vmem:[#allocation3 + $0xfe8] sm:$0xff]
    %v4988 = vld [vmem:[#allocation3 + $0xff0] sm:$0xff]
    %v4989 = vld [vmem:[#allocation3 + $0xff8] sm:$0xff]
    %v4990 = vld [vmem:[#allocation3 + $0x1000] sm:$0xff]
    %v4991 = vld [vmem:[#allocation3 + $0x1008] sm:$0xff]
    %v4992 = vld [vmem:[#allocation3 + $0x1010] sm:$0xff]
    %v4993 = vld [vmem:[#allocation3 + $0x1018] sm:$0xff]
    %v4994 = vld [vmem:[#allocation3 + $0x1020] sm:$0xff]
    %v4995 = vld [vmem:[#allocation3 + $0x1028] sm:$0xff]
    %v4996 = vld [vmem:[#allocation3 + $0x1030] sm:$0xff]
    %v4997 = vld [vmem:[#allocation3 + $0x1038] sm:$0xff]
    %v4998 = vld [vmem:[#allocation3 + $0x1040] sm:$0xff]
    %v4999 = vld [vmem:[#allocation3 + $0x1048] sm:$0xff]
    %v5000 = vld [vmem:[#allocation3 + $0x1050] sm:$0xff]
    %v5001 = vld [vmem:[#allocation3 + $0x1058] sm:$0xff]
    %v5002 = vld [vmem:[#allocation3 + $0x1060] sm:$0xff]
    %v5003 = vld [vmem:[#allocation3 + $0x1068] sm:$0xff]
    %v5004 = vld [vmem:[#allocation3 + $0x1070] sm:$0xff]
    %v5005 = vld [vmem:[#allocation3 + $0x1078] sm:$0xff]
    %v5006 = vld [vmem:[#allocation3 + $0x1080] sm:$0xff]
    %v5007 = vld [vmem:[#allocation3 + $0x1088] sm:$0xff]
    %v5008 = vld [vmem:[#allocation3 + $0x1090] sm:$0xff]
    %v5009 = vld [vmem:[#allocation3 + $0x1098] sm:$0xff]
    %v5010 = vld [vmem:[#allocation3 + $0x10a0] sm:$0xff]
    %v5011 = vld [vmem:[#allocation3 + $0x10a8] sm:$0xff]
    %v5012 = vld [vmem:[#allocation3 + $0x10b0] sm:$0xff]
    %v5013 = vld [vmem:[#allocation3 + $0x10b8] sm:$0xff]
    %v5014 = vld [vmem:[#allocation3 + $0x10c0] sm:$0xff]
    %v5015 = vld [vmem:[#allocation3 + $0x10c8] sm:$0xff]
    %v5016 = vld [vmem:[#allocation3 + $0x10d0] sm:$0xff]
    %v5017 = vld [vmem:[#allocation3 + $0x10d8] sm:$0xff]
    %v5018 = vld [vmem:[#allocation3 + $0x10e0] sm:$0xff]
    %v5019 = vld [vmem:[#allocation3 + $0x10e8] sm:$0xff]
    %v5020 = vld [vmem:[#allocation3 + $0x10f0] sm:$0xff]
    %v5021 = vld [vmem:[#allocation3 + $0x10f8] sm:$0xff]
    %v5022 = vld [vmem:[#allocation3 + $0x1100] sm:$0xff]
    %v5023 = vld [vmem:[#allocation3 + $0x1108] sm:$0xff]
    %v5024 = vld [vmem:[#allocation3 + $0x1110] sm:$0xff]
    %v5025 = vld [vmem:[#allocation3 + $0x1118] sm:$0xff]
    %v5026 = vld [vmem:[#allocation3 + $0x1120] sm:$0xff]
    %v5027 = vld [vmem:[#allocation3 + $0x1128] sm:$0xff]
    %v5028 = vld [vmem:[#allocation3 + $0x1130] sm:$0xff]
    %v5029 = vld [vmem:[#allocation3 + $0x1138] sm:$0xff]
    %v5030 = vld [vmem:[#allocation3 + $0x1140] sm:$0xff]
    %v5031 = vld [vmem:[#allocation3 + $0x1148] sm:$0xff]
    %v5032 = vld [vmem:[#allocation3 + $0x1150] sm:$0xff]
    %v5033 = vld [vmem:[#allocation3 + $0x1158] sm:$0xff]
    %v5034 = vld [vmem:[#allocation3 + $0x1160] sm:$0xff]
    %v5035 = vld [vmem:[#allocation3 + $0x1168] sm:$0xff]
    %v5036 = vld [vmem:[#allocation3 + $0x1170] sm:$0xff]
    %v5037 = vld [vmem:[#allocation3 + $0x1178] sm:$0xff]
    %v5038 = vld [vmem:[#allocation3 + $0x1180] sm:$0xff]
    %v5039 = vld [vmem:[#allocation3 + $0x1188] sm:$0xff]
    %v5040 = vld [vmem:[#allocation3 + $0x1190] sm:$0xff]
    %v5041 = vld [vmem:[#allocation3 + $0x1198] sm:$0xff]
    %v5042 = vld [vmem:[#allocation3 + $0x11a0] sm:$0xff]
    %v5043 = vld [vmem:[#allocation3 + $0x11a8] sm:$0xff]
    %v5044 = vld [vmem:[#allocation3 + $0x11b0] sm:$0xff]
    %v5045 = vld [vmem:[#allocation3 + $0x11b8] sm:$0xff]
    %v5046 = vld [vmem:[#allocation3 + $0x11c0] sm:$0xff]
    %v5047 = vld [vmem:[#allocation3 + $0x11c8] sm:$0xff]
    %v5048 = vld [vmem:[#allocation3 + $0x11d0] sm:$0xff]
    %v5049 = vld [vmem:[#allocation3 + $0x11d8] sm:$0xff]
    %v5050 = vld [vmem:[#allocation3 + $0x11e0] sm:$0xff]
    %v5051 = vld [vmem:[#allocation3 + $0x11e8] sm:$0xff]
    %v5052 = vld [vmem:[#allocation3 + $0x11f0] sm:$0xff]
    %v5053 = vld [vmem:[#allocation3 + $0x11f8] sm:$0xff]
    %v5054 = vld [vmem:[#allocation3 + $0x1200] sm:$0xff]
    %v5055 = vld [vmem:[#allocation3 + $0x1208] sm:$0xff]
    %v5056 = vld [vmem:[#allocation3 + $0x1210] sm:$0xff]
    %v5057 = vld [vmem:[#allocation3 + $0x1218] sm:$0xff]
    %v5058 = vld [vmem:[#allocation3 + $0x1220] sm:$0xff]
    %v5059 = vld [vmem:[#allocation3 + $0x1228] sm:$0xff]
    %v5060 = vld [vmem:[#allocation3 + $0x1230] sm:$0xff]
    %v5061 = vld [vmem:[#allocation3 + $0x1238] sm:$0xff]
    %v5062 = vld [vmem:[#allocation3 + $0x1240] sm:$0xff]
    %v5063 = vld [vmem:[#allocation3 + $0x1248] sm:$0xff]
    %v5064 = vld [vmem:[#allocation3 + $0x1250] sm:$0xff]
    %v5065 = vld [vmem:[#allocation3 + $0x1258] sm:$0xff]
    %v5066 = vld [vmem:[#allocation3 + $0x1260] sm:$0xff]
    %v5067 = vld [vmem:[#allocation3 + $0x1268] sm:$0xff]
    %v5068 = vld [vmem:[#allocation3 + $0x1270] sm:$0xff]
    %v5069 = vld [vmem:[#allocation3 + $0x1278] sm:$0xff]
    %v5070 = vld [vmem:[#allocation3 + $0x1280] sm:$0xff]
    %v5071 = vld [vmem:[#allocation3 + $0x1288] sm:$0xff]
    %v5072 = vld [vmem:[#allocation3 + $0x1290] sm:$0xff]
    %v5073 = vld [vmem:[#allocation3 + $0x1298] sm:$0xff]
    %v5074 = vld [vmem:[#allocation3 + $0x12a0] sm:$0xff]
    %v5075 = vld [vmem:[#allocation3 + $0x12a8] sm:$0xff]
    %v5076 = vld [vmem:[#allocation3 + $0x12b0] sm:$0xff]
    %v5077 = vld [vmem:[#allocation3 + $0x12b8] sm:$0xff]
    %v5078 = vld [vmem:[#allocation3 + $0x12c0] sm:$0xff]
    %v5079 = vld [vmem:[#allocation3 + $0x12c8] sm:$0xff]
    %v5080 = vld [vmem:[#allocation3 + $0x12d0] sm:$0xff]
    %v5081 = vld [vmem:[#allocation3 + $0x12d8] sm:$0xff]
    %v5082 = vld [vmem:[#allocation3 + $0x12e0] sm:$0xff]
    %v5083 = vld [vmem:[#allocation3 + $0x12e8] sm:$0xff]
    %v5084 = vld [vmem:[#allocation3 + $0x12f0] sm:$0xff]
    %v5085 = vld [vmem:[#allocation3 + $0x12f8] sm:$0xff]
    %v5086 = vld [vmem:[#allocation3 + $0x1300] sm:$0xff]
    %v5087 = vld [vmem:[#allocation3 + $0x1308] sm:$0xff]
    %v5088 = vld [vmem:[#allocation3 + $0x1310] sm:$0xff]
    %v5089 = vld [vmem:[#allocation3 + $0x1318] sm:$0xff]
    %v5090 = vld [vmem:[#allocation3 + $0x1320] sm:$0xff]
    %v5091 = vld [vmem:[#allocation3 + $0x1328] sm:$0xff]
    %v5092 = vld [vmem:[#allocation3 + $0x1330] sm:$0xff]
    %v5093 = vld [vmem:[#allocation3 + $0x1338] sm:$0xff]
    %v5094 = vld [vmem:[#allocation3 + $0x1340] sm:$0xff]
    %v5095 = vld [vmem:[#allocation3 + $0x1348] sm:$0xff]
    %v5096 = vld [vmem:[#allocation3 + $0x1350] sm:$0xff]
    %v5097 = vld [vmem:[#allocation3 + $0x1358] sm:$0xff]
    %v5098 = vld [vmem:[#allocation3 + $0x1360] sm:$0xff]
    %v5099 = vld [vmem:[#allocation3 + $0x1368] sm:$0xff]
    %v5100 = vld [vmem:[#allocation3 + $0x1370] sm:$0xff]
    %v5101 = vld [vmem:[#allocation3 + $0x1378] sm:$0xff]
    %v5102 = vld [vmem:[#allocation3 + $0x1380] sm:$0xff]
    %v5103 = vld [vmem:[#allocation3 + $0x1388] sm:$0xff]
    %v5104 = vld [vmem:[#allocation3 + $0x1390] sm:$0xff]
    %v5105 = vld [vmem:[#allocation3 + $0x1398] sm:$0xff]
    %v5106 = vld [vmem:[#allocation3 + $0x13a0] sm:$0xff]
    %v5107 = vld [vmem:[#allocation3 + $0x13a8] sm:$0xff]
    %v5108 = vld [vmem:[#allocation3 + $0x13b0] sm:$0xff]
    %v5109 = vld [vmem:[#allocation3 + $0x13b8] sm:$0xff]
    %v5110 = vld [vmem:[#allocation3 + $0x13c0] sm:$0xff]
    %v5111 = vld [vmem:[#allocation3 + $0x13c8] sm:$0xff]
    %v5112 = vld [vmem:[#allocation3 + $0x13d0] sm:$0xff]
    %v5113 = vld [vmem:[#allocation3 + $0x13d8] sm:$0xff]
    %v5114 = vld [vmem:[#allocation3 + $0x13e0] sm:$0xff]
    %v5115 = vld [vmem:[#allocation3 + $0x13e8] sm:$0xff]
    %v5116 = vld [vmem:[#allocation3 + $0x13f0] sm:$0xff]
    %v5117 = vld [vmem:[#allocation3 + $0x13f8] sm:$0xff]
    %v5118 = vld [vmem:[#allocation3 + $0x1400] sm:$0xff]
    %v5119 = vld [vmem:[#allocation3 + $0x1408] sm:$0xff]
    %v5120 = vld [vmem:[#allocation3 + $0x1410] sm:$0xff]
    %v5121 = vld [vmem:[#allocation3 + $0x1418] sm:$0xff]
    %v5122 = vld [vmem:[#allocation3 + $0x1420] sm:$0xff]
    %v5123 = vld [vmem:[#allocation3 + $0x1428] sm:$0xff]
    %v5124 = vld [vmem:[#allocation3 + $0x1430] sm:$0xff]
    %v5125 = vld [vmem:[#allocation3 + $0x1438] sm:$0xff]
    %v5126 = vld [vmem:[#allocation3 + $0x1440] sm:$0xff]
    %v5127 = vld [vmem:[#allocation3 + $0x1448] sm:$0xff]
    %v5128 = vld [vmem:[#allocation3 + $0x1450] sm:$0xff]
    %v5129 = vld [vmem:[#allocation3 + $0x1458] sm:$0xff]
    %v5130 = vld [vmem:[#allocation3 + $0x1460] sm:$0xff]
    %v5131 = vld [vmem:[#allocation3 + $0x1468] sm:$0xff]
    %v5132 = vld [vmem:[#allocation3 + $0x1470] sm:$0xff]
    %v5133 = vld [vmem:[#allocation3 + $0x1478] sm:$0xff]
    %v5134 = vld [vmem:[#allocation3 + $0x1480] sm:$0xff]
    %v5135 = vld [vmem:[#allocation3 + $0x1488] sm:$0xff]
    %v5136 = vld [vmem:[#allocation3 + $0x1490] sm:$0xff]
    %v5137 = vld [vmem:[#allocation3 + $0x1498] sm:$0xff]
    %v5138 = vld [vmem:[#allocation3 + $0x14a0] sm:$0xff]
    %v5139 = vld [vmem:[#allocation3 + $0x14a8] sm:$0xff]
    %v5140 = vld [vmem:[#allocation3 + $0x14b0] sm:$0xff]
    %v5141 = vld [vmem:[#allocation3 + $0x14b8] sm:$0xff]
    %v5142 = vld [vmem:[#allocation3 + $0x14c0] sm:$0xff]
    %v5143 = vld [vmem:[#allocation3 + $0x14c8] sm:$0xff]
    %v5144 = vld [vmem:[#allocation3 + $0x14d0] sm:$0xff]
    %v5145 = vld [vmem:[#allocation3 + $0x14d8] sm:$0xff]
    %v5146 = vld [vmem:[#allocation3 + $0x14e0] sm:$0xff]
    %v5147 = vld [vmem:[#allocation3 + $0x14e8] sm:$0xff]
    %v5148 = vld [vmem:[#allocation3 + $0x14f0] sm:$0xff]
    %v5149 = vld [vmem:[#allocation3 + $0x14f8] sm:$0xff]
    %v5150 = vld [vmem:[#allocation3 + $0x1500] sm:$0xff]
    %v5151 = vld [vmem:[#allocation3 + $0x1508] sm:$0xff]
    %v5152 = vld [vmem:[#allocation3 + $0x1510] sm:$0xff]
    %v5153 = vld [vmem:[#allocation3 + $0x1518] sm:$0xff]
    %v5154 = vld [vmem:[#allocation3 + $0x1520] sm:$0xff]
    %v5155 = vld [vmem:[#allocation3 + $0x1528] sm:$0xff]
    %v5156 = vld [vmem:[#allocation3 + $0x1530] sm:$0xff]
    %v5157 = vld [vmem:[#allocation3 + $0x1538] sm:$0xff]
    %v5158 = vld [vmem:[#allocation3 + $0x1540] sm:$0xff]
    %v5159 = vld [vmem:[#allocation3 + $0x1548] sm:$0xff]
    %v5160 = vld [vmem:[#allocation3 + $0x1550] sm:$0xff]
    %v5161 = vld [vmem:[#allocation3 + $0x1558] sm:$0xff]
    %v5162 = vld [vmem:[#allocation3 + $0x1560] sm:$0xff]
    %v5163 = vld [vmem:[#allocation3 + $0x1568] sm:$0xff]
    %v5164 = vld [vmem:[#allocation3 + $0x1570] sm:$0xff]
    %v5165 = vld [vmem:[#allocation3 + $0x1578] sm:$0xff]
    %v5166 = vld [vmem:[#allocation3 + $0x1580] sm:$0xff]
    %v5167 = vld [vmem:[#allocation3 + $0x1588] sm:$0xff]
    %v5168 = vld [vmem:[#allocation3 + $0x1590] sm:$0xff]
    %v5169 = vld [vmem:[#allocation3 + $0x1598] sm:$0xff]
    %v5170 = vld [vmem:[#allocation3 + $0x15a0] sm:$0xff]
    %v5171 = vld [vmem:[#allocation3 + $0x15a8] sm:$0xff]
    %v5172 = vld [vmem:[#allocation3 + $0x15b0] sm:$0xff]
    %v5173 = vld [vmem:[#allocation3 + $0x15b8] sm:$0xff]
    %v5174 = vld [vmem:[#allocation3 + $0x15c0] sm:$0xff]
    %v5175 = vld [vmem:[#allocation3 + $0x15c8] sm:$0xff]
    %v5176 = vld [vmem:[#allocation3 + $0x15d0] sm:$0xff]
    %v5177 = vld [vmem:[#allocation3 + $0x15d8] sm:$0xff]
    %v5178 = vld [vmem:[#allocation3 + $0x15e0] sm:$0xff]
    %v5179 = vld [vmem:[#allocation3 + $0x15e8] sm:$0xff]
    %v5180 = vld [vmem:[#allocation3 + $0x15f0] sm:$0xff]
    %v5181 = vld [vmem:[#allocation3 + $0x15f8] sm:$0xff]
    %v5182 = vld [vmem:[#allocation3 + $0x1600] sm:$0xff]
    %v5183 = vld [vmem:[#allocation3 + $0x1608] sm:$0xff]
    %v5184 = vld [vmem:[#allocation3 + $0x1610] sm:$0xff]
    %v5185 = vld [vmem:[#allocation3 + $0x1618] sm:$0xff]
    %v5186 = vld [vmem:[#allocation3 + $0x1620] sm:$0xff]
    %v5187 = vld [vmem:[#allocation3 + $0x1628] sm:$0xff]
    %v5188 = vld [vmem:[#allocation3 + $0x1630] sm:$0xff]
    %v5189 = vld [vmem:[#allocation3 + $0x1638] sm:$0xff]
    %v5190 = vld [vmem:[#allocation3 + $0x1640] sm:$0xff]
    %v5191 = vld [vmem:[#allocation3 + $0x1648] sm:$0xff]
    %v5192 = vld [vmem:[#allocation3 + $0x1650] sm:$0xff]
    %v5193 = vld [vmem:[#allocation3 + $0x1658] sm:$0xff]
    %v5194 = vld [vmem:[#allocation3 + $0x1660] sm:$0xff]
    %v5195 = vld [vmem:[#allocation3 + $0x1668] sm:$0xff]
    %v5196 = vld [vmem:[#allocation3 + $0x1670] sm:$0xff]
    %v5197 = vld [vmem:[#allocation3 + $0x1678] sm:$0xff]
    %v5198 = vld [vmem:[#allocation3 + $0x1680] sm:$0xff]
    %v5199 = vld [vmem:[#allocation3 + $0x1688] sm:$0xff]
    %v5200 = vld [vmem:[#allocation3 + $0x1690] sm:$0xff]
    %v5201 = vld [vmem:[#allocation3 + $0x1698] sm:$0xff]
    %v5202 = vld [vmem:[#allocation3 + $0x16a0] sm:$0xff]
    %v5203 = vld [vmem:[#allocation3 + $0x16a8] sm:$0xff]
    %v5204 = vld [vmem:[#allocation3 + $0x16b0] sm:$0xff]
    %v5205 = vld [vmem:[#allocation3 + $0x16b8] sm:$0xff]
    %v5206 = vld [vmem:[#allocation3 + $0x16c0] sm:$0xff]
    %v5207 = vld [vmem:[#allocation3 + $0x16c8] sm:$0xff]
    %v5208 = vld [vmem:[#allocation3 + $0x16d0] sm:$0xff]
    %v5209 = vld [vmem:[#allocation3 + $0x16d8] sm:$0xff]
    %v5210 = vld [vmem:[#allocation3 + $0x16e0] sm:$0xff]
    %v5211 = vld [vmem:[#allocation3 + $0x16e8] sm:$0xff]
    %v5212 = vld [vmem:[#allocation3 + $0x16f0] sm:$0xff]
    %v5213 = vld [vmem:[#allocation3 + $0x16f8] sm:$0xff]
    %v5214 = vld [vmem:[#allocation3 + $0x1700] sm:$0xff]
    %v5215 = vld [vmem:[#allocation3 + $0x1708] sm:$0xff]
    %v5216 = vld [vmem:[#allocation3 + $0x1710] sm:$0xff]
    %v5217 = vld [vmem:[#allocation3 + $0x1718] sm:$0xff]
    %v5218 = vld [vmem:[#allocation3 + $0x1720] sm:$0xff]
    %v5219 = vld [vmem:[#allocation3 + $0x1728] sm:$0xff]
    %v5220 = vld [vmem:[#allocation3 + $0x1730] sm:$0xff]
    %v5221 = vld [vmem:[#allocation3 + $0x1738] sm:$0xff]
    %v5222 = vld [vmem:[#allocation3 + $0x1740] sm:$0xff]
    %v5223 = vld [vmem:[#allocation3 + $0x1748] sm:$0xff]
    %v5224 = vld [vmem:[#allocation3 + $0x1750] sm:$0xff]
    %v5225 = vld [vmem:[#allocation3 + $0x1758] sm:$0xff]
    %v5226 = vld [vmem:[#allocation3 + $0x1760] sm:$0xff]
    %v5227 = vld [vmem:[#allocation3 + $0x1768] sm:$0xff]
    %v5228 = vld [vmem:[#allocation3 + $0x1770] sm:$0xff]
    %v5229 = vld [vmem:[#allocation3 + $0x1778] sm:$0xff]
    %v5230 = vld [vmem:[#allocation3 + $0x1780] sm:$0xff]
    %v5231 = vld [vmem:[#allocation3 + $0x1788] sm:$0xff]
    %v5232 = vld [vmem:[#allocation3 + $0x1790] sm:$0xff]
    %v5233 = vld [vmem:[#allocation3 + $0x1798] sm:$0xff]
    %v5234 = vld [vmem:[#allocation3 + $0x17a0] sm:$0xff]
    %v5235 = vld [vmem:[#allocation3 + $0x17a8] sm:$0xff]
    %v5236 = vld [vmem:[#allocation3 + $0x17b0] sm:$0xff]
    %v5237 = vld [vmem:[#allocation3 + $0x17b8] sm:$0xff]
    %v5238 = vld [vmem:[#allocation3 + $0x17c0] sm:$0xff]
    %v5239 = vld [vmem:[#allocation3 + $0x17c8] sm:$0xff]
    %v5240 = vld [vmem:[#allocation3 + $0x17d0] sm:$0xff]
    %v5241 = vld [vmem:[#allocation3 + $0x17d8] sm:$0xff]
    %v5242 = vld [vmem:[#allocation3 + $0x17e0] sm:$0xff]
    %v5243 = vld [vmem:[#allocation3 + $0x17e8] sm:$0xff]
    %v5244 = vld [vmem:[#allocation3 + $0x17f0] sm:$0xff]
    %v5245 = vld [vmem:[#allocation3 + $0x17f8] sm:$0xff]
    %v5246 = vld [vmem:[#allocation3 + $0x1800] sm:$0xff]
    %v5247 = vld [vmem:[#allocation3 + $0x1808] sm:$0xff]
    %v5248 = vld [vmem:[#allocation3 + $0x1810] sm:$0xff]
    %v5249 = vld [vmem:[#allocation3 + $0x1818] sm:$0xff]
    %v5250 = vld [vmem:[#allocation3 + $0x1820] sm:$0xff]
    %v5251 = vld [vmem:[#allocation3 + $0x1828] sm:$0xff]
    %v5252 = vld [vmem:[#allocation3 + $0x1830] sm:$0xff]
    %v5253 = vld [vmem:[#allocation3 + $0x1838] sm:$0xff]
    %v5254 = vld [vmem:[#allocation3 + $0x1840] sm:$0xff]
    %v5255 = vld [vmem:[#allocation3 + $0x1848] sm:$0xff]
    %v5256 = vld [vmem:[#allocation3 + $0x1850] sm:$0xff]
    %v5257 = vld [vmem:[#allocation3 + $0x1858] sm:$0xff]
    %v5258 = vld [vmem:[#allocation3 + $0x1860] sm:$0xff]
    %v5259 = vld [vmem:[#allocation3 + $0x1868] sm:$0xff]
    %v5260 = vld [vmem:[#allocation3 + $0x1870] sm:$0xff]
    %v5261 = vld [vmem:[#allocation3 + $0x1878] sm:$0xff]
    %v5262 = vld [vmem:[#allocation3 + $0x1880] sm:$0xff]
    %v5263 = vld [vmem:[#allocation3 + $0x1888] sm:$0xff]
    %v5264 = vld [vmem:[#allocation3 + $0x1890] sm:$0xff]
    %v5265 = vld [vmem:[#allocation3 + $0x1898] sm:$0xff]
    %v5266 = vld [vmem:[#allocation3 + $0x18a0] sm:$0xff]
    %v5267 = vld [vmem:[#allocation3 + $0x18a8] sm:$0xff]
    %v5268 = vld [vmem:[#allocation3 + $0x18b0] sm:$0xff]
    %v5269 = vld [vmem:[#allocation3 + $0x18b8] sm:$0xff]
    %v5270 = vld [vmem:[#allocation3 + $0x18c0] sm:$0xff]
    %v5271 = vld [vmem:[#allocation3 + $0x18c8] sm:$0xff]
    %v5272 = vld [vmem:[#allocation3 + $0x18d0] sm:$0xff]
    %v5273 = vld [vmem:[#allocation3 + $0x18d8] sm:$0xff]
    %v5274 = vld [vmem:[#allocation3 + $0x18e0] sm:$0xff]
    %v5275 = vld [vmem:[#allocation3 + $0x18e8] sm:$0xff]
    %v5276 = vld [vmem:[#allocation3 + $0x18f0] sm:$0xff]
    %v5277 = vld [vmem:[#allocation3 + $0x18f8] sm:$0xff]
    %v5278 = vld [vmem:[#allocation22] sm:$0xff]
    %v5279 = vld [vmem:[#allocation22 + $0x8] sm:$0x3]
    %v5280 = vpack.c.bf16 %v4464, %v4464
    %v5281 = vpack.c.bf16 %v4465, %v4465
    %v5282 = vpack.c.bf16 %v4466, %v4466
    %v5283 = vpack.c.bf16 %v4467, %v4467
    %v5284 = vpack.c.bf16 %v4468, %v4468
    %v5285 = vpack.c.bf16 %v4469, %v4469
    %v5286 = vpack.c.bf16 %v4470, %v4470
    %v5287 = vpack.c.bf16 %v4471, %v4471
    %v5288 = vpack.c.bf16 %v4472, %v4472
    %v5289 = vpack.c.bf16 %v4473, %v4473
    %v5292 = vlaneseq
    %v5293 = vshrl.u32 %v5292, 7
    %v5294 = vsub.s32 0, %v5293
    %v5295 = vrot.slane %v5278, %v5294
    %v5296 = vlaneseq
    %v5297 = vshrl.u32 %v5296, 7
    %v5298 = vsub.s32 1, %v5297
    %v5299 = vrot.slane %v5278, %v5298
    %v5300 = vlaneseq
    %v5301 = vshrl.u32 %v5300, 7
    %v5302 = vsub.s32 2, %v5301
    %v5303 = vrot.slane %v5278, %v5302
    %v5304 = vlaneseq
    %v5305 = vshrl.u32 %v5304, 7
    %v5306 = vsub.s32 3, %v5305
    %v5307 = vrot.slane %v5278, %v5306
    %v5308 = vlaneseq
    %v5309 = vshrl.u32 %v5308, 7
    %v5310 = vsub.s32 4, %v5309
    %v5311 = vrot.slane %v5278, %v5310
    %v5312 = vlaneseq
    %v5313 = vshrl.u32 %v5312, 7
    %v5314 = vsub.s32 5, %v5313
    %v5315 = vrot.slane %v5278, %v5314
    %v5316 = vlaneseq
    %v5317 = vshrl.u32 %v5316, 7
    %v5318 = vsub.s32 6, %v5317
    %v5319 = vrot.slane %v5278, %v5318
    %v5320 = vlaneseq
    %v5321 = vshrl.u32 %v5320, 7
    %v5322 = vsub.s32 7, %v5321
    %v5323 = vrot.slane %v5278, %v5322
    %v5324 = vlaneseq
    %v5325 = vshrl.u32 %v5324, 7
    %v5326 = vsub.s32 0, %v5325
    %v5327 = vrot.slane %v5279, %v5326
    %v5328 = vlaneseq
    %v5329 = vshrl.u32 %v5328, 7
    %v5330 = vsub.s32 1, %v5329
    %v5331 = vrot.slane %v5279, %v5330
    %v6142 = vunpack.c.l.b16 %v4478
    %v6143 = vunpack.c.h.b16 %v4478
    %v6144 = vunpack.c.l.b16 %v4479
    %v6145 = vunpack.c.h.b16 %v4479
    %v6146 = vunpack.c.l.b16 %v4480
    %v6147 = vunpack.c.h.b16 %v4480
    %v6148 = vunpack.c.l.b16 %v4481
    %v6149 = vunpack.c.h.b16 %v4481
    %v6150 = vunpack.c.l.b16 %v4482
    %v6151 = vunpack.c.h.b16 %v4482
    %v6152 = vunpack.c.l.b16 %v4483
    %v6153 = vunpack.c.h.b16 %v4483
    %v6154 = vunpack.c.l.b16 %v4484
    %v6155 = vunpack.c.h.b16 %v4484
    %v6156 = vunpack.c.l.b16 %v4485
    %v6157 = vunpack.c.h.b16 %v4485
    %v6158 = vunpack.c.l.b16 %v4486
    %v6159 = vunpack.c.h.b16 %v4486
    %v6160 = vunpack.c.l.b16 %v4487
    %v6161 = vunpack.c.h.b16 %v4487
    %v6162 = vunpack.c.l.b16 %v4488
    %v6163 = vunpack.c.h.b16 %v4488
    %v6164 = vunpack.c.l.b16 %v4489
    %v6165 = vunpack.c.h.b16 %v4489
    %v6166 = vunpack.c.l.b16 %v4490
    %v6167 = vunpack.c.h.b16 %v4490
    %v6168 = vunpack.c.l.b16 %v4491
    %v6169 = vunpack.c.h.b16 %v4491
    %v6170 = vunpack.c.l.b16 %v4492
    %v6171 = vunpack.c.h.b16 %v4492
    %v6172 = vunpack.c.l.b16 %v4493
    %v6173 = vunpack.c.h.b16 %v4493
    %v6174 = vunpack.c.l.b16 %v4494
    %v6175 = vunpack.c.h.b16 %v4494
    %v6176 = vunpack.c.l.b16 %v4495
    %v6177 = vunpack.c.h.b16 %v4495
    %v6178 = vunpack.c.l.b16 %v4496
    %v6179 = vunpack.c.h.b16 %v4496
    %v6180 = vunpack.c.l.b16 %v4497
    %v6181 = vunpack.c.h.b16 %v4497
    %v6182 = vunpack.c.l.b16 %v4498
    %v6183 = vunpack.c.h.b16 %v4498
    %v6184 = vunpack.c.l.b16 %v4499
    %v6185 = vunpack.c.h.b16 %v4499
    %v6186 = vunpack.c.l.b16 %v4500
    %v6187 = vunpack.c.h.b16 %v4500
    %v6188 = vunpack.c.l.b16 %v4501
    %v6189 = vunpack.c.h.b16 %v4501
    %v6190 = vunpack.c.l.b16 %v4502
    %v6191 = vunpack.c.h.b16 %v4502
    %v6192 = vunpack.c.l.b16 %v4503
    %v6193 = vunpack.c.h.b16 %v4503
    %v6194 = vunpack.c.l.b16 %v4504
    %v6195 = vunpack.c.h.b16 %v4504
    %v6196 = vunpack.c.l.b16 %v4505
    %v6197 = vunpack.c.h.b16 %v4505
    %v6198 = vunpack.c.l.b16 %v4506
    %v6199 = vunpack.c.h.b16 %v4506
    %v6200 = vunpack.c.l.b16 %v4507
    %v6201 = vunpack.c.h.b16 %v4507
    %v6202 = vunpack.c.l.b16 %v4508
    %v6203 = vunpack.c.h.b16 %v4508
    %v6204 = vunpack.c.l.b16 %v4509
    %v6205 = vunpack.c.h.b16 %v4509
    %v6206 = vunpack.c.l.b16 %v4510
    %v6207 = vunpack.c.h.b16 %v4510
    %v6208 = vunpack.c.l.b16 %v4511
    %v6209 = vunpack.c.h.b16 %v4511
    %v6210 = vunpack.c.l.b16 %v4512
    %v6211 = vunpack.c.h.b16 %v4512
    %v6212 = vunpack.c.l.b16 %v4513
    %v6213 = vunpack.c.h.b16 %v4513
    %v6214 = vunpack.c.l.b16 %v4514
    %v6215 = vunpack.c.h.b16 %v4514
    %v6216 = vunpack.c.l.b16 %v4515
    %v6217 = vunpack.c.h.b16 %v4515
    %v6218 = vunpack.c.l.b16 %v4516
    %v6219 = vunpack.c.h.b16 %v4516
    %v6220 = vunpack.c.l.b16 %v4517
    %v6221 = vunpack.c.h.b16 %v4517
    %v6222 = vunpack.c.l.b16 %v4518
    %v6223 = vunpack.c.h.b16 %v4518
    %v6224 = vunpack.c.l.b16 %v4519
    %v6225 = vunpack.c.h.b16 %v4519
    %v6226 = vunpack.c.l.b16 %v4520
    %v6227 = vunpack.c.h.b16 %v4520
    %v6228 = vunpack.c.l.b16 %v4521
    %v6229 = vunpack.c.h.b16 %v4521
    %v6230 = vunpack.c.l.b16 %v4522
    %v6231 = vunpack.c.h.b16 %v4522
    %v6232 = vunpack.c.l.b16 %v4523
    %v6233 = vunpack.c.h.b16 %v4523
    %v6234 = vunpack.c.l.b16 %v4524
    %v6235 = vunpack.c.h.b16 %v4524
    %v6236 = vunpack.c.l.b16 %v4525
    %v6237 = vunpack.c.h.b16 %v4525
    %v6238 = vunpack.c.l.b16 %v4526
    %v6239 = vunpack.c.h.b16 %v4526
    %v6240 = vunpack.c.l.b16 %v4527
    %v6241 = vunpack.c.h.b16 %v4527
    %v6242 = vunpack.c.l.b16 %v4528
    %v6243 = vunpack.c.h.b16 %v4528
    %v6244 = vunpack.c.l.b16 %v4529
    %v6245 = vunpack.c.h.b16 %v4529
    %v6246 = vunpack.c.l.b16 %v4530
    %v6247 = vunpack.c.h.b16 %v4530
    %v6248 = vunpack.c.l.b16 %v4531
    %v6249 = vunpack.c.h.b16 %v4531
    %v6250 = vunpack.c.l.b16 %v4532
    %v6251 = vunpack.c.h.b16 %v4532
    %v6252 = vunpack.c.l.b16 %v4533
    %v6253 = vunpack.c.h.b16 %v4533
    %v6254 = vunpack.c.l.b16 %v4534
    %v6255 = vunpack.c.h.b16 %v4534
    %v6256 = vunpack.c.l.b16 %v4535
    %v6257 = vunpack.c.h.b16 %v4535
    %v6258 = vunpack.c.l.b16 %v4536
    %v6259 = vunpack.c.h.b16 %v4536
    %v6260 = vunpack.c.l.b16 %v4537
    %v6261 = vunpack.c.h.b16 %v4537
    %v6262 = vunpack.c.l.b16 %v4538
    %v6263 = vunpack.c.h.b16 %v4538
    %v6264 = vunpack.c.l.b16 %v4539
    %v6265 = vunpack.c.h.b16 %v4539
    %v6266 = vunpack.c.l.b16 %v4540
    %v6267 = vunpack.c.h.b16 %v4540
    %v6268 = vunpack.c.l.b16 %v4541
    %v6269 = vunpack.c.h.b16 %v4541
    %v6270 = vunpack.c.l.b16 %v4542
    %v6271 = vunpack.c.h.b16 %v4542
    %v6272 = vunpack.c.l.b16 %v4543
    %v6273 = vunpack.c.h.b16 %v4543
    %v6274 = vunpack.c.l.b16 %v4544
    %v6275 = vunpack.c.h.b16 %v4544
    %v6276 = vunpack.c.l.b16 %v4545
    %v6277 = vunpack.c.h.b16 %v4545
    %v6278 = vunpack.c.l.b16 %v4546
    %v6279 = vunpack.c.h.b16 %v4546
    %v6280 = vunpack.c.l.b16 %v4547
    %v6281 = vunpack.c.h.b16 %v4547
    %v6282 = vunpack.c.l.b16 %v4548
    %v6283 = vunpack.c.h.b16 %v4548
    %v6284 = vunpack.c.l.b16 %v4549
    %v6285 = vunpack.c.h.b16 %v4549
    %v6286 = vunpack.c.l.b16 %v4550
    %v6287 = vunpack.c.h.b16 %v4550
    %v6288 = vunpack.c.l.b16 %v4551
    %v6289 = vunpack.c.h.b16 %v4551
    %v6290 = vunpack.c.l.b16 %v4552
    %v6291 = vunpack.c.h.b16 %v4552
    %v6292 = vunpack.c.l.b16 %v4553
    %v6293 = vunpack.c.h.b16 %v4553
    %v6294 = vunpack.c.l.b16 %v4554
    %v6295 = vunpack.c.h.b16 %v4554
    %v6296 = vunpack.c.l.b16 %v4555
    %v6297 = vunpack.c.h.b16 %v4555
    %v6298 = vunpack.c.l.b16 %v4556
    %v6299 = vunpack.c.h.b16 %v4556
    %v6300 = vunpack.c.l.b16 %v4557
    %v6301 = vunpack.c.h.b16 %v4557
    %v6302 = vunpack.c.l.b16 %v4558
    %v6303 = vunpack.c.h.b16 %v4558
    %v6304 = vunpack.c.l.b16 %v4559
    %v6305 = vunpack.c.h.b16 %v4559
    %v6306 = vunpack.c.l.b16 %v4560
    %v6307 = vunpack.c.h.b16 %v4560
    %v6308 = vunpack.c.l.b16 %v4561
    %v6309 = vunpack.c.h.b16 %v4561
    %v6310 = vunpack.c.l.b16 %v4562
    %v6311 = vunpack.c.h.b16 %v4562
    %v6312 = vunpack.c.l.b16 %v4563
    %v6313 = vunpack.c.h.b16 %v4563
    %v6314 = vunpack.c.l.b16 %v4564
    %v6315 = vunpack.c.h.b16 %v4564
    %v6316 = vunpack.c.l.b16 %v4565
    %v6317 = vunpack.c.h.b16 %v4565
    %v6318 = vunpack.c.l.b16 %v4566
    %v6319 = vunpack.c.h.b16 %v4566
    %v6320 = vunpack.c.l.b16 %v4567
    %v6321 = vunpack.c.h.b16 %v4567
    %v6322 = vunpack.c.l.b16 %v4568
    %v6323 = vunpack.c.h.b16 %v4568
    %v6324 = vunpack.c.l.b16 %v4569
    %v6325 = vunpack.c.h.b16 %v4569
    %v6326 = vunpack.c.l.b16 %v4570
    %v6327 = vunpack.c.h.b16 %v4570
    %v6328 = vunpack.c.l.b16 %v4571
    %v6329 = vunpack.c.h.b16 %v4571
    %v6330 = vunpack.c.l.b16 %v4572
    %v6331 = vunpack.c.h.b16 %v4572
    %v6332 = vunpack.c.l.b16 %v4573
    %v6333 = vunpack.c.h.b16 %v4573
    %v6334 = vunpack.c.l.b16 %v4574
    %v6335 = vunpack.c.h.b16 %v4574
    %v6336 = vunpack.c.l.b16 %v4575
    %v6337 = vunpack.c.h.b16 %v4575
    %v6338 = vunpack.c.l.b16 %v4576
    %v6339 = vunpack.c.h.b16 %v4576
    %v6340 = vunpack.c.l.b16 %v4577
    %v6341 = vunpack.c.h.b16 %v4577
    %v6342 = vunpack.c.l.b16 %v4578
    %v6343 = vunpack.c.h.b16 %v4578
    %v6344 = vunpack.c.l.b16 %v4579
    %v6345 = vunpack.c.h.b16 %v4579
    %v6346 = vunpack.c.l.b16 %v4580
    %v6347 = vunpack.c.h.b16 %v4580
    %v6348 = vunpack.c.l.b16 %v4581
    %v6349 = vunpack.c.h.b16 %v4581
    %v6350 = vunpack.c.l.b16 %v4582
    %v6351 = vunpack.c.h.b16 %v4582
    %v6352 = vunpack.c.l.b16 %v4583
    %v6353 = vunpack.c.h.b16 %v4583
    %v6354 = vunpack.c.l.b16 %v4584
    %v6355 = vunpack.c.h.b16 %v4584
    %v6356 = vunpack.c.l.b16 %v4585
    %v6357 = vunpack.c.h.b16 %v4585
    %v6358 = vunpack.c.l.b16 %v4586
    %v6359 = vunpack.c.h.b16 %v4586
    %v6360 = vunpack.c.l.b16 %v4587
    %v6361 = vunpack.c.h.b16 %v4587
    %v6362 = vunpack.c.l.b16 %v4588
    %v6363 = vunpack.c.h.b16 %v4588
    %v6364 = vunpack.c.l.b16 %v4589
    %v6365 = vunpack.c.h.b16 %v4589
    %v6366 = vunpack.c.l.b16 %v4590
    %v6367 = vunpack.c.h.b16 %v4590
    %v6368 = vunpack.c.l.b16 %v4591
    %v6369 = vunpack.c.h.b16 %v4591
    %v6370 = vunpack.c.l.b16 %v4592
    %v6371 = vunpack.c.h.b16 %v4592
    %v6372 = vunpack.c.l.b16 %v4593
    %v6373 = vunpack.c.h.b16 %v4593
    %v6374 = vunpack.c.l.b16 %v4594
    %v6375 = vunpack.c.h.b16 %v4594
    %v6376 = vunpack.c.l.b16 %v4595
    %v6377 = vunpack.c.h.b16 %v4595
    %v6378 = vunpack.c.l.b16 %v4596
    %v6379 = vunpack.c.h.b16 %v4596
    %v6380 = vunpack.c.l.b16 %v4597
    %v6381 = vunpack.c.h.b16 %v4597
    %v6382 = vunpack.c.l.b16 %v4598
    %v6383 = vunpack.c.h.b16 %v4598
    %v6384 = vunpack.c.l.b16 %v4599
    %v6385 = vunpack.c.h.b16 %v4599
    %v6386 = vunpack.c.l.b16 %v4600
    %v6387 = vunpack.c.h.b16 %v4600
    %v6388 = vunpack.c.l.b16 %v4601
    %v6389 = vunpack.c.h.b16 %v4601
    %v6390 = vunpack.c.l.b16 %v4602
    %v6391 = vunpack.c.h.b16 %v4602
    %v6392 = vunpack.c.l.b16 %v4603
    %v6393 = vunpack.c.h.b16 %v4603
    %v6394 = vunpack.c.l.b16 %v4604
    %v6395 = vunpack.c.h.b16 %v4604
    %v6396 = vunpack.c.l.b16 %v4605
    %v6397 = vunpack.c.h.b16 %v4605
    %v6398 = vunpack.c.l.b16 %v4606
    %v6399 = vunpack.c.h.b16 %v4606
    %v6400 = vunpack.c.l.b16 %v4607
    %v6401 = vunpack.c.h.b16 %v4607
    %v6402 = vunpack.c.l.b16 %v4608
    %v6403 = vunpack.c.h.b16 %v4608
    %v6404 = vunpack.c.l.b16 %v4609
    %v6405 = vunpack.c.h.b16 %v4609
    %v6406 = vunpack.c.l.b16 %v4610
    %v6407 = vunpack.c.h.b16 %v4610
    %v6408 = vunpack.c.l.b16 %v4611
    %v6409 = vunpack.c.h.b16 %v4611
    %v6410 = vunpack.c.l.b16 %v4612
    %v6411 = vunpack.c.h.b16 %v4612
    %v6412 = vunpack.c.l.b16 %v4613
    %v6413 = vunpack.c.h.b16 %v4613
    %v6414 = vunpack.c.l.b16 %v4614
    %v6415 = vunpack.c.h.b16 %v4614
    %v6416 = vunpack.c.l.b16 %v4615
    %v6417 = vunpack.c.h.b16 %v4615
    %v6418 = vunpack.c.l.b16 %v4616
    %v6419 = vunpack.c.h.b16 %v4616
    %v6420 = vunpack.c.l.b16 %v4617
    %v6421 = vunpack.c.h.b16 %v4617
    %v6422 = vunpack.c.l.b16 %v4618
    %v6423 = vunpack.c.h.b16 %v4618
    %v6424 = vunpack.c.l.b16 %v4619
    %v6425 = vunpack.c.h.b16 %v4619
    %v6426 = vunpack.c.l.b16 %v4620
    %v6427 = vunpack.c.h.b16 %v4620
    %v6428 = vunpack.c.l.b16 %v4621
    %v6429 = vunpack.c.h.b16 %v4621
    %v6430 = vunpack.c.l.b16 %v4622
    %v6431 = vunpack.c.h.b16 %v4622
    %v6432 = vunpack.c.l.b16 %v4623
    %v6433 = vunpack.c.h.b16 %v4623
    %v6434 = vunpack.c.l.b16 %v4624
    %v6435 = vunpack.c.h.b16 %v4624
    %v6436 = vunpack.c.l.b16 %v4625
    %v6437 = vunpack.c.h.b16 %v4625
    %v6438 = vunpack.c.l.b16 %v4626
    %v6439 = vunpack.c.h.b16 %v4626
    %v6440 = vunpack.c.l.b16 %v4627
    %v6441 = vunpack.c.h.b16 %v4627
    %v6442 = vunpack.c.l.b16 %v4628
    %v6443 = vunpack.c.h.b16 %v4628
    %v6444 = vunpack.c.l.b16 %v4629
    %v6445 = vunpack.c.h.b16 %v4629
    %v6446 = vunpack.c.l.b16 %v4630
    %v6447 = vunpack.c.h.b16 %v4630
    %v6448 = vunpack.c.l.b16 %v4631
    %v6449 = vunpack.c.h.b16 %v4631
    %v6450 = vunpack.c.l.b16 %v4632
    %v6451 = vunpack.c.h.b16 %v4632
    %v6452 = vunpack.c.l.b16 %v4633
    %v6453 = vunpack.c.h.b16 %v4633
    %v6454 = vunpack.c.l.b16 %v4634
    %v6455 = vunpack.c.h.b16 %v4634
    %v6456 = vunpack.c.l.b16 %v4635
    %v6457 = vunpack.c.h.b16 %v4635
    %v6458 = vunpack.c.l.b16 %v4636
    %v6459 = vunpack.c.h.b16 %v4636
    %v6460 = vunpack.c.l.b16 %v4637
    %v6461 = vunpack.c.h.b16 %v4637
    %v6462 = vunpack.c.l.b16 %v4638
    %v6463 = vunpack.c.h.b16 %v4638
    %v6464 = vunpack.c.l.b16 %v4639
    %v6465 = vunpack.c.h.b16 %v4639
    %v6466 = vunpack.c.l.b16 %v4640
    %v6467 = vunpack.c.h.b16 %v4640
    %v6468 = vunpack.c.l.b16 %v4641
    %v6469 = vunpack.c.h.b16 %v4641
    %v6470 = vunpack.c.l.b16 %v4642
    %v6471 = vunpack.c.h.b16 %v4642
    %v6472 = vunpack.c.l.b16 %v4643
    %v6473 = vunpack.c.h.b16 %v4643
    %v6474 = vunpack.c.l.b16 %v4644
    %v6475 = vunpack.c.h.b16 %v4644
    %v6476 = vunpack.c.l.b16 %v4645
    %v6477 = vunpack.c.h.b16 %v4645
    %v6478 = vunpack.c.l.b16 %v4646
    %v6479 = vunpack.c.h.b16 %v4646
    %v6480 = vunpack.c.l.b16 %v4647
    %v6481 = vunpack.c.h.b16 %v4647
    %v6482 = vunpack.c.l.b16 %v4648
    %v6483 = vunpack.c.h.b16 %v4648
    %v6484 = vunpack.c.l.b16 %v4649
    %v6485 = vunpack.c.h.b16 %v4649
    %v6486 = vunpack.c.l.b16 %v4650
    %v6487 = vunpack.c.h.b16 %v4650
    %v6488 = vunpack.c.l.b16 %v4651
    %v6489 = vunpack.c.h.b16 %v4651
    %v6490 = vunpack.c.l.b16 %v4652
    %v6491 = vunpack.c.h.b16 %v4652
    %v6492 = vunpack.c.l.b16 %v4653
    %v6493 = vunpack.c.h.b16 %v4653
    %v6494 = vunpack.c.l.b16 %v4654
    %v6495 = vunpack.c.h.b16 %v4654
    %v6496 = vunpack.c.l.b16 %v4655
    %v6497 = vunpack.c.h.b16 %v4655
    %v6498 = vunpack.c.l.b16 %v4656
    %v6499 = vunpack.c.h.b16 %v4656
    %v6500 = vunpack.c.l.b16 %v4657
    %v6501 = vunpack.c.h.b16 %v4657
    %v6502 = vunpack.c.l.b16 %v4658
    %v6503 = vunpack.c.h.b16 %v4658
    %v6504 = vunpack.c.l.b16 %v4659
    %v6505 = vunpack.c.h.b16 %v4659
    %v6506 = vunpack.c.l.b16 %v4660
    %v6507 = vunpack.c.h.b16 %v4660
    %v6508 = vunpack.c.l.b16 %v4661
    %v6509 = vunpack.c.h.b16 %v4661
    %v6510 = vunpack.c.l.b16 %v4662
    %v6511 = vunpack.c.h.b16 %v4662
    %v6512 = vunpack.c.l.b16 %v4663
    %v6513 = vunpack.c.h.b16 %v4663
    %v6514 = vunpack.c.l.b16 %v4664
    %v6515 = vunpack.c.h.b16 %v4664
    %v6516 = vunpack.c.l.b16 %v4665
    %v6517 = vunpack.c.h.b16 %v4665
    %v6518 = vunpack.c.l.b16 %v4666
    %v6519 = vunpack.c.h.b16 %v4666
    %v6520 = vunpack.c.l.b16 %v4667
    %v6521 = vunpack.c.h.b16 %v4667
    %v6522 = vunpack.c.l.b16 %v4668
    %v6523 = vunpack.c.h.b16 %v4668
    %v6524 = vunpack.c.l.b16 %v4669
    %v6525 = vunpack.c.h.b16 %v4669
    %v6526 = vunpack.c.l.b16 %v4670
    %v6527 = vunpack.c.h.b16 %v4670
    %v6528 = vunpack.c.l.b16 %v4671
    %v6529 = vunpack.c.h.b16 %v4671
    %v6530 = vunpack.c.l.b16 %v4672
    %v6531 = vunpack.c.h.b16 %v4672
    %v6532 = vunpack.c.l.b16 %v4673
    %v6533 = vunpack.c.h.b16 %v4673
    %v6534 = vunpack.c.l.b16 %v4674
    %v6535 = vunpack.c.h.b16 %v4674
    %v6536 = vunpack.c.l.b16 %v4675
    %v6537 = vunpack.c.h.b16 %v4675
    %v6538 = vunpack.c.l.b16 %v4676
    %v6539 = vunpack.c.h.b16 %v4676
    %v6540 = vunpack.c.l.b16 %v4677
    %v6541 = vunpack.c.h.b16 %v4677
    %v6542 = vunpack.c.l.b16 %v4678
    %v6543 = vunpack.c.h.b16 %v4678
    %v6544 = vunpack.c.l.b16 %v4679
    %v6545 = vunpack.c.h.b16 %v4679
    %v6546 = vunpack.c.l.b16 %v4680
    %v6547 = vunpack.c.h.b16 %v4680
    %v6548 = vunpack.c.l.b16 %v4681
    %v6549 = vunpack.c.h.b16 %v4681
    %v6550 = vunpack.c.l.b16 %v4682
    %v6551 = vunpack.c.h.b16 %v4682
    %v6552 = vunpack.c.l.b16 %v4683
    %v6553 = vunpack.c.h.b16 %v4683
    %v6554 = vunpack.c.l.b16 %v4684
    %v6555 = vunpack.c.h.b16 %v4684
    %v6556 = vunpack.c.l.b16 %v4685
    %v6557 = vunpack.c.h.b16 %v4685
    %v6558 = vunpack.c.l.b16 %v4686
    %v6559 = vunpack.c.h.b16 %v4686
    %v6560 = vunpack.c.l.b16 %v4687
    %v6561 = vunpack.c.h.b16 %v4687
    %v6562 = vunpack.c.l.b16 %v4688
    %v6563 = vunpack.c.h.b16 %v4688
    %v6564 = vunpack.c.l.b16 %v4689
    %v6565 = vunpack.c.h.b16 %v4689
    %v6566 = vunpack.c.l.b16 %v4690
    %v6567 = vunpack.c.h.b16 %v4690
    %v6568 = vunpack.c.l.b16 %v4691
    %v6569 = vunpack.c.h.b16 %v4691
    %v6570 = vunpack.c.l.b16 %v4692
    %v6571 = vunpack.c.h.b16 %v4692
    %v6572 = vunpack.c.l.b16 %v4693
    %v6573 = vunpack.c.h.b16 %v4693
    %v6574 = vunpack.c.l.b16 %v4694
    %v6575 = vunpack.c.h.b16 %v4694
    %v6576 = vunpack.c.l.b16 %v4695
    %v6577 = vunpack.c.h.b16 %v4695
    %v6578 = vunpack.c.l.b16 %v4696
    %v6579 = vunpack.c.h.b16 %v4696
    %v6580 = vunpack.c.l.b16 %v4697
    %v6581 = vunpack.c.h.b16 %v4697
    %v6582 = vunpack.c.l.b16 %v4698
    %v6583 = vunpack.c.h.b16 %v4698
    %v6584 = vunpack.c.l.b16 %v4699
    %v6585 = vunpack.c.h.b16 %v4699
    %v6586 = vunpack.c.l.b16 %v4700
    %v6587 = vunpack.c.h.b16 %v4700
    %v6588 = vunpack.c.l.b16 %v4701
    %v6589 = vunpack.c.h.b16 %v4701
    %v6590 = vunpack.c.l.b16 %v4702
    %v6591 = vunpack.c.h.b16 %v4702
    %v6592 = vunpack.c.l.b16 %v4703
    %v6593 = vunpack.c.h.b16 %v4703
    %v6594 = vunpack.c.l.b16 %v4704
    %v6595 = vunpack.c.h.b16 %v4704
    %v6596 = vunpack.c.l.b16 %v4705
    %v6597 = vunpack.c.h.b16 %v4705
    %v6598 = vunpack.c.l.b16 %v4706
    %v6599 = vunpack.c.h.b16 %v4706
    %v6600 = vunpack.c.l.b16 %v4707
    %v6601 = vunpack.c.h.b16 %v4707
    %v6602 = vunpack.c.l.b16 %v4708
    %v6603 = vunpack.c.h.b16 %v4708
    %v6604 = vunpack.c.l.b16 %v4709
    %v6605 = vunpack.c.h.b16 %v4709
    %v6606 = vunpack.c.l.b16 %v4710
    %v6607 = vunpack.c.h.b16 %v4710
    %v6608 = vunpack.c.l.b16 %v4711
    %v6609 = vunpack.c.h.b16 %v4711
    %v6610 = vunpack.c.l.b16 %v4712
    %v6611 = vunpack.c.h.b16 %v4712
    %v6612 = vunpack.c.l.b16 %v4713
    %v6613 = vunpack.c.h.b16 %v4713
    %v6614 = vunpack.c.l.b16 %v4714
    %v6615 = vunpack.c.h.b16 %v4714
    %v6616 = vunpack.c.l.b16 %v4715
    %v6617 = vunpack.c.h.b16 %v4715
    %v6618 = vunpack.c.l.b16 %v4716
    %v6619 = vunpack.c.h.b16 %v4716
    %v6620 = vunpack.c.l.b16 %v4717
    %v6621 = vunpack.c.h.b16 %v4717
    %v6622 = vunpack.c.l.b16 %v4718
    %v6623 = vunpack.c.h.b16 %v4718
    %v6624 = vunpack.c.l.b16 %v4719
    %v6625 = vunpack.c.h.b16 %v4719
    %v6626 = vunpack.c.l.b16 %v4720
    %v6627 = vunpack.c.h.b16 %v4720
    %v6628 = vunpack.c.l.b16 %v4721
    %v6629 = vunpack.c.h.b16 %v4721
    %v6630 = vunpack.c.l.b16 %v4722
    %v6631 = vunpack.c.h.b16 %v4722
    %v6632 = vunpack.c.l.b16 %v4723
    %v6633 = vunpack.c.h.b16 %v4723
    %v6634 = vunpack.c.l.b16 %v4724
    %v6635 = vunpack.c.h.b16 %v4724
    %v6636 = vunpack.c.l.b16 %v4725
    %v6637 = vunpack.c.h.b16 %v4725
    %v6638 = vunpack.c.l.b16 %v4726
    %v6639 = vunpack.c.h.b16 %v4726
    %v6640 = vunpack.c.l.b16 %v4727
    %v6641 = vunpack.c.h.b16 %v4727
    %v6642 = vunpack.c.l.b16 %v4728
    %v6643 = vunpack.c.h.b16 %v4728
    %v6644 = vunpack.c.l.b16 %v4729
    %v6645 = vunpack.c.h.b16 %v4729
    %v6646 = vunpack.c.l.b16 %v4730
    %v6647 = vunpack.c.h.b16 %v4730
    %v6648 = vunpack.c.l.b16 %v4731
    %v6649 = vunpack.c.h.b16 %v4731
    %v6650 = vunpack.c.l.b16 %v4732
    %v6651 = vunpack.c.h.b16 %v4732
    %v6652 = vunpack.c.l.b16 %v4733
    %v6653 = vunpack.c.h.b16 %v4733
    %v6654 = vunpack.c.l.b16 %v4734
    %v6655 = vunpack.c.h.b16 %v4734
    %v6656 = vunpack.c.l.b16 %v4735
    %v6657 = vunpack.c.h.b16 %v4735
    %v6658 = vunpack.c.l.b16 %v4736
    %v6659 = vunpack.c.h.b16 %v4736
    %v6660 = vunpack.c.l.b16 %v4737
    %v6661 = vunpack.c.h.b16 %v4737
    %v6662 = vunpack.c.l.b16 %v4738
    %v6663 = vunpack.c.h.b16 %v4738
    %v6664 = vunpack.c.l.b16 %v4739
    %v6665 = vunpack.c.h.b16 %v4739
    %v6666 = vunpack.c.l.b16 %v4740
    %v6667 = vunpack.c.h.b16 %v4740
    %v6668 = vunpack.c.l.b16 %v4741
    %v6669 = vunpack.c.h.b16 %v4741
    %v6670 = vunpack.c.l.b16 %v4742
    %v6671 = vunpack.c.h.b16 %v4742
    %v6672 = vunpack.c.l.b16 %v4743
    %v6673 = vunpack.c.h.b16 %v4743
    %v6674 = vunpack.c.l.b16 %v4744
    %v6675 = vunpack.c.h.b16 %v4744
    %v6676 = vunpack.c.l.b16 %v4745
    %v6677 = vunpack.c.h.b16 %v4745
    %v6678 = vunpack.c.l.b16 %v4746
    %v6679 = vunpack.c.h.b16 %v4746
    %v6680 = vunpack.c.l.b16 %v4747
    %v6681 = vunpack.c.h.b16 %v4747
    %v6682 = vunpack.c.l.b16 %v4748
    %v6683 = vunpack.c.h.b16 %v4748
    %v6684 = vunpack.c.l.b16 %v4749
    %v6685 = vunpack.c.h.b16 %v4749
    %v6686 = vunpack.c.l.b16 %v4750
    %v6687 = vunpack.c.h.b16 %v4750
    %v6688 = vunpack.c.l.b16 %v4751
    %v6689 = vunpack.c.h.b16 %v4751
    %v6690 = vunpack.c.l.b16 %v4752
    %v6691 = vunpack.c.h.b16 %v4752
    %v6692 = vunpack.c.l.b16 %v4753
    %v6693 = vunpack.c.h.b16 %v4753
    %v6694 = vunpack.c.l.b16 %v4754
    %v6695 = vunpack.c.h.b16 %v4754
    %v6696 = vunpack.c.l.b16 %v4755
    %v6697 = vunpack.c.h.b16 %v4755
    %v6698 = vunpack.c.l.b16 %v4756
    %v6699 = vunpack.c.h.b16 %v4756
    %v6700 = vunpack.c.l.b16 %v4757
    %v6701 = vunpack.c.h.b16 %v4757
    %v6702 = vunpack.c.l.b16 %v4758
    %v6703 = vunpack.c.h.b16 %v4758
    %v6704 = vunpack.c.l.b16 %v4759
    %v6705 = vunpack.c.h.b16 %v4759
    %v6706 = vunpack.c.l.b16 %v4760
    %v6707 = vunpack.c.h.b16 %v4760
    %v6708 = vunpack.c.l.b16 %v4761
    %v6709 = vunpack.c.h.b16 %v4761
    %v6710 = vunpack.c.l.b16 %v4762
    %v6711 = vunpack.c.h.b16 %v4762
    %v6712 = vunpack.c.l.b16 %v4763
    %v6713 = vunpack.c.h.b16 %v4763
    %v6714 = vunpack.c.l.b16 %v4764
    %v6715 = vunpack.c.h.b16 %v4764
    %v6716 = vunpack.c.l.b16 %v4765
    %v6717 = vunpack.c.h.b16 %v4765
    %v6718 = vunpack.c.l.b16 %v4766
    %v6719 = vunpack.c.h.b16 %v4766
    %v6720 = vunpack.c.l.b16 %v4767
    %v6721 = vunpack.c.h.b16 %v4767
    %v6722 = vunpack.c.l.b16 %v4768
    %v6723 = vunpack.c.h.b16 %v4768
    %v6724 = vunpack.c.l.b16 %v4769
    %v6725 = vunpack.c.h.b16 %v4769
    %v6726 = vunpack.c.l.b16 %v4770
    %v6727 = vunpack.c.h.b16 %v4770
    %v6728 = vunpack.c.l.b16 %v4771
    %v6729 = vunpack.c.h.b16 %v4771
    %v6730 = vunpack.c.l.b16 %v4772
    %v6731 = vunpack.c.h.b16 %v4772
    %v6732 = vunpack.c.l.b16 %v4773
    %v6733 = vunpack.c.h.b16 %v4773
    %v6734 = vunpack.c.l.b16 %v4774
    %v6735 = vunpack.c.h.b16 %v4774
    %v6736 = vunpack.c.l.b16 %v4775
    %v6737 = vunpack.c.h.b16 %v4775
    %v6738 = vunpack.c.l.b16 %v4776
    %v6739 = vunpack.c.h.b16 %v4776
    %v6740 = vunpack.c.l.b16 %v4777
    %v6741 = vunpack.c.h.b16 %v4777
    %v6742 = vunpack.c.l.b16 %v4778
    %v6743 = vunpack.c.h.b16 %v4778
    %v6744 = vunpack.c.l.b16 %v4779
    %v6745 = vunpack.c.h.b16 %v4779
    %v6746 = vunpack.c.l.b16 %v4780
    %v6747 = vunpack.c.h.b16 %v4780
    %v6748 = vunpack.c.l.b16 %v4781
    %v6749 = vunpack.c.h.b16 %v4781
    %v6750 = vunpack.c.l.b16 %v4782
    %v6751 = vunpack.c.h.b16 %v4782
    %v6752 = vunpack.c.l.b16 %v4783
    %v6753 = vunpack.c.h.b16 %v4783
    %v6754 = vunpack.c.l.b16 %v4784
    %v6755 = vunpack.c.h.b16 %v4784
    %v6756 = vunpack.c.l.b16 %v4785
    %v6757 = vunpack.c.h.b16 %v4785
    %v6758 = vunpack.c.l.b16 %v4786
    %v6759 = vunpack.c.h.b16 %v4786
    %v6760 = vunpack.c.l.b16 %v4787
    %v6761 = vunpack.c.h.b16 %v4787
    %v6762 = vunpack.c.l.b16 %v4788
    %v6763 = vunpack.c.h.b16 %v4788
    %v6764 = vunpack.c.l.b16 %v4789
    %v6765 = vunpack.c.h.b16 %v4789
    %v6766 = vunpack.c.l.b16 %v4790
    %v6767 = vunpack.c.h.b16 %v4790
    %v6768 = vunpack.c.l.b16 %v4791
    %v6769 = vunpack.c.h.b16 %v4791
    %v6770 = vunpack.c.l.b16 %v4792
    %v6771 = vunpack.c.h.b16 %v4792
    %v6772 = vunpack.c.l.b16 %v4793
    %v6773 = vunpack.c.h.b16 %v4793
    %v6774 = vunpack.c.l.b16 %v4794
    %v6775 = vunpack.c.h.b16 %v4794
    %v6776 = vunpack.c.l.b16 %v4795
    %v6777 = vunpack.c.h.b16 %v4795
    %v6778 = vunpack.c.l.b16 %v4796
    %v6779 = vunpack.c.h.b16 %v4796
    %v6780 = vunpack.c.l.b16 %v4797
    %v6781 = vunpack.c.h.b16 %v4797
    %v6782 = vunpack.c.l.b16 %v4798
    %v6783 = vunpack.c.h.b16 %v4798
    %v6784 = vunpack.c.l.b16 %v4799
    %v6785 = vunpack.c.h.b16 %v4799
    %v6786 = vunpack.c.l.b16 %v4800
    %v6787 = vunpack.c.h.b16 %v4800
    %v6788 = vunpack.c.l.b16 %v4801
    %v6789 = vunpack.c.h.b16 %v4801
    %v6790 = vunpack.c.l.b16 %v4802
    %v6791 = vunpack.c.h.b16 %v4802
    %v6792 = vunpack.c.l.b16 %v4803
    %v6793 = vunpack.c.h.b16 %v4803
    %v6794 = vunpack.c.l.b16 %v4804
    %v6795 = vunpack.c.h.b16 %v4804
    %v6796 = vunpack.c.l.b16 %v4805
    %v6797 = vunpack.c.h.b16 %v4805
    %v6798 = vunpack.c.l.b16 %v4806
    %v6799 = vunpack.c.h.b16 %v4806
    %v6800 = vunpack.c.l.b16 %v4807
    %v6801 = vunpack.c.h.b16 %v4807
    %v6802 = vunpack.c.l.b16 %v4808
    %v6803 = vunpack.c.h.b16 %v4808
    %v6804 = vunpack.c.l.b16 %v4809
    %v6805 = vunpack.c.h.b16 %v4809
    %v6806 = vunpack.c.l.b16 %v4810
    %v6807 = vunpack.c.h.b16 %v4810
    %v6808 = vunpack.c.l.b16 %v4811
    %v6809 = vunpack.c.h.b16 %v4811
    %v6810 = vunpack.c.l.b16 %v4812
    %v6811 = vunpack.c.h.b16 %v4812
    %v6812 = vunpack.c.l.b16 %v4813
    %v6813 = vunpack.c.h.b16 %v4813
    %v6814 = vunpack.c.l.b16 %v4814
    %v6815 = vunpack.c.h.b16 %v4814
    %v6816 = vunpack.c.l.b16 %v4815
    %v6817 = vunpack.c.h.b16 %v4815
    %v6818 = vunpack.c.l.b16 %v4816
    %v6819 = vunpack.c.h.b16 %v4816
    %v6820 = vunpack.c.l.b16 %v4817
    %v6821 = vunpack.c.h.b16 %v4817
    %v6822 = vunpack.c.l.b16 %v4818
    %v6823 = vunpack.c.h.b16 %v4818
    %v6824 = vunpack.c.l.b16 %v4819
    %v6825 = vunpack.c.h.b16 %v4819
    %v6826 = vunpack.c.l.b16 %v4820
    %v6827 = vunpack.c.h.b16 %v4820
    %v6828 = vunpack.c.l.b16 %v4821
    %v6829 = vunpack.c.h.b16 %v4821
    %v6830 = vunpack.c.l.b16 %v4822
    %v6831 = vunpack.c.h.b16 %v4822
    %v6832 = vunpack.c.l.b16 %v4823
    %v6833 = vunpack.c.h.b16 %v4823
    %v6834 = vunpack.c.l.b16 %v4824
    %v6835 = vunpack.c.h.b16 %v4824
    %v6836 = vunpack.c.l.b16 %v4825
    %v6837 = vunpack.c.h.b16 %v4825
    %v6838 = vunpack.c.l.b16 %v4826
    %v6839 = vunpack.c.h.b16 %v4826
    %v6840 = vunpack.c.l.b16 %v4827
    %v6841 = vunpack.c.h.b16 %v4827
    %v6842 = vunpack.c.l.b16 %v4828
    %v6843 = vunpack.c.h.b16 %v4828
    %v6844 = vunpack.c.l.b16 %v4829
    %v6845 = vunpack.c.h.b16 %v4829
    %v6846 = vunpack.c.l.b16 %v4830
    %v6847 = vunpack.c.h.b16 %v4830
    %v6848 = vunpack.c.l.b16 %v4831
    %v6849 = vunpack.c.h.b16 %v4831
    %v6850 = vunpack.c.l.b16 %v4832
    %v6851 = vunpack.c.h.b16 %v4832
    %v6852 = vunpack.c.l.b16 %v4833
    %v6853 = vunpack.c.h.b16 %v4833
    %v6854 = vunpack.c.l.b16 %v4834
    %v6855 = vunpack.c.h.b16 %v4834
    %v6856 = vunpack.c.l.b16 %v4835
    %v6857 = vunpack.c.h.b16 %v4835
    %v6858 = vunpack.c.l.b16 %v4836
    %v6859 = vunpack.c.h.b16 %v4836
    %v6860 = vunpack.c.l.b16 %v4837
    %v6861 = vunpack.c.h.b16 %v4837
    %v6862 = vunpack.c.l.b16 %v4838
    %v6863 = vunpack.c.h.b16 %v4838
    %v6864 = vunpack.c.l.b16 %v4839
    %v6865 = vunpack.c.h.b16 %v4839
    %v6866 = vunpack.c.l.b16 %v4840
    %v6867 = vunpack.c.h.b16 %v4840
    %v6868 = vunpack.c.l.b16 %v4841
    %v6869 = vunpack.c.h.b16 %v4841
    %v6870 = vunpack.c.l.b16 %v4842
    %v6871 = vunpack.c.h.b16 %v4842
    %v6872 = vunpack.c.l.b16 %v4843
    %v6873 = vunpack.c.h.b16 %v4843
    %v6874 = vunpack.c.l.b16 %v4844
    %v6875 = vunpack.c.h.b16 %v4844
    %v6876 = vunpack.c.l.b16 %v4845
    %v6877 = vunpack.c.h.b16 %v4845
    %v6878 = vunpack.c.l.b16 %v4846
    %v6879 = vunpack.c.h.b16 %v4846
    %v6880 = vunpack.c.l.b16 %v4847
    %v6881 = vunpack.c.h.b16 %v4847
    %v6882 = vunpack.c.l.b16 %v4848
    %v6883 = vunpack.c.h.b16 %v4848
    %v6884 = vunpack.c.l.b16 %v4849
    %v6885 = vunpack.c.h.b16 %v4849
    %v6886 = vunpack.c.l.b16 %v4850
    %v6887 = vunpack.c.h.b16 %v4850
    %v6888 = vunpack.c.l.b16 %v4851
    %v6889 = vunpack.c.h.b16 %v4851
    %v6890 = vunpack.c.l.b16 %v4852
    %v6891 = vunpack.c.h.b16 %v4852
    %v6892 = vunpack.c.l.b16 %v4853
    %v6893 = vunpack.c.h.b16 %v4853
    %v6894 = vunpack.c.l.b16 %v4854
    %v6895 = vunpack.c.h.b16 %v4854
    %v6896 = vunpack.c.l.b16 %v4855
    %v6897 = vunpack.c.h.b16 %v4855
    %v6898 = vunpack.c.l.b16 %v4856
    %v6899 = vunpack.c.h.b16 %v4856
    %v6900 = vunpack.c.l.b16 %v4857
    %v6901 = vunpack.c.h.b16 %v4857
    %v6902 = vunpack.c.l.b16 %v4858
    %v6903 = vunpack.c.h.b16 %v4858
    %v6904 = vunpack.c.l.b16 %v4859
    %v6905 = vunpack.c.h.b16 %v4859
    %v6906 = vunpack.c.l.b16 %v4860
    %v6907 = vunpack.c.h.b16 %v4860
    %v6908 = vunpack.c.l.b16 %v4861
    %v6909 = vunpack.c.h.b16 %v4861
    %v6910 = vunpack.c.l.b16 %v4862
    %v6911 = vunpack.c.h.b16 %v4862
    %v6912 = vunpack.c.l.b16 %v4863
    %v6913 = vunpack.c.h.b16 %v4863
    %v6914 = vunpack.c.l.b16 %v4864
    %v6915 = vunpack.c.h.b16 %v4864
    %v6916 = vunpack.c.l.b16 %v4865
    %v6917 = vunpack.c.h.b16 %v4865
    %v6918 = vunpack.c.l.b16 %v4866
    %v6919 = vunpack.c.h.b16 %v4866
    %v6920 = vunpack.c.l.b16 %v4867
    %v6921 = vunpack.c.h.b16 %v4867
    %v6922 = vunpack.c.l.b16 %v4868
    %v6923 = vunpack.c.h.b16 %v4868
    %v6924 = vunpack.c.l.b16 %v4869
    %v6925 = vunpack.c.h.b16 %v4869
    %v6926 = vunpack.c.l.b16 %v4870
    %v6927 = vunpack.c.h.b16 %v4870
    %v6928 = vunpack.c.l.b16 %v4871
    %v6929 = vunpack.c.h.b16 %v4871
    %v6930 = vunpack.c.l.b16 %v4872
    %v6931 = vunpack.c.h.b16 %v4872
    %v6932 = vunpack.c.l.b16 %v4873
    %v6933 = vunpack.c.h.b16 %v4873
    %v6934 = vunpack.c.l.b16 %v4874
    %v6935 = vunpack.c.h.b16 %v4874
    %v6936 = vunpack.c.l.b16 %v4875
    %v6937 = vunpack.c.h.b16 %v4875
    %v6938 = vunpack.c.l.b16 %v4876
    %v6939 = vunpack.c.h.b16 %v4876
    %v6940 = vunpack.c.l.b16 %v4877
    %v6941 = vunpack.c.h.b16 %v4877
    %v6942 = vunpack.c.l.b16 %v4878
    %v6943 = vunpack.c.h.b16 %v4878
    %v6944 = vunpack.c.l.b16 %v4879
    %v6945 = vunpack.c.h.b16 %v4879
    %v6946 = vunpack.c.l.b16 %v4880
    %v6947 = vunpack.c.h.b16 %v4880
    %v6948 = vunpack.c.l.b16 %v4881
    %v6949 = vunpack.c.h.b16 %v4881
    %v6950 = vunpack.c.l.b16 %v4882
    %v6951 = vunpack.c.h.b16 %v4882
    %v6952 = vunpack.c.l.b16 %v4883
    %v6953 = vunpack.c.h.b16 %v4883
    %v6954 = vunpack.c.l.b16 %v4884
    %v6955 = vunpack.c.h.b16 %v4884
    %v6956 = vunpack.c.l.b16 %v4885
    %v6957 = vunpack.c.h.b16 %v4885
    %v6958 = vunpack.c.l.b16 %v4886
    %v6959 = vunpack.c.h.b16 %v4886
    %v6960 = vunpack.c.l.b16 %v4887
    %v6961 = vunpack.c.h.b16 %v4887
    %v6962 = vunpack.c.l.b16 %v4888
    %v6963 = vunpack.c.h.b16 %v4888
    %v6964 = vunpack.c.l.b16 %v4889
    %v6965 = vunpack.c.h.b16 %v4889
    %v6966 = vunpack.c.l.b16 %v4890
    %v6967 = vunpack.c.h.b16 %v4890
    %v6968 = vunpack.c.l.b16 %v4891
    %v6969 = vunpack.c.h.b16 %v4891
    %v6970 = vunpack.c.l.b16 %v4892
    %v6971 = vunpack.c.h.b16 %v4892
    %v6972 = vunpack.c.l.b16 %v4893
    %v6973 = vunpack.c.h.b16 %v4893
    %v6974 = vunpack.c.l.b16 %v4894
    %v6975 = vunpack.c.h.b16 %v4894
    %v6976 = vunpack.c.l.b16 %v4895
    %v6977 = vunpack.c.h.b16 %v4895
    %v6978 = vunpack.c.l.b16 %v4896
    %v6979 = vunpack.c.h.b16 %v4896
    %v6980 = vunpack.c.l.b16 %v4897
    %v6981 = vunpack.c.h.b16 %v4897
    %v6982 = vunpack.c.l.b16 %v4898
    %v6983 = vunpack.c.h.b16 %v4898
    %v6984 = vunpack.c.l.b16 %v4899
    %v6985 = vunpack.c.h.b16 %v4899
    %v6986 = vunpack.c.l.b16 %v4900
    %v6987 = vunpack.c.h.b16 %v4900
    %v6988 = vunpack.c.l.b16 %v4901
    %v6989 = vunpack.c.h.b16 %v4901
    %v6990 = vunpack.c.l.b16 %v4902
    %v6991 = vunpack.c.h.b16 %v4902
    %v6992 = vunpack.c.l.b16 %v4903
    %v6993 = vunpack.c.h.b16 %v4903
    %v6994 = vunpack.c.l.b16 %v4904
    %v6995 = vunpack.c.h.b16 %v4904
    %v6996 = vunpack.c.l.b16 %v4905
    %v6997 = vunpack.c.h.b16 %v4905
    %v6998 = vunpack.c.l.b16 %v4906
    %v6999 = vunpack.c.h.b16 %v4906
    %v7000 = vunpack.c.l.b16 %v4907
    %v7001 = vunpack.c.h.b16 %v4907
    %v7002 = vunpack.c.l.b16 %v4908
    %v7003 = vunpack.c.h.b16 %v4908
    %v7004 = vunpack.c.l.b16 %v4909
    %v7005 = vunpack.c.h.b16 %v4909
    %v7006 = vunpack.c.l.b16 %v4910
    %v7007 = vunpack.c.h.b16 %v4910
    %v7008 = vunpack.c.l.b16 %v4911
    %v7009 = vunpack.c.h.b16 %v4911
    %v7010 = vunpack.c.l.b16 %v4912
    %v7011 = vunpack.c.h.b16 %v4912
    %v7012 = vunpack.c.l.b16 %v4913
    %v7013 = vunpack.c.h.b16 %v4913
    %v7014 = vunpack.c.l.b16 %v4914
    %v7015 = vunpack.c.h.b16 %v4914
    %v7016 = vunpack.c.l.b16 %v4915
    %v7017 = vunpack.c.h.b16 %v4915
    %v7018 = vunpack.c.l.b16 %v4916
    %v7019 = vunpack.c.h.b16 %v4916
    %v7020 = vunpack.c.l.b16 %v4917
    %v7021 = vunpack.c.h.b16 %v4917
    %v7022 = vunpack.c.l.b16 %v4918
    %v7023 = vunpack.c.h.b16 %v4918
    %v7024 = vunpack.c.l.b16 %v4919
    %v7025 = vunpack.c.h.b16 %v4919
    %v7026 = vunpack.c.l.b16 %v4920
    %v7027 = vunpack.c.h.b16 %v4920
    %v7028 = vunpack.c.l.b16 %v4921
    %v7029 = vunpack.c.h.b16 %v4921
    %v7030 = vunpack.c.l.b16 %v4922
    %v7031 = vunpack.c.h.b16 %v4922
    %v7032 = vunpack.c.l.b16 %v4923
    %v7033 = vunpack.c.h.b16 %v4923
    %v7034 = vunpack.c.l.b16 %v4924
    %v7035 = vunpack.c.h.b16 %v4924
    %v7036 = vunpack.c.l.b16 %v4925
    %v7037 = vunpack.c.h.b16 %v4925
    %v7038 = vunpack.c.l.b16 %v4926
    %v7039 = vunpack.c.h.b16 %v4926
    %v7040 = vunpack.c.l.b16 %v4927
    %v7041 = vunpack.c.h.b16 %v4927
    %v7042 = vunpack.c.l.b16 %v4928
    %v7043 = vunpack.c.h.b16 %v4928
    %v7044 = vunpack.c.l.b16 %v4929
    %v7045 = vunpack.c.h.b16 %v4929
    %v7046 = vunpack.c.l.b16 %v4930
    %v7047 = vunpack.c.h.b16 %v4930
    %v7048 = vunpack.c.l.b16 %v4931
    %v7049 = vunpack.c.h.b16 %v4931
    %v7050 = vunpack.c.l.b16 %v4932
    %v7051 = vunpack.c.h.b16 %v4932
    %v7052 = vunpack.c.l.b16 %v4933
    %v7053 = vunpack.c.h.b16 %v4933
    %v7054 = vunpack.c.l.b16 %v4934
    %v7055 = vunpack.c.h.b16 %v4934
    %v7056 = vunpack.c.l.b16 %v4935
    %v7057 = vunpack.c.h.b16 %v4935
    %v7058 = vunpack.c.l.b16 %v4936
    %v7059 = vunpack.c.h.b16 %v4936
    %v7060 = vunpack.c.l.b16 %v4937
    %v7061 = vunpack.c.h.b16 %v4937
    %v7062 = vunpack.c.l.b16 %v4938
    %v7063 = vunpack.c.h.b16 %v4938
    %v7064 = vunpack.c.l.b16 %v4939
    %v7065 = vunpack.c.h.b16 %v4939
    %v7066 = vunpack.c.l.b16 %v4940
    %v7067 = vunpack.c.h.b16 %v4940
    %v7068 = vunpack.c.l.b16 %v4941
    %v7069 = vunpack.c.h.b16 %v4941
    %v7070 = vunpack.c.l.b16 %v4942
    %v7071 = vunpack.c.h.b16 %v4942
    %v7072 = vunpack.c.l.b16 %v4943
    %v7073 = vunpack.c.h.b16 %v4943
    %v7074 = vunpack.c.l.b16 %v4944
    %v7075 = vunpack.c.h.b16 %v4944
    %v7076 = vunpack.c.l.b16 %v4945
    %v7077 = vunpack.c.h.b16 %v4945
    %v7078 = vunpack.c.l.b16 %v4946
    %v7079 = vunpack.c.h.b16 %v4946
    %v7080 = vunpack.c.l.b16 %v4947
    %v7081 = vunpack.c.h.b16 %v4947
    %v7082 = vunpack.c.l.b16 %v4948
    %v7083 = vunpack.c.h.b16 %v4948
    %v7084 = vunpack.c.l.b16 %v4949
    %v7085 = vunpack.c.h.b16 %v4949
    %v7086 = vunpack.c.l.b16 %v4950
    %v7087 = vunpack.c.h.b16 %v4950
    %v7088 = vunpack.c.l.b16 %v4951
    %v7089 = vunpack.c.h.b16 %v4951
    %v7090 = vunpack.c.l.b16 %v4952
    %v7091 = vunpack.c.h.b16 %v4952
    %v7092 = vunpack.c.l.b16 %v4953
    %v7093 = vunpack.c.h.b16 %v4953
    %v7094 = vunpack.c.l.b16 %v4954
    %v7095 = vunpack.c.h.b16 %v4954
    %v7096 = vunpack.c.l.b16 %v4955
    %v7097 = vunpack.c.h.b16 %v4955
    %v7098 = vunpack.c.l.b16 %v4956
    %v7099 = vunpack.c.h.b16 %v4956
    %v7100 = vunpack.c.l.b16 %v4957
    %v7101 = vunpack.c.h.b16 %v4957
    %v7102 = vunpack.c.l.b16 %v4958
    %v7103 = vunpack.c.h.b16 %v4958
    %v7104 = vunpack.c.l.b16 %v4959
    %v7105 = vunpack.c.h.b16 %v4959
    %v7106 = vunpack.c.l.b16 %v4960
    %v7107 = vunpack.c.h.b16 %v4960
    %v7108 = vunpack.c.l.b16 %v4961
    %v7109 = vunpack.c.h.b16 %v4961
    %v7110 = vunpack.c.l.b16 %v4962
    %v7111 = vunpack.c.h.b16 %v4962
    %v7112 = vunpack.c.l.b16 %v4963
    %v7113 = vunpack.c.h.b16 %v4963
    %v7114 = vunpack.c.l.b16 %v4964
    %v7115 = vunpack.c.h.b16 %v4964
    %v7116 = vunpack.c.l.b16 %v4965
    %v7117 = vunpack.c.h.b16 %v4965
    %v7118 = vunpack.c.l.b16 %v4966
    %v7119 = vunpack.c.h.b16 %v4966
    %v7120 = vunpack.c.l.b16 %v4967
    %v7121 = vunpack.c.h.b16 %v4967
    %v7122 = vunpack.c.l.b16 %v4968
    %v7123 = vunpack.c.h.b16 %v4968
    %v7124 = vunpack.c.l.b16 %v4969
    %v7125 = vunpack.c.h.b16 %v4969
    %v7126 = vunpack.c.l.b16 %v4970
    %v7127 = vunpack.c.h.b16 %v4970
    %v7128 = vunpack.c.l.b16 %v4971
    %v7129 = vunpack.c.h.b16 %v4971
    %v7130 = vunpack.c.l.b16 %v4972
    %v7131 = vunpack.c.h.b16 %v4972
    %v7132 = vunpack.c.l.b16 %v4973
    %v7133 = vunpack.c.h.b16 %v4973
    %v7134 = vunpack.c.l.b16 %v4974
    %v7135 = vunpack.c.h.b16 %v4974
    %v7136 = vunpack.c.l.b16 %v4975
    %v7137 = vunpack.c.h.b16 %v4975
    %v7138 = vunpack.c.l.b16 %v4976
    %v7139 = vunpack.c.h.b16 %v4976
    %v7140 = vunpack.c.l.b16 %v4977
    %v7141 = vunpack.c.h.b16 %v4977
    %v7142 = vunpack.c.l.b16 %v4978
    %v7143 = vunpack.c.h.b16 %v4978
    %v7144 = vunpack.c.l.b16 %v4979
    %v7145 = vunpack.c.h.b16 %v4979
    %v7146 = vunpack.c.l.b16 %v4980
    %v7147 = vunpack.c.h.b16 %v4980
    %v7148 = vunpack.c.l.b16 %v4981
    %v7149 = vunpack.c.h.b16 %v4981
    %v7150 = vunpack.c.l.b16 %v4982
    %v7151 = vunpack.c.h.b16 %v4982
    %v7152 = vunpack.c.l.b16 %v4983
    %v7153 = vunpack.c.h.b16 %v4983
    %v7154 = vunpack.c.l.b16 %v4984
    %v7155 = vunpack.c.h.b16 %v4984
    %v7156 = vunpack.c.l.b16 %v4985
    %v7157 = vunpack.c.h.b16 %v4985
    %v7158 = vunpack.c.l.b16 %v4986
    %v7159 = vunpack.c.h.b16 %v4986
    %v7160 = vunpack.c.l.b16 %v4987
    %v7161 = vunpack.c.h.b16 %v4987
    %v7162 = vunpack.c.l.b16 %v4988
    %v7163 = vunpack.c.h.b16 %v4988
    %v7164 = vunpack.c.l.b16 %v4989
    %v7165 = vunpack.c.h.b16 %v4989
    %v7166 = vunpack.c.l.b16 %v4990
    %v7167 = vunpack.c.h.b16 %v4990
    %v7168 = vunpack.c.l.b16 %v4991
    %v7169 = vunpack.c.h.b16 %v4991
    %v7170 = vunpack.c.l.b16 %v4992
    %v7171 = vunpack.c.h.b16 %v4992
    %v7172 = vunpack.c.l.b16 %v4993
    %v7173 = vunpack.c.h.b16 %v4993
    %v7174 = vunpack.c.l.b16 %v4994
    %v7175 = vunpack.c.h.b16 %v4994
    %v7176 = vunpack.c.l.b16 %v4995
    %v7177 = vunpack.c.h.b16 %v4995
    %v7178 = vunpack.c.l.b16 %v4996
    %v7179 = vunpack.c.h.b16 %v4996
    %v7180 = vunpack.c.l.b16 %v4997
    %v7181 = vunpack.c.h.b16 %v4997
    %v7182 = vunpack.c.l.b16 %v4998
    %v7183 = vunpack.c.h.b16 %v4998
    %v7184 = vunpack.c.l.b16 %v4999
    %v7185 = vunpack.c.h.b16 %v4999
    %v7186 = vunpack.c.l.b16 %v5000
    %v7187 = vunpack.c.h.b16 %v5000
    %v7188 = vunpack.c.l.b16 %v5001
    %v7189 = vunpack.c.h.b16 %v5001
    %v7190 = vunpack.c.l.b16 %v5002
    %v7191 = vunpack.c.h.b16 %v5002
    %v7192 = vunpack.c.l.b16 %v5003
    %v7193 = vunpack.c.h.b16 %v5003
    %v7194 = vunpack.c.l.b16 %v5004
    %v7195 = vunpack.c.h.b16 %v5004
    %v7196 = vunpack.c.l.b16 %v5005
    %v7197 = vunpack.c.h.b16 %v5005
    %v7198 = vunpack.c.l.b16 %v5006
    %v7199 = vunpack.c.h.b16 %v5006
    %v7200 = vunpack.c.l.b16 %v5007
    %v7201 = vunpack.c.h.b16 %v5007
    %v7202 = vunpack.c.l.b16 %v5008
    %v7203 = vunpack.c.h.b16 %v5008
    %v7204 = vunpack.c.l.b16 %v5009
    %v7205 = vunpack.c.h.b16 %v5009
    %v7206 = vunpack.c.l.b16 %v5010
    %v7207 = vunpack.c.h.b16 %v5010
    %v7208 = vunpack.c.l.b16 %v5011
    %v7209 = vunpack.c.h.b16 %v5011
    %v7210 = vunpack.c.l.b16 %v5012
    %v7211 = vunpack.c.h.b16 %v5012
    %v7212 = vunpack.c.l.b16 %v5013
    %v7213 = vunpack.c.h.b16 %v5013
    %v7214 = vunpack.c.l.b16 %v5014
    %v7215 = vunpack.c.h.b16 %v5014
    %v7216 = vunpack.c.l.b16 %v5015
    %v7217 = vunpack.c.h.b16 %v5015
    %v7218 = vunpack.c.l.b16 %v5016
    %v7219 = vunpack.c.h.b16 %v5016
    %v7220 = vunpack.c.l.b16 %v5017
    %v7221 = vunpack.c.h.b16 %v5017
    %v7222 = vunpack.c.l.b16 %v5018
    %v7223 = vunpack.c.h.b16 %v5018
    %v7224 = vunpack.c.l.b16 %v5019
    %v7225 = vunpack.c.h.b16 %v5019
    %v7226 = vunpack.c.l.b16 %v5020
    %v7227 = vunpack.c.h.b16 %v5020
    %v7228 = vunpack.c.l.b16 %v5021
    %v7229 = vunpack.c.h.b16 %v5021
    %v7230 = vunpack.c.l.b16 %v5022
    %v7231 = vunpack.c.h.b16 %v5022
    %v7232 = vunpack.c.l.b16 %v5023
    %v7233 = vunpack.c.h.b16 %v5023
    %v7234 = vunpack.c.l.b16 %v5024
    %v7235 = vunpack.c.h.b16 %v5024
    %v7236 = vunpack.c.l.b16 %v5025
    %v7237 = vunpack.c.h.b16 %v5025
    %v7238 = vunpack.c.l.b16 %v5026
    %v7239 = vunpack.c.h.b16 %v5026
    %v7240 = vunpack.c.l.b16 %v5027
    %v7241 = vunpack.c.h.b16 %v5027
    %v7242 = vunpack.c.l.b16 %v5028
    %v7243 = vunpack.c.h.b16 %v5028
    %v7244 = vunpack.c.l.b16 %v5029
    %v7245 = vunpack.c.h.b16 %v5029
    %v7246 = vunpack.c.l.b16 %v5030
    %v7247 = vunpack.c.h.b16 %v5030
    %v7248 = vunpack.c.l.b16 %v5031
    %v7249 = vunpack.c.h.b16 %v5031
    %v7250 = vunpack.c.l.b16 %v5032
    %v7251 = vunpack.c.h.b16 %v5032
    %v7252 = vunpack.c.l.b16 %v5033
    %v7253 = vunpack.c.h.b16 %v5033
    %v7254 = vunpack.c.l.b16 %v5034
    %v7255 = vunpack.c.h.b16 %v5034
    %v7256 = vunpack.c.l.b16 %v5035
    %v7257 = vunpack.c.h.b16 %v5035
    %v7258 = vunpack.c.l.b16 %v5036
    %v7259 = vunpack.c.h.b16 %v5036
    %v7260 = vunpack.c.l.b16 %v5037
    %v7261 = vunpack.c.h.b16 %v5037
    %v7262 = vunpack.c.l.b16 %v5038
    %v7263 = vunpack.c.h.b16 %v5038
    %v7264 = vunpack.c.l.b16 %v5039
    %v7265 = vunpack.c.h.b16 %v5039
    %v7266 = vunpack.c.l.b16 %v5040
    %v7267 = vunpack.c.h.b16 %v5040
    %v7268 = vunpack.c.l.b16 %v5041
    %v7269 = vunpack.c.h.b16 %v5041
    %v7270 = vunpack.c.l.b16 %v5042
    %v7271 = vunpack.c.h.b16 %v5042
    %v7272 = vunpack.c.l.b16 %v5043
    %v7273 = vunpack.c.h.b16 %v5043
    %v7274 = vunpack.c.l.b16 %v5044
    %v7275 = vunpack.c.h.b16 %v5044
    %v7276 = vunpack.c.l.b16 %v5045
    %v7277 = vunpack.c.h.b16 %v5045
    %v7278 = vunpack.c.l.b16 %v5046
    %v7279 = vunpack.c.h.b16 %v5046
    %v7280 = vunpack.c.l.b16 %v5047
    %v7281 = vunpack.c.h.b16 %v5047
    %v7282 = vunpack.c.l.b16 %v5048
    %v7283 = vunpack.c.h.b16 %v5048
    %v7284 = vunpack.c.l.b16 %v5049
    %v7285 = vunpack.c.h.b16 %v5049
    %v7286 = vunpack.c.l.b16 %v5050
    %v7287 = vunpack.c.h.b16 %v5050
    %v7288 = vunpack.c.l.b16 %v5051
    %v7289 = vunpack.c.h.b16 %v5051
    %v7290 = vunpack.c.l.b16 %v5052
    %v7291 = vunpack.c.h.b16 %v5052
    %v7292 = vunpack.c.l.b16 %v5053
    %v7293 = vunpack.c.h.b16 %v5053
    %v7294 = vunpack.c.l.b16 %v5054
    %v7295 = vunpack.c.h.b16 %v5054
    %v7296 = vunpack.c.l.b16 %v5055
    %v7297 = vunpack.c.h.b16 %v5055
    %v7298 = vunpack.c.l.b16 %v5056
    %v7299 = vunpack.c.h.b16 %v5056
    %v7300 = vunpack.c.l.b16 %v5057
    %v7301 = vunpack.c.h.b16 %v5057
    %v7302 = vunpack.c.l.b16 %v5058
    %v7303 = vunpack.c.h.b16 %v5058
    %v7304 = vunpack.c.l.b16 %v5059
    %v7305 = vunpack.c.h.b16 %v5059
    %v7306 = vunpack.c.l.b16 %v5060
    %v7307 = vunpack.c.h.b16 %v5060
    %v7308 = vunpack.c.l.b16 %v5061
    %v7309 = vunpack.c.h.b16 %v5061
    %v7310 = vunpack.c.l.b16 %v5062
    %v7311 = vunpack.c.h.b16 %v5062
    %v7312 = vunpack.c.l.b16 %v5063
    %v7313 = vunpack.c.h.b16 %v5063
    %v7314 = vunpack.c.l.b16 %v5064
    %v7315 = vunpack.c.h.b16 %v5064
    %v7316 = vunpack.c.l.b16 %v5065
    %v7317 = vunpack.c.h.b16 %v5065
    %v7318 = vunpack.c.l.b16 %v5066
    %v7319 = vunpack.c.h.b16 %v5066
    %v7320 = vunpack.c.l.b16 %v5067
    %v7321 = vunpack.c.h.b16 %v5067
    %v7322 = vunpack.c.l.b16 %v5068
    %v7323 = vunpack.c.h.b16 %v5068
    %v7324 = vunpack.c.l.b16 %v5069
    %v7325 = vunpack.c.h.b16 %v5069
    %v7326 = vunpack.c.l.b16 %v5070
    %v7327 = vunpack.c.h.b16 %v5070
    %v7328 = vunpack.c.l.b16 %v5071
    %v7329 = vunpack.c.h.b16 %v5071
    %v7330 = vunpack.c.l.b16 %v5072
    %v7331 = vunpack.c.h.b16 %v5072
    %v7332 = vunpack.c.l.b16 %v5073
    %v7333 = vunpack.c.h.b16 %v5073
    %v7334 = vunpack.c.l.b16 %v5074
    %v7335 = vunpack.c.h.b16 %v5074
    %v7336 = vunpack.c.l.b16 %v5075
    %v7337 = vunpack.c.h.b16 %v5075
    %v7338 = vunpack.c.l.b16 %v5076
    %v7339 = vunpack.c.h.b16 %v5076
    %v7340 = vunpack.c.l.b16 %v5077
    %v7341 = vunpack.c.h.b16 %v5077
    %v7342 = vunpack.c.l.b16 %v5078
    %v7343 = vunpack.c.h.b16 %v5078
    %v7344 = vunpack.c.l.b16 %v5079
    %v7345 = vunpack.c.h.b16 %v5079
    %v7346 = vunpack.c.l.b16 %v5080
    %v7347 = vunpack.c.h.b16 %v5080
    %v7348 = vunpack.c.l.b16 %v5081
    %v7349 = vunpack.c.h.b16 %v5081
    %v7350 = vunpack.c.l.b16 %v5082
    %v7351 = vunpack.c.h.b16 %v5082
    %v7352 = vunpack.c.l.b16 %v5083
    %v7353 = vunpack.c.h.b16 %v5083
    %v7354 = vunpack.c.l.b16 %v5084
    %v7355 = vunpack.c.h.b16 %v5084
    %v7356 = vunpack.c.l.b16 %v5085
    %v7357 = vunpack.c.h.b16 %v5085
    %v7358 = vunpack.c.l.b16 %v5086
    %v7359 = vunpack.c.h.b16 %v5086
    %v7360 = vunpack.c.l.b16 %v5087
    %v7361 = vunpack.c.h.b16 %v5087
    %v7362 = vunpack.c.l.b16 %v5088
    %v7363 = vunpack.c.h.b16 %v5088
    %v7364 = vunpack.c.l.b16 %v5089
    %v7365 = vunpack.c.h.b16 %v5089
    %v7366 = vunpack.c.l.b16 %v5090
    %v7367 = vunpack.c.h.b16 %v5090
    %v7368 = vunpack.c.l.b16 %v5091
    %v7369 = vunpack.c.h.b16 %v5091
    %v7370 = vunpack.c.l.b16 %v5092
    %v7371 = vunpack.c.h.b16 %v5092
    %v7372 = vunpack.c.l.b16 %v5093
    %v7373 = vunpack.c.h.b16 %v5093
    %v7374 = vunpack.c.l.b16 %v5094
    %v7375 = vunpack.c.h.b16 %v5094
    %v7376 = vunpack.c.l.b16 %v5095
    %v7377 = vunpack.c.h.b16 %v5095
    %v7378 = vunpack.c.l.b16 %v5096
    %v7379 = vunpack.c.h.b16 %v5096
    %v7380 = vunpack.c.l.b16 %v5097
    %v7381 = vunpack.c.h.b16 %v5097
    %v7382 = vunpack.c.l.b16 %v5098
    %v7383 = vunpack.c.h.b16 %v5098
    %v7384 = vunpack.c.l.b16 %v5099
    %v7385 = vunpack.c.h.b16 %v5099
    %v7386 = vunpack.c.l.b16 %v5100
    %v7387 = vunpack.c.h.b16 %v5100
    %v7388 = vunpack.c.l.b16 %v5101
    %v7389 = vunpack.c.h.b16 %v5101
    %v7390 = vunpack.c.l.b16 %v5102
    %v7391 = vunpack.c.h.b16 %v5102
    %v7392 = vunpack.c.l.b16 %v5103
    %v7393 = vunpack.c.h.b16 %v5103
    %v7394 = vunpack.c.l.b16 %v5104
    %v7395 = vunpack.c.h.b16 %v5104
    %v7396 = vunpack.c.l.b16 %v5105
    %v7397 = vunpack.c.h.b16 %v5105
    %v7398 = vunpack.c.l.b16 %v5106
    %v7399 = vunpack.c.h.b16 %v5106
    %v7400 = vunpack.c.l.b16 %v5107
    %v7401 = vunpack.c.h.b16 %v5107
    %v7402 = vunpack.c.l.b16 %v5108
    %v7403 = vunpack.c.h.b16 %v5108
    %v7404 = vunpack.c.l.b16 %v5109
    %v7405 = vunpack.c.h.b16 %v5109
    %v7406 = vunpack.c.l.b16 %v5110
    %v7407 = vunpack.c.h.b16 %v5110
    %v7408 = vunpack.c.l.b16 %v5111
    %v7409 = vunpack.c.h.b16 %v5111
    %v7410 = vunpack.c.l.b16 %v5112
    %v7411 = vunpack.c.h.b16 %v5112
    %v7412 = vunpack.c.l.b16 %v5113
    %v7413 = vunpack.c.h.b16 %v5113
    %v7414 = vunpack.c.l.b16 %v5114
    %v7415 = vunpack.c.h.b16 %v5114
    %v7416 = vunpack.c.l.b16 %v5115
    %v7417 = vunpack.c.h.b16 %v5115
    %v7418 = vunpack.c.l.b16 %v5116
    %v7419 = vunpack.c.h.b16 %v5116
    %v7420 = vunpack.c.l.b16 %v5117
    %v7421 = vunpack.c.h.b16 %v5117
    %v7422 = vunpack.c.l.b16 %v5118
    %v7423 = vunpack.c.h.b16 %v5118
    %v7424 = vunpack.c.l.b16 %v5119
    %v7425 = vunpack.c.h.b16 %v5119
    %v7426 = vunpack.c.l.b16 %v5120
    %v7427 = vunpack.c.h.b16 %v5120
    %v7428 = vunpack.c.l.b16 %v5121
    %v7429 = vunpack.c.h.b16 %v5121
    %v7430 = vunpack.c.l.b16 %v5122
    %v7431 = vunpack.c.h.b16 %v5122
    %v7432 = vunpack.c.l.b16 %v5123
    %v7433 = vunpack.c.h.b16 %v5123
    %v7434 = vunpack.c.l.b16 %v5124
    %v7435 = vunpack.c.h.b16 %v5124
    %v7436 = vunpack.c.l.b16 %v5125
    %v7437 = vunpack.c.h.b16 %v5125
    %v7438 = vunpack.c.l.b16 %v5126
    %v7439 = vunpack.c.h.b16 %v5126
    %v7440 = vunpack.c.l.b16 %v5127
    %v7441 = vunpack.c.h.b16 %v5127
    %v7442 = vunpack.c.l.b16 %v5128
    %v7443 = vunpack.c.h.b16 %v5128
    %v7444 = vunpack.c.l.b16 %v5129
    %v7445 = vunpack.c.h.b16 %v5129
    %v7446 = vunpack.c.l.b16 %v5130
    %v7447 = vunpack.c.h.b16 %v5130
    %v7448 = vunpack.c.l.b16 %v5131
    %v7449 = vunpack.c.h.b16 %v5131
    %v7450 = vunpack.c.l.b16 %v5132
    %v7451 = vunpack.c.h.b16 %v5132
    %v7452 = vunpack.c.l.b16 %v5133
    %v7453 = vunpack.c.h.b16 %v5133
    %v7454 = vunpack.c.l.b16 %v5134
    %v7455 = vunpack.c.h.b16 %v5134
    %v7456 = vunpack.c.l.b16 %v5135
    %v7457 = vunpack.c.h.b16 %v5135
    %v7458 = vunpack.c.l.b16 %v5136
    %v7459 = vunpack.c.h.b16 %v5136
    %v7460 = vunpack.c.l.b16 %v5137
    %v7461 = vunpack.c.h.b16 %v5137
    %v7462 = vunpack.c.l.b16 %v5138
    %v7463 = vunpack.c.h.b16 %v5138
    %v7464 = vunpack.c.l.b16 %v5139
    %v7465 = vunpack.c.h.b16 %v5139
    %v7466 = vunpack.c.l.b16 %v5140
    %v7467 = vunpack.c.h.b16 %v5140
    %v7468 = vunpack.c.l.b16 %v5141
    %v7469 = vunpack.c.h.b16 %v5141
    %v7470 = vunpack.c.l.b16 %v5142
    %v7471 = vunpack.c.h.b16 %v5142
    %v7472 = vunpack.c.l.b16 %v5143
    %v7473 = vunpack.c.h.b16 %v5143
    %v7474 = vunpack.c.l.b16 %v5144
    %v7475 = vunpack.c.h.b16 %v5144
    %v7476 = vunpack.c.l.b16 %v5145
    %v7477 = vunpack.c.h.b16 %v5145
    %v7478 = vunpack.c.l.b16 %v5146
    %v7479 = vunpack.c.h.b16 %v5146
    %v7480 = vunpack.c.l.b16 %v5147
    %v7481 = vunpack.c.h.b16 %v5147
    %v7482 = vunpack.c.l.b16 %v5148
    %v7483 = vunpack.c.h.b16 %v5148
    %v7484 = vunpack.c.l.b16 %v5149
    %v7485 = vunpack.c.h.b16 %v5149
    %v7486 = vunpack.c.l.b16 %v5150
    %v7487 = vunpack.c.h.b16 %v5150
    %v7488 = vunpack.c.l.b16 %v5151
    %v7489 = vunpack.c.h.b16 %v5151
    %v7490 = vunpack.c.l.b16 %v5152
    %v7491 = vunpack.c.h.b16 %v5152
    %v7492 = vunpack.c.l.b16 %v5153
    %v7493 = vunpack.c.h.b16 %v5153
    %v7494 = vunpack.c.l.b16 %v5154
    %v7495 = vunpack.c.h.b16 %v5154
    %v7496 = vunpack.c.l.b16 %v5155
    %v7497 = vunpack.c.h.b16 %v5155
    %v7498 = vunpack.c.l.b16 %v5156
    %v7499 = vunpack.c.h.b16 %v5156
    %v7500 = vunpack.c.l.b16 %v5157
    %v7501 = vunpack.c.h.b16 %v5157
    %v7502 = vunpack.c.l.b16 %v5158
    %v7503 = vunpack.c.h.b16 %v5158
    %v7504 = vunpack.c.l.b16 %v5159
    %v7505 = vunpack.c.h.b16 %v5159
    %v7506 = vunpack.c.l.b16 %v5160
    %v7507 = vunpack.c.h.b16 %v5160
    %v7508 = vunpack.c.l.b16 %v5161
    %v7509 = vunpack.c.h.b16 %v5161
    %v7510 = vunpack.c.l.b16 %v5162
    %v7511 = vunpack.c.h.b16 %v5162
    %v7512 = vunpack.c.l.b16 %v5163
    %v7513 = vunpack.c.h.b16 %v5163
    %v7514 = vunpack.c.l.b16 %v5164
    %v7515 = vunpack.c.h.b16 %v5164
    %v7516 = vunpack.c.l.b16 %v5165
    %v7517 = vunpack.c.h.b16 %v5165
    %v7518 = vunpack.c.l.b16 %v5166
    %v7519 = vunpack.c.h.b16 %v5166
    %v7520 = vunpack.c.l.b16 %v5167
    %v7521 = vunpack.c.h.b16 %v5167
    %v7522 = vunpack.c.l.b16 %v5168
    %v7523 = vunpack.c.h.b16 %v5168
    %v7524 = vunpack.c.l.b16 %v5169
    %v7525 = vunpack.c.h.b16 %v5169
    %v7526 = vunpack.c.l.b16 %v5170
    %v7527 = vunpack.c.h.b16 %v5170
    %v7528 = vunpack.c.l.b16 %v5171
    %v7529 = vunpack.c.h.b16 %v5171
    %v7530 = vunpack.c.l.b16 %v5172
    %v7531 = vunpack.c.h.b16 %v5172
    %v7532 = vunpack.c.l.b16 %v5173
    %v7533 = vunpack.c.h.b16 %v5173
    %v7534 = vunpack.c.l.b16 %v5174
    %v7535 = vunpack.c.h.b16 %v5174
    %v7536 = vunpack.c.l.b16 %v5175
    %v7537 = vunpack.c.h.b16 %v5175
    %v7538 = vunpack.c.l.b16 %v5176
    %v7539 = vunpack.c.h.b16 %v5176
    %v7540 = vunpack.c.l.b16 %v5177
    %v7541 = vunpack.c.h.b16 %v5177
    %v7542 = vunpack.c.l.b16 %v5178
    %v7543 = vunpack.c.h.b16 %v5178
    %v7544 = vunpack.c.l.b16 %v5179
    %v7545 = vunpack.c.h.b16 %v5179
    %v7546 = vunpack.c.l.b16 %v5180
    %v7547 = vunpack.c.h.b16 %v5180
    %v7548 = vunpack.c.l.b16 %v5181
    %v7549 = vunpack.c.h.b16 %v5181
    %v7550 = vunpack.c.l.b16 %v5182
    %v7551 = vunpack.c.h.b16 %v5182
    %v7552 = vunpack.c.l.b16 %v5183
    %v7553 = vunpack.c.h.b16 %v5183
    %v7554 = vunpack.c.l.b16 %v5184
    %v7555 = vunpack.c.h.b16 %v5184
    %v7556 = vunpack.c.l.b16 %v5185
    %v7557 = vunpack.c.h.b16 %v5185
    %v7558 = vunpack.c.l.b16 %v5186
    %v7559 = vunpack.c.h.b16 %v5186
    %v7560 = vunpack.c.l.b16 %v5187
    %v7561 = vunpack.c.h.b16 %v5187
    %v7562 = vunpack.c.l.b16 %v5188
    %v7563 = vunpack.c.h.b16 %v5188
    %v7564 = vunpack.c.l.b16 %v5189
    %v7565 = vunpack.c.h.b16 %v5189
    %v7566 = vunpack.c.l.b16 %v5190
    %v7567 = vunpack.c.h.b16 %v5190
    %v7568 = vunpack.c.l.b16 %v5191
    %v7569 = vunpack.c.h.b16 %v5191
    %v7570 = vunpack.c.l.b16 %v5192
    %v7571 = vunpack.c.h.b16 %v5192
    %v7572 = vunpack.c.l.b16 %v5193
    %v7573 = vunpack.c.h.b16 %v5193
    %v7574 = vunpack.c.l.b16 %v5194
    %v7575 = vunpack.c.h.b16 %v5194
    %v7576 = vunpack.c.l.b16 %v5195
    %v7577 = vunpack.c.h.b16 %v5195
    %v7578 = vunpack.c.l.b16 %v5196
    %v7579 = vunpack.c.h.b16 %v5196
    %v7580 = vunpack.c.l.b16 %v5197
    %v7581 = vunpack.c.h.b16 %v5197
    %v7582 = vunpack.c.l.b16 %v5198
    %v7583 = vunpack.c.h.b16 %v5198
    %v7584 = vunpack.c.l.b16 %v5199
    %v7585 = vunpack.c.h.b16 %v5199
    %v7586 = vunpack.c.l.b16 %v5200
    %v7587 = vunpack.c.h.b16 %v5200
    %v7588 = vunpack.c.l.b16 %v5201
    %v7589 = vunpack.c.h.b16 %v5201
    %v7590 = vunpack.c.l.b16 %v5202
    %v7591 = vunpack.c.h.b16 %v5202
    %v7592 = vunpack.c.l.b16 %v5203
    %v7593 = vunpack.c.h.b16 %v5203
    %v7594 = vunpack.c.l.b16 %v5204
    %v7595 = vunpack.c.h.b16 %v5204
    %v7596 = vunpack.c.l.b16 %v5205
    %v7597 = vunpack.c.h.b16 %v5205
    %v7598 = vunpack.c.l.b16 %v5206
    %v7599 = vunpack.c.h.b16 %v5206
    %v7600 = vunpack.c.l.b16 %v5207
    %v7601 = vunpack.c.h.b16 %v5207
    %v7602 = vunpack.c.l.b16 %v5208
    %v7603 = vunpack.c.h.b16 %v5208
    %v7604 = vunpack.c.l.b16 %v5209
    %v7605 = vunpack.c.h.b16 %v5209
    %v7606 = vunpack.c.l.b16 %v5210
    %v7607 = vunpack.c.h.b16 %v5210
    %v7608 = vunpack.c.l.b16 %v5211
    %v7609 = vunpack.c.h.b16 %v5211
    %v7610 = vunpack.c.l.b16 %v5212
    %v7611 = vunpack.c.h.b16 %v5212
    %v7612 = vunpack.c.l.b16 %v5213
    %v7613 = vunpack.c.h.b16 %v5213
    %v7614 = vunpack.c.l.b16 %v5214
    %v7615 = vunpack.c.h.b16 %v5214
    %v7616 = vunpack.c.l.b16 %v5215
    %v7617 = vunpack.c.h.b16 %v5215
    %v7618 = vunpack.c.l.b16 %v5216
    %v7619 = vunpack.c.h.b16 %v5216
    %v7620 = vunpack.c.l.b16 %v5217
    %v7621 = vunpack.c.h.b16 %v5217
    %v7622 = vunpack.c.l.b16 %v5218
    %v7623 = vunpack.c.h.b16 %v5218
    %v7624 = vunpack.c.l.b16 %v5219
    %v7625 = vunpack.c.h.b16 %v5219
    %v7626 = vunpack.c.l.b16 %v5220
    %v7627 = vunpack.c.h.b16 %v5220
    %v7628 = vunpack.c.l.b16 %v5221
    %v7629 = vunpack.c.h.b16 %v5221
    %v7630 = vunpack.c.l.b16 %v5222
    %v7631 = vunpack.c.h.b16 %v5222
    %v7632 = vunpack.c.l.b16 %v5223
    %v7633 = vunpack.c.h.b16 %v5223
    %v7634 = vunpack.c.l.b16 %v5224
    %v7635 = vunpack.c.h.b16 %v5224
    %v7636 = vunpack.c.l.b16 %v5225
    %v7637 = vunpack.c.h.b16 %v5225
    %v7638 = vunpack.c.l.b16 %v5226
    %v7639 = vunpack.c.h.b16 %v5226
    %v7640 = vunpack.c.l.b16 %v5227
    %v7641 = vunpack.c.h.b16 %v5227
    %v7642 = vunpack.c.l.b16 %v5228
    %v7643 = vunpack.c.h.b16 %v5228
    %v7644 = vunpack.c.l.b16 %v5229
    %v7645 = vunpack.c.h.b16 %v5229
    %v7646 = vunpack.c.l.b16 %v5230
    %v7647 = vunpack.c.h.b16 %v5230
    %v7648 = vunpack.c.l.b16 %v5231
    %v7649 = vunpack.c.h.b16 %v5231
    %v7650 = vunpack.c.l.b16 %v5232
    %v7651 = vunpack.c.h.b16 %v5232
    %v7652 = vunpack.c.l.b16 %v5233
    %v7653 = vunpack.c.h.b16 %v5233
    %v7654 = vunpack.c.l.b16 %v5234
    %v7655 = vunpack.c.h.b16 %v5234
    %v7656 = vunpack.c.l.b16 %v5235
    %v7657 = vunpack.c.h.b16 %v5235
    %v7658 = vunpack.c.l.b16 %v5236
    %v7659 = vunpack.c.h.b16 %v5236
    %v7660 = vunpack.c.l.b16 %v5237
    %v7661 = vunpack.c.h.b16 %v5237
    %v7662 = vunpack.c.l.b16 %v5238
    %v7663 = vunpack.c.h.b16 %v5238
    %v7664 = vunpack.c.l.b16 %v5239
    %v7665 = vunpack.c.h.b16 %v5239
    %v7666 = vunpack.c.l.b16 %v5240
    %v7667 = vunpack.c.h.b16 %v5240
    %v7668 = vunpack.c.l.b16 %v5241
    %v7669 = vunpack.c.h.b16 %v5241
    %v7670 = vunpack.c.l.b16 %v5242
    %v7671 = vunpack.c.h.b16 %v5242
    %v7672 = vunpack.c.l.b16 %v5243
    %v7673 = vunpack.c.h.b16 %v5243
    %v7674 = vunpack.c.l.b16 %v5244
    %v7675 = vunpack.c.h.b16 %v5244
    %v7676 = vunpack.c.l.b16 %v5245
    %v7677 = vunpack.c.h.b16 %v5245
    %v7678 = vunpack.c.l.b16 %v5246
    %v7679 = vunpack.c.h.b16 %v5246
    %v7680 = vunpack.c.l.b16 %v5247
    %v7681 = vunpack.c.h.b16 %v5247
    %v7682 = vunpack.c.l.b16 %v5248
    %v7683 = vunpack.c.h.b16 %v5248
    %v7684 = vunpack.c.l.b16 %v5249
    %v7685 = vunpack.c.h.b16 %v5249
    %v7686 = vunpack.c.l.b16 %v5250
    %v7687 = vunpack.c.h.b16 %v5250
    %v7688 = vunpack.c.l.b16 %v5251
    %v7689 = vunpack.c.h.b16 %v5251
    %v7690 = vunpack.c.l.b16 %v5252
    %v7691 = vunpack.c.h.b16 %v5252
    %v7692 = vunpack.c.l.b16 %v5253
    %v7693 = vunpack.c.h.b16 %v5253
    %v7694 = vunpack.c.l.b16 %v5254
    %v7695 = vunpack.c.h.b16 %v5254
    %v7696 = vunpack.c.l.b16 %v5255
    %v7697 = vunpack.c.h.b16 %v5255
    %v7698 = vunpack.c.l.b16 %v5256
    %v7699 = vunpack.c.h.b16 %v5256
    %v7700 = vunpack.c.l.b16 %v5257
    %v7701 = vunpack.c.h.b16 %v5257
    %v7702 = vunpack.c.l.b16 %v5258
    %v7703 = vunpack.c.h.b16 %v5258
    %v7704 = vunpack.c.l.b16 %v5259
    %v7705 = vunpack.c.h.b16 %v5259
    %v7706 = vunpack.c.l.b16 %v5260
    %v7707 = vunpack.c.h.b16 %v5260
    %v7708 = vunpack.c.l.b16 %v5261
    %v7709 = vunpack.c.h.b16 %v5261
    %v7710 = vunpack.c.l.b16 %v5262
    %v7711 = vunpack.c.h.b16 %v5262
    %v7712 = vunpack.c.l.b16 %v5263
    %v7713 = vunpack.c.h.b16 %v5263
    %v7714 = vunpack.c.l.b16 %v5264
    %v7715 = vunpack.c.h.b16 %v5264
    %v7716 = vunpack.c.l.b16 %v5265
    %v7717 = vunpack.c.h.b16 %v5265
    %v7718 = vunpack.c.l.b16 %v5266
    %v7719 = vunpack.c.h.b16 %v5266
    %v7720 = vunpack.c.l.b16 %v5267
    %v7721 = vunpack.c.h.b16 %v5267
    %v7722 = vunpack.c.l.b16 %v5268
    %v7723 = vunpack.c.h.b16 %v5268
    %v7724 = vunpack.c.l.b16 %v5269
    %v7725 = vunpack.c.h.b16 %v5269
    %v7726 = vunpack.c.l.b16 %v5270
    %v7727 = vunpack.c.h.b16 %v5270
    %v7728 = vunpack.c.l.b16 %v5271
    %v7729 = vunpack.c.h.b16 %v5271
    %v7730 = vunpack.c.l.b16 %v5272
    %v7731 = vunpack.c.h.b16 %v5272
    %v7732 = vunpack.c.l.b16 %v5273
    %v7733 = vunpack.c.h.b16 %v5273
    %v7734 = vunpack.c.l.b16 %v5274
    %v7735 = vunpack.c.h.b16 %v5274
    %v7736 = vunpack.c.l.b16 %v5275
    %v7737 = vunpack.c.h.b16 %v5275
    %v7738 = vunpack.c.l.b16 %v5276
    %v7739 = vunpack.c.h.b16 %v5276
    %v7740 = vunpack.c.l.b16 %v5277
    %v7741 = vunpack.c.h.b16 %v5277
    %v7742 = vpack.c.b16 %v6152, %v6142
    %v7743 = vpack.c.b16 %v6153, %v6143
    %v7744 = vpack.c.b16 %v6154, %v6144
    %v7745 = vpack.c.b16 %v6155, %v6145
    %v7746 = vpack.c.b16 %v6156, %v6146
    %v7747 = vpack.c.b16 %v6157, %v6147
    %v7748 = vpack.c.b16 %v6158, %v6148
    %v7749 = vpack.c.b16 %v6159, %v6149
    %v7750 = vpack.c.b16 %v6160, %v6150
    %v7751 = vpack.c.b16 %v6161, %v6151
    %v7752 = vpack.c.b16 %v6172, %v6162
    %v7753 = vpack.c.b16 %v6173, %v6163
    %v7754 = vpack.c.b16 %v6174, %v6164
    %v7755 = vpack.c.b16 %v6175, %v6165
    %v7756 = vpack.c.b16 %v6176, %v6166
    %v7757 = vpack.c.b16 %v6177, %v6167
    %v7758 = vpack.c.b16 %v6178, %v6168
    %v7759 = vpack.c.b16 %v6179, %v6169
    %v7760 = vpack.c.b16 %v6180, %v6170
    %v7761 = vpack.c.b16 %v6181, %v6171
    %v7762 = vpack.c.b16 %v6192, %v6182
    %v7763 = vpack.c.b16 %v6193, %v6183
    %v7764 = vpack.c.b16 %v6194, %v6184
    %v7765 = vpack.c.b16 %v6195, %v6185
    %v7766 = vpack.c.b16 %v6196, %v6186
    %v7767 = vpack.c.b16 %v6197, %v6187
    %v7768 = vpack.c.b16 %v6198, %v6188
    %v7769 = vpack.c.b16 %v6199, %v6189
    %v7770 = vpack.c.b16 %v6200, %v6190
    %v7771 = vpack.c.b16 %v6201, %v6191
    %v7772 = vpack.c.b16 %v6212, %v6202
    %v7773 = vpack.c.b16 %v6213, %v6203
    %v7774 = vpack.c.b16 %v6214, %v6204
    %v7775 = vpack.c.b16 %v6215, %v6205
    %v7776 = vpack.c.b16 %v6216, %v6206
    %v7777 = vpack.c.b16 %v6217, %v6207
    %v7778 = vpack.c.b16 %v6218, %v6208
    %v7779 = vpack.c.b16 %v6219, %v6209
    %v7780 = vpack.c.b16 %v6220, %v6210
    %v7781 = vpack.c.b16 %v6221, %v6211
    %v7782 = vpack.c.b16 %v6232, %v6222
    %v7783 = vpack.c.b16 %v6233, %v6223
    %v7784 = vpack.c.b16 %v6234, %v6224
    %v7785 = vpack.c.b16 %v6235, %v6225
    %v7786 = vpack.c.b16 %v6236, %v6226
    %v7787 = vpack.c.b16 %v6237, %v6227
    %v7788 = vpack.c.b16 %v6238, %v6228
    %v7789 = vpack.c.b16 %v6239, %v6229
    %v7790 = vpack.c.b16 %v6240, %v6230
    %v7791 = vpack.c.b16 %v6241, %v6231
    %v7792 = vpack.c.b16 %v6252, %v6242
    %v7793 = vpack.c.b16 %v6253, %v6243
    %v7794 = vpack.c.b16 %v6254, %v6244
    %v7795 = vpack.c.b16 %v6255, %v6245
    %v7796 = vpack.c.b16 %v6256, %v6246
    %v7797 = vpack.c.b16 %v6257, %v6247
    %v7798 = vpack.c.b16 %v6258, %v6248
    %v7799 = vpack.c.b16 %v6259, %v6249
    %v7800 = vpack.c.b16 %v6260, %v6250
    %v7801 = vpack.c.b16 %v6261, %v6251
    %v7802 = vpack.c.b16 %v6272, %v6262
    %v7803 = vpack.c.b16 %v6273, %v6263
    %v7804 = vpack.c.b16 %v6274, %v6264
    %v7805 = vpack.c.b16 %v6275, %v6265
    %v7806 = vpack.c.b16 %v6276, %v6266
    %v7807 = vpack.c.b16 %v6277, %v6267
    %v7808 = vpack.c.b16 %v6278, %v6268
    %v7809 = vpack.c.b16 %v6279, %v6269
    %v7810 = vpack.c.b16 %v6280, %v6270
    %v7811 = vpack.c.b16 %v6281, %v6271
    %v7812 = vpack.c.b16 %v6292, %v6282
    %v7813 = vpack.c.b16 %v6293, %v6283
    %v7814 = vpack.c.b16 %v6294, %v6284
    %v7815 = vpack.c.b16 %v6295, %v6285
    %v7816 = vpack.c.b16 %v6296, %v6286
    %v7817 = vpack.c.b16 %v6297, %v6287
    %v7818 = vpack.c.b16 %v6298, %v6288
    %v7819 = vpack.c.b16 %v6299, %v6289
    %v7820 = vpack.c.b16 %v6300, %v6290
    %v7821 = vpack.c.b16 %v6301, %v6291
    %v7822 = vpack.c.b16 %v6312, %v6302
    %v7823 = vpack.c.b16 %v6313, %v6303
    %v7824 = vpack.c.b16 %v6314, %v6304
    %v7825 = vpack.c.b16 %v6315, %v6305
    %v7826 = vpack.c.b16 %v6316, %v6306
    %v7827 = vpack.c.b16 %v6317, %v6307
    %v7828 = vpack.c.b16 %v6318, %v6308
    %v7829 = vpack.c.b16 %v6319, %v6309
    %v7830 = vpack.c.b16 %v6320, %v6310
    %v7831 = vpack.c.b16 %v6321, %v6311
    %v7832 = vpack.c.b16 %v6332, %v6322
    %v7833 = vpack.c.b16 %v6333, %v6323
    %v7834 = vpack.c.b16 %v6334, %v6324
    %v7835 = vpack.c.b16 %v6335, %v6325
    %v7836 = vpack.c.b16 %v6336, %v6326
    %v7837 = vpack.c.b16 %v6337, %v6327
    %v7838 = vpack.c.b16 %v6338, %v6328
    %v7839 = vpack.c.b16 %v6339, %v6329
    %v7840 = vpack.c.b16 %v6340, %v6330
    %v7841 = vpack.c.b16 %v6341, %v6331
    %v7842 = vpack.c.b16 %v6352, %v6342
    %v7843 = vpack.c.b16 %v6353, %v6343
    %v7844 = vpack.c.b16 %v6354, %v6344
    %v7845 = vpack.c.b16 %v6355, %v6345
    %v7846 = vpack.c.b16 %v6356, %v6346
    %v7847 = vpack.c.b16 %v6357, %v6347
    %v7848 = vpack.c.b16 %v6358, %v6348
    %v7849 = vpack.c.b16 %v6359, %v6349
    %v7850 = vpack.c.b16 %v6360, %v6350
    %v7851 = vpack.c.b16 %v6361, %v6351
    %v7852 = vpack.c.b16 %v6372, %v6362
    %v7853 = vpack.c.b16 %v6373, %v6363
    %v7854 = vpack.c.b16 %v6374, %v6364
    %v7855 = vpack.c.b16 %v6375, %v6365
    %v7856 = vpack.c.b16 %v6376, %v6366
    %v7857 = vpack.c.b16 %v6377, %v6367
    %v7858 = vpack.c.b16 %v6378, %v6368
    %v7859 = vpack.c.b16 %v6379, %v6369
    %v7860 = vpack.c.b16 %v6380, %v6370
    %v7861 = vpack.c.b16 %v6381, %v6371
    %v7862 = vpack.c.b16 %v6392, %v6382
    %v7863 = vpack.c.b16 %v6393, %v6383
    %v7864 = vpack.c.b16 %v6394, %v6384
    %v7865 = vpack.c.b16 %v6395, %v6385
    %v7866 = vpack.c.b16 %v6396, %v6386
    %v7867 = vpack.c.b16 %v6397, %v6387
    %v7868 = vpack.c.b16 %v6398, %v6388
    %v7869 = vpack.c.b16 %v6399, %v6389
    %v7870 = vpack.c.b16 %v6400, %v6390
    %v7871 = vpack.c.b16 %v6401, %v6391
    %v7872 = vpack.c.b16 %v6412, %v6402
    %v7873 = vpack.c.b16 %v6413, %v6403
    %v7874 = vpack.c.b16 %v6414, %v6404
    %v7875 = vpack.c.b16 %v6415, %v6405
    %v7876 = vpack.c.b16 %v6416, %v6406
    %v7877 = vpack.c.b16 %v6417, %v6407
    %v7878 = vpack.c.b16 %v6418, %v6408
    %v7879 = vpack.c.b16 %v6419, %v6409
    %v7880 = vpack.c.b16 %v6420, %v6410
    %v7881 = vpack.c.b16 %v6421, %v6411
    %v7882 = vpack.c.b16 %v6432, %v6422
    %v7883 = vpack.c.b16 %v6433, %v6423
    %v7884 = vpack.c.b16 %v6434, %v6424
    %v7885 = vpack.c.b16 %v6435, %v6425
    %v7886 = vpack.c.b16 %v6436, %v6426
    %v7887 = vpack.c.b16 %v6437, %v6427
    %v7888 = vpack.c.b16 %v6438, %v6428
    %v7889 = vpack.c.b16 %v6439, %v6429
    %v7890 = vpack.c.b16 %v6440, %v6430
    %v7891 = vpack.c.b16 %v6441, %v6431
    %v7892 = vpack.c.b16 %v6452, %v6442
    %v7893 = vpack.c.b16 %v6453, %v6443
    %v7894 = vpack.c.b16 %v6454, %v6444
    %v7895 = vpack.c.b16 %v6455, %v6445
    %v7896 = vpack.c.b16 %v6456, %v6446
    %v7897 = vpack.c.b16 %v6457, %v6447
    %v7898 = vpack.c.b16 %v6458, %v6448
    %v7899 = vpack.c.b16 %v6459, %v6449
    %v7900 = vpack.c.b16 %v6460, %v6450
    %v7901 = vpack.c.b16 %v6461, %v6451
    %v7902 = vpack.c.b16 %v6472, %v6462
    %v7903 = vpack.c.b16 %v6473, %v6463
    %v7904 = vpack.c.b16 %v6474, %v6464
    %v7905 = vpack.c.b16 %v6475, %v6465
    %v7906 = vpack.c.b16 %v6476, %v6466
    %v7907 = vpack.c.b16 %v6477, %v6467
    %v7908 = vpack.c.b16 %v6478, %v6468
    %v7909 = vpack.c.b16 %v6479, %v6469
    %v7910 = vpack.c.b16 %v6480, %v6470
    %v7911 = vpack.c.b16 %v6481, %v6471
    %v7912 = vpack.c.b16 %v6492, %v6482
    %v7913 = vpack.c.b16 %v6493, %v6483
    %v7914 = vpack.c.b16 %v6494, %v6484
    %v7915 = vpack.c.b16 %v6495, %v6485
    %v7916 = vpack.c.b16 %v6496, %v6486
    %v7917 = vpack.c.b16 %v6497, %v6487
    %v7918 = vpack.c.b16 %v6498, %v6488
    %v7919 = vpack.c.b16 %v6499, %v6489
    %v7920 = vpack.c.b16 %v6500, %v6490
    %v7921 = vpack.c.b16 %v6501, %v6491
    %v7922 = vpack.c.b16 %v6512, %v6502
    %v7923 = vpack.c.b16 %v6513, %v6503
    %v7924 = vpack.c.b16 %v6514, %v6504
    %v7925 = vpack.c.b16 %v6515, %v6505
    %v7926 = vpack.c.b16 %v6516, %v6506
    %v7927 = vpack.c.b16 %v6517, %v6507
    %v7928 = vpack.c.b16 %v6518, %v6508
    %v7929 = vpack.c.b16 %v6519, %v6509
    %v7930 = vpack.c.b16 %v6520, %v6510
    %v7931 = vpack.c.b16 %v6521, %v6511
    %v7932 = vpack.c.b16 %v6532, %v6522
    %v7933 = vpack.c.b16 %v6533, %v6523
    %v7934 = vpack.c.b16 %v6534, %v6524
    %v7935 = vpack.c.b16 %v6535, %v6525
    %v7936 = vpack.c.b16 %v6536, %v6526
    %v7937 = vpack.c.b16 %v6537, %v6527
    %v7938 = vpack.c.b16 %v6538, %v6528
    %v7939 = vpack.c.b16 %v6539, %v6529
    %v7940 = vpack.c.b16 %v6540, %v6530
    %v7941 = vpack.c.b16 %v6541, %v6531
    %v7942 = vpack.c.b16 %v6552, %v6542
    %v7943 = vpack.c.b16 %v6553, %v6543
    %v7944 = vpack.c.b16 %v6554, %v6544
    %v7945 = vpack.c.b16 %v6555, %v6545
    %v7946 = vpack.c.b16 %v6556, %v6546
    %v7947 = vpack.c.b16 %v6557, %v6547
    %v7948 = vpack.c.b16 %v6558, %v6548
    %v7949 = vpack.c.b16 %v6559, %v6549
    %v7950 = vpack.c.b16 %v6560, %v6550
    %v7951 = vpack.c.b16 %v6561, %v6551
    %v7952 = vpack.c.b16 %v6572, %v6562
    %v7953 = vpack.c.b16 %v6573, %v6563
    %v7954 = vpack.c.b16 %v6574, %v6564
    %v7955 = vpack.c.b16 %v6575, %v6565
    %v7956 = vpack.c.b16 %v6576, %v6566
    %v7957 = vpack.c.b16 %v6577, %v6567
    %v7958 = vpack.c.b16 %v6578, %v6568
    %v7959 = vpack.c.b16 %v6579, %v6569
    %v7960 = vpack.c.b16 %v6580, %v6570
    %v7961 = vpack.c.b16 %v6581, %v6571
    %v7962 = vpack.c.b16 %v6592, %v6582
    %v7963 = vpack.c.b16 %v6593, %v6583
    %v7964 = vpack.c.b16 %v6594, %v6584
    %v7965 = vpack.c.b16 %v6595, %v6585
    %v7966 = vpack.c.b16 %v6596, %v6586
    %v7967 = vpack.c.b16 %v6597, %v6587
    %v7968 = vpack.c.b16 %v6598, %v6588
    %v7969 = vpack.c.b16 %v6599, %v6589
    %v7970 = vpack.c.b16 %v6600, %v6590
    %v7971 = vpack.c.b16 %v6601, %v6591
    %v7972 = vpack.c.b16 %v6612, %v6602
    %v7973 = vpack.c.b16 %v6613, %v6603
    %v7974 = vpack.c.b16 %v6614, %v6604
    %v7975 = vpack.c.b16 %v6615, %v6605
    %v7976 = vpack.c.b16 %v6616, %v6606
    %v7977 = vpack.c.b16 %v6617, %v6607
    %v7978 = vpack.c.b16 %v6618, %v6608
    %v7979 = vpack.c.b16 %v6619, %v6609
    %v7980 = vpack.c.b16 %v6620, %v6610
    %v7981 = vpack.c.b16 %v6621, %v6611
    %v7982 = vpack.c.b16 %v6632, %v6622
    %v7983 = vpack.c.b16 %v6633, %v6623
    %v7984 = vpack.c.b16 %v6634, %v6624
    %v7985 = vpack.c.b16 %v6635, %v6625
    %v7986 = vpack.c.b16 %v6636, %v6626
    %v7987 = vpack.c.b16 %v6637, %v6627
    %v7988 = vpack.c.b16 %v6638, %v6628
    %v7989 = vpack.c.b16 %v6639, %v6629
    %v7990 = vpack.c.b16 %v6640, %v6630
    %v7991 = vpack.c.b16 %v6641, %v6631
    %v7992 = vpack.c.b16 %v6652, %v6642
    %v7993 = vpack.c.b16 %v6653, %v6643
    %v7994 = vpack.c.b16 %v6654, %v6644
    %v7995 = vpack.c.b16 %v6655, %v6645
    %v7996 = vpack.c.b16 %v6656, %v6646
    %v7997 = vpack.c.b16 %v6657, %v6647
    %v7998 = vpack.c.b16 %v6658, %v6648
    %v7999 = vpack.c.b16 %v6659, %v6649
    %v8000 = vpack.c.b16 %v6660, %v6650
    %v8001 = vpack.c.b16 %v6661, %v6651
    %v8002 = vpack.c.b16 %v6672, %v6662
    %v8003 = vpack.c.b16 %v6673, %v6663
    %v8004 = vpack.c.b16 %v6674, %v6664
    %v8005 = vpack.c.b16 %v6675, %v6665
    %v8006 = vpack.c.b16 %v6676, %v6666
    %v8007 = vpack.c.b16 %v6677, %v6667
    %v8008 = vpack.c.b16 %v6678, %v6668
    %v8009 = vpack.c.b16 %v6679, %v6669
    %v8010 = vpack.c.b16 %v6680, %v6670
    %v8011 = vpack.c.b16 %v6681, %v6671
    %v8012 = vpack.c.b16 %v6692, %v6682
    %v8013 = vpack.c.b16 %v6693, %v6683
    %v8014 = vpack.c.b16 %v6694, %v6684
    %v8015 = vpack.c.b16 %v6695, %v6685
    %v8016 = vpack.c.b16 %v6696, %v6686
    %v8017 = vpack.c.b16 %v6697, %v6687
    %v8018 = vpack.c.b16 %v6698, %v6688
    %v8019 = vpack.c.b16 %v6699, %v6689
    %v8020 = vpack.c.b16 %v6700, %v6690
    %v8021 = vpack.c.b16 %v6701, %v6691
    %v8022 = vpack.c.b16 %v6712, %v6702
    %v8023 = vpack.c.b16 %v6713, %v6703
    %v8024 = vpack.c.b16 %v6714, %v6704
    %v8025 = vpack.c.b16 %v6715, %v6705
    %v8026 = vpack.c.b16 %v6716, %v6706
    %v8027 = vpack.c.b16 %v6717, %v6707
    %v8028 = vpack.c.b16 %v6718, %v6708
    %v8029 = vpack.c.b16 %v6719, %v6709
    %v8030 = vpack.c.b16 %v6720, %v6710
    %v8031 = vpack.c.b16 %v6721, %v6711
    %v8032 = vpack.c.b16 %v6732, %v6722
    %v8033 = vpack.c.b16 %v6733, %v6723
    %v8034 = vpack.c.b16 %v6734, %v6724
    %v8035 = vpack.c.b16 %v6735, %v6725
    %v8036 = vpack.c.b16 %v6736, %v6726
    %v8037 = vpack.c.b16 %v6737, %v6727
    %v8038 = vpack.c.b16 %v6738, %v6728
    %v8039 = vpack.c.b16 %v6739, %v6729
    %v8040 = vpack.c.b16 %v6740, %v6730
    %v8041 = vpack.c.b16 %v6741, %v6731
    %v8042 = vpack.c.b16 %v6752, %v6742
    %v8043 = vpack.c.b16 %v6753, %v6743
    %v8044 = vpack.c.b16 %v6754, %v6744
    %v8045 = vpack.c.b16 %v6755, %v6745
    %v8046 = vpack.c.b16 %v6756, %v6746
    %v8047 = vpack.c.b16 %v6757, %v6747
    %v8048 = vpack.c.b16 %v6758, %v6748
    %v8049 = vpack.c.b16 %v6759, %v6749
    %v8050 = vpack.c.b16 %v6760, %v6750
    %v8051 = vpack.c.b16 %v6761, %v6751
    %v8052 = vpack.c.b16 %v6772, %v6762
    %v8053 = vpack.c.b16 %v6773, %v6763
    %v8054 = vpack.c.b16 %v6774, %v6764
    %v8055 = vpack.c.b16 %v6775, %v6765
    %v8056 = vpack.c.b16 %v6776, %v6766
    %v8057 = vpack.c.b16 %v6777, %v6767
    %v8058 = vpack.c.b16 %v6778, %v6768
    %v8059 = vpack.c.b16 %v6779, %v6769
    %v8060 = vpack.c.b16 %v6780, %v6770
    %v8061 = vpack.c.b16 %v6781, %v6771
    %v8062 = vpack.c.b16 %v6792, %v6782
    %v8063 = vpack.c.b16 %v6793, %v6783
    %v8064 = vpack.c.b16 %v6794, %v6784
    %v8065 = vpack.c.b16 %v6795, %v6785
    %v8066 = vpack.c.b16 %v6796, %v6786
    %v8067 = vpack.c.b16 %v6797, %v6787
    %v8068 = vpack.c.b16 %v6798, %v6788
    %v8069 = vpack.c.b16 %v6799, %v6789
    %v8070 = vpack.c.b16 %v6800, %v6790
    %v8071 = vpack.c.b16 %v6801, %v6791
    %v8072 = vpack.c.b16 %v6812, %v6802
    %v8073 = vpack.c.b16 %v6813, %v6803
    %v8074 = vpack.c.b16 %v6814, %v6804
    %v8075 = vpack.c.b16 %v6815, %v6805
    %v8076 = vpack.c.b16 %v6816, %v6806
    %v8077 = vpack.c.b16 %v6817, %v6807
    %v8078 = vpack.c.b16 %v6818, %v6808
    %v8079 = vpack.c.b16 %v6819, %v6809
    %v8080 = vpack.c.b16 %v6820, %v6810
    %v8081 = vpack.c.b16 %v6821, %v6811
    %v8082 = vpack.c.b16 %v6832, %v6822
    %v8083 = vpack.c.b16 %v6833, %v6823
    %v8084 = vpack.c.b16 %v6834, %v6824
    %v8085 = vpack.c.b16 %v6835, %v6825
    %v8086 = vpack.c.b16 %v6836, %v6826
    %v8087 = vpack.c.b16 %v6837, %v6827
    %v8088 = vpack.c.b16 %v6838, %v6828
    %v8089 = vpack.c.b16 %v6839, %v6829
    %v8090 = vpack.c.b16 %v6840, %v6830
    %v8091 = vpack.c.b16 %v6841, %v6831
    %v8092 = vpack.c.b16 %v6852, %v6842
    %v8093 = vpack.c.b16 %v6853, %v6843
    %v8094 = vpack.c.b16 %v6854, %v6844
    %v8095 = vpack.c.b16 %v6855, %v6845
    %v8096 = vpack.c.b16 %v6856, %v6846
    %v8097 = vpack.c.b16 %v6857, %v6847
    %v8098 = vpack.c.b16 %v6858, %v6848
    %v8099 = vpack.c.b16 %v6859, %v6849
    %v8100 = vpack.c.b16 %v6860, %v6850
    %v8101 = vpack.c.b16 %v6861, %v6851
    %v8102 = vpack.c.b16 %v6872, %v6862
    %v8103 = vpack.c.b16 %v6873, %v6863
    %v8104 = vpack.c.b16 %v6874, %v6864
    %v8105 = vpack.c.b16 %v6875, %v6865
    %v8106 = vpack.c.b16 %v6876, %v6866
    %v8107 = vpack.c.b16 %v6877, %v6867
    %v8108 = vpack.c.b16 %v6878, %v6868
    %v8109 = vpack.c.b16 %v6879, %v6869
    %v8110 = vpack.c.b16 %v6880, %v6870
    %v8111 = vpack.c.b16 %v6881, %v6871
    %v8112 = vpack.c.b16 %v6892, %v6882
    %v8113 = vpack.c.b16 %v6893, %v6883
    %v8114 = vpack.c.b16 %v6894, %v6884
    %v8115 = vpack.c.b16 %v6895, %v6885
    %v8116 = vpack.c.b16 %v6896, %v6886
    %v8117 = vpack.c.b16 %v6897, %v6887
    %v8118 = vpack.c.b16 %v6898, %v6888
    %v8119 = vpack.c.b16 %v6899, %v6889
    %v8120 = vpack.c.b16 %v6900, %v6890
    %v8121 = vpack.c.b16 %v6901, %v6891
    %v8122 = vpack.c.b16 %v6912, %v6902
    %v8123 = vpack.c.b16 %v6913, %v6903
    %v8124 = vpack.c.b16 %v6914, %v6904
    %v8125 = vpack.c.b16 %v6915, %v6905
    %v8126 = vpack.c.b16 %v6916, %v6906
    %v8127 = vpack.c.b16 %v6917, %v6907
    %v8128 = vpack.c.b16 %v6918, %v6908
    %v8129 = vpack.c.b16 %v6919, %v6909
    %v8130 = vpack.c.b16 %v6920, %v6910
    %v8131 = vpack.c.b16 %v6921, %v6911
    %v8132 = vpack.c.b16 %v6932, %v6922
    %v8133 = vpack.c.b16 %v6933, %v6923
    %v8134 = vpack.c.b16 %v6934, %v6924
    %v8135 = vpack.c.b16 %v6935, %v6925
    %v8136 = vpack.c.b16 %v6936, %v6926
    %v8137 = vpack.c.b16 %v6937, %v6927
    %v8138 = vpack.c.b16 %v6938, %v6928
    %v8139 = vpack.c.b16 %v6939, %v6929
    %v8140 = vpack.c.b16 %v6940, %v6930
    %v8141 = vpack.c.b16 %v6941, %v6931
    %v8142 = vpack.c.b16 %v6952, %v6942
    %v8143 = vpack.c.b16 %v6953, %v6943
    %v8144 = vpack.c.b16 %v6954, %v6944
    %v8145 = vpack.c.b16 %v6955, %v6945
    %v8146 = vpack.c.b16 %v6956, %v6946
    %v8147 = vpack.c.b16 %v6957, %v6947
    %v8148 = vpack.c.b16 %v6958, %v6948
    %v8149 = vpack.c.b16 %v6959, %v6949
    %v8150 = vpack.c.b16 %v6960, %v6950
    %v8151 = vpack.c.b16 %v6961, %v6951
    %v8152 = vpack.c.b16 %v6972, %v6962
    %v8153 = vpack.c.b16 %v6973, %v6963
    %v8154 = vpack.c.b16 %v6974, %v6964
    %v8155 = vpack.c.b16 %v6975, %v6965
    %v8156 = vpack.c.b16 %v6976, %v6966
    %v8157 = vpack.c.b16 %v6977, %v6967
    %v8158 = vpack.c.b16 %v6978, %v6968
    %v8159 = vpack.c.b16 %v6979, %v6969
    %v8160 = vpack.c.b16 %v6980, %v6970
    %v8161 = vpack.c.b16 %v6981, %v6971
    %v8162 = vpack.c.b16 %v6992, %v6982
    %v8163 = vpack.c.b16 %v6993, %v6983
    %v8164 = vpack.c.b16 %v6994, %v6984
    %v8165 = vpack.c.b16 %v6995, %v6985
    %v8166 = vpack.c.b16 %v6996, %v6986
    %v8167 = vpack.c.b16 %v6997, %v6987
    %v8168 = vpack.c.b16 %v6998, %v6988
    %v8169 = vpack.c.b16 %v6999, %v6989
    %v8170 = vpack.c.b16 %v7000, %v6990
    %v8171 = vpack.c.b16 %v7001, %v6991
    %v8172 = vpack.c.b16 %v7012, %v7002
    %v8173 = vpack.c.b16 %v7013, %v7003
    %v8174 = vpack.c.b16 %v7014, %v7004
    %v8175 = vpack.c.b16 %v7015, %v7005
    %v8176 = vpack.c.b16 %v7016, %v7006
    %v8177 = vpack.c.b16 %v7017, %v7007
    %v8178 = vpack.c.b16 %v7018, %v7008
    %v8179 = vpack.c.b16 %v7019, %v7009
    %v8180 = vpack.c.b16 %v7020, %v7010
    %v8181 = vpack.c.b16 %v7021, %v7011
    %v8182 = vpack.c.b16 %v7032, %v7022
    %v8183 = vpack.c.b16 %v7033, %v7023
    %v8184 = vpack.c.b16 %v7034, %v7024
    %v8185 = vpack.c.b16 %v7035, %v7025
    %v8186 = vpack.c.b16 %v7036, %v7026
    %v8187 = vpack.c.b16 %v7037, %v7027
    %v8188 = vpack.c.b16 %v7038, %v7028
    %v8189 = vpack.c.b16 %v7039, %v7029
    %v8190 = vpack.c.b16 %v7040, %v7030
    %v8191 = vpack.c.b16 %v7041, %v7031
    %v8192 = vpack.c.b16 %v7052, %v7042
    %v8193 = vpack.c.b16 %v7053, %v7043
    %v8194 = vpack.c.b16 %v7054, %v7044
    %v8195 = vpack.c.b16 %v7055, %v7045
    %v8196 = vpack.c.b16 %v7056, %v7046
    %v8197 = vpack.c.b16 %v7057, %v7047
    %v8198 = vpack.c.b16 %v7058, %v7048
    %v8199 = vpack.c.b16 %v7059, %v7049
    %v8200 = vpack.c.b16 %v7060, %v7050
    %v8201 = vpack.c.b16 %v7061, %v7051
    %v8202 = vpack.c.b16 %v7072, %v7062
    %v8203 = vpack.c.b16 %v7073, %v7063
    %v8204 = vpack.c.b16 %v7074, %v7064
    %v8205 = vpack.c.b16 %v7075, %v7065
    %v8206 = vpack.c.b16 %v7076, %v7066
    %v8207 = vpack.c.b16 %v7077, %v7067
    %v8208 = vpack.c.b16 %v7078, %v7068
    %v8209 = vpack.c.b16 %v7079, %v7069
    %v8210 = vpack.c.b16 %v7080, %v7070
    %v8211 = vpack.c.b16 %v7081, %v7071
    %v8212 = vpack.c.b16 %v7092, %v7082
    %v8213 = vpack.c.b16 %v7093, %v7083
    %v8214 = vpack.c.b16 %v7094, %v7084
    %v8215 = vpack.c.b16 %v7095, %v7085
    %v8216 = vpack.c.b16 %v7096, %v7086
    %v8217 = vpack.c.b16 %v7097, %v7087
    %v8218 = vpack.c.b16 %v7098, %v7088
    %v8219 = vpack.c.b16 %v7099, %v7089
    %v8220 = vpack.c.b16 %v7100, %v7090
    %v8221 = vpack.c.b16 %v7101, %v7091
    %v8222 = vpack.c.b16 %v7112, %v7102
    %v8223 = vpack.c.b16 %v7113, %v7103
    %v8224 = vpack.c.b16 %v7114, %v7104
    %v8225 = vpack.c.b16 %v7115, %v7105
    %v8226 = vpack.c.b16 %v7116, %v7106
    %v8227 = vpack.c.b16 %v7117, %v7107
    %v8228 = vpack.c.b16 %v7118, %v7108
    %v8229 = vpack.c.b16 %v7119, %v7109
    %v8230 = vpack.c.b16 %v7120, %v7110
    %v8231 = vpack.c.b16 %v7121, %v7111
    %v8232 = vpack.c.b16 %v7132, %v7122
    %v8233 = vpack.c.b16 %v7133, %v7123
    %v8234 = vpack.c.b16 %v7134, %v7124
    %v8235 = vpack.c.b16 %v7135, %v7125
    %v8236 = vpack.c.b16 %v7136, %v7126
    %v8237 = vpack.c.b16 %v7137, %v7127
    %v8238 = vpack.c.b16 %v7138, %v7128
    %v8239 = vpack.c.b16 %v7139, %v7129
    %v8240 = vpack.c.b16 %v7140, %v7130
    %v8241 = vpack.c.b16 %v7141, %v7131
    %v8242 = vpack.c.b16 %v7152, %v7142
    %v8243 = vpack.c.b16 %v7153, %v7143
    %v8244 = vpack.c.b16 %v7154, %v7144
    %v8245 = vpack.c.b16 %v7155, %v7145
    %v8246 = vpack.c.b16 %v7156, %v7146
    %v8247 = vpack.c.b16 %v7157, %v7147
    %v8248 = vpack.c.b16 %v7158, %v7148
    %v8249 = vpack.c.b16 %v7159, %v7149
    %v8250 = vpack.c.b16 %v7160, %v7150
    %v8251 = vpack.c.b16 %v7161, %v7151
    %v8252 = vpack.c.b16 %v7172, %v7162
    %v8253 = vpack.c.b16 %v7173, %v7163
    %v8254 = vpack.c.b16 %v7174, %v7164
    %v8255 = vpack.c.b16 %v7175, %v7165
    %v8256 = vpack.c.b16 %v7176, %v7166
    %v8257 = vpack.c.b16 %v7177, %v7167
    %v8258 = vpack.c.b16 %v7178, %v7168
    %v8259 = vpack.c.b16 %v7179, %v7169
    %v8260 = vpack.c.b16 %v7180, %v7170
    %v8261 = vpack.c.b16 %v7181, %v7171
    %v8262 = vpack.c.b16 %v7192, %v7182
    %v8263 = vpack.c.b16 %v7193, %v7183
    %v8264 = vpack.c.b16 %v7194, %v7184
    %v8265 = vpack.c.b16 %v7195, %v7185
    %v8266 = vpack.c.b16 %v7196, %v7186
    %v8267 = vpack.c.b16 %v7197, %v7187
    %v8268 = vpack.c.b16 %v7198, %v7188
    %v8269 = vpack.c.b16 %v7199, %v7189
    %v8270 = vpack.c.b16 %v7200, %v7190
    %v8271 = vpack.c.b16 %v7201, %v7191
    %v8272 = vpack.c.b16 %v7212, %v7202
    %v8273 = vpack.c.b16 %v7213, %v7203
    %v8274 = vpack.c.b16 %v7214, %v7204
    %v8275 = vpack.c.b16 %v7215, %v7205
    %v8276 = vpack.c.b16 %v7216, %v7206
    %v8277 = vpack.c.b16 %v7217, %v7207
    %v8278 = vpack.c.b16 %v7218, %v7208
    %v8279 = vpack.c.b16 %v7219, %v7209
    %v8280 = vpack.c.b16 %v7220, %v7210
    %v8281 = vpack.c.b16 %v7221, %v7211
    %v8282 = vpack.c.b16 %v7232, %v7222
    %v8283 = vpack.c.b16 %v7233, %v7223
    %v8284 = vpack.c.b16 %v7234, %v7224
    %v8285 = vpack.c.b16 %v7235, %v7225
    %v8286 = vpack.c.b16 %v7236, %v7226
    %v8287 = vpack.c.b16 %v7237, %v7227
    %v8288 = vpack.c.b16 %v7238, %v7228
    %v8289 = vpack.c.b16 %v7239, %v7229
    %v8290 = vpack.c.b16 %v7240, %v7230
    %v8291 = vpack.c.b16 %v7241, %v7231
    %v8292 = vpack.c.b16 %v7252, %v7242
    %v8293 = vpack.c.b16 %v7253, %v7243
    %v8294 = vpack.c.b16 %v7254, %v7244
    %v8295 = vpack.c.b16 %v7255, %v7245
    %v8296 = vpack.c.b16 %v7256, %v7246
    %v8297 = vpack.c.b16 %v7257, %v7247
    %v8298 = vpack.c.b16 %v7258, %v7248
    %v8299 = vpack.c.b16 %v7259, %v7249
    %v8300 = vpack.c.b16 %v7260, %v7250
    %v8301 = vpack.c.b16 %v7261, %v7251
    %v8302 = vpack.c.b16 %v7272, %v7262
    %v8303 = vpack.c.b16 %v7273, %v7263
    %v8304 = vpack.c.b16 %v7274, %v7264
    %v8305 = vpack.c.b16 %v7275, %v7265
    %v8306 = vpack.c.b16 %v7276, %v7266
    %v8307 = vpack.c.b16 %v7277, %v7267
    %v8308 = vpack.c.b16 %v7278, %v7268
    %v8309 = vpack.c.b16 %v7279, %v7269
    %v8310 = vpack.c.b16 %v7280, %v7270
    %v8311 = vpack.c.b16 %v7281, %v7271
    %v8312 = vpack.c.b16 %v7292, %v7282
    %v8313 = vpack.c.b16 %v7293, %v7283
    %v8314 = vpack.c.b16 %v7294, %v7284
    %v8315 = vpack.c.b16 %v7295, %v7285
    %v8316 = vpack.c.b16 %v7296, %v7286
    %v8317 = vpack.c.b16 %v7297, %v7287
    %v8318 = vpack.c.b16 %v7298, %v7288
    %v8319 = vpack.c.b16 %v7299, %v7289
    %v8320 = vpack.c.b16 %v7300, %v7290
    %v8321 = vpack.c.b16 %v7301, %v7291
    %v8322 = vpack.c.b16 %v7312, %v7302
    %v8323 = vpack.c.b16 %v7313, %v7303
    %v8324 = vpack.c.b16 %v7314, %v7304
    %v8325 = vpack.c.b16 %v7315, %v7305
    %v8326 = vpack.c.b16 %v7316, %v7306
    %v8327 = vpack.c.b16 %v7317, %v7307
    %v8328 = vpack.c.b16 %v7318, %v7308
    %v8329 = vpack.c.b16 %v7319, %v7309
    %v8330 = vpack.c.b16 %v7320, %v7310
    %v8331 = vpack.c.b16 %v7321, %v7311
    %v8332 = vpack.c.b16 %v7332, %v7322
    %v8333 = vpack.c.b16 %v7333, %v7323
    %v8334 = vpack.c.b16 %v7334, %v7324
    %v8335 = vpack.c.b16 %v7335, %v7325
    %v8336 = vpack.c.b16 %v7336, %v7326
    %v8337 = vpack.c.b16 %v7337, %v7327
    %v8338 = vpack.c.b16 %v7338, %v7328
    %v8339 = vpack.c.b16 %v7339, %v7329
    %v8340 = vpack.c.b16 %v7340, %v7330
    %v8341 = vpack.c.b16 %v7341, %v7331
    %v8342 = vpack.c.b16 %v7352, %v7342
    %v8343 = vpack.c.b16 %v7353, %v7343
    %v8344 = vpack.c.b16 %v7354, %v7344
    %v8345 = vpack.c.b16 %v7355, %v7345
    %v8346 = vpack.c.b16 %v7356, %v7346
    %v8347 = vpack.c.b16 %v7357, %v7347
    %v8348 = vpack.c.b16 %v7358, %v7348
    %v8349 = vpack.c.b16 %v7359, %v7349
    %v8350 = vpack.c.b16 %v7360, %v7350
    %v8351 = vpack.c.b16 %v7361, %v7351
    %v8352 = vpack.c.b16 %v7372, %v7362
    %v8353 = vpack.c.b16 %v7373, %v7363
    %v8354 = vpack.c.b16 %v7374, %v7364
    %v8355 = vpack.c.b16 %v7375, %v7365
    %v8356 = vpack.c.b16 %v7376, %v7366
    %v8357 = vpack.c.b16 %v7377, %v7367
    %v8358 = vpack.c.b16 %v7378, %v7368
    %v8359 = vpack.c.b16 %v7379, %v7369
    %v8360 = vpack.c.b16 %v7380, %v7370
    %v8361 = vpack.c.b16 %v7381, %v7371
    %v8362 = vpack.c.b16 %v7392, %v7382
    %v8363 = vpack.c.b16 %v7393, %v7383
    %v8364 = vpack.c.b16 %v7394, %v7384
    %v8365 = vpack.c.b16 %v7395, %v7385
    %v8366 = vpack.c.b16 %v7396, %v7386
    %v8367 = vpack.c.b16 %v7397, %v7387
    %v8368 = vpack.c.b16 %v7398, %v7388
    %v8369 = vpack.c.b16 %v7399, %v7389
    %v8370 = vpack.c.b16 %v7400, %v7390
    %v8371 = vpack.c.b16 %v7401, %v7391
    %v8372 = vpack.c.b16 %v7412, %v7402
    %v8373 = vpack.c.b16 %v7413, %v7403
    %v8374 = vpack.c.b16 %v7414, %v7404
    %v8375 = vpack.c.b16 %v7415, %v7405
    %v8376 = vpack.c.b16 %v7416, %v7406
    %v8377 = vpack.c.b16 %v7417, %v7407
    %v8378 = vpack.c.b16 %v7418, %v7408
    %v8379 = vpack.c.b16 %v7419, %v7409
    %v8380 = vpack.c.b16 %v7420, %v7410
    %v8381 = vpack.c.b16 %v7421, %v7411
    %v8382 = vpack.c.b16 %v7432, %v7422
    %v8383 = vpack.c.b16 %v7433, %v7423
    %v8384 = vpack.c.b16 %v7434, %v7424
    %v8385 = vpack.c.b16 %v7435, %v7425
    %v8386 = vpack.c.b16 %v7436, %v7426
    %v8387 = vpack.c.b16 %v7437, %v7427
    %v8388 = vpack.c.b16 %v7438, %v7428
    %v8389 = vpack.c.b16 %v7439, %v7429
    %v8390 = vpack.c.b16 %v7440, %v7430
    %v8391 = vpack.c.b16 %v7441, %v7431
    %v8392 = vpack.c.b16 %v7452, %v7442
    %v8393 = vpack.c.b16 %v7453, %v7443
    %v8394 = vpack.c.b16 %v7454, %v7444
    %v8395 = vpack.c.b16 %v7455, %v7445
    %v8396 = vpack.c.b16 %v7456, %v7446
    %v8397 = vpack.c.b16 %v7457, %v7447
    %v8398 = vpack.c.b16 %v7458, %v7448
    %v8399 = vpack.c.b16 %v7459, %v7449
    %v8400 = vpack.c.b16 %v7460, %v7450
    %v8401 = vpack.c.b16 %v7461, %v7451
    %v8402 = vpack.c.b16 %v7472, %v7462
    %v8403 = vpack.c.b16 %v7473, %v7463
    %v8404 = vpack.c.b16 %v7474, %v7464
    %v8405 = vpack.c.b16 %v7475, %v7465
    %v8406 = vpack.c.b16 %v7476, %v7466
    %v8407 = vpack.c.b16 %v7477, %v7467
    %v8408 = vpack.c.b16 %v7478, %v7468
    %v8409 = vpack.c.b16 %v7479, %v7469
    %v8410 = vpack.c.b16 %v7480, %v7470
    %v8411 = vpack.c.b16 %v7481, %v7471
    %v8412 = vpack.c.b16 %v7492, %v7482
    %v8413 = vpack.c.b16 %v7493, %v7483
    %v8414 = vpack.c.b16 %v7494, %v7484
    %v8415 = vpack.c.b16 %v7495, %v7485
    %v8416 = vpack.c.b16 %v7496, %v7486
    %v8417 = vpack.c.b16 %v7497, %v7487
    %v8418 = vpack.c.b16 %v7498, %v7488
    %v8419 = vpack.c.b16 %v7499, %v7489
    %v8420 = vpack.c.b16 %v7500, %v7490
    %v8421 = vpack.c.b16 %v7501, %v7491
    %v8422 = vpack.c.b16 %v7512, %v7502
    %v8423 = vpack.c.b16 %v7513, %v7503
    %v8424 = vpack.c.b16 %v7514, %v7504
    %v8425 = vpack.c.b16 %v7515, %v7505
    %v8426 = vpack.c.b16 %v7516, %v7506
    %v8427 = vpack.c.b16 %v7517, %v7507
    %v8428 = vpack.c.b16 %v7518, %v7508
    %v8429 = vpack.c.b16 %v7519, %v7509
    %v8430 = vpack.c.b16 %v7520, %v7510
    %v8431 = vpack.c.b16 %v7521, %v7511
    %v8432 = vpack.c.b16 %v7532, %v7522
    %v8433 = vpack.c.b16 %v7533, %v7523
    %v8434 = vpack.c.b16 %v7534, %v7524
    %v8435 = vpack.c.b16 %v7535, %v7525
    %v8436 = vpack.c.b16 %v7536, %v7526
    %v8437 = vpack.c.b16 %v7537, %v7527
    %v8438 = vpack.c.b16 %v7538, %v7528
    %v8439 = vpack.c.b16 %v7539, %v7529
    %v8440 = vpack.c.b16 %v7540, %v7530
    %v8441 = vpack.c.b16 %v7541, %v7531
    %v8442 = vpack.c.b16 %v7552, %v7542
    %v8443 = vpack.c.b16 %v7553, %v7543
    %v8444 = vpack.c.b16 %v7554, %v7544
    %v8445 = vpack.c.b16 %v7555, %v7545
    %v8446 = vpack.c.b16 %v7556, %v7546
    %v8447 = vpack.c.b16 %v7557, %v7547
    %v8448 = vpack.c.b16 %v7558, %v7548
    %v8449 = vpack.c.b16 %v7559, %v7549
    %v8450 = vpack.c.b16 %v7560, %v7550
    %v8451 = vpack.c.b16 %v7561, %v7551
    %v8452 = vpack.c.b16 %v7572, %v7562
    %v8453 = vpack.c.b16 %v7573, %v7563
    %v8454 = vpack.c.b16 %v7574, %v7564
    %v8455 = vpack.c.b16 %v7575, %v7565
    %v8456 = vpack.c.b16 %v7576, %v7566
    %v8457 = vpack.c.b16 %v7577, %v7567
    %v8458 = vpack.c.b16 %v7578, %v7568
    %v8459 = vpack.c.b16 %v7579, %v7569
    %v8460 = vpack.c.b16 %v7580, %v7570
    %v8461 = vpack.c.b16 %v7581, %v7571
    %v8462 = vpack.c.b16 %v7592, %v7582
    %v8463 = vpack.c.b16 %v7593, %v7583
    %v8464 = vpack.c.b16 %v7594, %v7584
    %v8465 = vpack.c.b16 %v7595, %v7585
    %v8466 = vpack.c.b16 %v7596, %v7586
    %v8467 = vpack.c.b16 %v7597, %v7587
    %v8468 = vpack.c.b16 %v7598, %v7588
    %v8469 = vpack.c.b16 %v7599, %v7589
    %v8470 = vpack.c.b16 %v7600, %v7590
    %v8471 = vpack.c.b16 %v7601, %v7591
    %v8472 = vpack.c.b16 %v7612, %v7602
    %v8473 = vpack.c.b16 %v7613, %v7603
    %v8474 = vpack.c.b16 %v7614, %v7604
    %v8475 = vpack.c.b16 %v7615, %v7605
    %v8476 = vpack.c.b16 %v7616, %v7606
    %v8477 = vpack.c.b16 %v7617, %v7607
    %v8478 = vpack.c.b16 %v7618, %v7608
    %v8479 = vpack.c.b16 %v7619, %v7609
    %v8480 = vpack.c.b16 %v7620, %v7610
    %v8481 = vpack.c.b16 %v7621, %v7611
    %v8482 = vpack.c.b16 %v7632, %v7622
    %v8483 = vpack.c.b16 %v7633, %v7623
    %v8484 = vpack.c.b16 %v7634, %v7624
    %v8485 = vpack.c.b16 %v7635, %v7625
    %v8486 = vpack.c.b16 %v7636, %v7626
    %v8487 = vpack.c.b16 %v7637, %v7627
    %v8488 = vpack.c.b16 %v7638, %v7628
    %v8489 = vpack.c.b16 %v7639, %v7629
    %v8490 = vpack.c.b16 %v7640, %v7630
    %v8491 = vpack.c.b16 %v7641, %v7631
    %v8492 = vpack.c.b16 %v7652, %v7642
    %v8493 = vpack.c.b16 %v7653, %v7643
    %v8494 = vpack.c.b16 %v7654, %v7644
    %v8495 = vpack.c.b16 %v7655, %v7645
    %v8496 = vpack.c.b16 %v7656, %v7646
    %v8497 = vpack.c.b16 %v7657, %v7647
    %v8498 = vpack.c.b16 %v7658, %v7648
    %v8499 = vpack.c.b16 %v7659, %v7649
    %v8500 = vpack.c.b16 %v7660, %v7650
    %v8501 = vpack.c.b16 %v7661, %v7651
    %v8502 = vpack.c.b16 %v7672, %v7662
    %v8503 = vpack.c.b16 %v7673, %v7663
    %v8504 = vpack.c.b16 %v7674, %v7664
    %v8505 = vpack.c.b16 %v7675, %v7665
    %v8506 = vpack.c.b16 %v7676, %v7666
    %v8507 = vpack.c.b16 %v7677, %v7667
    %v8508 = vpack.c.b16 %v7678, %v7668
    %v8509 = vpack.c.b16 %v7679, %v7669
    %v8510 = vpack.c.b16 %v7680, %v7670
    %v8511 = vpack.c.b16 %v7681, %v7671
    %v8512 = vpack.c.b16 %v7692, %v7682
    %v8513 = vpack.c.b16 %v7693, %v7683
    %v8514 = vpack.c.b16 %v7694, %v7684
    %v8515 = vpack.c.b16 %v7695, %v7685
    %v8516 = vpack.c.b16 %v7696, %v7686
    %v8517 = vpack.c.b16 %v7697, %v7687
    %v8518 = vpack.c.b16 %v7698, %v7688
    %v8519 = vpack.c.b16 %v7699, %v7689
    %v8520 = vpack.c.b16 %v7700, %v7690
    %v8521 = vpack.c.b16 %v7701, %v7691
    %v8522 = vpack.c.b16 %v7712, %v7702
    %v8523 = vpack.c.b16 %v7713, %v7703
    %v8524 = vpack.c.b16 %v7714, %v7704
    %v8525 = vpack.c.b16 %v7715, %v7705
    %v8526 = vpack.c.b16 %v7716, %v7706
    %v8527 = vpack.c.b16 %v7717, %v7707
    %v8528 = vpack.c.b16 %v7718, %v7708
    %v8529 = vpack.c.b16 %v7719, %v7709
    %v8530 = vpack.c.b16 %v7720, %v7710
    %v8531 = vpack.c.b16 %v7721, %v7711
    %v8532 = vpack.c.b16 %v7732, %v7722
    %v8533 = vpack.c.b16 %v7733, %v7723
    %v8534 = vpack.c.b16 %v7734, %v7724
    %v8535 = vpack.c.b16 %v7735, %v7725
    %v8536 = vpack.c.b16 %v7736, %v7726
    %v8537 = vpack.c.b16 %v7737, %v7727
    %v8538 = vpack.c.b16 %v7738, %v7728
    %v8539 = vpack.c.b16 %v7739, %v7729
    %v8540 = vpack.c.b16 %v7740, %v7730
    %v8541 = vpack.c.b16 %v7741, %v7731
    %9342 = vmatprep.subr.bf16.mxu0 %v7813
    %9343 = vmatpush1.bf16.msra.mxu0 %v7812
    %9344 = vmatprep.subr.bf16.mxu0 %v7803
    %9345 = vmatpush1.bf16.msra.mxu0 %v7802
    %9346 = vmatprep.subr.bf16.mxu0 %v7793
    %9347 = vmatpush1.bf16.msra.mxu0 %v7792
    %9348 = vmatprep.subr.bf16.mxu0 %v7783
    %9349 = vmatpush1.bf16.msra.mxu0 %v7782
    %9350 = vmatprep.subr.bf16.mxu0 %v7773
    %9351 = vmatpush1.bf16.msra.mxu0 %v7772
    %9352 = vmatprep.subr.bf16.mxu0 %v7763
    %9353 = vmatpush1.bf16.msra.mxu0 %v7762
    %9354 = vmatprep.subr.bf16.mxu0 %v7753
    %9355 = vmatpush1.bf16.msra.mxu0 %v7752
    %9356 = vmatprep.subr.bf16.mxu0 %v7743
    %9357 = vmatpush1.bf16.msra.mxu0 %v7742
    %9358 = vmatprep.subr.bf16.mxu0 %v7893
    %9359 = vmatpush2.bf16.msra.mxu0 %v7892
    %9360 = vmatprep.subr.bf16.mxu0 %v7883
    %9361 = vmatpush2.bf16.msra.mxu0 %v7882
    %9362 = vmatprep.subr.bf16.mxu0 %v7873
    %9363 = vmatpush2.bf16.msra.mxu0 %v7872
    %9364 = vmatprep.subr.bf16.mxu0 %v7863
    %9365 = vmatpush2.bf16.msra.mxu0 %v7862
    %9366 = vmatprep.subr.bf16.mxu0 %v7853
    %9367 = vmatpush2.bf16.msra.mxu0 %v7852
    %9368 = vmatprep.subr.bf16.mxu0 %v7843
    %9369 = vmatpush2.bf16.msra.mxu0 %v7842
    %9370 = vmatprep.subr.bf16.mxu0 %v7833
    %9371 = vmatpush2.bf16.msra.mxu0 %v7832
    %9372 = vmatprep.subr.bf16.mxu0 %v7823
    %9373 = vmatpush2.bf16.msra.mxu0 %v7822
    %9374 = vmatprep.mubr.bf16.mxu0 %v5281
    %9375 = vmatmul.mubr.bf16.gmra.mxu0 %v5280
    %v9376 = vpop.f32.mrf.mxu0
    %v9377 = vadd.f32 %v5295, %v9376
    %v9378 = vpop.f32.mrf.mxu0
    %v9379 = vadd.f32 %v5299, %v9378
    %v9380 = vpop.f32.mrf.mxu0
    %v9381 = vpop.f32.mrf.mxu0
    %9382 = vdwg.mxu0
    %9383 = vmatprep.subr.bf16.mxu0 %v7973
    %9384 = vmatpush1.bf16.msra.mxu0 %v7972
    %9385 = vmatprep.subr.bf16.mxu0 %v7963
    %9386 = vmatpush1.bf16.msra.mxu0 %v7962
    %9387 = vmatprep.subr.bf16.mxu0 %v7953
    %9388 = vmatpush1.bf16.msra.mxu0 %v7952
    %9389 = vmatprep.subr.bf16.mxu0 %v7943
    %9390 = vmatpush1.bf16.msra.mxu0 %v7942
    %9391 = vmatprep.subr.bf16.mxu0 %v7933
    %9392 = vmatpush1.bf16.msra.mxu0 %v7932
    %9393 = vmatprep.subr.bf16.mxu0 %v7923
    %9394 = vmatpush1.bf16.msra.mxu0 %v7922
    %9395 = vmatprep.subr.bf16.mxu0 %v7913
    %9396 = vmatpush1.bf16.msra.mxu0 %v7912
    %9397 = vmatprep.subr.bf16.mxu0 %v7903
    %9398 = vmatpush1.bf16.msra.mxu0 %v7902
    %9399 = vmatprep.subr.bf16.mxu0 %v8053
    %9400 = vmatpush2.bf16.msra.mxu0 %v8052
    %9401 = vmatprep.subr.bf16.mxu0 %v8043
    %9402 = vmatpush2.bf16.msra.mxu0 %v8042
    %9403 = vmatprep.subr.bf16.mxu0 %v8033
    %9404 = vmatpush2.bf16.msra.mxu0 %v8032
    %9405 = vmatprep.subr.bf16.mxu0 %v8023
    %9406 = vmatpush2.bf16.msra.mxu0 %v8022
    %9407 = vmatprep.subr.bf16.mxu0 %v8013
    %9408 = vmatpush2.bf16.msra.mxu0 %v8012
    %9409 = vmatprep.subr.bf16.mxu0 %v8003
    %9410 = vmatpush2.bf16.msra.mxu0 %v8002
    %9411 = vmatprep.subr.bf16.mxu0 %v7993
    %9412 = vmatpush2.bf16.msra.mxu0 %v7992
    %9413 = vmatprep.subr.bf16.mxu0 %v7983
    %9414 = vmatpush2.bf16.msra.mxu0 %v7982
    %9415 = vmatprep.mubr.bf16.mxu0 %v5283
    %9416 = vmatmul.mubr.bf16.gmra.mxu0 %v5282
    %v9417 = vpop.f32.mrf.mxu0
    %v9418 = vadd.f32 %v9377, %v9417
    %v9419 = vpop.f32.mrf.mxu0
    %v9420 = vadd.f32 %v9379, %v9419
    %v9421 = vpop.f32.mrf.mxu0
    %v9422 = vpop.f32.mrf.mxu0
    %9423 = vdwg.mxu0
    %9424 = vmatprep.subr.bf16.mxu0 %v8133
    %9425 = vmatpush1.bf16.msra.mxu0 %v8132
    %9426 = vmatprep.subr.bf16.mxu0 %v8123
    %9427 = vmatpush1.bf16.msra.mxu0 %v8122
    %9428 = vmatprep.subr.bf16.mxu0 %v8113
    %9429 = vmatpush1.bf16.msra.mxu0 %v8112
    %9430 = vmatprep.subr.bf16.mxu0 %v8103
    %9431 = vmatpush1.bf16.msra.mxu0 %v8102
    %9432 = vmatprep.subr.bf16.mxu0 %v8093
    %9433 = vmatpush1.bf16.msra.mxu0 %v8092
    %9434 = vmatprep.subr.bf16.mxu0 %v8083
    %9435 = vmatpush1.bf16.msra.mxu0 %v8082
    %9436 = vmatprep.subr.bf16.mxu0 %v8073
    %9437 = vmatpush1.bf16.msra.mxu0 %v8072
    %9438 = vmatprep.subr.bf16.mxu0 %v8063
    %9439 = vmatpush1.bf16.msra.mxu0 %v8062
    %9440 = vmatprep.subr.bf16.mxu0 %v8213
    %9441 = vmatpush2.bf16.msra.mxu0 %v8212
    %9442 = vmatprep.subr.bf16.mxu0 %v8203
    %9443 = vmatpush2.bf16.msra.mxu0 %v8202
    %9444 = vmatprep.subr.bf16.mxu0 %v8193
    %9445 = vmatpush2.bf16.msra.mxu0 %v8192
    %9446 = vmatprep.subr.bf16.mxu0 %v8183
    %9447 = vmatpush2.bf16.msra.mxu0 %v8182
    %9448 = vmatprep.subr.bf16.mxu0 %v8173
    %9449 = vmatpush2.bf16.msra.mxu0 %v8172
    %9450 = vmatprep.subr.bf16.mxu0 %v8163
    %9451 = vmatpush2.bf16.msra.mxu0 %v8162
    %9452 = vmatprep.subr.bf16.mxu0 %v8153
    %9453 = vmatpush2.bf16.msra.mxu0 %v8152
    %9454 = vmatprep.subr.bf16.mxu0 %v8143
    %9455 = vmatpush2.bf16.msra.mxu0 %v8142
    %9456 = vmatprep.mubr.bf16.mxu0 %v5285
    %9457 = vmatmul.mubr.bf16.gmra.mxu0 %v5284
    %v9458 = vpop.f32.mrf.mxu0
    %v9459 = vadd.f32 %v9418, %v9458
    %v9460 = vpop.f32.mrf.mxu0
    %v9461 = vadd.f32 %v9420, %v9460
    %v9462 = vpop.f32.mrf.mxu0
    %v9463 = vpop.f32.mrf.mxu0
    %9464 = vdwg.mxu0
    %9465 = vmatprep.subr.bf16.mxu0 %v8293
    %9466 = vmatpush1.bf16.msra.mxu0 %v8292
    %9467 = vmatprep.subr.bf16.mxu0 %v8283
    %9468 = vmatpush1.bf16.msra.mxu0 %v8282
    %9469 = vmatprep.subr.bf16.mxu0 %v8273
    %9470 = vmatpush1.bf16.msra.mxu0 %v8272
    %9471 = vmatprep.subr.bf16.mxu0 %v8263
    %9472 = vmatpush1.bf16.msra.mxu0 %v8262
    %9473 = vmatprep.subr.bf16.mxu0 %v8253
    %9474 = vmatpush1.bf16.msra.mxu0 %v8252
    %9475 = vmatprep.subr.bf16.mxu0 %v8243
    %9476 = vmatpush1.bf16.msra.mxu0 %v8242
    %9477 = vmatprep.subr.bf16.mxu0 %v8233
    %9478 = vmatpush1.bf16.msra.mxu0 %v8232
    %9479 = vmatprep.subr.bf16.mxu0 %v8223
    %9480 = vmatpush1.bf16.msra.mxu0 %v8222
    %9481 = vmatprep.subr.bf16.mxu0 %v8373
    %9482 = vmatpush2.bf16.msra.mxu0 %v8372
    %9483 = vmatprep.subr.bf16.mxu0 %v8363
    %9484 = vmatpush2.bf16.msra.mxu0 %v8362
    %9485 = vmatprep.subr.bf16.mxu0 %v8353
    %9486 = vmatpush2.bf16.msra.mxu0 %v8352
    %9487 = vmatprep.subr.bf16.mxu0 %v8343
    %9488 = vmatpush2.bf16.msra.mxu0 %v8342
    %9489 = vmatprep.subr.bf16.mxu0 %v8333
    %9490 = vmatpush2.bf16.msra.mxu0 %v8332
    %9491 = vmatprep.subr.bf16.mxu0 %v8323
    %9492 = vmatpush2.bf16.msra.mxu0 %v8322
    %9493 = vmatprep.subr.bf16.mxu0 %v8313
    %9494 = vmatpush2.bf16.msra.mxu0 %v8312
    %9495 = vmatprep.subr.bf16.mxu0 %v8303
    %9496 = vmatpush2.bf16.msra.mxu0 %v8302
    %9497 = vmatprep.mubr.bf16.mxu0 %v5287
    %9498 = vmatmul.mubr.bf16.gmra.mxu0 %v5286
    %v9499 = vpop.f32.mrf.mxu0
    %v9500 = vadd.f32 %v9459, %v9499
    %v9501 = vpop.f32.mrf.mxu0
    %v9502 = vadd.f32 %v9461, %v9501
    %v9503 = vpop.f32.mrf.mxu0
    %v9504 = vpop.f32.mrf.mxu0
    %9505 = vdwg.mxu0
    %9506 = vmatprep.subr.bf16.mxu0 %v8453
    %9507 = vmatpush1.bf16.msra.mxu0 %v8452
    %9508 = vmatprep.subr.bf16.mxu0 %v8443
    %9509 = vmatpush1.bf16.msra.mxu0 %v8442
    %9510 = vmatprep.subr.bf16.mxu0 %v8433
    %9511 = vmatpush1.bf16.msra.mxu0 %v8432
    %9512 = vmatprep.subr.bf16.mxu0 %v8423
    %9513 = vmatpush1.bf16.msra.mxu0 %v8422
    %9514 = vmatprep.subr.bf16.mxu0 %v8413
    %9515 = vmatpush1.bf16.msra.mxu0 %v8412
    %9516 = vmatprep.subr.bf16.mxu0 %v8403
    %9517 = vmatpush1.bf16.msra.mxu0 %v8402
    %9518 = vmatprep.subr.bf16.mxu0 %v8393
    %9519 = vmatpush1.bf16.msra.mxu0 %v8392
    %9520 = vmatprep.subr.bf16.mxu0 %v8383
    %9521 = vmatpush1.bf16.msra.mxu0 %v8382
    %9522 = vmatprep.subr.bf16.mxu0 %v8533
    %9523 = vmatpush2.bf16.msra.mxu0 %v8532
    %9524 = vmatprep.subr.bf16.mxu0 %v8523
    %9525 = vmatpush2.bf16.msra.mxu0 %v8522
    %9526 = vmatprep.subr.bf16.mxu0 %v8513
    %9527 = vmatpush2.bf16.msra.mxu0 %v8512
    %9528 = vmatprep.subr.bf16.mxu0 %v8503
    %9529 = vmatpush2.bf16.msra.mxu0 %v8502
    %9530 = vmatprep.subr.bf16.mxu0 %v8493
    %9531 = vmatpush2.bf16.msra.mxu0 %v8492
    %9532 = vmatprep.subr.bf16.mxu0 %v8483
    %9533 = vmatpush2.bf16.msra.mxu0 %v8482
    %9534 = vmatprep.subr.bf16.mxu0 %v8473
    %9535 = vmatpush2.bf16.msra.mxu0 %v8472
    %9536 = vmatprep.subr.bf16.mxu0 %v8463
    %9537 = vmatpush2.bf16.msra.mxu0 %v8462
    %9538 = vmatprep.mubr.bf16.mxu0 %v5289
    %9539 = vmatmul.mubr.bf16.gmra.mxu0 %v5288
    %v9540 = vpop.f32.mrf.mxu0
    %v9541 = vadd.f32 %v9500, %v9540
    %v9542 = vpop.f32.mrf.mxu0
    %v9543 = vadd.f32 %v9502, %v9542
    %v9544 = vpop.f32.mrf.mxu0
    %v9545 = vpop.f32.mrf.mxu0
    %9546 = vdwg.mxu0
    %9547 = vmatprep.subr.bf16.mxu0 %v7815
    %9548 = vmatpush1.bf16.msra.mxu0 %v7814
    %9549 = vmatprep.subr.bf16.mxu0 %v7805
    %9550 = vmatpush1.bf16.msra.mxu0 %v7804
    %9551 = vmatprep.subr.bf16.mxu0 %v7795
    %9552 = vmatpush1.bf16.msra.mxu0 %v7794
    %9553 = vmatprep.subr.bf16.mxu0 %v7785
    %9554 = vmatpush1.bf16.msra.mxu0 %v7784
    %9555 = vmatprep.subr.bf16.mxu0 %v7775
    %9556 = vmatpush1.bf16.msra.mxu0 %v7774
    %9557 = vmatprep.subr.bf16.mxu0 %v7765
    %9558 = vmatpush1.bf16.msra.mxu0 %v7764
    %9559 = vmatprep.subr.bf16.mxu0 %v7755
    %9560 = vmatpush1.bf16.msra.mxu0 %v7754
    %9561 = vmatprep.subr.bf16.mxu0 %v7745
    %9562 = vmatpush1.bf16.msra.mxu0 %v7744
    %9563 = vmatprep.subr.bf16.mxu0 %v7895
    %9564 = vmatpush2.bf16.msra.mxu0 %v7894
    %9565 = vmatprep.subr.bf16.mxu0 %v7885
    %9566 = vmatpush2.bf16.msra.mxu0 %v7884
    %9567 = vmatprep.subr.bf16.mxu0 %v7875
    %9568 = vmatpush2.bf16.msra.mxu0 %v7874
    %9569 = vmatprep.subr.bf16.mxu0 %v7865
    %9570 = vmatpush2.bf16.msra.mxu0 %v7864
    %9571 = vmatprep.subr.bf16.mxu0 %v7855
    %9572 = vmatpush2.bf16.msra.mxu0 %v7854
    %9573 = vmatprep.subr.bf16.mxu0 %v7845
    %9574 = vmatpush2.bf16.msra.mxu0 %v7844
    %9575 = vmatprep.subr.bf16.mxu0 %v7835
    %9576 = vmatpush2.bf16.msra.mxu0 %v7834
    %9577 = vmatprep.subr.bf16.mxu0 %v7825
    %9578 = vmatpush2.bf16.msra.mxu0 %v7824
    %9579 = vmatprep.mubr.bf16.mxu0 %v5281
    %9580 = vmatmul.mubr.bf16.gmra.mxu0 %v5280
    %v9581 = vpop.f32.mrf.mxu0
    %v9582 = vadd.f32 %v5303, %v9581
    %v9583 = vpop.f32.mrf.mxu0
    %v9584 = vadd.f32 %v5307, %v9583
    %v9585 = vpop.f32.mrf.mxu0
    %v9586 = vpop.f32.mrf.mxu0
    %9587 = vdwg.mxu0
    %9588 = vmatprep.subr.bf16.mxu0 %v7975
    %9589 = vmatpush1.bf16.msra.mxu0 %v7974
    %9590 = vmatprep.subr.bf16.mxu0 %v7965
    %9591 = vmatpush1.bf16.msra.mxu0 %v7964
    %9592 = vmatprep.subr.bf16.mxu0 %v7955
    %9593 = vmatpush1.bf16.msra.mxu0 %v7954
    %9594 = vmatprep.subr.bf16.mxu0 %v7945
    %9595 = vmatpush1.bf16.msra.mxu0 %v7944
    %9596 = vmatprep.subr.bf16.mxu0 %v7935
    %9597 = vmatpush1.bf16.msra.mxu0 %v7934
    %9598 = vmatprep.subr.bf16.mxu0 %v7925
    %9599 = vmatpush1.bf16.msra.mxu0 %v7924
    %9600 = vmatprep.subr.bf16.mxu0 %v7915
    %9601 = vmatpush1.bf16.msra.mxu0 %v7914
    %9602 = vmatprep.subr.bf16.mxu0 %v7905
    %9603 = vmatpush1.bf16.msra.mxu0 %v7904
    %9604 = vmatprep.subr.bf16.mxu0 %v8055
    %9605 = vmatpush2.bf16.msra.mxu0 %v8054
    %9606 = vmatprep.subr.bf16.mxu0 %v8045
    %9607 = vmatpush2.bf16.msra.mxu0 %v8044
    %9608 = vmatprep.subr.bf16.mxu0 %v8035
    %9609 = vmatpush2.bf16.msra.mxu0 %v8034
    %9610 = vmatprep.subr.bf16.mxu0 %v8025
    %9611 = vmatpush2.bf16.msra.mxu0 %v8024
    %9612 = vmatprep.subr.bf16.mxu0 %v8015
    %9613 = vmatpush2.bf16.msra.mxu0 %v8014
    %9614 = vmatprep.subr.bf16.mxu0 %v8005
    %9615 = vmatpush2.bf16.msra.mxu0 %v8004
    %9616 = vmatprep.subr.bf16.mxu0 %v7995
    %9617 = vmatpush2.bf16.msra.mxu0 %v7994
    %9618 = vmatprep.subr.bf16.mxu0 %v7985
    %9619 = vmatpush2.bf16.msra.mxu0 %v7984
    %9620 = vmatprep.mubr.bf16.mxu0 %v5283
    %9621 = vmatmul.mubr.bf16.gmra.mxu0 %v5282
    %v9622 = vpop.f32.mrf.mxu0
    %v9623 = vadd.f32 %v9582, %v9622
    %v9624 = vpop.f32.mrf.mxu0
    %v9625 = vadd.f32 %v9584, %v9624
    %v9626 = vpop.f32.mrf.mxu0
    %v9627 = vpop.f32.mrf.mxu0
    %9628 = vdwg.mxu0
    %9629 = vmatprep.subr.bf16.mxu0 %v8135
    %9630 = vmatpush1.bf16.msra.mxu0 %v8134
    %9631 = vmatprep.subr.bf16.mxu0 %v8125
    %9632 = vmatpush1.bf16.msra.mxu0 %v8124
    %9633 = vmatprep.subr.bf16.mxu0 %v8115
    %9634 = vmatpush1.bf16.msra.mxu0 %v8114
    %9635 = vmatprep.subr.bf16.mxu0 %v8105
    %9636 = vmatpush1.bf16.msra.mxu0 %v8104
    %9637 = vmatprep.subr.bf16.mxu0 %v8095
    %9638 = vmatpush1.bf16.msra.mxu0 %v8094
    %9639 = vmatprep.subr.bf16.mxu0 %v8085
    %9640 = vmatpush1.bf16.msra.mxu0 %v8084
    %9641 = vmatprep.subr.bf16.mxu0 %v8075
    %9642 = vmatpush1.bf16.msra.mxu0 %v8074
    %9643 = vmatprep.subr.bf16.mxu0 %v8065
    %9644 = vmatpush1.bf16.msra.mxu0 %v8064
    %9645 = vmatprep.subr.bf16.mxu0 %v8215
    %9646 = vmatpush2.bf16.msra.mxu0 %v8214
    %9647 = vmatprep.subr.bf16.mxu0 %v8205
    %9648 = vmatpush2.bf16.msra.mxu0 %v8204
    %9649 = vmatprep.subr.bf16.mxu0 %v8195
    %9650 = vmatpush2.bf16.msra.mxu0 %v8194
    %9651 = vmatprep.subr.bf16.mxu0 %v8185
    %9652 = vmatpush2.bf16.msra.mxu0 %v8184
    %9653 = vmatprep.subr.bf16.mxu0 %v8175
    %9654 = vmatpush2.bf16.msra.mxu0 %v8174
    %9655 = vmatprep.subr.bf16.mxu0 %v8165
    %9656 = vmatpush2.bf16.msra.mxu0 %v8164
    %9657 = vmatprep.subr.bf16.mxu0 %v8155
    %9658 = vmatpush2.bf16.msra.mxu0 %v8154
    %9659 = vmatprep.subr.bf16.mxu0 %v8145
    %9660 = vmatpush2.bf16.msra.mxu0 %v8144
    %9661 = vmatprep.mubr.bf16.mxu0 %v5285
    %9662 = vmatmul.mubr.bf16.gmra.mxu0 %v5284
    %v9663 = vpop.f32.mrf.mxu0
    %v9664 = vadd.f32 %v9623, %v9663
    %v9665 = vpop.f32.mrf.mxu0
    %v9666 = vadd.f32 %v9625, %v9665
    %v9667 = vpop.f32.mrf.mxu0
    %v9668 = vpop.f32.mrf.mxu0
    %9669 = vdwg.mxu0
    %9670 = vmatprep.subr.bf16.mxu0 %v8295
    %9671 = vmatpush1.bf16.msra.mxu0 %v8294
    %9672 = vmatprep.subr.bf16.mxu0 %v8285
    %9673 = vmatpush1.bf16.msra.mxu0 %v8284
    %9674 = vmatprep.subr.bf16.mxu0 %v8275
    %9675 = vmatpush1.bf16.msra.mxu0 %v8274
    %9676 = vmatprep.subr.bf16.mxu0 %v8265
    %9677 = vmatpush1.bf16.msra.mxu0 %v8264
    %9678 = vmatprep.subr.bf16.mxu0 %v8255
    %9679 = vmatpush1.bf16.msra.mxu0 %v8254
    %9680 = vmatprep.subr.bf16.mxu0 %v8245
    %9681 = vmatpush1.bf16.msra.mxu0 %v8244
    %9682 = vmatprep.subr.bf16.mxu0 %v8235
    %9683 = vmatpush1.bf16.msra.mxu0 %v8234
    %9684 = vmatprep.subr.bf16.mxu0 %v8225
    %9685 = vmatpush1.bf16.msra.mxu0 %v8224
    %9686 = vmatprep.subr.bf16.mxu0 %v8375
    %9687 = vmatpush2.bf16.msra.mxu0 %v8374
    %9688 = vmatprep.subr.bf16.mxu0 %v8365
    %9689 = vmatpush2.bf16.msra.mxu0 %v8364
    %9690 = vmatprep.subr.bf16.mxu0 %v8355
    %9691 = vmatpush2.bf16.msra.mxu0 %v8354
    %9692 = vmatprep.subr.bf16.mxu0 %v8345
    %9693 = vmatpush2.bf16.msra.mxu0 %v8344
    %9694 = vmatprep.subr.bf16.mxu0 %v8335
    %9695 = vmatpush2.bf16.msra.mxu0 %v8334
    %9696 = vmatprep.subr.bf16.mxu0 %v8325
    %9697 = vmatpush2.bf16.msra.mxu0 %v8324
    %9698 = vmatprep.subr.bf16.mxu0 %v8315
    %9699 = vmatpush2.bf16.msra.mxu0 %v8314
    %9700 = vmatprep.subr.bf16.mxu0 %v8305
    %9701 = vmatpush2.bf16.msra.mxu0 %v8304
    %9702 = vmatprep.mubr.bf16.mxu0 %v5287
    %9703 = vmatmul.mubr.bf16.gmra.mxu0 %v5286
    %v9704 = vpop.f32.mrf.mxu0
    %v9705 = vadd.f32 %v9664, %v9704
    %v9706 = vpop.f32.mrf.mxu0
    %v9707 = vadd.f32 %v9666, %v9706
    %v9708 = vpop.f32.mrf.mxu0
    %v9709 = vpop.f32.mrf.mxu0
    %9710 = vdwg.mxu0
    %9711 = vmatprep.subr.bf16.mxu0 %v8455
    %9712 = vmatpush1.bf16.msra.mxu0 %v8454
    %9713 = vmatprep.subr.bf16.mxu0 %v8445
    %9714 = vmatpush1.bf16.msra.mxu0 %v8444
    %9715 = vmatprep.subr.bf16.mxu0 %v8435
    %9716 = vmatpush1.bf16.msra.mxu0 %v8434
    %9717 = vmatprep.subr.bf16.mxu0 %v8425
    %9718 = vmatpush1.bf16.msra.mxu0 %v8424
    %9719 = vmatprep.subr.bf16.mxu0 %v8415
    %9720 = vmatpush1.bf16.msra.mxu0 %v8414
    %9721 = vmatprep.subr.bf16.mxu0 %v8405
    %9722 = vmatpush1.bf16.msra.mxu0 %v8404
    %9723 = vmatprep.subr.bf16.mxu0 %v8395
    %9724 = vmatpush1.bf16.msra.mxu0 %v8394
    %9725 = vmatprep.subr.bf16.mxu0 %v8385
    %9726 = vmatpush1.bf16.msra.mxu0 %v8384
    %9727 = vmatprep.subr.bf16.mxu0 %v8535
    %9728 = vmatpush2.bf16.msra.mxu0 %v8534
    %9729 = vmatprep.subr.bf16.mxu0 %v8525
    %9730 = vmatpush2.bf16.msra.mxu0 %v8524
    %9731 = vmatprep.subr.bf16.mxu0 %v8515
    %9732 = vmatpush2.bf16.msra.mxu0 %v8514
    %9733 = vmatprep.subr.bf16.mxu0 %v8505
    %9734 = vmatpush2.bf16.msra.mxu0 %v8504
    %9735 = vmatprep.subr.bf16.mxu0 %v8495
    %9736 = vmatpush2.bf16.msra.mxu0 %v8494
    %9737 = vmatprep.subr.bf16.mxu0 %v8485
    %9738 = vmatpush2.bf16.msra.mxu0 %v8484
    %9739 = vmatprep.subr.bf16.mxu0 %v8475
    %9740 = vmatpush2.bf16.msra.mxu0 %v8474
    %9741 = vmatprep.subr.bf16.mxu0 %v8465
    %9742 = vmatpush2.bf16.msra.mxu0 %v8464
    %9743 = vmatprep.mubr.bf16.mxu0 %v5289
    %9744 = vmatmul.mubr.bf16.gmra.mxu0 %v5288
    %v9745 = vpop.f32.mrf.mxu0
    %v9746 = vadd.f32 %v9705, %v9745
    %v9747 = vpop.f32.mrf.mxu0
    %v9748 = vadd.f32 %v9707, %v9747
    %v9749 = vpop.f32.mrf.mxu0
    %v9750 = vpop.f32.mrf.mxu0
    %9751 = vdwg.mxu0
    %9752 = vmatprep.subr.bf16.mxu0 %v7817
    %9753 = vmatpush1.bf16.msra.mxu0 %v7816
    %9754 = vmatprep.subr.bf16.mxu0 %v7807
    %9755 = vmatpush1.bf16.msra.mxu0 %v7806
    %9756 = vmatprep.subr.bf16.mxu0 %v7797
    %9757 = vmatpush1.bf16.msra.mxu0 %v7796
    %9758 = vmatprep.subr.bf16.mxu0 %v7787
    %9759 = vmatpush1.bf16.msra.mxu0 %v7786
    %9760 = vmatprep.subr.bf16.mxu0 %v7777
    %9761 = vmatpush1.bf16.msra.mxu0 %v7776
    %9762 = vmatprep.subr.bf16.mxu0 %v7767
    %9763 = vmatpush1.bf16.msra.mxu0 %v7766
    %9764 = vmatprep.subr.bf16.mxu0 %v7757
    %9765 = vmatpush1.bf16.msra.mxu0 %v7756
    %9766 = vmatprep.subr.bf16.mxu0 %v7747
    %9767 = vmatpush1.bf16.msra.mxu0 %v7746
    %9768 = vmatprep.subr.bf16.mxu0 %v7897
    %9769 = vmatpush2.bf16.msra.mxu0 %v7896
    %9770 = vmatprep.subr.bf16.mxu0 %v7887
    %9771 = vmatpush2.bf16.msra.mxu0 %v7886
    %9772 = vmatprep.subr.bf16.mxu0 %v7877
    %9773 = vmatpush2.bf16.msra.mxu0 %v7876
    %9774 = vmatprep.subr.bf16.mxu0 %v7867
    %9775 = vmatpush2.bf16.msra.mxu0 %v7866
    %9776 = vmatprep.subr.bf16.mxu0 %v7857
    %9777 = vmatpush2.bf16.msra.mxu0 %v7856
    %9778 = vmatprep.subr.bf16.mxu0 %v7847
    %9779 = vmatpush2.bf16.msra.mxu0 %v7846
    %9780 = vmatprep.subr.bf16.mxu0 %v7837
    %9781 = vmatpush2.bf16.msra.mxu0 %v7836
    %9782 = vmatprep.subr.bf16.mxu0 %v7827
    %9783 = vmatpush2.bf16.msra.mxu0 %v7826
    %9784 = vmatprep.mubr.bf16.mxu0 %v5281
    %9785 = vmatmul.mubr.bf16.gmra.mxu0 %v5280
    %v9786 = vpop.f32.mrf.mxu0
    %v9787 = vadd.f32 %v5311, %v9786
    %v9788 = vpop.f32.mrf.mxu0
    %v9789 = vadd.f32 %v5315, %v9788
    %v9790 = vpop.f32.mrf.mxu0
    %v9791 = vpop.f32.mrf.mxu0
    %9792 = vdwg.mxu0
    %9793 = vmatprep.subr.bf16.mxu0 %v7977
    %9794 = vmatpush1.bf16.msra.mxu0 %v7976
    %9795 = vmatprep.subr.bf16.mxu0 %v7967
    %9796 = vmatpush1.bf16.msra.mxu0 %v7966
    %9797 = vmatprep.subr.bf16.mxu0 %v7957
    %9798 = vmatpush1.bf16.msra.mxu0 %v7956
    %9799 = vmatprep.subr.bf16.mxu0 %v7947
    %9800 = vmatpush1.bf16.msra.mxu0 %v7946
    %9801 = vmatprep.subr.bf16.mxu0 %v7937
    %9802 = vmatpush1.bf16.msra.mxu0 %v7936
    %9803 = vmatprep.subr.bf16.mxu0 %v7927
    %9804 = vmatpush1.bf16.msra.mxu0 %v7926
    %9805 = vmatprep.subr.bf16.mxu0 %v7917
    %9806 = vmatpush1.bf16.msra.mxu0 %v7916
    %9807 = vmatprep.subr.bf16.mxu0 %v7907
    %9808 = vmatpush1.bf16.msra.mxu0 %v7906
    %9809 = vmatprep.subr.bf16.mxu0 %v8057
    %9810 = vmatpush2.bf16.msra.mxu0 %v8056
    %9811 = vmatprep.subr.bf16.mxu0 %v8047
    %9812 = vmatpush2.bf16.msra.mxu0 %v8046
    %9813 = vmatprep.subr.bf16.mxu0 %v8037
    %9814 = vmatpush2.bf16.msra.mxu0 %v8036
    %9815 = vmatprep.subr.bf16.mxu0 %v8027
    %9816 = vmatpush2.bf16.msra.mxu0 %v8026
    %9817 = vmatprep.subr.bf16.mxu0 %v8017
    %9818 = vmatpush2.bf16.msra.mxu0 %v8016
    %9819 = vmatprep.subr.bf16.mxu0 %v8007
    %9820 = vmatpush2.bf16.msra.mxu0 %v8006
    %9821 = vmatprep.subr.bf16.mxu0 %v7997
    %9822 = vmatpush2.bf16.msra.mxu0 %v7996
    %9823 = vmatprep.subr.bf16.mxu0 %v7987
    %9824 = vmatpush2.bf16.msra.mxu0 %v7986
    %9825 = vmatprep.mubr.bf16.mxu0 %v5283
    %9826 = vmatmul.mubr.bf16.gmra.mxu0 %v5282
    %v9827 = vpop.f32.mrf.mxu0
    %v9828 = vadd.f32 %v9787, %v9827
    %v9829 = vpop.f32.mrf.mxu0
    %v9830 = vadd.f32 %v9789, %v9829
    %v9831 = vpop.f32.mrf.mxu0
    %v9832 = vpop.f32.mrf.mxu0
    %9833 = vdwg.mxu0
    %9834 = vmatprep.subr.bf16.mxu0 %v8137
    %9835 = vmatpush1.bf16.msra.mxu0 %v8136
    %9836 = vmatprep.subr.bf16.mxu0 %v8127
    %9837 = vmatpush1.bf16.msra.mxu0 %v8126
    %9838 = vmatprep.subr.bf16.mxu0 %v8117
    %9839 = vmatpush1.bf16.msra.mxu0 %v8116
    %9840 = vmatprep.subr.bf16.mxu0 %v8107
    %9841 = vmatpush1.bf16.msra.mxu0 %v8106
    %9842 = vmatprep.subr.bf16.mxu0 %v8097
    %9843 = vmatpush1.bf16.msra.mxu0 %v8096
    %9844 = vmatprep.subr.bf16.mxu0 %v8087
    %9845 = vmatpush1.bf16.msra.mxu0 %v8086
    %9846 = vmatprep.subr.bf16.mxu0 %v8077
    %9847 = vmatpush1.bf16.msra.mxu0 %v8076
    %9848 = vmatprep.subr.bf16.mxu0 %v8067
    %9849 = vmatpush1.bf16.msra.mxu0 %v8066
    %9850 = vmatprep.subr.bf16.mxu0 %v8217
    %9851 = vmatpush2.bf16.msra.mxu0 %v8216
    %9852 = vmatprep.subr.bf16.mxu0 %v8207
    %9853 = vmatpush2.bf16.msra.mxu0 %v8206
    %9854 = vmatprep.subr.bf16.mxu0 %v8197
    %9855 = vmatpush2.bf16.msra.mxu0 %v8196
    %9856 = vmatprep.subr.bf16.mxu0 %v8187
    %9857 = vmatpush2.bf16.msra.mxu0 %v8186
    %9858 = vmatprep.subr.bf16.mxu0 %v8177
    %9859 = vmatpush2.bf16.msra.mxu0 %v8176
    %9860 = vmatprep.subr.bf16.mxu0 %v8167
    %9861 = vmatpush2.bf16.msra.mxu0 %v8166
    %9862 = vmatprep.subr.bf16.mxu0 %v8157
    %9863 = vmatpush2.bf16.msra.mxu0 %v8156
    %9864 = vmatprep.subr.bf16.mxu0 %v8147
    %9865 = vmatpush2.bf16.msra.mxu0 %v8146
    %9866 = vmatprep.mubr.bf16.mxu0 %v5285
    %9867 = vmatmul.mubr.bf16.gmra.mxu0 %v5284
    %v9868 = vpop.f32.mrf.mxu0
    %v9869 = vadd.f32 %v9828, %v9868
    %v9870 = vpop.f32.mrf.mxu0
    %v9871 = vadd.f32 %v9830, %v9870
    %v9872 = vpop.f32.mrf.mxu0
    %v9873 = vpop.f32.mrf.mxu0
    %9874 = vdwg.mxu0
    %9875 = vmatprep.subr.bf16.mxu0 %v8297
    %9876 = vmatpush1.bf16.msra.mxu0 %v8296
    %9877 = vmatprep.subr.bf16.mxu0 %v8287
    %9878 = vmatpush1.bf16.msra.mxu0 %v8286
    %9879 = vmatprep.subr.bf16.mxu0 %v8277
    %9880 = vmatpush1.bf16.msra.mxu0 %v8276
    %9881 = vmatprep.subr.bf16.mxu0 %v8267
    %9882 = vmatpush1.bf16.msra.mxu0 %v8266
    %9883 = vmatprep.subr.bf16.mxu0 %v8257
    %9884 = vmatpush1.bf16.msra.mxu0 %v8256
    %9885 = vmatprep.subr.bf16.mxu0 %v8247
    %9886 = vmatpush1.bf16.msra.mxu0 %v8246
    %9887 = vmatprep.subr.bf16.mxu0 %v8237
    %9888 = vmatpush1.bf16.msra.mxu0 %v8236
    %9889 = vmatprep.subr.bf16.mxu0 %v8227
    %9890 = vmatpush1.bf16.msra.mxu0 %v8226
    %9891 = vmatprep.subr.bf16.mxu0 %v8377
    %9892 = vmatpush2.bf16.msra.mxu0 %v8376
    %9893 = vmatprep.subr.bf16.mxu0 %v8367
    %9894 = vmatpush2.bf16.msra.mxu0 %v8366
    %9895 = vmatprep.subr.bf16.mxu0 %v8357
    %9896 = vmatpush2.bf16.msra.mxu0 %v8356
    %9897 = vmatprep.subr.bf16.mxu0 %v8347
    %9898 = vmatpush2.bf16.msra.mxu0 %v8346
    %9899 = vmatprep.subr.bf16.mxu0 %v8337
    %9900 = vmatpush2.bf16.msra.mxu0 %v8336
    %9901 = vmatprep.subr.bf16.mxu0 %v8327
    %9902 = vmatpush2.bf16.msra.mxu0 %v8326
    %9903 = vmatprep.subr.bf16.mxu0 %v8317
    %9904 = vmatpush2.bf16.msra.mxu0 %v8316
    %9905 = vmatprep.subr.bf16.mxu0 %v8307
    %9906 = vmatpush2.bf16.msra.mxu0 %v8306
    %9907 = vmatprep.mubr.bf16.mxu0 %v5287
    %9908 = vmatmul.mubr.bf16.gmra.mxu0 %v5286
    %v9909 = vpop.f32.mrf.mxu0
    %v9910 = vadd.f32 %v9869, %v9909
    %v9911 = vpop.f32.mrf.mxu0
    %v9912 = vadd.f32 %v9871, %v9911
    %v9913 = vpop.f32.mrf.mxu0
    %v9914 = vpop.f32.mrf.mxu0
    %9915 = vdwg.mxu0
    %9916 = vmatprep.subr.bf16.mxu0 %v8457
    %9917 = vmatpush1.bf16.msra.mxu0 %v8456
    %9918 = vmatprep.subr.bf16.mxu0 %v8447
    %9919 = vmatpush1.bf16.msra.mxu0 %v8446
    %9920 = vmatprep.subr.bf16.mxu0 %v8437
    %9921 = vmatpush1.bf16.msra.mxu0 %v8436
    %9922 = vmatprep.subr.bf16.mxu0 %v8427
    %9923 = vmatpush1.bf16.msra.mxu0 %v8426
    %9924 = vmatprep.subr.bf16.mxu0 %v8417
    %9925 = vmatpush1.bf16.msra.mxu0 %v8416
    %9926 = vmatprep.subr.bf16.mxu0 %v8407
    %9927 = vmatpush1.bf16.msra.mxu0 %v8406
    %9928 = vmatprep.subr.bf16.mxu0 %v8397
    %9929 = vmatpush1.bf16.msra.mxu0 %v8396
    %9930 = vmatprep.subr.bf16.mxu0 %v8387
    %9931 = vmatpush1.bf16.msra.mxu0 %v8386
    %9932 = vmatprep.subr.bf16.mxu0 %v8537
    %9933 = vmatpush2.bf16.msra.mxu0 %v8536
    %9934 = vmatprep.subr.bf16.mxu0 %v8527
    %9935 = vmatpush2.bf16.msra.mxu0 %v8526
    %9936 = vmatprep.subr.bf16.mxu0 %v8517
    %9937 = vmatpush2.bf16.msra.mxu0 %v8516
    %9938 = vmatprep.subr.bf16.mxu0 %v8507
    %9939 = vmatpush2.bf16.msra.mxu0 %v8506
    %9940 = vmatprep.subr.bf16.mxu0 %v8497
    %9941 = vmatpush2.bf16.msra.mxu0 %v8496
    %9942 = vmatprep.subr.bf16.mxu0 %v8487
    %9943 = vmatpush2.bf16.msra.mxu0 %v8486
    %9944 = vmatprep.subr.bf16.mxu0 %v8477
    %9945 = vmatpush2.bf16.msra.mxu0 %v8476
    %9946 = vmatprep.subr.bf16.mxu0 %v8467
    %9947 = vmatpush2.bf16.msra.mxu0 %v8466
    %9948 = vmatprep.mubr.bf16.mxu0 %v5289
    %9949 = vmatmul.mubr.bf16.gmra.mxu0 %v5288
    %v9950 = vpop.f32.mrf.mxu0
    %v9951 = vadd.f32 %v9910, %v9950
    %v9952 = vpop.f32.mrf.mxu0
    %v9953 = vadd.f32 %v9912, %v9952
    %v9954 = vpop.f32.mrf.mxu0
    %v9955 = vpop.f32.mrf.mxu0
    %9956 = vdwg.mxu0
    %9957 = vmatprep.subr.bf16.mxu0 %v7819
    %9958 = vmatpush1.bf16.msra.mxu0 %v7818
    %9959 = vmatprep.subr.bf16.mxu0 %v7809
    %9960 = vmatpush1.bf16.msra.mxu0 %v7808
    %9961 = vmatprep.subr.bf16.mxu0 %v7799
    %9962 = vmatpush1.bf16.msra.mxu0 %v7798
    %9963 = vmatprep.subr.bf16.mxu0 %v7789
    %9964 = vmatpush1.bf16.msra.mxu0 %v7788
    %9965 = vmatprep.subr.bf16.mxu0 %v7779
    %9966 = vmatpush1.bf16.msra.mxu0 %v7778
    %9967 = vmatprep.subr.bf16.mxu0 %v7769
    %9968 = vmatpush1.bf16.msra.mxu0 %v7768
    %9969 = vmatprep.subr.bf16.mxu0 %v7759
    %9970 = vmatpush1.bf16.msra.mxu0 %v7758
    %9971 = vmatprep.subr.bf16.mxu0 %v7749
    %9972 = vmatpush1.bf16.msra.mxu0 %v7748
    %9973 = vmatprep.subr.bf16.mxu0 %v7899
    %9974 = vmatpush2.bf16.msra.mxu0 %v7898
    %9975 = vmatprep.subr.bf16.mxu0 %v7889
    %9976 = vmatpush2.bf16.msra.mxu0 %v7888
    %9977 = vmatprep.subr.bf16.mxu0 %v7879
    %9978 = vmatpush2.bf16.msra.mxu0 %v7878
    %9979 = vmatprep.subr.bf16.mxu0 %v7869
    %9980 = vmatpush2.bf16.msra.mxu0 %v7868
    %9981 = vmatprep.subr.bf16.mxu0 %v7859
    %9982 = vmatpush2.bf16.msra.mxu0 %v7858
    %9983 = vmatprep.subr.bf16.mxu0 %v7849
    %9984 = vmatpush2.bf16.msra.mxu0 %v7848
    %9985 = vmatprep.subr.bf16.mxu0 %v7839
    %9986 = vmatpush2.bf16.msra.mxu0 %v7838
    %9987 = vmatprep.subr.bf16.mxu0 %v7829
    %9988 = vmatpush2.bf16.msra.mxu0 %v7828
    %9989 = vmatprep.mubr.bf16.mxu0 %v5281
    %9990 = vmatmul.mubr.bf16.gmra.mxu0 %v5280
    %v9991 = vpop.f32.mrf.mxu0
    %v9992 = vadd.f32 %v5319, %v9991
    %v9993 = vpop.f32.mrf.mxu0
    %v9994 = vadd.f32 %v5323, %v9993
    %v9995 = vpop.f32.mrf.mxu0
    %v9996 = vpop.f32.mrf.mxu0
    %9997 = vdwg.mxu0
    %9998 = vmatprep.subr.bf16.mxu0 %v7979
    %9999 = vmatpush1.bf16.msra.mxu0 %v7978
    %10000 = vmatprep.subr.bf16.mxu0 %v7969
    %10001 = vmatpush1.bf16.msra.mxu0 %v7968
    %10002 = vmatprep.subr.bf16.mxu0 %v7959
    %10003 = vmatpush1.bf16.msra.mxu0 %v7958
    %10004 = vmatprep.subr.bf16.mxu0 %v7949
    %10005 = vmatpush1.bf16.msra.mxu0 %v7948
    %10006 = vmatprep.subr.bf16.mxu0 %v7939
    %10007 = vmatpush1.bf16.msra.mxu0 %v7938
    %10008 = vmatprep.subr.bf16.mxu0 %v7929
    %10009 = vmatpush1.bf16.msra.mxu0 %v7928
    %10010 = vmatprep.subr.bf16.mxu0 %v7919
    %10011 = vmatpush1.bf16.msra.mxu0 %v7918
    %10012 = vmatprep.subr.bf16.mxu0 %v7909
    %10013 = vmatpush1.bf16.msra.mxu0 %v7908
    %10014 = vmatprep.subr.bf16.mxu0 %v8059
    %10015 = vmatpush2.bf16.msra.mxu0 %v8058
    %10016 = vmatprep.subr.bf16.mxu0 %v8049
    %10017 = vmatpush2.bf16.msra.mxu0 %v8048
    %10018 = vmatprep.subr.bf16.mxu0 %v8039
    %10019 = vmatpush2.bf16.msra.mxu0 %v8038
    %10020 = vmatprep.subr.bf16.mxu0 %v8029
    %10021 = vmatpush2.bf16.msra.mxu0 %v8028
    %10022 = vmatprep.subr.bf16.mxu0 %v8019
    %10023 = vmatpush2.bf16.msra.mxu0 %v8018
    %10024 = vmatprep.subr.bf16.mxu0 %v8009
    %10025 = vmatpush2.bf16.msra.mxu0 %v8008
    %10026 = vmatprep.subr.bf16.mxu0 %v7999
    %10027 = vmatpush2.bf16.msra.mxu0 %v7998
    %10028 = vmatprep.subr.bf16.mxu0 %v7989
    %10029 = vmatpush2.bf16.msra.mxu0 %v7988
    %10030 = vmatprep.mubr.bf16.mxu0 %v5283
    %10031 = vmatmul.mubr.bf16.gmra.mxu0 %v5282
    %v10032 = vpop.f32.mrf.mxu0
    %v10033 = vadd.f32 %v9992, %v10032
    %v10034 = vpop.f32.mrf.mxu0
    %v10035 = vadd.f32 %v9994, %v10034
    %v10036 = vpop.f32.mrf.mxu0
    %v10037 = vpop.f32.mrf.mxu0
    %10038 = vdwg.mxu0
    %10039 = vmatprep.subr.bf16.mxu0 %v8139
    %10040 = vmatpush1.bf16.msra.mxu0 %v8138
    %10041 = vmatprep.subr.bf16.mxu0 %v8129
    %10042 = vmatpush1.bf16.msra.mxu0 %v8128
    %10043 = vmatprep.subr.bf16.mxu0 %v8119
    %10044 = vmatpush1.bf16.msra.mxu0 %v8118
    %10045 = vmatprep.subr.bf16.mxu0 %v8109
    %10046 = vmatpush1.bf16.msra.mxu0 %v8108
    %10047 = vmatprep.subr.bf16.mxu0 %v8099
    %10048 = vmatpush1.bf16.msra.mxu0 %v8098
    %10049 = vmatprep.subr.bf16.mxu0 %v8089
    %10050 = vmatpush1.bf16.msra.mxu0 %v8088
    %10051 = vmatprep.subr.bf16.mxu0 %v8079
    %10052 = vmatpush1.bf16.msra.mxu0 %v8078
    %10053 = vmatprep.subr.bf16.mxu0 %v8069
    %10054 = vmatpush1.bf16.msra.mxu0 %v8068
    %10055 = vmatprep.subr.bf16.mxu0 %v8219
    %10056 = vmatpush2.bf16.msra.mxu0 %v8218
    %10057 = vmatprep.subr.bf16.mxu0 %v8209
    %10058 = vmatpush2.bf16.msra.mxu0 %v8208
    %10059 = vmatprep.subr.bf16.mxu0 %v8199
    %10060 = vmatpush2.bf16.msra.mxu0 %v8198
    %10061 = vmatprep.subr.bf16.mxu0 %v8189
    %10062 = vmatpush2.bf16.msra.mxu0 %v8188
    %10063 = vmatprep.subr.bf16.mxu0 %v8179
    %10064 = vmatpush2.bf16.msra.mxu0 %v8178
    %10065 = vmatprep.subr.bf16.mxu0 %v8169
    %10066 = vmatpush2.bf16.msra.mxu0 %v8168
    %10067 = vmatprep.subr.bf16.mxu0 %v8159
    %10068 = vmatpush2.bf16.msra.mxu0 %v8158
    %10069 = vmatprep.subr.bf16.mxu0 %v8149
    %10070 = vmatpush2.bf16.msra.mxu0 %v8148
    %10071 = vmatprep.mubr.bf16.mxu0 %v5285
    %10072 = vmatmul.mubr.bf16.gmra.mxu0 %v5284
    %v10073 = vpop.f32.mrf.mxu0
    %v10074 = vadd.f32 %v10033, %v10073
    %v10075 = vpop.f32.mrf.mxu0
    %v10076 = vadd.f32 %v10035, %v10075
    %v10077 = vpop.f32.mrf.mxu0
    %v10078 = vpop.f32.mrf.mxu0
    %10079 = vdwg.mxu0
    %10080 = vmatprep.subr.bf16.mxu0 %v8299
    %10081 = vmatpush1.bf16.msra.mxu0 %v8298
    %10082 = vmatprep.subr.bf16.mxu0 %v8289
    %10083 = vmatpush1.bf16.msra.mxu0 %v8288
    %10084 = vmatprep.subr.bf16.mxu0 %v8279
    %10085 = vmatpush1.bf16.msra.mxu0 %v8278
    %10086 = vmatprep.subr.bf16.mxu0 %v8269
    %10087 = vmatpush1.bf16.msra.mxu0 %v8268
    %10088 = vmatprep.subr.bf16.mxu0 %v8259
    %10089 = vmatpush1.bf16.msra.mxu0 %v8258
    %10090 = vmatprep.subr.bf16.mxu0 %v8249
    %10091 = vmatpush1.bf16.msra.mxu0 %v8248
    %10092 = vmatprep.subr.bf16.mxu0 %v8239
    %10093 = vmatpush1.bf16.msra.mxu0 %v8238
    %10094 = vmatprep.subr.bf16.mxu0 %v8229
    %10095 = vmatpush1.bf16.msra.mxu0 %v8228
    %10096 = vmatprep.subr.bf16.mxu0 %v8379
    %10097 = vmatpush2.bf16.msra.mxu0 %v8378
    %10098 = vmatprep.subr.bf16.mxu0 %v8369
    %10099 = vmatpush2.bf16.msra.mxu0 %v8368
    %10100 = vmatprep.subr.bf16.mxu0 %v8359
    %10101 = vmatpush2.bf16.msra.mxu0 %v8358
    %10102 = vmatprep.subr.bf16.mxu0 %v8349
    %10103 = vmatpush2.bf16.msra.mxu0 %v8348
    %10104 = vmatprep.subr.bf16.mxu0 %v8339
    %10105 = vmatpush2.bf16.msra.mxu0 %v8338
    %10106 = vmatprep.subr.bf16.mxu0 %v8329
    %10107 = vmatpush2.bf16.msra.mxu0 %v8328
    %10108 = vmatprep.subr.bf16.mxu0 %v8319
    %10109 = vmatpush2.bf16.msra.mxu0 %v8318
    %10110 = vmatprep.subr.bf16.mxu0 %v8309
    %10111 = vmatpush2.bf16.msra.mxu0 %v8308
    %10112 = vmatprep.mubr.bf16.mxu0 %v5287
    %10113 = vmatmul.mubr.bf16.gmra.mxu0 %v5286
    %v10114 = vpop.f32.mrf.mxu0
    %v10115 = vadd.f32 %v10074, %v10114
    %v10116 = vpop.f32.mrf.mxu0
    %v10117 = vadd.f32 %v10076, %v10116
    %v10118 = vpop.f32.mrf.mxu0
    %v10119 = vpop.f32.mrf.mxu0
    %10120 = vdwg.mxu0
    %10121 = vmatprep.subr.bf16.mxu0 %v8459
    %10122 = vmatpush1.bf16.msra.mxu0 %v8458
    %10123 = vmatprep.subr.bf16.mxu0 %v8449
    %10124 = vmatpush1.bf16.msra.mxu0 %v8448
    %10125 = vmatprep.subr.bf16.mxu0 %v8439
    %10126 = vmatpush1.bf16.msra.mxu0 %v8438
    %10127 = vmatprep.subr.bf16.mxu0 %v8429
    %10128 = vmatpush1.bf16.msra.mxu0 %v8428
    %10129 = vmatprep.subr.bf16.mxu0 %v8419
    %10130 = vmatpush1.bf16.msra.mxu0 %v8418
    %10131 = vmatprep.subr.bf16.mxu0 %v8409
    %10132 = vmatpush1.bf16.msra.mxu0 %v8408
    %10133 = vmatprep.subr.bf16.mxu0 %v8399
    %10134 = vmatpush1.bf16.msra.mxu0 %v8398
    %10135 = vmatprep.subr.bf16.mxu0 %v8389
    %10136 = vmatpush1.bf16.msra.mxu0 %v8388
    %10137 = vmatprep.subr.bf16.mxu0 %v8539
    %10138 = vmatpush2.bf16.msra.mxu0 %v8538
    %10139 = vmatprep.subr.bf16.mxu0 %v8529
    %10140 = vmatpush2.bf16.msra.mxu0 %v8528
    %10141 = vmatprep.subr.bf16.mxu0 %v8519
    %10142 = vmatpush2.bf16.msra.mxu0 %v8518
    %10143 = vmatprep.subr.bf16.mxu0 %v8509
    %10144 = vmatpush2.bf16.msra.mxu0 %v8508
    %10145 = vmatprep.subr.bf16.mxu0 %v8499
    %10146 = vmatpush2.bf16.msra.mxu0 %v8498
    %10147 = vmatprep.subr.bf16.mxu0 %v8489
    %10148 = vmatpush2.bf16.msra.mxu0 %v8488
    %10149 = vmatprep.subr.bf16.mxu0 %v8479
    %10150 = vmatpush2.bf16.msra.mxu0 %v8478
    %10151 = vmatprep.subr.bf16.mxu0 %v8469
    %10152 = vmatpush2.bf16.msra.mxu0 %v8468
    %10153 = vmatprep.mubr.bf16.mxu0 %v5289
    %10154 = vmatmul.mubr.bf16.gmra.mxu0 %v5288
    %v10155 = vpop.f32.mrf.mxu0
    %v10156 = vadd.f32 %v10115, %v10155
    %v10157 = vpop.f32.mrf.mxu0
    %v10158 = vadd.f32 %v10117, %v10157
    %v10159 = vpop.f32.mrf.mxu0
    %v10160 = vpop.f32.mrf.mxu0
    %10161 = vdwg.mxu0
    %10162 = vmatprep.subr.bf16.mxu0 %v7821
    %10163 = vmatpush1.bf16.msra.mxu0 %v7820
    %10164 = vmatprep.subr.bf16.mxu0 %v7811
    %10165 = vmatpush1.bf16.msra.mxu0 %v7810
    %10166 = vmatprep.subr.bf16.mxu0 %v7801
    %10167 = vmatpush1.bf16.msra.mxu0 %v7800
    %10168 = vmatprep.subr.bf16.mxu0 %v7791
    %10169 = vmatpush1.bf16.msra.mxu0 %v7790
    %10170 = vmatprep.subr.bf16.mxu0 %v7781
    %10171 = vmatpush1.bf16.msra.mxu0 %v7780
    %10172 = vmatprep.subr.bf16.mxu0 %v7771
    %10173 = vmatpush1.bf16.msra.mxu0 %v7770
    %10174 = vmatprep.subr.bf16.mxu0 %v7761
    %10175 = vmatpush1.bf16.msra.mxu0 %v7760
    %10176 = vmatprep.subr.bf16.mxu0 %v7751
    %10177 = vmatpush1.bf16.msra.mxu0 %v7750
    %10178 = vmatprep.subr.bf16.mxu0 %v7901
    %10179 = vmatpush2.bf16.msra.mxu0 %v7900
    %10180 = vmatprep.subr.bf16.mxu0 %v7891
    %10181 = vmatpush2.bf16.msra.mxu0 %v7890
    %10182 = vmatprep.subr.bf16.mxu0 %v7881
    %10183 = vmatpush2.bf16.msra.mxu0 %v7880
    %10184 = vmatprep.subr.bf16.mxu0 %v7871
    %10185 = vmatpush2.bf16.msra.mxu0 %v7870
    %10186 = vmatprep.subr.bf16.mxu0 %v7861
    %10187 = vmatpush2.bf16.msra.mxu0 %v7860
    %10188 = vmatprep.subr.bf16.mxu0 %v7851
    %10189 = vmatpush2.bf16.msra.mxu0 %v7850
    %10190 = vmatprep.subr.bf16.mxu0 %v7841
    %10191 = vmatpush2.bf16.msra.mxu0 %v7840
    %10192 = vmatprep.subr.bf16.mxu0 %v7831
    %10193 = vmatpush2.bf16.msra.mxu0 %v7830
    %10194 = vmatprep.mubr.bf16.mxu0 %v5281
    %10195 = vmatmul.mubr.bf16.gmra.mxu0 %v5280
    %v10196 = vpop.f32.mrf.mxu0
    %v10197 = vadd.f32 %v5327, %v10196
    %v10198 = vpop.f32.mrf.mxu0
    %v10199 = vadd.f32 %v5331, %v10198
    %v10200 = vpop.f32.mrf.mxu0
    %v10201 = vpop.f32.mrf.mxu0
    %10202 = vdwg.mxu0
    %10203 = vmatprep.subr.bf16.mxu0 %v7981
    %10204 = vmatpush1.bf16.msra.mxu0 %v7980
    %10205 = vmatprep.subr.bf16.mxu0 %v7971
    %10206 = vmatpush1.bf16.msra.mxu0 %v7970
    %10207 = vmatprep.subr.bf16.mxu0 %v7961
    %10208 = vmatpush1.bf16.msra.mxu0 %v7960
    %10209 = vmatprep.subr.bf16.mxu0 %v7951
    %10210 = vmatpush1.bf16.msra.mxu0 %v7950
    %10211 = vmatprep.subr.bf16.mxu0 %v7941
    %10212 = vmatpush1.bf16.msra.mxu0 %v7940
    %10213 = vmatprep.subr.bf16.mxu0 %v7931
    %10214 = vmatpush1.bf16.msra.mxu0 %v7930
    %10215 = vmatprep.subr.bf16.mxu0 %v7921
    %10216 = vmatpush1.bf16.msra.mxu0 %v7920
    %10217 = vmatprep.subr.bf16.mxu0 %v7911
    %10218 = vmatpush1.bf16.msra.mxu0 %v7910
    %10219 = vmatprep.subr.bf16.mxu0 %v8061
    %10220 = vmatpush2.bf16.msra.mxu0 %v8060
    %10221 = vmatprep.subr.bf16.mxu0 %v8051
    %10222 = vmatpush2.bf16.msra.mxu0 %v8050
    %10223 = vmatprep.subr.bf16.mxu0 %v8041
    %10224 = vmatpush2.bf16.msra.mxu0 %v8040
    %10225 = vmatprep.subr.bf16.mxu0 %v8031
    %10226 = vmatpush2.bf16.msra.mxu0 %v8030
    %10227 = vmatprep.subr.bf16.mxu0 %v8021
    %10228 = vmatpush2.bf16.msra.mxu0 %v8020
    %10229 = vmatprep.subr.bf16.mxu0 %v8011
    %10230 = vmatpush2.bf16.msra.mxu0 %v8010
    %10231 = vmatprep.subr.bf16.mxu0 %v8001
    %10232 = vmatpush2.bf16.msra.mxu0 %v8000
    %10233 = vmatprep.subr.bf16.mxu0 %v7991
    %10234 = vmatpush2.bf16.msra.mxu0 %v7990
    %10235 = vmatprep.mubr.bf16.mxu0 %v5283
    %10236 = vmatmul.mubr.bf16.gmra.mxu0 %v5282
    %v10237 = vpop.f32.mrf.mxu0
    %v10238 = vadd.f32 %v10197, %v10237
    %v10239 = vpop.f32.mrf.mxu0
    %v10240 = vadd.f32 %v10199, %v10239
    %v10241 = vpop.f32.mrf.mxu0
    %v10242 = vpop.f32.mrf.mxu0
    %10243 = vdwg.mxu0
    %10244 = vmatprep.subr.bf16.mxu0 %v8141
    %10245 = vmatpush1.bf16.msra.mxu0 %v8140
    %10246 = vmatprep.subr.bf16.mxu0 %v8131
    %10247 = vmatpush1.bf16.msra.mxu0 %v8130
    %10248 = vmatprep.subr.bf16.mxu0 %v8121
    %10249 = vmatpush1.bf16.msra.mxu0 %v8120
    %10250 = vmatprep.subr.bf16.mxu0 %v8111
    %10251 = vmatpush1.bf16.msra.mxu0 %v8110
    %10252 = vmatprep.subr.bf16.mxu0 %v8101
    %10253 = vmatpush1.bf16.msra.mxu0 %v8100
    %10254 = vmatprep.subr.bf16.mxu0 %v8091
    %10255 = vmatpush1.bf16.msra.mxu0 %v8090
    %10256 = vmatprep.subr.bf16.mxu0 %v8081
    %10257 = vmatpush1.bf16.msra.mxu0 %v8080
    %10258 = vmatprep.subr.bf16.mxu0 %v8071
    %10259 = vmatpush1.bf16.msra.mxu0 %v8070
    %10260 = vmatprep.subr.bf16.mxu0 %v8221
    %10261 = vmatpush2.bf16.msra.mxu0 %v8220
    %10262 = vmatprep.subr.bf16.mxu0 %v8211
    %10263 = vmatpush2.bf16.msra.mxu0 %v8210
    %10264 = vmatprep.subr.bf16.mxu0 %v8201
    %10265 = vmatpush2.bf16.msra.mxu0 %v8200
    %10266 = vmatprep.subr.bf16.mxu0 %v8191
    %10267 = vmatpush2.bf16.msra.mxu0 %v8190
    %10268 = vmatprep.subr.bf16.mxu0 %v8181
    %10269 = vmatpush2.bf16.msra.mxu0 %v8180
    %10270 = vmatprep.subr.bf16.mxu0 %v8171
    %10271 = vmatpush2.bf16.msra.mxu0 %v8170
    %10272 = vmatprep.subr.bf16.mxu0 %v8161
    %10273 = vmatpush2.bf16.msra.mxu0 %v8160
    %10274 = vmatprep.subr.bf16.mxu0 %v8151
    %10275 = vmatpush2.bf16.msra.mxu0 %v8150
    %10276 = vmatprep.mubr.bf16.mxu0 %v5285
    %10277 = vmatmul.mubr.bf16.gmra.mxu0 %v5284
    %v10278 = vpop.f32.mrf.mxu0
    %v10279 = vadd.f32 %v10238, %v10278
    %v10280 = vpop.f32.mrf.mxu0
    %v10281 = vadd.f32 %v10240, %v10280
    %v10282 = vpop.f32.mrf.mxu0
    %v10283 = vpop.f32.mrf.mxu0
    %10284 = vdwg.mxu0
    %10285 = vmatprep.subr.bf16.mxu0 %v8301
    %10286 = vmatpush1.bf16.msra.mxu0 %v8300
    %10287 = vmatprep.subr.bf16.mxu0 %v8291
    %10288 = vmatpush1.bf16.msra.mxu0 %v8290
    %10289 = vmatprep.subr.bf16.mxu0 %v8281
    %10290 = vmatpush1.bf16.msra.mxu0 %v8280
    %10291 = vmatprep.subr.bf16.mxu0 %v8271
    %10292 = vmatpush1.bf16.msra.mxu0 %v8270
    %10293 = vmatprep.subr.bf16.mxu0 %v8261
    %10294 = vmatpush1.bf16.msra.mxu0 %v8260
    %10295 = vmatprep.subr.bf16.mxu0 %v8251
    %10296 = vmatpush1.bf16.msra.mxu0 %v8250
    %10297 = vmatprep.subr.bf16.mxu0 %v8241
    %10298 = vmatpush1.bf16.msra.mxu0 %v8240
    %10299 = vmatprep.subr.bf16.mxu0 %v8231
    %10300 = vmatpush1.bf16.msra.mxu0 %v8230
    %10301 = vmatprep.subr.bf16.mxu0 %v8381
    %10302 = vmatpush2.bf16.msra.mxu0 %v8380
    %10303 = vmatprep.subr.bf16.mxu0 %v8371
    %10304 = vmatpush2.bf16.msra.mxu0 %v8370
    %10305 = vmatprep.subr.bf16.mxu0 %v8361
    %10306 = vmatpush2.bf16.msra.mxu0 %v8360
    %10307 = vmatprep.subr.bf16.mxu0 %v8351
    %10308 = vmatpush2.bf16.msra.mxu0 %v8350
    %10309 = vmatprep.subr.bf16.mxu0 %v8341
    %10310 = vmatpush2.bf16.msra.mxu0 %v8340
    %10311 = vmatprep.subr.bf16.mxu0 %v8331
    %10312 = vmatpush2.bf16.msra.mxu0 %v8330
    %10313 = vmatprep.subr.bf16.mxu0 %v8321
    %10314 = vmatpush2.bf16.msra.mxu0 %v8320
    %10315 = vmatprep.subr.bf16.mxu0 %v8311
    %10316 = vmatpush2.bf16.msra.mxu0 %v8310
    %10317 = vmatprep.mubr.bf16.mxu0 %v5287
    %10318 = vmatmul.mubr.bf16.gmra.mxu0 %v5286
    %v10319 = vpop.f32.mrf.mxu0
    %v10320 = vadd.f32 %v10279, %v10319
    %v10321 = vpop.f32.mrf.mxu0
    %v10322 = vadd.f32 %v10281, %v10321
    %v10323 = vpop.f32.mrf.mxu0
    %v10324 = vpop.f32.mrf.mxu0
    %10325 = vdwg.mxu0
    %10326 = vmatprep.subr.bf16.mxu0 %v8461
    %10327 = vmatpush1.bf16.msra.mxu0 %v8460
    %10328 = vmatprep.subr.bf16.mxu0 %v8451
    %10329 = vmatpush1.bf16.msra.mxu0 %v8450
    %10330 = vmatprep.subr.bf16.mxu0 %v8441
    %10331 = vmatpush1.bf16.msra.mxu0 %v8440
    %10332 = vmatprep.subr.bf16.mxu0 %v8431
    %10333 = vmatpush1.bf16.msra.mxu0 %v8430
    %10334 = vmatprep.subr.bf16.mxu0 %v8421
    %10335 = vmatpush1.bf16.msra.mxu0 %v8420
    %10336 = vmatprep.subr.bf16.mxu0 %v8411
    %10337 = vmatpush1.bf16.msra.mxu0 %v8410
    %10338 = vmatprep.subr.bf16.mxu0 %v8401
    %10339 = vmatpush1.bf16.msra.mxu0 %v8400
    %10340 = vmatprep.subr.bf16.mxu0 %v8391
    %10341 = vmatpush1.bf16.msra.mxu0 %v8390
    %10342 = vmatprep.subr.bf16.mxu0 %v8541
    %10343 = vmatpush2.bf16.msra.mxu0 %v8540
    %10344 = vmatprep.subr.bf16.mxu0 %v8531
    %10345 = vmatpush2.bf16.msra.mxu0 %v8530
    %10346 = vmatprep.subr.bf16.mxu0 %v8521
    %10347 = vmatpush2.bf16.msra.mxu0 %v8520
    %10348 = vmatprep.subr.bf16.mxu0 %v8511
    %10349 = vmatpush2.bf16.msra.mxu0 %v8510
    %10350 = vmatprep.subr.bf16.mxu0 %v8501
    %10351 = vmatpush2.bf16.msra.mxu0 %v8500
    %10352 = vmatprep.subr.bf16.mxu0 %v8491
    %10353 = vmatpush2.bf16.msra.mxu0 %v8490
    %10354 = vmatprep.subr.bf16.mxu0 %v8481
    %10355 = vmatpush2.bf16.msra.mxu0 %v8480
    %10356 = vmatprep.subr.bf16.mxu0 %v8471
    %10357 = vmatpush2.bf16.msra.mxu0 %v8470
    %10358 = vmatprep.mubr.bf16.mxu0 %v5289
    %10359 = vmatmul.mubr.bf16.gmra.mxu0 %v5288
    %v10360 = vpop.f32.mrf.mxu0
    %v10361 = vadd.f32 %v10320, %v10360
    %v10362 = vpop.f32.mrf.mxu0
    %v10363 = vadd.f32 %v10322, %v10362
    %v10364 = vpop.f32.mrf.mxu0
    %v10365 = vpop.f32.mrf.mxu0
    %10366 = vdwg.mxu0
    %v10367 = vmax.f32 %v9541, 0.0
    %v10368 = vmax.f32 %v9543, 0.0
    %v10369 = vmax.f32 %v9746, 0.0
    %v10370 = vmax.f32 %v9748, 0.0
    %v10371 = vmax.f32 %v9951, 0.0
    %v10372 = vmax.f32 %v9953, 0.0
    %v10373 = vmax.f32 %v10156, 0.0
    %v10374 = vmax.f32 %v10158, 0.0
    %v10375 = vmax.f32 %v10361, 0.0
    %v10376 = vmax.f32 %v10363, 0.0
    %v10377 = vld [vmem:[#allocation23] sm:$0xff]
    %v10378 = vld [vmem:[#allocation23 + $0x8] sm:$0x3]
    %v10381 = vlaneseq
    %v10382 = vshrl.u32 %v10381, 7
    %v10383 = vsub.s32 0, %v10382
    %v10384 = vrot.slane %v10377, %v10383
    %v10385 = vlaneseq
    %v10386 = vshrl.u32 %v10385, 7
    %v10387 = vsub.s32 1, %v10386
    %v10388 = vrot.slane %v10377, %v10387
    %v10389 = vlaneseq
    %v10390 = vshrl.u32 %v10389, 7
    %v10391 = vsub.s32 2, %v10390
    %v10392 = vrot.slane %v10377, %v10391
    %v10393 = vlaneseq
    %v10394 = vshrl.u32 %v10393, 7
    %v10395 = vsub.s32 3, %v10394
    %v10396 = vrot.slane %v10377, %v10395
    %v10397 = vlaneseq
    %v10398 = vshrl.u32 %v10397, 7
    %v10399 = vsub.s32 4, %v10398
    %v10400 = vrot.slane %v10377, %v10399
    %v10401 = vlaneseq
    %v10402 = vshrl.u32 %v10401, 7
    %v10403 = vsub.s32 5, %v10402
    %v10404 = vrot.slane %v10377, %v10403
    %v10405 = vlaneseq
    %v10406 = vshrl.u32 %v10405, 7
    %v10407 = vsub.s32 6, %v10406
    %v10408 = vrot.slane %v10377, %v10407
    %v10409 = vlaneseq
    %v10410 = vshrl.u32 %v10409, 7
    %v10411 = vsub.s32 7, %v10410
    %v10412 = vrot.slane %v10377, %v10411
    %v10413 = vlaneseq
    %v10414 = vshrl.u32 %v10413, 7
    %v10415 = vsub.s32 0, %v10414
    %v10416 = vrot.slane %v10378, %v10415
    %v10417 = vlaneseq
    %v10418 = vshrl.u32 %v10417, 7
    %v10419 = vsub.s32 1, %v10418
    %v10420 = vrot.slane %v10378, %v10419
    %v10431 = vmul.f32 %v10367, %v10384
    %v10432 = vmul.f32 %v10368, %v10388
    %v10433 = vmul.f32 %v10369, %v10392
    %v10434 = vmul.f32 %v10370, %v10396
    %v10435 = vmul.f32 %v10371, %v10400
    %v10436 = vmul.f32 %v10372, %v10404
    %v10437 = vmul.f32 %v10373, %v10408
    %v10438 = vmul.f32 %v10374, %v10412
    %v10439 = vmul.f32 %v10375, %v10416
    %v10440 = vmul.f32 %v10376, %v10420
    %v10441 = vsel %vm231, %v10431, 0.0
    %v10442 = vsel %vm231, %v10432, 0.0
    %v10443 = vadd.f32 %v10441, %v10442
    %v10444 = vsel %vm231, %v10433, 0.0
    %v10445 = vadd.f32 %v10443, %v10444
    %v10446 = vsel %vm231, %v10434, 0.0
    %v10447 = vadd.f32 %v10445, %v10446
    %v10448 = vsel %vm231, %v10435, 0.0
    %v10449 = vadd.f32 %v10447, %v10448
    %v10450 = vsel %vm231, %v10436, 0.0
    %v10451 = vadd.f32 %v10449, %v10450
    %v10452 = vsel %vm231, %v10437, 0.0
    %v10453 = vadd.f32 %v10451, %v10452
    %v10454 = vsel %vm231, %v10438, 0.0
    %v10455 = vadd.f32 %v10453, %v10454
    %v10456 = vsel %vm231, %v10439, 0.0
    %v10457 = vadd.f32 %v10455, %v10456
    %v10458 = vsel %vm231, %v10440, 0.0
    %v10459 = vadd.f32 %v10457, %v10458
    %10460 = vadd.xlane.f32.xlu0 %v10459
    %v10461 = vpop.xlane.xlu0 %10460
    %v10462 = vld [vmem:[#allocation5] sm:$0x1]
    %v10464 = vlaneseq
    %v10465 = vshrl.u32 %v10464, 7
    %v10466 = vsub.s32 0, %v10465
    %v10467 = vrot.slane %v10462, %v10466
    %v10469 = vadd.f32 %v10461, %v10467
    %vm10470 = vcmask 1024
    %10471 = vst.msk [vmem:[%s16] sm:$0x3] %vm10470, %v10469
    // Predicated region
    $region114: #{net_forward.1} parent=1 // pred_check
      _
    $region115: #{net_forward.1} parent=1 // pred_check_branch
      %10473 = sbr.rel (0) target = $region117
    $region116: #{net_forward.1} parent=1 // pred_region
      _
    $region117: #{net_forward.1} parent=1 // pred_fallthru
      _
    // Predicated region
    $region118: #{net_forward.1} parent=1 // pred_check
      _
    $region119: #{net_forward.1} parent=1 // pred_check_branch
      %10475 = sbr.rel (0) target = $region121
    $region120: #{net_forward.1} parent=1 // pred_region
      _
    $region121: #{net_forward.1} parent=1 // pred_fallthru
      _
    %10476 = vsyncpa [#allocation7], 1
    %10477 = vsyncpa [#allocation9], 1
    %10478 = vsyncpa [#allocation12], 1
    %10479 = vsyncpa [#allocation15], 1
    %10480 = vsyncpa [#allocation18], 1
    %10481 = vsyncpa [#allocation21], 1
    %10482 = vsyncpa [#allocation24], 1
  %10483 = vsyncmov [#allocation4]
  %s10484 = vpop.sfrf %10483
  %p10485 = scmp.eq.s32.totalorder %s10484, 0
  %p10486 = pneg %p10485
  %10488 = shalt.err (%p10486)
  %s10489 = scalar_lea.sflag [#allocation4], 1
  %10490 = vsyncmov %s10489
  %s10491 = vpop.sfrf %10490
  %p10492 = scmp.eq.s32.totalorder %s10491, 0
  %p10493 = pneg %p10492
  %10495 = shalt.err (%p10493)

</llo_original>
